<compile_context>
chip_gen: v7x
topology: tpu7x:2x2x1
jax: 0.10.0
libtpu: 0.0.40
codegen_flags: <defaults>
</compile_context>

<pallas_src>
import functools

import jax
import jax.numpy as jnp
from jax.experimental import pallas as pl
from jax.experimental.pallas import tpu as pltpu


# ----------------------------- fused Pallas kernel ---------------------------

def _ppgn_fused_kernel(
    x_ref, m_ref,
    w12_1_ref, b12_1_ref, w3a_1_ref, w3b_1_ref, b3_1_ref,
    w12_2_ref, b12_2_ref, w3a_2_ref, w3b_2_ref, b3_2_ref,
    w12_3_ref, b12_3_ref, w3a_3_ref, w3b_3_ref, b3_3_ref,
    wh1_ref, bh1_ref, wh2_ref, bh2_ref,
    out_ref, *, n, nneuron):
    N, H = n, nneuron
    P = N * N

    x = x_ref[0]                       # (P, Cin) pixel-major, p = i*N + j
    m = m_ref[0]                       # (P, 1)   = M[b, 0] flattened

    def spatial_matmul(x1_pm, x2_pm):
        # per-channel (N,N)@(N,N): out[(i,j),h] = sum_k x1[(i,k),h]*x2[(k,j),h]
        # done as N rank-1 broadcast-multiply-accumulate steps on the VPU
        # (a 16x16 matmul would use <2% of the MXU array; MXU stays on convs).
        # reshape keeps the minor (lane) dim unchanged and splits P=N*N with
        # N a multiple of 8, so it is layout-preserving.
        x1 = x1_pm.reshape(N, N, H)    # (i, k, h)
        x2 = x2_pm.reshape(N, N, H)    # (k, j, h)
        acc = x1[:, 0:1, :] * x2[0:1, :, :]
        for k in range(1, N):
            acc = acc + x1[:, k:k + 1, :] * x2[k:k + 1, :, :]
        return acc.reshape(P, H)       # (P, H), p = i*N + j

    def block(xc, w12, b12, w3a, w3b, b3):
        # merged mlp*_1 / mlp*_2 1x1 convs: one (P, Cin) @ (Cin, 2H) matmul
        y12 = jnp.maximum(
            jnp.dot(xc, w12, preferred_element_type=jnp.float32) + b12, 0.0)
        x12 = spatial_matmul(y12[:, :H], y12[:, H:])             # (P, H)
        # mlp*_3(cat([x1x2, x], 1)): weight split along its input channels,
        # bias/relu epilogue fused.
        y = jnp.maximum(
            jnp.dot(x12, w3a, preferred_element_type=jnp.float32)
            + jnp.dot(xc, w3b, preferred_element_type=jnp.float32)
            + b3, 0.0)                                           # (P, H)
        # xo[i, h] = sum_j y[(i,j), h] * m[(i,j)]  (sublane reduce, no rt matmul)
        xo = jnp.sum((y * m).reshape(N, N, H), axis=1)           # (N, H)
        return y, xo

    y1, xo1 = block(x, w12_1_ref[...], b12_1_ref[...], w3a_1_ref[...],
                    w3b_1_ref[...], b3_1_ref[...])
    y2, xo2 = block(y1, w12_2_ref[...], b12_2_ref[...], w3a_2_ref[...],
                    w3b_2_ref[...], b3_2_ref[...])
    _, xo3 = block(y2, w12_3_ref[...], b12_3_ref[...], w3a_3_ref[...],
                   w3b_3_ref[...], b3_3_ref[...])

    # readout head fused in: cat([xo1,xo2,xo3]) -> relu(h1) -> mean over N -> h2
    xc = jnp.concatenate([xo1, xo2, xo3], axis=-1)               # (N, 3H)
    h = jnp.maximum(
        jnp.dot(xc, wh1_ref[...], preferred_element_type=jnp.float32)
        + bh1_ref[...], 0.0)                                     # (N, 64)
    hm = jnp.mean(h, axis=0, keepdims=True)                      # (1, 64)
    out_ref[0] = (jnp.dot(hm, wh2_ref[...], preferred_element_type=jnp.float32)
                  + bh2_ref[...])                                # (1, 1)


def ppgn_forward(params, X2, M):
    """X2: (B, ninp, N, N) NCHW;  M: (B, 2, N, N).  Returns (B, 1)."""
    B, Cin, N, _ = X2.shape
    P = N * N
    H = params['block1']['w3a'].shape[0]

    # Single layout prep on the tiny input (done once); everything downstream
    # stays VMEM-resident inside one kernel.
    x_pm = jnp.transpose(X2.astype(jnp.float32), (0, 2, 3, 1)).reshape(B, P, Cin)
    m_pm = M[:, 0].astype(jnp.float32).reshape(B, P, 1)

    def wspec(shape):
        nd = len(shape)
        return pl.BlockSpec(shape, lambda b, _nd=nd: (0,) * _nd)

    weight_args = []
    in_specs = [
        pl.BlockSpec((1, P, Cin), lambda b: (b, 0, 0)),   # x, pixel-major
        pl.BlockSpec((1, P, 1), lambda b: (b, 0, 0)),     # mask M[:, 0]
    ]
    for blk in (1, 2, 3):
        p = params[f'block{blk}']
        for name in ('w12', 'b12', 'w3a', 'w3b', 'b3'):
            w = p[name]
            weight_args.append(w)
            in_specs.append(wspec(w.shape))
    for name in ('wh1', 'bh1', 'wh2', 'bh2'):
        w = params[name]
        weight_args.append(w)
        in_specs.append(wspec(w.shape))

    kernel = functools.partial(_ppgn_fused_kernel, n=N, nneuron=H)
    out = pl.pallas_call(
        kernel,
        out_shape=jax.ShapeDtypeStruct((B, 1, 1), jnp.float32),
        grid=(B,),
        in_specs=in_specs,
        out_specs=pl.BlockSpec((1, 1, 1), lambda b: (b, 0, 0)),
        compiler_params=pltpu.CompilerParams(
            dimension_semantics=("parallel",)),   # v7x: one batch elem per TC
    )(x_pm, m_pm, *weight_args)
    return out[:, 0, :]                                           # (B, 1)


# ----------------------------- parameters ------------------------------------

def init_params(key, ninp, nneuron):
    H = nneuron

    def w(k, shape, scale=0.1):
        return (scale * jax.random.normal(k, shape)).astype(jnp.float32)

    keys = iter(jax.random.split(key, 32))
    params = {}
    for blk, cin in zip((1, 2, 3), (ninp, H, H)):
        params[f'block{blk}'] = dict(
            # mlp*_1 and mlp*_2 merged: columns [:H] are conv1, [H:] are conv2
            w12=w(next(keys), (cin, 2 * H)), b12=w(next(keys), (1, 2 * H)),
            # mlp*_3 weight split along its (H + cin) input channels
            w3a=w(next(keys), (H, H)),        # acts on x1x2
            w3b=w(next(keys), (cin, H)),      # acts on x
            b3=w(next(keys), (1, H)),
        )
    params['wh1'] = w(next(keys), (3 * H, 64))
    params['bh1'] = w(next(keys), (1, 64))
    params['wh2'] = w(next(keys), (64, 1))
    params['bh2'] = w(next(keys), (1, 1))
    return params


# ----------------------------- pure-JAX reference ----------------------------

def ppgn_reference(params, X2, M):
    x = X2.astype(jnp.float32)
    m0 = M[:, 0:1].astype(jnp.float32)
    H = params['block1']['w3a'].shape[0]

    def conv1x1(xx, w, b):     # w: (Cin, Cout), b: (1, Cout)
        return jnp.einsum('bcij,cd->bdij', xx, w) + b[0][None, :, None, None]

    def block(xx, p):
        x1 = jax.nn.relu(conv1x1(xx, p['w12'][:, :H], p['b12'][:, :H]))
        x2 = jax.nn.relu(conv1x1(xx, p['w12'][:, H:], p['b12'][:, H:]))
        x1x2 = jnp.einsum('bhik,bhkj->bhij', x1, x2)
        w3 = jnp.concatenate([p['w3a'], p['w3b']], axis=0)
        xn = jax.nn.relu(conv1x1(jnp.concatenate([x1x2, xx], axis=1), w3, p['b3']))
        xo = jnp.sum(xn * m0, axis=3)                              # (B, H, N)
        return xn, xo

    xos = []
    for blk in (1, 2, 3):
        x, xo = block(x, params[f'block{blk}'])
        xos.append(xo)
    xc = jnp.transpose(jnp.concatenate(xos, axis=1), (0, 2, 1))    # (B, N, 3H)
    h = jax.nn.relu(xc @ params['wh1'] + params['bh1'][0])
    hm = jnp.mean(h, axis=1)
    return hm @ params['wh2'] + params['bh2'][0]


# ----------------------------- main -------------------------------------------

if __name__ == "__main__":
    B, ninp, N, H = 2, 4, 16, 32      # batch=2, ninp=4, nmax=16, nneuron=32
    key = jax.random.PRNGKey(0)
    kx, km, kp = jax.random.split(key, 3)
    X2 = jax.random.normal(kx, (B, ninp, N, N), dtype=jnp.float32)
    M = (jax.random.uniform(km, (B, 2, N, N)) > 0.3).astype(jnp.float32)
    params = init_params(kp, ninp, H)

    out = jax.jit(ppgn_forward)(params, X2, M)
    out = jax.block_until_ready(out)

    with jax.default_matmul_precision("highest"):
        ref = ppgn_reference(params, X2, M)
    ref = jax.block_until_ready(ref)

    assert out.shape == (B, 1), out.shape
    assert bool(jnp.all(jnp.isfinite(out)))
    assert bool(jnp.allclose(out, ref, atol=1e-2, rtol=1e-2)), (out, ref)
    print("KERNEL_OK")
</pallas_src>

<mosaic_0001>
module attributes {stable_mosaic.version = 11 : i64} {
  func.func @_ppgn_fused_kernel(%arg0: i32, %arg1: memref<1x256x4xf32, #tpu.memory_space<vmem>>, %arg2: memref<1x256x1xf32, #tpu.memory_space<vmem>>, %arg3: memref<4x64xf32, #tpu.memory_space<vmem>>, %arg4: memref<1x64xf32, #tpu.memory_space<vmem>>, %arg5: memref<32x32xf32, #tpu.memory_space<vmem>>, %arg6: memref<4x32xf32, #tpu.memory_space<vmem>>, %arg7: memref<1x32xf32, #tpu.memory_space<vmem>>, %arg8: memref<32x64xf32, #tpu.memory_space<vmem>>, %arg9: memref<1x64xf32, #tpu.memory_space<vmem>>, %arg10: memref<32x32xf32, #tpu.memory_space<vmem>>, %arg11: memref<32x32xf32, #tpu.memory_space<vmem>>, %arg12: memref<1x32xf32, #tpu.memory_space<vmem>>, %arg13: memref<32x64xf32, #tpu.memory_space<vmem>>, %arg14: memref<1x64xf32, #tpu.memory_space<vmem>>, %arg15: memref<32x32xf32, #tpu.memory_space<vmem>>, %arg16: memref<32x32xf32, #tpu.memory_space<vmem>>, %arg17: memref<1x32xf32, #tpu.memory_space<vmem>>, %arg18: memref<96x64xf32, #tpu.memory_space<vmem>>, %arg19: memref<1x64xf32, #tpu.memory_space<vmem>>, %arg20: memref<64x1xf32, #tpu.memory_space<vmem>>, %arg21: memref<1x1xf32, #tpu.memory_space<vmem>>, %arg22: memref<1x1x1xf32, #tpu.memory_space<vmem>>) attributes {dimension_semantics = [#tpu.dimension_semantics<parallel>], iteration_bounds = array<i64: 2>, scalar_prefetch = 0 : i64, scratch_operands = 0 : i64, tpu.core_type = #tpu.core_type<tc>, window_params = [{transform_indices = @transform_0, window_bounds = array<i64: 1, 256, 4>}, {transform_indices = @transform_1, window_bounds = array<i64: 1, 256, 1>}, {pipeline_mode = #tpu.pipeline_mode<synchronous>, transform_indices = @transform_2, window_bounds = array<i64: 4, 64>}, {pipeline_mode = #tpu.pipeline_mode<synchronous>, transform_indices = @transform_3, window_bounds = array<i64: 1, 64>}, {pipeline_mode = #tpu.pipeline_mode<synchronous>, transform_indices = @transform_4, window_bounds = array<i64: 32, 32>}, {pipeline_mode = #tpu.pipeline_mode<synchronous>, transform_indices = @transform_5, window_bounds = array<i64: 4, 32>}, {pipeline_mode = #tpu.pipeline_mode<synchronous>, transform_indices = @transform_6, window_bounds = array<i64: 1, 32>}, {pipeline_mode = #tpu.pipeline_mode<synchronous>, transform_indices = @transform_7, window_bounds = array<i64: 32, 64>}, {pipeline_mode = #tpu.pipeline_mode<synchronous>, transform_indices = @transform_8, window_bounds = array<i64: 1, 64>}, {pipeline_mode = #tpu.pipeline_mode<synchronous>, transform_indices = @transform_9, window_bounds = array<i64: 32, 32>}, {pipeline_mode = #tpu.pipeline_mode<synchronous>, transform_indices = @transform_10, window_bounds = array<i64: 32, 32>}, {pipeline_mode = #tpu.pipeline_mode<synchronous>, transform_indices = @transform_11, window_bounds = array<i64: 1, 32>}, {pipeline_mode = #tpu.pipeline_mode<synchronous>, transform_indices = @transform_12, window_bounds = array<i64: 32, 64>}, {pipeline_mode = #tpu.pipeline_mode<synchronous>, transform_indices = @transform_13, window_bounds = array<i64: 1, 64>}, {pipeline_mode = #tpu.pipeline_mode<synchronous>, transform_indices = @transform_14, window_bounds = array<i64: 32, 32>}, {pipeline_mode = #tpu.pipeline_mode<synchronous>, transform_indices = @transform_15, window_bounds = array<i64: 32, 32>}, {pipeline_mode = #tpu.pipeline_mode<synchronous>, transform_indices = @transform_16, window_bounds = array<i64: 1, 32>}, {pipeline_mode = #tpu.pipeline_mode<synchronous>, transform_indices = @transform_17, window_bounds = array<i64: 96, 64>}, {pipeline_mode = #tpu.pipeline_mode<synchronous>, transform_indices = @transform_18, window_bounds = array<i64: 1, 64>}, {pipeline_mode = #tpu.pipeline_mode<synchronous>, transform_indices = @transform_19, window_bounds = array<i64: 64, 1>}, {pipeline_mode = #tpu.pipeline_mode<synchronous>, transform_indices = @transform_20, window_bounds = array<i64: 1, 1>}, {transform_indices = @transform_21, window_bounds = array<i64: 1, 1, 1>}]} {
    %c0 = arith.constant 0 : index
    %c0_0 = arith.constant 0 : index
    %c0_1 = arith.constant 0 : index
    %0 = vector.load %arg1[%c0, %c0_0, %c0_1] : memref<1x256x4xf32, #tpu.memory_space<vmem>>, vector<1x256x4xf32>
    %1 = vector.shape_cast %0 : vector<1x256x4xf32> to vector<256x4xf32>
    %c0_2 = arith.constant 0 : index
    %c0_3 = arith.constant 0 : index
    %c0_4 = arith.constant 0 : index
    %2 = vector.load %arg2[%c0_2, %c0_3, %c0_4] : memref<1x256x1xf32, #tpu.memory_space<vmem>>, vector<1x256x1xf32>
    %3 = vector.shape_cast %2 : vector<1x256x1xf32> to vector<256x1xf32>
    %c0_5 = arith.constant 0 : index
    %c0_6 = arith.constant 0 : index
    %4 = vector.load %arg3[%c0_5, %c0_6] : memref<4x64xf32, #tpu.memory_space<vmem>>, vector<4x64xf32>
    %c0_7 = arith.constant 0 : index
    %c0_8 = arith.constant 0 : index
    %5 = vector.load %arg4[%c0_7, %c0_8] : memref<1x64xf32, #tpu.memory_space<vmem>>, vector<1x64xf32>
    %c0_9 = arith.constant 0 : index
    %c0_10 = arith.constant 0 : index
    %6 = vector.load %arg5[%c0_9, %c0_10] : memref<32x32xf32, #tpu.memory_space<vmem>>, vector<32x32xf32>
    %c0_11 = arith.constant 0 : index
    %c0_12 = arith.constant 0 : index
    %7 = vector.load %arg6[%c0_11, %c0_12] : memref<4x32xf32, #tpu.memory_space<vmem>>, vector<4x32xf32>
    %c0_13 = arith.constant 0 : index
    %c0_14 = arith.constant 0 : index
    %8 = vector.load %arg7[%c0_13, %c0_14] : memref<1x32xf32, #tpu.memory_space<vmem>>, vector<1x32xf32>
    %cst = arith.constant dense<0.000000e+00> : vector<256x64xf32>
    %9 = tpu.matmul %1, %4, %cst {dimension_numbers = #tpu.dot_dimension_numbers<[1], [0], [0], [1], [0, 0, 1, 1], [], []>} : vector<256x4xf32>, vector<4x64xf32>, vector<256x64xf32> -> vector<256x64xf32>
    %10 = vector.broadcast %5 : vector<1x64xf32> to vector<256x64xf32>
    %11 = arith.addf %9, %10 : vector<256x64xf32>
    %cst_15 = arith.constant 0.000000e+00 : f32
    %12 = vector.broadcast %cst_15 : f32 to vector<256x64xf32>
    %13 = arith.maximumf %11, %12 : vector<256x64xf32>
    %14 = vector.extract_strided_slice %13 {offsets = [0, 0], sizes = [256, 32], strides = [1, 1]} : vector<256x64xf32> to vector<256x32xf32>
    %15 = vector.extract_strided_slice %13 {offsets = [0, 32], sizes = [256, 32], strides = [1, 1]} : vector<256x64xf32> to vector<256x32xf32>
    %16 = vector.shape_cast %14 : vector<256x32xf32> to vector<16x16x32xf32>
    %17 = vector.shape_cast %15 : vector<256x32xf32> to vector<16x16x32xf32>
    %18 = vector.extract_strided_slice %16 {offsets = [0, 0, 0], sizes = [16, 1, 32], strides = [1, 1, 1]} : vector<16x16x32xf32> to vector<16x1x32xf32>
    %19 = vector.extract_strided_slice %17 {offsets = [0, 0, 0], sizes = [1, 16, 32], strides = [1, 1, 1]} : vector<16x16x32xf32> to vector<1x16x32xf32>
    %20 = vector.broadcast %18 : vector<16x1x32xf32> to vector<16x16x32xf32>
    %21 = vector.broadcast %19 : vector<1x16x32xf32> to vector<16x16x32xf32>
    %22 = arith.mulf %20, %21 : vector<16x16x32xf32>
    %23 = vector.extract_strided_slice %16 {offsets = [0, 1, 0], sizes = [16, 1, 32], strides = [1, 1, 1]} : vector<16x16x32xf32> to vector<16x1x32xf32>
    %24 = vector.extract_strided_slice %17 {offsets = [1, 0, 0], sizes = [1, 16, 32], strides = [1, 1, 1]} : vector<16x16x32xf32> to vector<1x16x32xf32>
    %25 = vector.broadcast %23 : vector<16x1x32xf32> to vector<16x16x32xf32>
    %26 = vector.broadcast %24 : vector<1x16x32xf32> to vector<16x16x32xf32>
    %27 = arith.mulf %25, %26 : vector<16x16x32xf32>
    %28 = arith.addf %22, %27 : vector<16x16x32xf32>
    %29 = vector.extract_strided_slice %16 {offsets = [0, 2, 0], sizes = [16, 1, 32], strides = [1, 1, 1]} : vector<16x16x32xf32> to vector<16x1x32xf32>
    %30 = vector.extract_strided_slice %17 {offsets = [2, 0, 0], sizes = [1, 16, 32], strides = [1, 1, 1]} : vector<16x16x32xf32> to vector<1x16x32xf32>
    %31 = vector.broadcast %29 : vector<16x1x32xf32> to vector<16x16x32xf32>
    %32 = vector.broadcast %30 : vector<1x16x32xf32> to vector<16x16x32xf32>
    %33 = arith.mulf %31, %32 : vector<16x16x32xf32>
    %34 = arith.addf %28, %33 : vector<16x16x32xf32>
    %35 = vector.extract_strided_slice %16 {offsets = [0, 3, 0], sizes = [16, 1, 32], strides = [1, 1, 1]} : vector<16x16x32xf32> to vector<16x1x32xf32>
    %36 = vector.extract_strided_slice %17 {offsets = [3, 0, 0], sizes = [1, 16, 32], strides = [1, 1, 1]} : vector<16x16x32xf32> to vector<1x16x32xf32>
    %37 = vector.broadcast %35 : vector<16x1x32xf32> to vector<16x16x32xf32>
    %38 = vector.broadcast %36 : vector<1x16x32xf32> to vector<16x16x32xf32>
    %39 = arith.mulf %37, %38 : vector<16x16x32xf32>
    %40 = arith.addf %34, %39 : vector<16x16x32xf32>
    %41 = vector.extract_strided_slice %16 {offsets = [0, 4, 0], sizes = [16, 1, 32], strides = [1, 1, 1]} : vector<16x16x32xf32> to vector<16x1x32xf32>
    %42 = vector.extract_strided_slice %17 {offsets = [4, 0, 0], sizes = [1, 16, 32], strides = [1, 1, 1]} : vector<16x16x32xf32> to vector<1x16x32xf32>
    %43 = vector.broadcast %41 : vector<16x1x32xf32> to vector<16x16x32xf32>
    %44 = vector.broadcast %42 : vector<1x16x32xf32> to vector<16x16x32xf32>
    %45 = arith.mulf %43, %44 : vector<16x16x32xf32>
    %46 = arith.addf %40, %45 : vector<16x16x32xf32>
    %47 = vector.extract_strided_slice %16 {offsets = [0, 5, 0], sizes = [16, 1, 32], strides = [1, 1, 1]} : vector<16x16x32xf32> to vector<16x1x32xf32>
    %48 = vector.extract_strided_slice %17 {offsets = [5, 0, 0], sizes = [1, 16, 32], strides = [1, 1, 1]} : vector<16x16x32xf32> to vector<1x16x32xf32>
    %49 = vector.broadcast %47 : vector<16x1x32xf32> to vector<16x16x32xf32>
    %50 = vector.broadcast %48 : vector<1x16x32xf32> to vector<16x16x32xf32>
    %51 = arith.mulf %49, %50 : vector<16x16x32xf32>
    %52 = arith.addf %46, %51 : vector<16x16x32xf32>
    %53 = vector.extract_strided_slice %16 {offsets = [0, 6, 0], sizes = [16, 1, 32], strides = [1, 1, 1]} : vector<16x16x32xf32> to vector<16x1x32xf32>
    %54 = vector.extract_strided_slice %17 {offsets = [6, 0, 0], sizes = [1, 16, 32], strides = [1, 1, 1]} : vector<16x16x32xf32> to vector<1x16x32xf32>
    %55 = vector.broadcast %53 : vector<16x1x32xf32> to vector<16x16x32xf32>
    %56 = vector.broadcast %54 : vector<1x16x32xf32> to vector<16x16x32xf32>
    %57 = arith.mulf %55, %56 : vector<16x16x32xf32>
    %58 = arith.addf %52, %57 : vector<16x16x32xf32>
    %59 = vector.extract_strided_slice %16 {offsets = [0, 7, 0], sizes = [16, 1, 32], strides = [1, 1, 1]} : vector<16x16x32xf32> to vector<16x1x32xf32>
    %60 = vector.extract_strided_slice %17 {offsets = [7, 0, 0], sizes = [1, 16, 32], strides = [1, 1, 1]} : vector<16x16x32xf32> to vector<1x16x32xf32>
    %61 = vector.broadcast %59 : vector<16x1x32xf32> to vector<16x16x32xf32>
    %62 = vector.broadcast %60 : vector<1x16x32xf32> to vector<16x16x32xf32>
    %63 = arith.mulf %61, %62 : vector<16x16x32xf32>
    %64 = arith.addf %58, %63 : vector<16x16x32xf32>
    %65 = vector.extract_strided_slice %16 {offsets = [0, 8, 0], sizes = [16, 1, 32], strides = [1, 1, 1]} : vector<16x16x32xf32> to vector<16x1x32xf32>
    %66 = vector.extract_strided_slice %17 {offsets = [8, 0, 0], sizes = [1, 16, 32], strides = [1, 1, 1]} : vector<16x16x32xf32> to vector<1x16x32xf32>
    %67 = vector.broadcast %65 : vector<16x1x32xf32> to vector<16x16x32xf32>
    %68 = vector.broadcast %66 : vector<1x16x32xf32> to vector<16x16x32xf32>
    %69 = arith.mulf %67, %68 : vector<16x16x32xf32>
    %70 = arith.addf %64, %69 : vector<16x16x32xf32>
    %71 = vector.extract_strided_slice %16 {offsets = [0, 9, 0], sizes = [16, 1, 32], strides = [1, 1, 1]} : vector<16x16x32xf32> to vector<16x1x32xf32>
    %72 = vector.extract_strided_slice %17 {offsets = [9, 0, 0], sizes = [1, 16, 32], strides = [1, 1, 1]} : vector<16x16x32xf32> to vector<1x16x32xf32>
    %73 = vector.broadcast %71 : vector<16x1x32xf32> to vector<16x16x32xf32>
    %74 = vector.broadcast %72 : vector<1x16x32xf32> to vector<16x16x32xf32>
    %75 = arith.mulf %73, %74 : vector<16x16x32xf32>
    %76 = arith.addf %70, %75 : vector<16x16x32xf32>
    %77 = vector.extract_strided_slice %16 {offsets = [0, 10, 0], sizes = [16, 1, 32], strides = [1, 1, 1]} : vector<16x16x32xf32> to vector<16x1x32xf32>
    %78 = vector.extract_strided_slice %17 {offsets = [10, 0, 0], sizes = [1, 16, 32], strides = [1, 1, 1]} : vector<16x16x32xf32> to vector<1x16x32xf32>
    %79 = vector.broadcast %77 : vector<16x1x32xf32> to vector<16x16x32xf32>
    %80 = vector.broadcast %78 : vector<1x16x32xf32> to vector<16x16x32xf32>
    %81 = arith.mulf %79, %80 : vector<16x16x32xf32>
    %82 = arith.addf %76, %81 : vector<16x16x32xf32>
    %83 = vector.extract_strided_slice %16 {offsets = [0, 11, 0], sizes = [16, 1, 32], strides = [1, 1, 1]} : vector<16x16x32xf32> to vector<16x1x32xf32>
    %84 = vector.extract_strided_slice %17 {offsets = [11, 0, 0], sizes = [1, 16, 32], strides = [1, 1, 1]} : vector<16x16x32xf32> to vector<1x16x32xf32>
    %85 = vector.broadcast %83 : vector<16x1x32xf32> to vector<16x16x32xf32>
    %86 = vector.broadcast %84 : vector<1x16x32xf32> to vector<16x16x32xf32>
    %87 = arith.mulf %85, %86 : vector<16x16x32xf32>
    %88 = arith.addf %82, %87 : vector<16x16x32xf32>
    %89 = vector.extract_strided_slice %16 {offsets = [0, 12, 0], sizes = [16, 1, 32], strides = [1, 1, 1]} : vector<16x16x32xf32> to vector<16x1x32xf32>
    %90 = vector.extract_strided_slice %17 {offsets = [12, 0, 0], sizes = [1, 16, 32], strides = [1, 1, 1]} : vector<16x16x32xf32> to vector<1x16x32xf32>
    %91 = vector.broadcast %89 : vector<16x1x32xf32> to vector<16x16x32xf32>
    %92 = vector.broadcast %90 : vector<1x16x32xf32> to vector<16x16x32xf32>
    %93 = arith.mulf %91, %92 : vector<16x16x32xf32>
    %94 = arith.addf %88, %93 : vector<16x16x32xf32>
    %95 = vector.extract_strided_slice %16 {offsets = [0, 13, 0], sizes = [16, 1, 32], strides = [1, 1, 1]} : vector<16x16x32xf32> to vector<16x1x32xf32>
    %96 = vector.extract_strided_slice %17 {offsets = [13, 0, 0], sizes = [1, 16, 32], strides = [1, 1, 1]} : vector<16x16x32xf32> to vector<1x16x32xf32>
    %97 = vector.broadcast %95 : vector<16x1x32xf32> to vector<16x16x32xf32>
    %98 = vector.broadcast %96 : vector<1x16x32xf32> to vector<16x16x32xf32>
    %99 = arith.mulf %97, %98 : vector<16x16x32xf32>
    %100 = arith.addf %94, %99 : vector<16x16x32xf32>
    %101 = vector.extract_strided_slice %16 {offsets = [0, 14, 0], sizes = [16, 1, 32], strides = [1, 1, 1]} : vector<16x16x32xf32> to vector<16x1x32xf32>
    %102 = vector.extract_strided_slice %17 {offsets = [14, 0, 0], sizes = [1, 16, 32], strides = [1, 1, 1]} : vector<16x16x32xf32> to vector<1x16x32xf32>
    %103 = vector.broadcast %101 : vector<16x1x32xf32> to vector<16x16x32xf32>
    %104 = vector.broadcast %102 : vector<1x16x32xf32> to vector<16x16x32xf32>
    %105 = arith.mulf %103, %104 : vector<16x16x32xf32>
    %106 = arith.addf %100, %105 : vector<16x16x32xf32>
    %107 = vector.extract_strided_slice %16 {offsets = [0, 15, 0], sizes = [16, 1, 32], strides = [1, 1, 1]} : vector<16x16x32xf32> to vector<16x1x32xf32>
    %108 = vector.extract_strided_slice %17 {offsets = [15, 0, 0], sizes = [1, 16, 32], strides = [1, 1, 1]} : vector<16x16x32xf32> to vector<1x16x32xf32>
    %109 = vector.broadcast %107 : vector<16x1x32xf32> to vector<16x16x32xf32>
    %110 = vector.broadcast %108 : vector<1x16x32xf32> to vector<16x16x32xf32>
    %111 = arith.mulf %109, %110 : vector<16x16x32xf32>
    %112 = arith.addf %106, %111 : vector<16x16x32xf32>
    %113 = vector.shape_cast %112 : vector<16x16x32xf32> to vector<256x32xf32>
    %cst_16 = arith.constant dense<0.000000e+00> : vector<256x32xf32>
    %114 = tpu.matmul %113, %6, %cst_16 {dimension_numbers = #tpu.dot_dimension_numbers<[1], [0], [0], [1], [0, 0, 1, 1], [], []>} : vector<256x32xf32>, vector<32x32xf32>, vector<256x32xf32> -> vector<256x32xf32>
    %cst_17 = arith.constant dense<0.000000e+00> : vector<256x32xf32>
    %115 = tpu.matmul %1, %7, %cst_17 {dimension_numbers = #tpu.dot_dimension_numbers<[1], [0], [0], [1], [0, 0, 1, 1], [], []>} : vector<256x4xf32>, vector<4x32xf32>, vector<256x32xf32> -> vector<256x32xf32>
    %116 = arith.addf %114, %115 : vector<256x32xf32>
    %117 = vector.broadcast %8 : vector<1x32xf32> to vector<256x32xf32>
    %118 = arith.addf %116, %117 : vector<256x32xf32>
    %cst_18 = arith.constant 0.000000e+00 : f32
    %119 = vector.broadcast %cst_18 : f32 to vector<256x32xf32>
    %120 = arith.maximumf %118, %119 : vector<256x32xf32>
    %121 = vector.broadcast %3 : vector<256x1xf32> to vector<256x32xf32>
    %122 = arith.mulf %120, %121 : vector<256x32xf32>
    %123 = vector.shape_cast %122 : vector<256x32xf32> to vector<16x16x32xf32>
    %cst_19 = arith.constant dense<0.000000e+00> : vector<16x32xf32>
    %124 = vector.multi_reduction <add>, %123, %cst_19 [1] : vector<16x16x32xf32> to vector<16x32xf32>
    %c0_20 = arith.constant 0 : index
    %c0_21 = arith.constant 0 : index
    %125 = vector.load %arg8[%c0_20, %c0_21] : memref<32x64xf32, #tpu.memory_space<vmem>>, vector<32x64xf32>
    %c0_22 = arith.constant 0 : index
    %c0_23 = arith.constant 0 : index
    %126 = vector.load %arg9[%c0_22, %c0_23] : memref<1x64xf32, #tpu.memory_space<vmem>>, vector<1x64xf32>
    %c0_24 = arith.constant 0 : index
    %c0_25 = arith.constant 0 : index
    %127 = vector.load %arg10[%c0_24, %c0_25] : memref<32x32xf32, #tpu.memory_space<vmem>>, vector<32x32xf32>
    %c0_26 = arith.constant 0 : index
    %c0_27 = arith.constant 0 : index
    %128 = vector.load %arg11[%c0_26, %c0_27] : memref<32x32xf32, #tpu.memory_space<vmem>>, vector<32x32xf32>
    %c0_28 = arith.constant 0 : index
    %c0_29 = arith.constant 0 : index
    %129 = vector.load %arg12[%c0_28, %c0_29] : memref<1x32xf32, #tpu.memory_space<vmem>>, vector<1x32xf32>
    %cst_30 = arith.constant dense<0.000000e+00> : vector<256x64xf32>
    %130 = tpu.matmul %120, %125, %cst_30 {dimension_numbers = #tpu.dot_dimension_numbers<[1], [0], [0], [1], [0, 0, 1, 1], [], []>} : vector<256x32xf32>, vector<32x64xf32>, vector<256x64xf32> -> vector<256x64xf32>
    %131 = vector.broadcast %126 : vector<1x64xf32> to vector<256x64xf32>
    %132 = arith.addf %130, %131 : vector<256x64xf32>
    %cst_31 = arith.constant 0.000000e+00 : f32
    %133 = vector.broadcast %cst_31 : f32 to vector<256x64xf32>
    %134 = arith.maximumf %132, %133 : vector<256x64xf32>
    %135 = vector.extract_strided_slice %134 {offsets = [0, 0], sizes = [256, 32], strides = [1, 1]} : vector<256x64xf32> to vector<256x32xf32>
    %136 = vector.extract_strided_slice %134 {offsets = [0, 32], sizes = [256, 32], strides = [1, 1]} : vector<256x64xf32> to vector<256x32xf32>
    %137 = vector.shape_cast %135 : vector<256x32xf32> to vector<16x16x32xf32>
    %138 = vector.shape_cast %136 : vector<256x32xf32> to vector<16x16x32xf32>
    %139 = vector.extract_strided_slice %137 {offsets = [0, 0, 0], sizes = [16, 1, 32], strides = [1, 1, 1]} : vector<16x16x32xf32> to vector<16x1x32xf32>
    %140 = vector.extract_strided_slice %138 {offsets = [0, 0, 0], sizes = [1, 16, 32], strides = [1, 1, 1]} : vector<16x16x32xf32> to vector<1x16x32xf32>
    %141 = vector.broadcast %139 : vector<16x1x32xf32> to vector<16x16x32xf32>
    %142 = vector.broadcast %140 : vector<1x16x32xf32> to vector<16x16x32xf32>
    %143 = arith.mulf %141, %142 : vector<16x16x32xf32>
    %144 = vector.extract_strided_slice %137 {offsets = [0, 1, 0], sizes = [16, 1, 32], strides = [1, 1, 1]} : vector<16x16x32xf32> to vector<16x1x32xf32>
    %145 = vector.extract_strided_slice %138 {offsets = [1, 0, 0], sizes = [1, 16, 32], strides = [1, 1, 1]} : vector<16x16x32xf32> to vector<1x16x32xf32>
    %146 = vector.broadcast %144 : vector<16x1x32xf32> to vector<16x16x32xf32>
    %147 = vector.broadcast %145 : vector<1x16x32xf32> to vector<16x16x32xf32>
    %148 = arith.mulf %146, %147 : vector<16x16x32xf32>
    %149 = arith.addf %143, %148 : vector<16x16x32xf32>
    %150 = vector.extract_strided_slice %137 {offsets = [0, 2, 0], sizes = [16, 1, 32], strides = [1, 1, 1]} : vector<16x16x32xf32> to vector<16x1x32xf32>
    %151 = vector.extract_strided_slice %138 {offsets = [2, 0, 0], sizes = [1, 16, 32], strides = [1, 1, 1]} : vector<16x16x32xf32> to vector<1x16x32xf32>
    %152 = vector.broadcast %150 : vector<16x1x32xf32> to vector<16x16x32xf32>
    %153 = vector.broadcast %151 : vector<1x16x32xf32> to vector<16x16x32xf32>
    %154 = arith.mulf %152, %153 : vector<16x16x32xf32>
    %155 = arith.addf %149, %154 : vector<16x16x32xf32>
    %156 = vector.extract_strided_slice %137 {offsets = [0, 3, 0], sizes = [16, 1, 32], strides = [1, 1, 1]} : vector<16x16x32xf32> to vector<16x1x32xf32>
    %157 = vector.extract_strided_slice %138 {offsets = [3, 0, 0], sizes = [1, 16, 32], strides = [1, 1, 1]} : vector<16x16x32xf32> to vector<1x16x32xf32>
    %158 = vector.broadcast %156 : vector<16x1x32xf32> to vector<16x16x32xf32>
    %159 = vector.broadcast %157 : vector<1x16x32xf32> to vector<16x16x32xf32>
    %160 = arith.mulf %158, %159 : vector<16x16x32xf32>
    %161 = arith.addf %155, %160 : vector<16x16x32xf32>
    %162 = vector.extract_strided_slice %137 {offsets = [0, 4, 0], sizes = [16, 1, 32], strides = [1, 1, 1]} : vector<16x16x32xf32> to vector<16x1x32xf32>
    %163 = vector.extract_strided_slice %138 {offsets = [4, 0, 0], sizes = [1, 16, 32], strides = [1, 1, 1]} : vector<16x16x32xf32> to vector<1x16x32xf32>
    %164 = vector.broadcast %162 : vector<16x1x32xf32> to vector<16x16x32xf32>
    %165 = vector.broadcast %163 : vector<1x16x32xf32> to vector<16x16x32xf32>
    %166 = arith.mulf %164, %165 : vector<16x16x32xf32>
    %167 = arith.addf %161, %166 : vector<16x16x32xf32>
    %168 = vector.extract_strided_slice %137 {offsets = [0, 5, 0], sizes = [16, 1, 32], strides = [1, 1, 1]} : vector<16x16x32xf32> to vector<16x1x32xf32>
    %169 = vector.extract_strided_slice %138 {offsets = [5, 0, 0], sizes = [1, 16, 32], strides = [1, 1, 1]} : vector<16x16x32xf32> to vector<1x16x32xf32>
    %170 = vector.broadcast %168 : vector<16x1x32xf32> to vector<16x16x32xf32>
    %171 = vector.broadcast %169 : vector<1x16x32xf32> to vector<16x16x32xf32>
    %172 = arith.mulf %170, %171 : vector<16x16x32xf32>
    %173 = arith.addf %167, %172 : vector<16x16x32xf32>
    %174 = vector.extract_strided_slice %137 {offsets = [0, 6, 0], sizes = [16, 1, 32], strides = [1, 1, 1]} : vector<16x16x32xf32> to vector<16x1x32xf32>
    %175 = vector.extract_strided_slice %138 {offsets = [6, 0, 0], sizes = [1, 16, 32], strides = [1, 1, 1]} : vector<16x16x32xf32> to vector<1x16x32xf32>
    %176 = vector.broadcast %174 : vector<16x1x32xf32> to vector<16x16x32xf32>
    %177 = vector.broadcast %175 : vector<1x16x32xf32> to vector<16x16x32xf32>
    %178 = arith.mulf %176, %177 : vector<16x16x32xf32>
    %179 = arith.addf %173, %178 : vector<16x16x32xf32>
    %180 = vector.extract_strided_slice %137 {offsets = [0, 7, 0], sizes = [16, 1, 32], strides = [1, 1, 1]} : vector<16x16x32xf32> to vector<16x1x32xf32>
    %181 = vector.extract_strided_slice %138 {offsets = [7, 0, 0], sizes = [1, 16, 32], strides = [1, 1, 1]} : vector<16x16x32xf32> to vector<1x16x32xf32>
    %182 = vector.broadcast %180 : vector<16x1x32xf32> to vector<16x16x32xf32>
    %183 = vector.broadcast %181 : vector<1x16x32xf32> to vector<16x16x32xf32>
    %184 = arith.mulf %182, %183 : vector<16x16x32xf32>
    %185 = arith.addf %179, %184 : vector<16x16x32xf32>
    %186 = vector.extract_strided_slice %137 {offsets = [0, 8, 0], sizes = [16, 1, 32], strides = [1, 1, 1]} : vector<16x16x32xf32> to vector<16x1x32xf32>
    %187 = vector.extract_strided_slice %138 {offsets = [8, 0, 0], sizes = [1, 16, 32], strides = [1, 1, 1]} : vector<16x16x32xf32> to vector<1x16x32xf32>
    %188 = vector.broadcast %186 : vector<16x1x32xf32> to vector<16x16x32xf32>
    %189 = vector.broadcast %187 : vector<1x16x32xf32> to vector<16x16x32xf32>
    %190 = arith.mulf %188, %189 : vector<16x16x32xf32>
    %191 = arith.addf %185, %190 : vector<16x16x32xf32>
    %192 = vector.extract_strided_slice %137 {offsets = [0, 9, 0], sizes = [16, 1, 32], strides = [1, 1, 1]} : vector<16x16x32xf32> to vector<16x1x32xf32>
    %193 = vector.extract_strided_slice %138 {offsets = [9, 0, 0], sizes = [1, 16, 32], strides = [1, 1, 1]} : vector<16x16x32xf32> to vector<1x16x32xf32>
    %194 = vector.broadcast %192 : vector<16x1x32xf32> to vector<16x16x32xf32>
    %195 = vector.broadcast %193 : vector<1x16x32xf32> to vector<16x16x32xf32>
    %196 = arith.mulf %194, %195 : vector<16x16x32xf32>
    %197 = arith.addf %191, %196 : vector<16x16x32xf32>
    %198 = vector.extract_strided_slice %137 {offsets = [0, 10, 0], sizes = [16, 1, 32], strides = [1, 1, 1]} : vector<16x16x32xf32> to vector<16x1x32xf32>
    %199 = vector.extract_strided_slice %138 {offsets = [10, 0, 0], sizes = [1, 16, 32], strides = [1, 1, 1]} : vector<16x16x32xf32> to vector<1x16x32xf32>
    %200 = vector.broadcast %198 : vector<16x1x32xf32> to vector<16x16x32xf32>
    %201 = vector.broadcast %199 : vector<1x16x32xf32> to vector<16x16x32xf32>
    %202 = arith.mulf %200, %201 : vector<16x16x32xf32>
    %203 = arith.addf %197, %202 : vector<16x16x32xf32>
    %204 = vector.extract_strided_slice %137 {offsets = [0, 11, 0], sizes = [16, 1, 32], strides = [1, 1, 1]} : vector<16x16x32xf32> to vector<16x1x32xf32>
    %205 = vector.extract_strided_slice %138 {offsets = [11, 0, 0], sizes = [1, 16, 32], strides = [1, 1, 1]} : vector<16x16x32xf32> to vector<1x16x32xf32>
    %206 = vector.broadcast %204 : vector<16x1x32xf32> to vector<16x16x32xf32>
    %207 = vector.broadcast %205 : vector<1x16x32xf32> to vector<16x16x32xf32>
    %208 = arith.mulf %206, %207 : vector<16x16x32xf32>
    %209 = arith.addf %203, %208 : vector<16x16x32xf32>
    %210 = vector.extract_strided_slice %137 {offsets = [0, 12, 0], sizes = [16, 1, 32], strides = [1, 1, 1]} : vector<16x16x32xf32> to vector<16x1x32xf32>
    %211 = vector.extract_strided_slice %138 {offsets = [12, 0, 0], sizes = [1, 16, 32], strides = [1, 1, 1]} : vector<16x16x32xf32> to vector<1x16x32xf32>
    %212 = vector.broadcast %210 : vector<16x1x32xf32> to vector<16x16x32xf32>
    %213 = vector.broadcast %211 : vector<1x16x32xf32> to vector<16x16x32xf32>
    %214 = arith.mulf %212, %213 : vector<16x16x32xf32>
    %215 = arith.addf %209, %214 : vector<16x16x32xf32>
    %216 = vector.extract_strided_slice %137 {offsets = [0, 13, 0], sizes = [16, 1, 32], strides = [1, 1, 1]} : vector<16x16x32xf32> to vector<16x1x32xf32>
    %217 = vector.extract_strided_slice %138 {offsets = [13, 0, 0], sizes = [1, 16, 32], strides = [1, 1, 1]} : vector<16x16x32xf32> to vector<1x16x32xf32>
    %218 = vector.broadcast %216 : vector<16x1x32xf32> to vector<16x16x32xf32>
    %219 = vector.broadcast %217 : vector<1x16x32xf32> to vector<16x16x32xf32>
    %220 = arith.mulf %218, %219 : vector<16x16x32xf32>
    %221 = arith.addf %215, %220 : vector<16x16x32xf32>
    %222 = vector.extract_strided_slice %137 {offsets = [0, 14, 0], sizes = [16, 1, 32], strides = [1, 1, 1]} : vector<16x16x32xf32> to vector<16x1x32xf32>
    %223 = vector.extract_strided_slice %138 {offsets = [14, 0, 0], sizes = [1, 16, 32], strides = [1, 1, 1]} : vector<16x16x32xf32> to vector<1x16x32xf32>
    %224 = vector.broadcast %222 : vector<16x1x32xf32> to vector<16x16x32xf32>
    %225 = vector.broadcast %223 : vector<1x16x32xf32> to vector<16x16x32xf32>
    %226 = arith.mulf %224, %225 : vector<16x16x32xf32>
    %227 = arith.addf %221, %226 : vector<16x16x32xf32>
    %228 = vector.extract_strided_slice %137 {offsets = [0, 15, 0], sizes = [16, 1, 32], strides = [1, 1, 1]} : vector<16x16x32xf32> to vector<16x1x32xf32>
    %229 = vector.extract_strided_slice %138 {offsets = [15, 0, 0], sizes = [1, 16, 32], strides = [1, 1, 1]} : vector<16x16x32xf32> to vector<1x16x32xf32>
    %230 = vector.broadcast %228 : vector<16x1x32xf32> to vector<16x16x32xf32>
    %231 = vector.broadcast %229 : vector<1x16x32xf32> to vector<16x16x32xf32>
    %232 = arith.mulf %230, %231 : vector<16x16x32xf32>
    %233 = arith.addf %227, %232 : vector<16x16x32xf32>
    %234 = vector.shape_cast %233 : vector<16x16x32xf32> to vector<256x32xf32>
    %cst_32 = arith.constant dense<0.000000e+00> : vector<256x32xf32>
    %235 = tpu.matmul %234, %127, %cst_32 {dimension_numbers = #tpu.dot_dimension_numbers<[1], [0], [0], [1], [0, 0, 1, 1], [], []>} : vector<256x32xf32>, vector<32x32xf32>, vector<256x32xf32> -> vector<256x32xf32>
    %cst_33 = arith.constant dense<0.000000e+00> : vector<256x32xf32>
    %236 = tpu.matmul %120, %128, %cst_33 {dimension_numbers = #tpu.dot_dimension_numbers<[1], [0], [0], [1], [0, 0, 1, 1], [], []>} : vector<256x32xf32>, vector<32x32xf32>, vector<256x32xf32> -> vector<256x32xf32>
    %237 = arith.addf %235, %236 : vector<256x32xf32>
    %238 = vector.broadcast %129 : vector<1x32xf32> to vector<256x32xf32>
    %239 = arith.addf %237, %238 : vector<256x32xf32>
    %cst_34 = arith.constant 0.000000e+00 : f32
    %240 = vector.broadcast %cst_34 : f32 to vector<256x32xf32>
    %241 = arith.maximumf %239, %240 : vector<256x32xf32>
    %242 = vector.broadcast %3 : vector<256x1xf32> to vector<256x32xf32>
    %243 = arith.mulf %241, %242 : vector<256x32xf32>
    %244 = vector.shape_cast %243 : vector<256x32xf32> to vector<16x16x32xf32>
    %cst_35 = arith.constant dense<0.000000e+00> : vector<16x32xf32>
    %245 = vector.multi_reduction <add>, %244, %cst_35 [1] : vector<16x16x32xf32> to vector<16x32xf32>
    %c0_36 = arith.constant 0 : index
    %c0_37 = arith.constant 0 : index
    %246 = vector.load %arg13[%c0_36, %c0_37] : memref<32x64xf32, #tpu.memory_space<vmem>>, vector<32x64xf32>
    %c0_38 = arith.constant 0 : index
    %c0_39 = arith.constant 0 : index
    %247 = vector.load %arg14[%c0_38, %c0_39] : memref<1x64xf32, #tpu.memory_space<vmem>>, vector<1x64xf32>
    %c0_40 = arith.constant 0 : index
    %c0_41 = arith.constant 0 : index
    %248 = vector.load %arg15[%c0_40, %c0_41] : memref<32x32xf32, #tpu.memory_space<vmem>>, vector<32x32xf32>
    %c0_42 = arith.constant 0 : index
    %c0_43 = arith.constant 0 : index
    %249 = vector.load %arg16[%c0_42, %c0_43] : memref<32x32xf32, #tpu.memory_space<vmem>>, vector<32x32xf32>
    %c0_44 = arith.constant 0 : index
    %c0_45 = arith.constant 0 : index
    %250 = vector.load %arg17[%c0_44, %c0_45] : memref<1x32xf32, #tpu.memory_space<vmem>>, vector<1x32xf32>
    %cst_46 = arith.constant dense<0.000000e+00> : vector<256x64xf32>
    %251 = tpu.matmul %241, %246, %cst_46 {dimension_numbers = #tpu.dot_dimension_numbers<[1], [0], [0], [1], [0, 0, 1, 1], [], []>} : vector<256x32xf32>, vector<32x64xf32>, vector<256x64xf32> -> vector<256x64xf32>
    %252 = vector.broadcast %247 : vector<1x64xf32> to vector<256x64xf32>
    %253 = arith.addf %251, %252 : vector<256x64xf32>
    %cst_47 = arith.constant 0.000000e+00 : f32
    %254 = vector.broadcast %cst_47 : f32 to vector<256x64xf32>
    %255 = arith.maximumf %253, %254 : vector<256x64xf32>
    %256 = vector.extract_strided_slice %255 {offsets = [0, 0], sizes = [256, 32], strides = [1, 1]} : vector<256x64xf32> to vector<256x32xf32>
    %257 = vector.extract_strided_slice %255 {offsets = [0, 32], sizes = [256, 32], strides = [1, 1]} : vector<256x64xf32> to vector<256x32xf32>
    %258 = vector.shape_cast %256 : vector<256x32xf32> to vector<16x16x32xf32>
    %259 = vector.shape_cast %257 : vector<256x32xf32> to vector<16x16x32xf32>
    %260 = vector.extract_strided_slice %258 {offsets = [0, 0, 0], sizes = [16, 1, 32], strides = [1, 1, 1]} : vector<16x16x32xf32> to vector<16x1x32xf32>
    %261 = vector.extract_strided_slice %259 {offsets = [0, 0, 0], sizes = [1, 16, 32], strides = [1, 1, 1]} : vector<16x16x32xf32> to vector<1x16x32xf32>
    %262 = vector.broadcast %260 : vector<16x1x32xf32> to vector<16x16x32xf32>
    %263 = vector.broadcast %261 : vector<1x16x32xf32> to vector<16x16x32xf32>
    %264 = arith.mulf %262, %263 : vector<16x16x32xf32>
    %265 = vector.extract_strided_slice %258 {offsets = [0, 1, 0], sizes = [16, 1, 32], strides = [1, 1, 1]} : vector<16x16x32xf32> to vector<16x1x32xf32>
    %266 = vector.extract_strided_slice %259 {offsets = [1, 0, 0], sizes = [1, 16, 32], strides = [1, 1, 1]} : vector<16x16x32xf32> to vector<1x16x32xf32>
    %267 = vector.broadcast %265 : vector<16x1x32xf32> to vector<16x16x32xf32>
    %268 = vector.broadcast %266 : vector<1x16x32xf32> to vector<16x16x32xf32>
    %269 = arith.mulf %267, %268 : vector<16x16x32xf32>
    %270 = arith.addf %264, %269 : vector<16x16x32xf32>
    %271 = vector.extract_strided_slice %258 {offsets = [0, 2, 0], sizes = [16, 1, 32], strides = [1, 1, 1]} : vector<16x16x32xf32> to vector<16x1x32xf32>
    %272 = vector.extract_strided_slice %259 {offsets = [2, 0, 0], sizes = [1, 16, 32], strides = [1, 1, 1]} : vector<16x16x32xf32> to vector<1x16x32xf32>
    %273 = vector.broadcast %271 : vector<16x1x32xf32> to vector<16x16x32xf32>
    %274 = vector.broadcast %272 : vector<1x16x32xf32> to vector<16x16x32xf32>
    %275 = arith.mulf %273, %274 : vector<16x16x32xf32>
    %276 = arith.addf %270, %275 : vector<16x16x32xf32>
    %277 = vector.extract_strided_slice %258 {offsets = [0, 3, 0], sizes = [16, 1, 32], strides = [1, 1, 1]} : vector<16x16x32xf32> to vector<16x1x32xf32>
    %278 = vector.extract_strided_slice %259 {offsets = [3, 0, 0], sizes = [1, 16, 32], strides = [1, 1, 1]} : vector<16x16x32xf32> to vector<1x16x32xf32>
    %279 = vector.broadcast %277 : vector<16x1x32xf32> to vector<16x16x32xf32>
    %280 = vector.broadcast %278 : vector<1x16x32xf32> to vector<16x16x32xf32>
    %281 = arith.mulf %279, %280 : vector<16x16x32xf32>
    %282 = arith.addf %276, %281 : vector<16x16x32xf32>
    %283 = vector.extract_strided_slice %258 {offsets = [0, 4, 0], sizes = [16, 1, 32], strides = [1, 1, 1]} : vector<16x16x32xf32> to vector<16x1x32xf32>
    %284 = vector.extract_strided_slice %259 {offsets = [4, 0, 0], sizes = [1, 16, 32], strides = [1, 1, 1]} : vector<16x16x32xf32> to vector<1x16x32xf32>
    %285 = vector.broadcast %283 : vector<16x1x32xf32> to vector<16x16x32xf32>
    %286 = vector.broadcast %284 : vector<1x16x32xf32> to vector<16x16x32xf32>
    %287 = arith.mulf %285, %286 : vector<16x16x32xf32>
    %288 = arith.addf %282, %287 : vector<16x16x32xf32>
    %289 = vector.extract_strided_slice %258 {offsets = [0, 5, 0], sizes = [16, 1, 32], strides = [1, 1, 1]} : vector<16x16x32xf32> to vector<16x1x32xf32>
    %290 = vector.extract_strided_slice %259 {offsets = [5, 0, 0], sizes = [1, 16, 32], strides = [1, 1, 1]} : vector<16x16x32xf32> to vector<1x16x32xf32>
    %291 = vector.broadcast %289 : vector<16x1x32xf32> to vector<16x16x32xf32>
    %292 = vector.broadcast %290 : vector<1x16x32xf32> to vector<16x16x32xf32>
    %293 = arith.mulf %291, %292 : vector<16x16x32xf32>
    %294 = arith.addf %288, %293 : vector<16x16x32xf32>
    %295 = vector.extract_strided_slice %258 {offsets = [0, 6, 0], sizes = [16, 1, 32], strides = [1, 1, 1]} : vector<16x16x32xf32> to vector<16x1x32xf32>
    %296 = vector.extract_strided_slice %259 {offsets = [6, 0, 0], sizes = [1, 16, 32], strides = [1, 1, 1]} : vector<16x16x32xf32> to vector<1x16x32xf32>
    %297 = vector.broadcast %295 : vector<16x1x32xf32> to vector<16x16x32xf32>
    %298 = vector.broadcast %296 : vector<1x16x32xf32> to vector<16x16x32xf32>
    %299 = arith.mulf %297, %298 : vector<16x16x32xf32>
    %300 = arith.addf %294, %299 : vector<16x16x32xf32>
    %301 = vector.extract_strided_slice %258 {offsets = [0, 7, 0], sizes = [16, 1, 32], strides = [1, 1, 1]} : vector<16x16x32xf32> to vector<16x1x32xf32>
    %302 = vector.extract_strided_slice %259 {offsets = [7, 0, 0], sizes = [1, 16, 32], strides = [1, 1, 1]} : vector<16x16x32xf32> to vector<1x16x32xf32>
    %303 = vector.broadcast %301 : vector<16x1x32xf32> to vector<16x16x32xf32>
    %304 = vector.broadcast %302 : vector<1x16x32xf32> to vector<16x16x32xf32>
    %305 = arith.mulf %303, %304 : vector<16x16x32xf32>
    %306 = arith.addf %300, %305 : vector<16x16x32xf32>
    %307 = vector.extract_strided_slice %258 {offsets = [0, 8, 0], sizes = [16, 1, 32], strides = [1, 1, 1]} : vector<16x16x32xf32> to vector<16x1x32xf32>
    %308 = vector.extract_strided_slice %259 {offsets = [8, 0, 0], sizes = [1, 16, 32], strides = [1, 1, 1]} : vector<16x16x32xf32> to vector<1x16x32xf32>
    %309 = vector.broadcast %307 : vector<16x1x32xf32> to vector<16x16x32xf32>
    %310 = vector.broadcast %308 : vector<1x16x32xf32> to vector<16x16x32xf32>
    %311 = arith.mulf %309, %310 : vector<16x16x32xf32>
    %312 = arith.addf %306, %311 : vector<16x16x32xf32>
    %313 = vector.extract_strided_slice %258 {offsets = [0, 9, 0], sizes = [16, 1, 32], strides = [1, 1, 1]} : vector<16x16x32xf32> to vector<16x1x32xf32>
    %314 = vector.extract_strided_slice %259 {offsets = [9, 0, 0], sizes = [1, 16, 32], strides = [1, 1, 1]} : vector<16x16x32xf32> to vector<1x16x32xf32>
    %315 = vector.broadcast %313 : vector<16x1x32xf32> to vector<16x16x32xf32>
    %316 = vector.broadcast %314 : vector<1x16x32xf32> to vector<16x16x32xf32>
    %317 = arith.mulf %315, %316 : vector<16x16x32xf32>
    %318 = arith.addf %312, %317 : vector<16x16x32xf32>
    %319 = vector.extract_strided_slice %258 {offsets = [0, 10, 0], sizes = [16, 1, 32], strides = [1, 1, 1]} : vector<16x16x32xf32> to vector<16x1x32xf32>
    %320 = vector.extract_strided_slice %259 {offsets = [10, 0, 0], sizes = [1, 16, 32], strides = [1, 1, 1]} : vector<16x16x32xf32> to vector<1x16x32xf32>
    %321 = vector.broadcast %319 : vector<16x1x32xf32> to vector<16x16x32xf32>
    %322 = vector.broadcast %320 : vector<1x16x32xf32> to vector<16x16x32xf32>
    %323 = arith.mulf %321, %322 : vector<16x16x32xf32>
    %324 = arith.addf %318, %323 : vector<16x16x32xf32>
    %325 = vector.extract_strided_slice %258 {offsets = [0, 11, 0], sizes = [16, 1, 32], strides = [1, 1, 1]} : vector<16x16x32xf32> to vector<16x1x32xf32>
    %326 = vector.extract_strided_slice %259 {offsets = [11, 0, 0], sizes = [1, 16, 32], strides = [1, 1, 1]} : vector<16x16x32xf32> to vector<1x16x32xf32>
    %327 = vector.broadcast %325 : vector<16x1x32xf32> to vector<16x16x32xf32>
    %328 = vector.broadcast %326 : vector<1x16x32xf32> to vector<16x16x32xf32>
    %329 = arith.mulf %327, %328 : vector<16x16x32xf32>
    %330 = arith.addf %324, %329 : vector<16x16x32xf32>
    %331 = vector.extract_strided_slice %258 {offsets = [0, 12, 0], sizes = [16, 1, 32], strides = [1, 1, 1]} : vector<16x16x32xf32> to vector<16x1x32xf32>
    %332 = vector.extract_strided_slice %259 {offsets = [12, 0, 0], sizes = [1, 16, 32], strides = [1, 1, 1]} : vector<16x16x32xf32> to vector<1x16x32xf32>
    %333 = vector.broadcast %331 : vector<16x1x32xf32> to vector<16x16x32xf32>
    %334 = vector.broadcast %332 : vector<1x16x32xf32> to vector<16x16x32xf32>
    %335 = arith.mulf %333, %334 : vector<16x16x32xf32>
    %336 = arith.addf %330, %335 : vector<16x16x32xf32>
    %337 = vector.extract_strided_slice %258 {offsets = [0, 13, 0], sizes = [16, 1, 32], strides = [1, 1, 1]} : vector<16x16x32xf32> to vector<16x1x32xf32>
    %338 = vector.extract_strided_slice %259 {offsets = [13, 0, 0], sizes = [1, 16, 32], strides = [1, 1, 1]} : vector<16x16x32xf32> to vector<1x16x32xf32>
    %339 = vector.broadcast %337 : vector<16x1x32xf32> to vector<16x16x32xf32>
    %340 = vector.broadcast %338 : vector<1x16x32xf32> to vector<16x16x32xf32>
    %341 = arith.mulf %339, %340 : vector<16x16x32xf32>
    %342 = arith.addf %336, %341 : vector<16x16x32xf32>
    %343 = vector.extract_strided_slice %258 {offsets = [0, 14, 0], sizes = [16, 1, 32], strides = [1, 1, 1]} : vector<16x16x32xf32> to vector<16x1x32xf32>
    %344 = vector.extract_strided_slice %259 {offsets = [14, 0, 0], sizes = [1, 16, 32], strides = [1, 1, 1]} : vector<16x16x32xf32> to vector<1x16x32xf32>
    %345 = vector.broadcast %343 : vector<16x1x32xf32> to vector<16x16x32xf32>
    %346 = vector.broadcast %344 : vector<1x16x32xf32> to vector<16x16x32xf32>
    %347 = arith.mulf %345, %346 : vector<16x16x32xf32>
    %348 = arith.addf %342, %347 : vector<16x16x32xf32>
    %349 = vector.extract_strided_slice %258 {offsets = [0, 15, 0], sizes = [16, 1, 32], strides = [1, 1, 1]} : vector<16x16x32xf32> to vector<16x1x32xf32>
    %350 = vector.extract_strided_slice %259 {offsets = [15, 0, 0], sizes = [1, 16, 32], strides = [1, 1, 1]} : vector<16x16x32xf32> to vector<1x16x32xf32>
    %351 = vector.broadcast %349 : vector<16x1x32xf32> to vector<16x16x32xf32>
    %352 = vector.broadcast %350 : vector<1x16x32xf32> to vector<16x16x32xf32>
    %353 = arith.mulf %351, %352 : vector<16x16x32xf32>
    %354 = arith.addf %348, %353 : vector<16x16x32xf32>
    %355 = vector.shape_cast %354 : vector<16x16x32xf32> to vector<256x32xf32>
    %cst_48 = arith.constant dense<0.000000e+00> : vector<256x32xf32>
    %356 = tpu.matmul %355, %248, %cst_48 {dimension_numbers = #tpu.dot_dimension_numbers<[1], [0], [0], [1], [0, 0, 1, 1], [], []>} : vector<256x32xf32>, vector<32x32xf32>, vector<256x32xf32> -> vector<256x32xf32>
    %cst_49 = arith.constant dense<0.000000e+00> : vector<256x32xf32>
    %357 = tpu.matmul %241, %249, %cst_49 {dimension_numbers = #tpu.dot_dimension_numbers<[1], [0], [0], [1], [0, 0, 1, 1], [], []>} : vector<256x32xf32>, vector<32x32xf32>, vector<256x32xf32> -> vector<256x32xf32>
    %358 = arith.addf %356, %357 : vector<256x32xf32>
    %359 = vector.broadcast %250 : vector<1x32xf32> to vector<256x32xf32>
    %360 = arith.addf %358, %359 : vector<256x32xf32>
    %cst_50 = arith.constant 0.000000e+00 : f32
    %361 = vector.broadcast %cst_50 : f32 to vector<256x32xf32>
    %362 = arith.maximumf %360, %361 : vector<256x32xf32>
    %363 = vector.broadcast %3 : vector<256x1xf32> to vector<256x32xf32>
    %364 = arith.mulf %362, %363 : vector<256x32xf32>
    %365 = vector.shape_cast %364 : vector<256x32xf32> to vector<16x16x32xf32>
    %cst_51 = arith.constant dense<0.000000e+00> : vector<16x32xf32>
    %366 = vector.multi_reduction <add>, %365, %cst_51 [1] : vector<16x16x32xf32> to vector<16x32xf32>
    %367 = tpu.concatenate %124, %245, %366 in 1 : vector<16x32xf32>, vector<16x32xf32>, vector<16x32xf32> -> vector<16x96xf32>
    %c0_52 = arith.constant 0 : index
    %c0_53 = arith.constant 0 : index
    %368 = vector.load %arg18[%c0_52, %c0_53] : memref<96x64xf32, #tpu.memory_space<vmem>>, vector<96x64xf32>
    %cst_54 = arith.constant dense<0.000000e+00> : vector<16x64xf32>
    %369 = tpu.matmul %367, %368, %cst_54 {dimension_numbers = #tpu.dot_dimension_numbers<[1], [0], [0], [1], [0, 0, 1, 1], [], []>} : vector<16x96xf32>, vector<96x64xf32>, vector<16x64xf32> -> vector<16x64xf32>
    %c0_55 = arith.constant 0 : index
    %c0_56 = arith.constant 0 : index
    %370 = vector.load %arg19[%c0_55, %c0_56] : memref<1x64xf32, #tpu.memory_space<vmem>>, vector<1x64xf32>
    %371 = vector.broadcast %370 : vector<1x64xf32> to vector<16x64xf32>
    %372 = arith.addf %369, %371 : vector<16x64xf32>
    %cst_57 = arith.constant 0.000000e+00 : f32
    %373 = vector.broadcast %cst_57 : f32 to vector<16x64xf32>
    %374 = arith.maximumf %372, %373 : vector<16x64xf32>
    %cst_58 = arith.constant dense<0.000000e+00> : vector<64xf32>
    %375 = vector.multi_reduction <add>, %374, %cst_58 [0] : vector<16x64xf32> to vector<64xf32>
    %376 = vector.shape_cast %375 : vector<64xf32> to vector<1x64xf32>
    %cst_59 = arith.constant 1.600000e+01 : f32
    %377 = vector.broadcast %cst_59 : f32 to vector<1x64xf32>
    %378 = arith.divf %376, %377 : vector<1x64xf32>
    %c0_60 = arith.constant 0 : index
    %c0_61 = arith.constant 0 : index
    %379 = vector.load %arg20[%c0_60, %c0_61] : memref<64x1xf32, #tpu.memory_space<vmem>>, vector<64x1xf32>
    %cst_62 = arith.constant dense<0.000000e+00> : vector<1x1xf32>
    %380 = tpu.matmul %378, %379, %cst_62 {dimension_numbers = #tpu.dot_dimension_numbers<[1], [0], [0], [1], [0, 0, 1, 1], [], []>} : vector<1x64xf32>, vector<64x1xf32>, vector<1x1xf32> -> vector<1x1xf32>
    %c0_63 = arith.constant 0 : index
    %c0_64 = arith.constant 0 : index
    %381 = vector.load %arg21[%c0_63, %c0_64] : memref<1x1xf32, #tpu.memory_space<vmem>>, vector<1x1xf32>
    %382 = arith.addf %380, %381 : vector<1x1xf32>
    %c0_65 = arith.constant 0 : index
    %c0_66 = arith.constant 0 : index
    %c0_67 = arith.constant 0 : index
    %383 = vector.load %arg22[%c0_65, %c0_66, %c0_67] : memref<1x1x1xf32, #tpu.memory_space<vmem>>, vector<1x1x1xf32>
    %384 = vector.shape_cast %383 : vector<1x1x1xf32> to vector<1x1xf32>
    %385 = vector.shape_cast %382 : vector<1x1xf32> to vector<1x1x1xf32>
    tpu.vector_store %arg22[%c0_65, %c0_66, %c0_67], %385 {strides = array<i32>} : memref<1x1x1xf32, #tpu.memory_space<vmem>>, vector<1x1x1xf32>,
    return
  }
  func.func @transform_0(%arg0: i32) -> (i32, i32, i32) {
    %c0_i32 = arith.constant 0 : i32
    %c0_i32_0 = arith.constant 0 : i32
    %c0_i32_1 = arith.constant 0 : i32
    return %arg0, %c0_i32, %c0_i32_0 : i32, i32, i32
  }
  func.func @transform_1(%arg0: i32) -> (i32, i32, i32) {
    %c0_i32 = arith.constant 0 : i32
    %c0_i32_0 = arith.constant 0 : i32
    %c0_i32_1 = arith.constant 0 : i32
    return %arg0, %c0_i32, %c0_i32_0 : i32, i32, i32
  }
  func.func @transform_2(%arg0: i32) -> (i32, i32) {
    %c0_i32 = arith.constant 0 : i32
    %c0_i32_0 = arith.constant 0 : i32
    %c0_i32_1 = arith.constant 0 : i32
    return %c0_i32, %c0_i32_0 : i32, i32
  }
  func.func @transform_3(%arg0: i32) -> (i32, i32) {
    %c0_i32 = arith.constant 0 : i32
    %c0_i32_0 = arith.constant 0 : i32
    %c0_i32_1 = arith.constant 0 : i32
    return %c0_i32, %c0_i32_0 : i32, i32
  }
  func.func @transform_4(%arg0: i32) -> (i32, i32) {
    %c0_i32 = arith.constant 0 : i32
    %c0_i32_0 = arith.constant 0 : i32
    %c0_i32_1 = arith.constant 0 : i32
    return %c0_i32, %c0_i32_0 : i32, i32
  }
  func.func @transform_5(%arg0: i32) -> (i32, i32) {
    %c0_i32 = arith.constant 0 : i32
    %c0_i32_0 = arith.constant 0 : i32
    %c0_i32_1 = arith.constant 0 : i32
    return %c0_i32, %c0_i32_0 : i32, i32
  }
  func.func @transform_6(%arg0: i32) -> (i32, i32) {
    %c0_i32 = arith.constant 0 : i32
    %c0_i32_0 = arith.constant 0 : i32
    %c0_i32_1 = arith.constant 0 : i32
    return %c0_i32, %c0_i32_0 : i32, i32
  }
  func.func @transform_7(%arg0: i32) -> (i32, i32) {
    %c0_i32 = arith.constant 0 : i32
    %c0_i32_0 = arith.constant 0 : i32
    %c0_i32_1 = arith.constant 0 : i32
    return %c0_i32, %c0_i32_0 : i32, i32
  }
  func.func @transform_8(%arg0: i32) -> (i32, i32) {
    %c0_i32 = arith.constant 0 : i32
    %c0_i32_0 = arith.constant 0 : i32
    %c0_i32_1 = arith.constant 0 : i32
    return %c0_i32, %c0_i32_0 : i32, i32
  }
  func.func @transform_9(%arg0: i32) -> (i32, i32) {
    %c0_i32 = arith.constant 0 : i32
    %c0_i32_0 = arith.constant 0 : i32
    %c0_i32_1 = arith.constant 0 : i32
    return %c0_i32, %c0_i32_0 : i32, i32
  }
  func.func @transform_10(%arg0: i32) -> (i32, i32) {
    %c0_i32 = arith.constant 0 : i32
    %c0_i32_0 = arith.constant 0 : i32
    %c0_i32_1 = arith.constant 0 : i32
    return %c0_i32, %c0_i32_0 : i32, i32
  }
  func.func @transform_11(%arg0: i32) -> (i32, i32) {
    %c0_i32 = arith.constant 0 : i32
    %c0_i32_0 = arith.constant 0 : i32
    %c0_i32_1 = arith.constant 0 : i32
    return %c0_i32, %c0_i32_0 : i32, i32
  }
  func.func @transform_12(%arg0: i32) -> (i32, i32) {
    %c0_i32 = arith.constant 0 : i32
    %c0_i32_0 = arith.constant 0 : i32
    %c0_i32_1 = arith.constant 0 : i32
    return %c0_i32, %c0_i32_0 : i32, i32
  }
  func.func @transform_13(%arg0: i32) -> (i32, i32) {
    %c0_i32 = arith.constant 0 : i32
    %c0_i32_0 = arith.constant 0 : i32
    %c0_i32_1 = arith.constant 0 : i32
    return %c0_i32, %c0_i32_0 : i32, i32
  }
  func.func @transform_14(%arg0: i32) -> (i32, i32) {
    %c0_i32 = arith.constant 0 : i32
    %c0_i32_0 = arith.constant 0 : i32
    %c0_i32_1 = arith.constant 0 : i32
    return %c0_i32, %c0_i32_0 : i32, i32
  }
  func.func @transform_15(%arg0: i32) -> (i32, i32) {
    %c0_i32 = arith.constant 0 : i32
    %c0_i32_0 = arith.constant 0 : i32
    %c0_i32_1 = arith.constant 0 : i32
    return %c0_i32, %c0_i32_0 : i32, i32
  }
  func.func @transform_16(%arg0: i32) -> (i32, i32) {
    %c0_i32 = arith.constant 0 : i32
    %c0_i32_0 = arith.constant 0 : i32
    %c0_i32_1 = arith.constant 0 : i32
    return %c0_i32, %c0_i32_0 : i32, i32
  }
  func.func @transform_17(%arg0: i32) -> (i32, i32) {
    %c0_i32 = arith.constant 0 : i32
    %c0_i32_0 = arith.constant 0 : i32
    %c0_i32_1 = arith.constant 0 : i32
    return %c0_i32, %c0_i32_0 : i32, i32
  }
  func.func @transform_18(%arg0: i32) -> (i32, i32) {
    %c0_i32 = arith.constant 0 : i32
    %c0_i32_0 = arith.constant 0 : i32
    %c0_i32_1 = arith.constant 0 : i32
    return %c0_i32, %c0_i32_0 : i32, i32
  }
  func.func @transform_19(%arg0: i32) -> (i32, i32) {
    %c0_i32 = arith.constant 0 : i32
    %c0_i32_0 = arith.constant 0 : i32
    %c0_i32_1 = arith.constant 0 : i32
    return %c0_i32, %c0_i32_0 : i32, i32
  }
  func.func @transform_20(%arg0: i32) -> (i32, i32) {
    %c0_i32 = arith.constant 0 : i32
    %c0_i32_0 = arith.constant 0 : i32
    %c0_i32_1 = arith.constant 0 : i32
    return %c0_i32, %c0_i32_0 : i32, i32
  }
  func.func @transform_21(%arg0: i32) -> (i32, i32, i32) {
    %c0_i32 = arith.constant 0 : i32
    %c0_i32_0 = arith.constant 0 : i32
    %c0_i32_1 = arith.constant 0 : i32
    return %arg0, %c0_i32, %c0_i32_0 : i32, i32, i32
  }
}

</mosaic_0001>

<llo_original>
// kernel: squeeze.0
$region0: #{squeeze.0}
  %s0 = inlined_call_operand.vmem [shape: f32[2,1,16,16], index: 0, kind: input, shape index: {}]
  %s1 = inlined_call_operand.vmem [shape: f32[2,256,1], index: 1, kind: output, shape index: {}]
  %v2 = vld [vmem:[%s0] sm:$0xff]
  %vm3 = vcmask 7168
  %4 = vst.msk [vmem:[%s1] ss:$16 sm:$0x3] %vm3, %v2
  %5 = vst.msk [vmem:[%s1] ss:$16 sm:$0xc] %vm3, %v2
  %6 = vst.msk [vmem:[%s1] ss:$16 sm:$0x30] %vm3, %v2
  %7 = vst.msk [vmem:[%s1] ss:$16 sm:$0xc0] %vm3, %v2
  %s8 = scalar_lea.vmem %s0, 8
  %v9 = vld [vmem:[%s8] sm:$0xff]
  %vm10 = vcmask 7168
  %s11 = scalar_lea.vmem %s1, 128
  %12 = vst.msk [vmem:[%s11] ss:$16 sm:$0x3] %vm10, %v9
  %s13 = scalar_lea.vmem %s1, 128
  %14 = vst.msk [vmem:[%s13] ss:$16 sm:$0xc] %vm10, %v9
  %s15 = scalar_lea.vmem %s1, 128
  %16 = vst.msk [vmem:[%s15] ss:$16 sm:$0x30] %vm10, %v9
  %s17 = scalar_lea.vmem %s1, 128
  %18 = vst.msk [vmem:[%s17] ss:$16 sm:$0xc0] %vm10, %v9
  %s19 = scalar_lea.vmem %s0, 16
  %v20 = vld [vmem:[%s19] sm:$0xff]
  %vm21 = vcmask 7168
  %s22 = scalar_lea.vmem %s1, 256
  %23 = vst.msk [vmem:[%s22] ss:$16 sm:$0x3] %vm21, %v20
  %s24 = scalar_lea.vmem %s1, 256
  %25 = vst.msk [vmem:[%s24] ss:$16 sm:$0xc] %vm21, %v20
  %s26 = scalar_lea.vmem %s1, 256
  %27 = vst.msk [vmem:[%s26] ss:$16 sm:$0x30] %vm21, %v20
  %s28 = scalar_lea.vmem %s1, 256
  %29 = vst.msk [vmem:[%s28] ss:$16 sm:$0xc0] %vm21, %v20
  %s30 = scalar_lea.vmem %s0, 24
  %v31 = vld [vmem:[%s30] sm:$0xff]
  %vm32 = vcmask 7168
  %s33 = scalar_lea.vmem %s1, 384
  %34 = vst.msk [vmem:[%s33] ss:$16 sm:$0x3] %vm32, %v31
  %s35 = scalar_lea.vmem %s1, 384
  %36 = vst.msk [vmem:[%s35] ss:$16 sm:$0xc] %vm32, %v31
  %s37 = scalar_lea.vmem %s1, 384
  %38 = vst.msk [vmem:[%s37] ss:$16 sm:$0x30] %vm32, %v31
  %s39 = scalar_lea.vmem %s1, 384
  %40 = vst.msk [vmem:[%s39] ss:$16 sm:$0xc0] %vm32, %v31
  %v41 = vld [vmem:[%s0] sm:$0xff]
  %42 = vrot.lane.b32.xlu0 %v41, 127
  %v43 = vpop.permute.xlu0 %42
  %vm44 = vcmask 7168
  %s45 = scalar_lea.vmem %s1, 1
  %46 = vst.msk [vmem:[%s45] ss:$16 sm:$0x3] %vm44, %v43
  %s47 = scalar_lea.vmem %s1, 1
  %48 = vst.msk [vmem:[%s47] ss:$16 sm:$0xc] %vm44, %v43
  %s49 = scalar_lea.vmem %s1, 1
  %50 = vst.msk [vmem:[%s49] ss:$16 sm:$0x30] %vm44, %v43
  %s51 = scalar_lea.vmem %s1, 1
  %52 = vst.msk [vmem:[%s51] ss:$16 sm:$0xc0] %vm44, %v43
  %s53 = scalar_lea.vmem %s0, 8
  %v54 = vld [vmem:[%s53] sm:$0xff]
  %55 = vrot.lane.b32.xlu0 %v54, 127
  %v56 = vpop.permute.xlu0 %55
  %vm57 = vcmask 7168
  %s58 = scalar_lea.vmem %s1, 129
  %59 = vst.msk [vmem:[%s58] ss:$16 sm:$0x3] %vm57, %v56
  %s60 = scalar_lea.vmem %s1, 129
  %61 = vst.msk [vmem:[%s60] ss:$16 sm:$0xc] %vm57, %v56
  %s62 = scalar_lea.vmem %s1, 129
  %63 = vst.msk [vmem:[%s62] ss:$16 sm:$0x30] %vm57, %v56
  %s64 = scalar_lea.vmem %s1, 129
  %65 = vst.msk [vmem:[%s64] ss:$16 sm:$0xc0] %vm57, %v56
  %s66 = scalar_lea.vmem %s0, 16
  %v67 = vld [vmem:[%s66] sm:$0xff]
  %68 = vrot.lane.b32.xlu0 %v67, 127
  %v69 = vpop.permute.xlu0 %68
  %vm70 = vcmask 7168
  %s71 = scalar_lea.vmem %s1, 257
  %72 = vst.msk [vmem:[%s71] ss:$16 sm:$0x3] %vm70, %v69
  %s73 = scalar_lea.vmem %s1, 257
  %74 = vst.msk [vmem:[%s73] ss:$16 sm:$0xc] %vm70, %v69
  %s75 = scalar_lea.vmem %s1, 257
  %76 = vst.msk [vmem:[%s75] ss:$16 sm:$0x30] %vm70, %v69
  %s77 = scalar_lea.vmem %s1, 257
  %78 = vst.msk [vmem:[%s77] ss:$16 sm:$0xc0] %vm70, %v69
  %s79 = scalar_lea.vmem %s0, 24
  %v80 = vld [vmem:[%s79] sm:$0xff]
  %81 = vrot.lane.b32.xlu0 %v80, 127
  %v82 = vpop.permute.xlu0 %81
  %vm83 = vcmask 7168
  %s84 = scalar_lea.vmem %s1, 385
  %85 = vst.msk [vmem:[%s84] ss:$16 sm:$0x3] %vm83, %v82
  %s86 = scalar_lea.vmem %s1, 385
  %87 = vst.msk [vmem:[%s86] ss:$16 sm:$0xc] %vm83, %v82
  %s88 = scalar_lea.vmem %s1, 385
  %89 = vst.msk [vmem:[%s88] ss:$16 sm:$0x30] %vm83, %v82
  %s90 = scalar_lea.vmem %s1, 385
  %91 = vst.msk [vmem:[%s90] ss:$16 sm:$0xc0] %vm83, %v82
  %v92 = vld [vmem:[%s0] sm:$0xff]
  %93 = vrot.lane.b32.xlu0 %v92, 126
  %v94 = vpop.permute.xlu0 %93
  %vm95 = vcmask 7168
  %s96 = scalar_lea.vmem %s1, 2
  %97 = vst.msk [vmem:[%s96] ss:$16 sm:$0x3] %vm95, %v94
  %s98 = scalar_lea.vmem %s1, 2
  %99 = vst.msk [vmem:[%s98] ss:$16 sm:$0xc] %vm95, %v94
  %s100 = scalar_lea.vmem %s1, 2
  %101 = vst.msk [vmem:[%s100] ss:$16 sm:$0x30] %vm95, %v94
  %s102 = scalar_lea.vmem %s1, 2
  %103 = vst.msk [vmem:[%s102] ss:$16 sm:$0xc0] %vm95, %v94
  %s104 = scalar_lea.vmem %s0, 8
  %v105 = vld [vmem:[%s104] sm:$0xff]
  %106 = vrot.lane.b32.xlu0 %v105, 126
  %v107 = vpop.permute.xlu0 %106
  %vm108 = vcmask 7168
  %s109 = scalar_lea.vmem %s1, 130
  %110 = vst.msk [vmem:[%s109] ss:$16 sm:$0x3] %vm108, %v107
  %s111 = scalar_lea.vmem %s1, 130
  %112 = vst.msk [vmem:[%s111] ss:$16 sm:$0xc] %vm108, %v107
  %s113 = scalar_lea.vmem %s1, 130
  %114 = vst.msk [vmem:[%s113] ss:$16 sm:$0x30] %vm108, %v107
  %s115 = scalar_lea.vmem %s1, 130
  %116 = vst.msk [vmem:[%s115] ss:$16 sm:$0xc0] %vm108, %v107
  %s117 = scalar_lea.vmem %s0, 16
  %v118 = vld [vmem:[%s117] sm:$0xff]
  %119 = vrot.lane.b32.xlu0 %v118, 126
  %v120 = vpop.permute.xlu0 %119
  %vm121 = vcmask 7168
  %s122 = scalar_lea.vmem %s1, 258
  %123 = vst.msk [vmem:[%s122] ss:$16 sm:$0x3] %vm121, %v120
  %s124 = scalar_lea.vmem %s1, 258
  %125 = vst.msk [vmem:[%s124] ss:$16 sm:$0xc] %vm121, %v120
  %s126 = scalar_lea.vmem %s1, 258
  %127 = vst.msk [vmem:[%s126] ss:$16 sm:$0x30] %vm121, %v120
  %s128 = scalar_lea.vmem %s1, 258
  %129 = vst.msk [vmem:[%s128] ss:$16 sm:$0xc0] %vm121, %v120
  %s130 = scalar_lea.vmem %s0, 24
  %v131 = vld [vmem:[%s130] sm:$0xff]
  %132 = vrot.lane.b32.xlu0 %v131, 126
  %v133 = vpop.permute.xlu0 %132
  %vm134 = vcmask 7168
  %s135 = scalar_lea.vmem %s1, 386
  %136 = vst.msk [vmem:[%s135] ss:$16 sm:$0x3] %vm134, %v133
  %s137 = scalar_lea.vmem %s1, 386
  %138 = vst.msk [vmem:[%s137] ss:$16 sm:$0xc] %vm134, %v133
  %s139 = scalar_lea.vmem %s1, 386
  %140 = vst.msk [vmem:[%s139] ss:$16 sm:$0x30] %vm134, %v133
  %s141 = scalar_lea.vmem %s1, 386
  %142 = vst.msk [vmem:[%s141] ss:$16 sm:$0xc0] %vm134, %v133
  %v143 = vld [vmem:[%s0] sm:$0xff]
  %144 = vrot.lane.b32.xlu0 %v143, 125
  %v145 = vpop.permute.xlu0 %144
  %vm146 = vcmask 7168
  %s147 = scalar_lea.vmem %s1, 3
  %148 = vst.msk [vmem:[%s147] ss:$16 sm:$0x3] %vm146, %v145
  %s149 = scalar_lea.vmem %s1, 3
  %150 = vst.msk [vmem:[%s149] ss:$16 sm:$0xc] %vm146, %v145
  %s151 = scalar_lea.vmem %s1, 3
  %152 = vst.msk [vmem:[%s151] ss:$16 sm:$0x30] %vm146, %v145
  %s153 = scalar_lea.vmem %s1, 3
  %154 = vst.msk [vmem:[%s153] ss:$16 sm:$0xc0] %vm146, %v145
  %s155 = scalar_lea.vmem %s0, 8
  %v156 = vld [vmem:[%s155] sm:$0xff]
  %157 = vrot.lane.b32.xlu0 %v156, 125
  %v158 = vpop.permute.xlu0 %157
  %vm159 = vcmask 7168
  %s160 = scalar_lea.vmem %s1, 131
  %161 = vst.msk [vmem:[%s160] ss:$16 sm:$0x3] %vm159, %v158
  %s162 = scalar_lea.vmem %s1, 131
  %163 = vst.msk [vmem:[%s162] ss:$16 sm:$0xc] %vm159, %v158
  %s164 = scalar_lea.vmem %s1, 131
  %165 = vst.msk [vmem:[%s164] ss:$16 sm:$0x30] %vm159, %v158
  %s166 = scalar_lea.vmem %s1, 131
  %167 = vst.msk [vmem:[%s166] ss:$16 sm:$0xc0] %vm159, %v158
  %s168 = scalar_lea.vmem %s0, 16
  %v169 = vld [vmem:[%s168] sm:$0xff]
  %170 = vrot.lane.b32.xlu0 %v169, 125
  %v171 = vpop.permute.xlu0 %170
  %vm172 = vcmask 7168
  %s173 = scalar_lea.vmem %s1, 259
  %174 = vst.msk [vmem:[%s173] ss:$16 sm:$0x3] %vm172, %v171
  %s175 = scalar_lea.vmem %s1, 259
  %176 = vst.msk [vmem:[%s175] ss:$16 sm:$0xc] %vm172, %v171
  %s177 = scalar_lea.vmem %s1, 259
  %178 = vst.msk [vmem:[%s177] ss:$16 sm:$0x30] %vm172, %v171
  %s179 = scalar_lea.vmem %s1, 259
  %180 = vst.msk [vmem:[%s179] ss:$16 sm:$0xc0] %vm172, %v171
  %s181 = scalar_lea.vmem %s0, 24
  %v182 = vld [vmem:[%s181] sm:$0xff]
  %183 = vrot.lane.b32.xlu0 %v182, 125
  %v184 = vpop.permute.xlu0 %183
  %vm185 = vcmask 7168
  %s186 = scalar_lea.vmem %s1, 387
  %187 = vst.msk [vmem:[%s186] ss:$16 sm:$0x3] %vm185, %v184
  %s188 = scalar_lea.vmem %s1, 387
  %189 = vst.msk [vmem:[%s188] ss:$16 sm:$0xc] %vm185, %v184
  %s190 = scalar_lea.vmem %s1, 387
  %191 = vst.msk [vmem:[%s190] ss:$16 sm:$0x30] %vm185, %v184
  %s192 = scalar_lea.vmem %s1, 387
  %193 = vst.msk [vmem:[%s192] ss:$16 sm:$0xc0] %vm185, %v184
  %v194 = vld [vmem:[%s0] sm:$0xff]
  %195 = vrot.lane.b32.xlu0 %v194, 124
  %v196 = vpop.permute.xlu0 %195
  %vm197 = vcmask 7168
  %s198 = scalar_lea.vmem %s1, 4
  %199 = vst.msk [vmem:[%s198] ss:$16 sm:$0x3] %vm197, %v196
  %s200 = scalar_lea.vmem %s1, 4
  %201 = vst.msk [vmem:[%s200] ss:$16 sm:$0xc] %vm197, %v196
  %s202 = scalar_lea.vmem %s1, 4
  %203 = vst.msk [vmem:[%s202] ss:$16 sm:$0x30] %vm197, %v196
  %s204 = scalar_lea.vmem %s1, 4
  %205 = vst.msk [vmem:[%s204] ss:$16 sm:$0xc0] %vm197, %v196
  %s206 = scalar_lea.vmem %s0, 8
  %v207 = vld [vmem:[%s206] sm:$0xff]
  %208 = vrot.lane.b32.xlu0 %v207, 124
  %v209 = vpop.permute.xlu0 %208
  %vm210 = vcmask 7168
  %s211 = scalar_lea.vmem %s1, 132
  %212 = vst.msk [vmem:[%s211] ss:$16 sm:$0x3] %vm210, %v209
  %s213 = scalar_lea.vmem %s1, 132
  %214 = vst.msk [vmem:[%s213] ss:$16 sm:$0xc] %vm210, %v209
  %s215 = scalar_lea.vmem %s1, 132
  %216 = vst.msk [vmem:[%s215] ss:$16 sm:$0x30] %vm210, %v209
  %s217 = scalar_lea.vmem %s1, 132
  %218 = vst.msk [vmem:[%s217] ss:$16 sm:$0xc0] %vm210, %v209
  %s219 = scalar_lea.vmem %s0, 16
  %v220 = vld [vmem:[%s219] sm:$0xff]
  %221 = vrot.lane.b32.xlu0 %v220, 124
  %v222 = vpop.permute.xlu0 %221
  %vm223 = vcmask 7168
  %s224 = scalar_lea.vmem %s1, 260
  %225 = vst.msk [vmem:[%s224] ss:$16 sm:$0x3] %vm223, %v222
  %s226 = scalar_lea.vmem %s1, 260
  %227 = vst.msk [vmem:[%s226] ss:$16 sm:$0xc] %vm223, %v222
  %s228 = scalar_lea.vmem %s1, 260
  %229 = vst.msk [vmem:[%s228] ss:$16 sm:$0x30] %vm223, %v222
  %s230 = scalar_lea.vmem %s1, 260
  %231 = vst.msk [vmem:[%s230] ss:$16 sm:$0xc0] %vm223, %v222
  %s232 = scalar_lea.vmem %s0, 24
  %v233 = vld [vmem:[%s232] sm:$0xff]
  %234 = vrot.lane.b32.xlu0 %v233, 124
  %v235 = vpop.permute.xlu0 %234
  %vm236 = vcmask 7168
  %s237 = scalar_lea.vmem %s1, 388
  %238 = vst.msk [vmem:[%s237] ss:$16 sm:$0x3] %vm236, %v235
  %s239 = scalar_lea.vmem %s1, 388
  %240 = vst.msk [vmem:[%s239] ss:$16 sm:$0xc] %vm236, %v235
  %s241 = scalar_lea.vmem %s1, 388
  %242 = vst.msk [vmem:[%s241] ss:$16 sm:$0x30] %vm236, %v235
  %s243 = scalar_lea.vmem %s1, 388
  %244 = vst.msk [vmem:[%s243] ss:$16 sm:$0xc0] %vm236, %v235
  %v245 = vld [vmem:[%s0] sm:$0xff]
  %246 = vrot.lane.b32.xlu0 %v245, 123
  %v247 = vpop.permute.xlu0 %246
  %vm248 = vcmask 7168
  %s249 = scalar_lea.vmem %s1, 5
  %250 = vst.msk [vmem:[%s249] ss:$16 sm:$0x3] %vm248, %v247
  %s251 = scalar_lea.vmem %s1, 5
  %252 = vst.msk [vmem:[%s251] ss:$16 sm:$0xc] %vm248, %v247
  %s253 = scalar_lea.vmem %s1, 5
  %254 = vst.msk [vmem:[%s253] ss:$16 sm:$0x30] %vm248, %v247
  %s255 = scalar_lea.vmem %s1, 5
  %256 = vst.msk [vmem:[%s255] ss:$16 sm:$0xc0] %vm248, %v247
  %s257 = scalar_lea.vmem %s0, 8
  %v258 = vld [vmem:[%s257] sm:$0xff]
  %259 = vrot.lane.b32.xlu0 %v258, 123
  %v260 = vpop.permute.xlu0 %259
  %vm261 = vcmask 7168
  %s262 = scalar_lea.vmem %s1, 133
  %263 = vst.msk [vmem:[%s262] ss:$16 sm:$0x3] %vm261, %v260
  %s264 = scalar_lea.vmem %s1, 133
  %265 = vst.msk [vmem:[%s264] ss:$16 sm:$0xc] %vm261, %v260
  %s266 = scalar_lea.vmem %s1, 133
  %267 = vst.msk [vmem:[%s266] ss:$16 sm:$0x30] %vm261, %v260
  %s268 = scalar_lea.vmem %s1, 133
  %269 = vst.msk [vmem:[%s268] ss:$16 sm:$0xc0] %vm261, %v260
  %s270 = scalar_lea.vmem %s0, 16
  %v271 = vld [vmem:[%s270] sm:$0xff]
  %272 = vrot.lane.b32.xlu0 %v271, 123
  %v273 = vpop.permute.xlu0 %272
  %vm274 = vcmask 7168
  %s275 = scalar_lea.vmem %s1, 261
  %276 = vst.msk [vmem:[%s275] ss:$16 sm:$0x3] %vm274, %v273
  %s277 = scalar_lea.vmem %s1, 261
  %278 = vst.msk [vmem:[%s277] ss:$16 sm:$0xc] %vm274, %v273
  %s279 = scalar_lea.vmem %s1, 261
  %280 = vst.msk [vmem:[%s279] ss:$16 sm:$0x30] %vm274, %v273
  %s281 = scalar_lea.vmem %s1, 261
  %282 = vst.msk [vmem:[%s281] ss:$16 sm:$0xc0] %vm274, %v273
  %s283 = scalar_lea.vmem %s0, 24
  %v284 = vld [vmem:[%s283] sm:$0xff]
  %285 = vrot.lane.b32.xlu0 %v284, 123
  %v286 = vpop.permute.xlu0 %285
  %vm287 = vcmask 7168
  %s288 = scalar_lea.vmem %s1, 389
  %289 = vst.msk [vmem:[%s288] ss:$16 sm:$0x3] %vm287, %v286
  %s290 = scalar_lea.vmem %s1, 389
  %291 = vst.msk [vmem:[%s290] ss:$16 sm:$0xc] %vm287, %v286
  %s292 = scalar_lea.vmem %s1, 389
  %293 = vst.msk [vmem:[%s292] ss:$16 sm:$0x30] %vm287, %v286
  %s294 = scalar_lea.vmem %s1, 389
  %295 = vst.msk [vmem:[%s294] ss:$16 sm:$0xc0] %vm287, %v286
  %v296 = vld [vmem:[%s0] sm:$0xff]
  %297 = vrot.lane.b32.xlu0 %v296, 122
  %v298 = vpop.permute.xlu0 %297
  %vm299 = vcmask 7168
  %s300 = scalar_lea.vmem %s1, 6
  %301 = vst.msk [vmem:[%s300] ss:$16 sm:$0x3] %vm299, %v298
  %s302 = scalar_lea.vmem %s1, 6
  %303 = vst.msk [vmem:[%s302] ss:$16 sm:$0xc] %vm299, %v298
  %s304 = scalar_lea.vmem %s1, 6
  %305 = vst.msk [vmem:[%s304] ss:$16 sm:$0x30] %vm299, %v298
  %s306 = scalar_lea.vmem %s1, 6
  %307 = vst.msk [vmem:[%s306] ss:$16 sm:$0xc0] %vm299, %v298
  %s308 = scalar_lea.vmem %s0, 8
  %v309 = vld [vmem:[%s308] sm:$0xff]
  %310 = vrot.lane.b32.xlu0 %v309, 122
  %v311 = vpop.permute.xlu0 %310
  %vm312 = vcmask 7168
  %s313 = scalar_lea.vmem %s1, 134
  %314 = vst.msk [vmem:[%s313] ss:$16 sm:$0x3] %vm312, %v311
  %s315 = scalar_lea.vmem %s1, 134
  %316 = vst.msk [vmem:[%s315] ss:$16 sm:$0xc] %vm312, %v311
  %s317 = scalar_lea.vmem %s1, 134
  %318 = vst.msk [vmem:[%s317] ss:$16 sm:$0x30] %vm312, %v311
  %s319 = scalar_lea.vmem %s1, 134
  %320 = vst.msk [vmem:[%s319] ss:$16 sm:$0xc0] %vm312, %v311
  %s321 = scalar_lea.vmem %s0, 16
  %v322 = vld [vmem:[%s321] sm:$0xff]
  %323 = vrot.lane.b32.xlu0 %v322, 122
  %v324 = vpop.permute.xlu0 %323
  %vm325 = vcmask 7168
  %s326 = scalar_lea.vmem %s1, 262
  %327 = vst.msk [vmem:[%s326] ss:$16 sm:$0x3] %vm325, %v324
  %s328 = scalar_lea.vmem %s1, 262
  %329 = vst.msk [vmem:[%s328] ss:$16 sm:$0xc] %vm325, %v324
  %s330 = scalar_lea.vmem %s1, 262
  %331 = vst.msk [vmem:[%s330] ss:$16 sm:$0x30] %vm325, %v324
  %s332 = scalar_lea.vmem %s1, 262
  %333 = vst.msk [vmem:[%s332] ss:$16 sm:$0xc0] %vm325, %v324
  %s334 = scalar_lea.vmem %s0, 24
  %v335 = vld [vmem:[%s334] sm:$0xff]
  %336 = vrot.lane.b32.xlu0 %v335, 122
  %v337 = vpop.permute.xlu0 %336
  %vm338 = vcmask 7168
  %s339 = scalar_lea.vmem %s1, 390
  %340 = vst.msk [vmem:[%s339] ss:$16 sm:$0x3] %vm338, %v337
  %s341 = scalar_lea.vmem %s1, 390
  %342 = vst.msk [vmem:[%s341] ss:$16 sm:$0xc] %vm338, %v337
  %s343 = scalar_lea.vmem %s1, 390
  %344 = vst.msk [vmem:[%s343] ss:$16 sm:$0x30] %vm338, %v337
  %s345 = scalar_lea.vmem %s1, 390
  %346 = vst.msk [vmem:[%s345] ss:$16 sm:$0xc0] %vm338, %v337
  %v347 = vld [vmem:[%s0] sm:$0xff]
  %348 = vrot.lane.b32.xlu0 %v347, 121
  %v349 = vpop.permute.xlu0 %348
  %vm350 = vcmask 7168
  %s351 = scalar_lea.vmem %s1, 7
  %352 = vst.msk [vmem:[%s351] ss:$16 sm:$0x3] %vm350, %v349
  %s353 = scalar_lea.vmem %s1, 7
  %354 = vst.msk [vmem:[%s353] ss:$16 sm:$0xc] %vm350, %v349
  %s355 = scalar_lea.vmem %s1, 7
  %356 = vst.msk [vmem:[%s355] ss:$16 sm:$0x30] %vm350, %v349
  %s357 = scalar_lea.vmem %s1, 7
  %358 = vst.msk [vmem:[%s357] ss:$16 sm:$0xc0] %vm350, %v349
  %s359 = scalar_lea.vmem %s0, 8
  %v360 = vld [vmem:[%s359] sm:$0xff]
  %361 = vrot.lane.b32.xlu0 %v360, 121
  %v362 = vpop.permute.xlu0 %361
  %vm363 = vcmask 7168
  %s364 = scalar_lea.vmem %s1, 135
  %365 = vst.msk [vmem:[%s364] ss:$16 sm:$0x3] %vm363, %v362
  %s366 = scalar_lea.vmem %s1, 135
  %367 = vst.msk [vmem:[%s366] ss:$16 sm:$0xc] %vm363, %v362
  %s368 = scalar_lea.vmem %s1, 135
  %369 = vst.msk [vmem:[%s368] ss:$16 sm:$0x30] %vm363, %v362
  %s370 = scalar_lea.vmem %s1, 135
  %371 = vst.msk [vmem:[%s370] ss:$16 sm:$0xc0] %vm363, %v362
  %s372 = scalar_lea.vmem %s0, 16
  %v373 = vld [vmem:[%s372] sm:$0xff]
  %374 = vrot.lane.b32.xlu0 %v373, 121
  %v375 = vpop.permute.xlu0 %374
  %vm376 = vcmask 7168
  %s377 = scalar_lea.vmem %s1, 263
  %378 = vst.msk [vmem:[%s377] ss:$16 sm:$0x3] %vm376, %v375
  %s379 = scalar_lea.vmem %s1, 263
  %380 = vst.msk [vmem:[%s379] ss:$16 sm:$0xc] %vm376, %v375
  %s381 = scalar_lea.vmem %s1, 263
  %382 = vst.msk [vmem:[%s381] ss:$16 sm:$0x30] %vm376, %v375
  %s383 = scalar_lea.vmem %s1, 263
  %384 = vst.msk [vmem:[%s383] ss:$16 sm:$0xc0] %vm376, %v375
  %s385 = scalar_lea.vmem %s0, 24
  %v386 = vld [vmem:[%s385] sm:$0xff]
  %387 = vrot.lane.b32.xlu0 %v386, 121
  %v388 = vpop.permute.xlu0 %387
  %vm389 = vcmask 7168
  %s390 = scalar_lea.vmem %s1, 391
  %391 = vst.msk [vmem:[%s390] ss:$16 sm:$0x3] %vm389, %v388
  %s392 = scalar_lea.vmem %s1, 391
  %393 = vst.msk [vmem:[%s392] ss:$16 sm:$0xc] %vm389, %v388
  %s394 = scalar_lea.vmem %s1, 391
  %395 = vst.msk [vmem:[%s394] ss:$16 sm:$0x30] %vm389, %v388
  %s396 = scalar_lea.vmem %s1, 391
  %397 = vst.msk [vmem:[%s396] ss:$16 sm:$0xc0] %vm389, %v388
  %v398 = vld [vmem:[%s0] sm:$0xff]
  %399 = vrot.lane.b32.xlu0 %v398, 120
  %v400 = vpop.permute.xlu0 %399
  %vm401 = vcmask 7168
  %s402 = scalar_lea.vmem %s1, 8
  %403 = vst.msk [vmem:[%s402] ss:$16 sm:$0x3] %vm401, %v400
  %s404 = scalar_lea.vmem %s1, 8
  %405 = vst.msk [vmem:[%s404] ss:$16 sm:$0xc] %vm401, %v400
  %s406 = scalar_lea.vmem %s1, 8
  %407 = vst.msk [vmem:[%s406] ss:$16 sm:$0x30] %vm401, %v400
  %s408 = scalar_lea.vmem %s1, 8
  %409 = vst.msk [vmem:[%s408] ss:$16 sm:$0xc0] %vm401, %v400
  %s410 = scalar_lea.vmem %s0, 8
  %v411 = vld [vmem:[%s410] sm:$0xff]
  %412 = vrot.lane.b32.xlu0 %v411, 120
  %v413 = vpop.permute.xlu0 %412
  %vm414 = vcmask 7168
  %s415 = scalar_lea.vmem %s1, 136
  %416 = vst.msk [vmem:[%s415] ss:$16 sm:$0x3] %vm414, %v413
  %s417 = scalar_lea.vmem %s1, 136
  %418 = vst.msk [vmem:[%s417] ss:$16 sm:$0xc] %vm414, %v413
  %s419 = scalar_lea.vmem %s1, 136
  %420 = vst.msk [vmem:[%s419] ss:$16 sm:$0x30] %vm414, %v413
  %s421 = scalar_lea.vmem %s1, 136
  %422 = vst.msk [vmem:[%s421] ss:$16 sm:$0xc0] %vm414, %v413
  %s423 = scalar_lea.vmem %s0, 16
  %v424 = vld [vmem:[%s423] sm:$0xff]
  %425 = vrot.lane.b32.xlu0 %v424, 120
  %v426 = vpop.permute.xlu0 %425
  %vm427 = vcmask 7168
  %s428 = scalar_lea.vmem %s1, 264
  %429 = vst.msk [vmem:[%s428] ss:$16 sm:$0x3] %vm427, %v426
  %s430 = scalar_lea.vmem %s1, 264
  %431 = vst.msk [vmem:[%s430] ss:$16 sm:$0xc] %vm427, %v426
  %s432 = scalar_lea.vmem %s1, 264
  %433 = vst.msk [vmem:[%s432] ss:$16 sm:$0x30] %vm427, %v426
  %s434 = scalar_lea.vmem %s1, 264
  %435 = vst.msk [vmem:[%s434] ss:$16 sm:$0xc0] %vm427, %v426
  %s436 = scalar_lea.vmem %s0, 24
  %v437 = vld [vmem:[%s436] sm:$0xff]
  %438 = vrot.lane.b32.xlu0 %v437, 120
  %v439 = vpop.permute.xlu0 %438
  %vm440 = vcmask 7168
  %s441 = scalar_lea.vmem %s1, 392
  %442 = vst.msk [vmem:[%s441] ss:$16 sm:$0x3] %vm440, %v439
  %s443 = scalar_lea.vmem %s1, 392
  %444 = vst.msk [vmem:[%s443] ss:$16 sm:$0xc] %vm440, %v439
  %s445 = scalar_lea.vmem %s1, 392
  %446 = vst.msk [vmem:[%s445] ss:$16 sm:$0x30] %vm440, %v439
  %s447 = scalar_lea.vmem %s1, 392
  %448 = vst.msk [vmem:[%s447] ss:$16 sm:$0xc0] %vm440, %v439
  %v449 = vld [vmem:[%s0] sm:$0xff]
  %450 = vrot.lane.b32.xlu0 %v449, 119
  %v451 = vpop.permute.xlu0 %450
  %vm452 = vcmask 7168
  %s453 = scalar_lea.vmem %s1, 9
  %454 = vst.msk [vmem:[%s453] ss:$16 sm:$0x3] %vm452, %v451
  %s455 = scalar_lea.vmem %s1, 9
  %456 = vst.msk [vmem:[%s455] ss:$16 sm:$0xc] %vm452, %v451
  %s457 = scalar_lea.vmem %s1, 9
  %458 = vst.msk [vmem:[%s457] ss:$16 sm:$0x30] %vm452, %v451
  %s459 = scalar_lea.vmem %s1, 9
  %460 = vst.msk [vmem:[%s459] ss:$16 sm:$0xc0] %vm452, %v451
  %s461 = scalar_lea.vmem %s0, 8
  %v462 = vld [vmem:[%s461] sm:$0xff]
  %463 = vrot.lane.b32.xlu0 %v462, 119
  %v464 = vpop.permute.xlu0 %463
  %vm465 = vcmask 7168
  %s466 = scalar_lea.vmem %s1, 137
  %467 = vst.msk [vmem:[%s466] ss:$16 sm:$0x3] %vm465, %v464
  %s468 = scalar_lea.vmem %s1, 137
  %469 = vst.msk [vmem:[%s468] ss:$16 sm:$0xc] %vm465, %v464
  %s470 = scalar_lea.vmem %s1, 137
  %471 = vst.msk [vmem:[%s470] ss:$16 sm:$0x30] %vm465, %v464
  %s472 = scalar_lea.vmem %s1, 137
  %473 = vst.msk [vmem:[%s472] ss:$16 sm:$0xc0] %vm465, %v464
  %s474 = scalar_lea.vmem %s0, 16
  %v475 = vld [vmem:[%s474] sm:$0xff]
  %476 = vrot.lane.b32.xlu0 %v475, 119
  %v477 = vpop.permute.xlu0 %476
  %vm478 = vcmask 7168
  %s479 = scalar_lea.vmem %s1, 265
  %480 = vst.msk [vmem:[%s479] ss:$16 sm:$0x3] %vm478, %v477
  %s481 = scalar_lea.vmem %s1, 265
  %482 = vst.msk [vmem:[%s481] ss:$16 sm:$0xc] %vm478, %v477
  %s483 = scalar_lea.vmem %s1, 265
  %484 = vst.msk [vmem:[%s483] ss:$16 sm:$0x30] %vm478, %v477
  %s485 = scalar_lea.vmem %s1, 265
  %486 = vst.msk [vmem:[%s485] ss:$16 sm:$0xc0] %vm478, %v477
  %s487 = scalar_lea.vmem %s0, 24
  %v488 = vld [vmem:[%s487] sm:$0xff]
  %489 = vrot.lane.b32.xlu0 %v488, 119
  %v490 = vpop.permute.xlu0 %489
  %vm491 = vcmask 7168
  %s492 = scalar_lea.vmem %s1, 393
  %493 = vst.msk [vmem:[%s492] ss:$16 sm:$0x3] %vm491, %v490
  %s494 = scalar_lea.vmem %s1, 393
  %495 = vst.msk [vmem:[%s494] ss:$16 sm:$0xc] %vm491, %v490
  %s496 = scalar_lea.vmem %s1, 393
  %497 = vst.msk [vmem:[%s496] ss:$16 sm:$0x30] %vm491, %v490
  %s498 = scalar_lea.vmem %s1, 393
  %499 = vst.msk [vmem:[%s498] ss:$16 sm:$0xc0] %vm491, %v490
  %v500 = vld [vmem:[%s0] sm:$0xff]
  %501 = vrot.lane.b32.xlu0 %v500, 118
  %v502 = vpop.permute.xlu0 %501
  %vm503 = vcmask 7168
  %s504 = scalar_lea.vmem %s1, 10
  %505 = vst.msk [vmem:[%s504] ss:$16 sm:$0x3] %vm503, %v502
  %s506 = scalar_lea.vmem %s1, 10
  %507 = vst.msk [vmem:[%s506] ss:$16 sm:$0xc] %vm503, %v502
  %s508 = scalar_lea.vmem %s1, 10
  %509 = vst.msk [vmem:[%s508] ss:$16 sm:$0x30] %vm503, %v502
  %s510 = scalar_lea.vmem %s1, 10
  %511 = vst.msk [vmem:[%s510] ss:$16 sm:$0xc0] %vm503, %v502
  %s512 = scalar_lea.vmem %s0, 8
  %v513 = vld [vmem:[%s512] sm:$0xff]
  %514 = vrot.lane.b32.xlu0 %v513, 118
  %v515 = vpop.permute.xlu0 %514
  %vm516 = vcmask 7168
  %s517 = scalar_lea.vmem %s1, 138
  %518 = vst.msk [vmem:[%s517] ss:$16 sm:$0x3] %vm516, %v515
  %s519 = scalar_lea.vmem %s1, 138
  %520 = vst.msk [vmem:[%s519] ss:$16 sm:$0xc] %vm516, %v515
  %s521 = scalar_lea.vmem %s1, 138
  %522 = vst.msk [vmem:[%s521] ss:$16 sm:$0x30] %vm516, %v515
  %s523 = scalar_lea.vmem %s1, 138
  %524 = vst.msk [vmem:[%s523] ss:$16 sm:$0xc0] %vm516, %v515
  %s525 = scalar_lea.vmem %s0, 16
  %v526 = vld [vmem:[%s525] sm:$0xff]
  %527 = vrot.lane.b32.xlu0 %v526, 118
  %v528 = vpop.permute.xlu0 %527
  %vm529 = vcmask 7168
  %s530 = scalar_lea.vmem %s1, 266
  %531 = vst.msk [vmem:[%s530] ss:$16 sm:$0x3] %vm529, %v528
  %s532 = scalar_lea.vmem %s1, 266
  %533 = vst.msk [vmem:[%s532] ss:$16 sm:$0xc] %vm529, %v528
  %s534 = scalar_lea.vmem %s1, 266
  %535 = vst.msk [vmem:[%s534] ss:$16 sm:$0x30] %vm529, %v528
  %s536 = scalar_lea.vmem %s1, 266
  %537 = vst.msk [vmem:[%s536] ss:$16 sm:$0xc0] %vm529, %v528
  %s538 = scalar_lea.vmem %s0, 24
  %v539 = vld [vmem:[%s538] sm:$0xff]
  %540 = vrot.lane.b32.xlu0 %v539, 118
  %v541 = vpop.permute.xlu0 %540
  %vm542 = vcmask 7168
  %s543 = scalar_lea.vmem %s1, 394
  %544 = vst.msk [vmem:[%s543] ss:$16 sm:$0x3] %vm542, %v541
  %s545 = scalar_lea.vmem %s1, 394
  %546 = vst.msk [vmem:[%s545] ss:$16 sm:$0xc] %vm542, %v541
  %s547 = scalar_lea.vmem %s1, 394
  %548 = vst.msk [vmem:[%s547] ss:$16 sm:$0x30] %vm542, %v541
  %s549 = scalar_lea.vmem %s1, 394
  %550 = vst.msk [vmem:[%s549] ss:$16 sm:$0xc0] %vm542, %v541
  %v551 = vld [vmem:[%s0] sm:$0xff]
  %552 = vrot.lane.b32.xlu0 %v551, 117
  %v553 = vpop.permute.xlu0 %552
  %vm554 = vcmask 7168
  %s555 = scalar_lea.vmem %s1, 11
  %556 = vst.msk [vmem:[%s555] ss:$16 sm:$0x3] %vm554, %v553
  %s557 = scalar_lea.vmem %s1, 11
  %558 = vst.msk [vmem:[%s557] ss:$16 sm:$0xc] %vm554, %v553
  %s559 = scalar_lea.vmem %s1, 11
  %560 = vst.msk [vmem:[%s559] ss:$16 sm:$0x30] %vm554, %v553
  %s561 = scalar_lea.vmem %s1, 11
  %562 = vst.msk [vmem:[%s561] ss:$16 sm:$0xc0] %vm554, %v553
  %s563 = scalar_lea.vmem %s0, 8
  %v564 = vld [vmem:[%s563] sm:$0xff]
  %565 = vrot.lane.b32.xlu0 %v564, 117
  %v566 = vpop.permute.xlu0 %565
  %vm567 = vcmask 7168
  %s568 = scalar_lea.vmem %s1, 139
  %569 = vst.msk [vmem:[%s568] ss:$16 sm:$0x3] %vm567, %v566
  %s570 = scalar_lea.vmem %s1, 139
  %571 = vst.msk [vmem:[%s570] ss:$16 sm:$0xc] %vm567, %v566
  %s572 = scalar_lea.vmem %s1, 139
  %573 = vst.msk [vmem:[%s572] ss:$16 sm:$0x30] %vm567, %v566
  %s574 = scalar_lea.vmem %s1, 139
  %575 = vst.msk [vmem:[%s574] ss:$16 sm:$0xc0] %vm567, %v566
  %s576 = scalar_lea.vmem %s0, 16
  %v577 = vld [vmem:[%s576] sm:$0xff]
  %578 = vrot.lane.b32.xlu0 %v577, 117
  %v579 = vpop.permute.xlu0 %578
  %vm580 = vcmask 7168
  %s581 = scalar_lea.vmem %s1, 267
  %582 = vst.msk [vmem:[%s581] ss:$16 sm:$0x3] %vm580, %v579
  %s583 = scalar_lea.vmem %s1, 267
  %584 = vst.msk [vmem:[%s583] ss:$16 sm:$0xc] %vm580, %v579
  %s585 = scalar_lea.vmem %s1, 267
  %586 = vst.msk [vmem:[%s585] ss:$16 sm:$0x30] %vm580, %v579
  %s587 = scalar_lea.vmem %s1, 267
  %588 = vst.msk [vmem:[%s587] ss:$16 sm:$0xc0] %vm580, %v579
  %s589 = scalar_lea.vmem %s0, 24
  %v590 = vld [vmem:[%s589] sm:$0xff]
  %591 = vrot.lane.b32.xlu0 %v590, 117
  %v592 = vpop.permute.xlu0 %591
  %vm593 = vcmask 7168
  %s594 = scalar_lea.vmem %s1, 395
  %595 = vst.msk [vmem:[%s594] ss:$16 sm:$0x3] %vm593, %v592
  %s596 = scalar_lea.vmem %s1, 395
  %597 = vst.msk [vmem:[%s596] ss:$16 sm:$0xc] %vm593, %v592
  %s598 = scalar_lea.vmem %s1, 395
  %599 = vst.msk [vmem:[%s598] ss:$16 sm:$0x30] %vm593, %v592
  %s600 = scalar_lea.vmem %s1, 395
  %601 = vst.msk [vmem:[%s600] ss:$16 sm:$0xc0] %vm593, %v592
  %v602 = vld [vmem:[%s0] sm:$0xff]
  %603 = vrot.lane.b32.xlu0 %v602, 116
  %v604 = vpop.permute.xlu0 %603
  %vm605 = vcmask 7168
  %s606 = scalar_lea.vmem %s1, 12
  %607 = vst.msk [vmem:[%s606] ss:$16 sm:$0x3] %vm605, %v604
  %s608 = scalar_lea.vmem %s1, 12
  %609 = vst.msk [vmem:[%s608] ss:$16 sm:$0xc] %vm605, %v604
  %s610 = scalar_lea.vmem %s1, 12
  %611 = vst.msk [vmem:[%s610] ss:$16 sm:$0x30] %vm605, %v604
  %s612 = scalar_lea.vmem %s1, 12
  %613 = vst.msk [vmem:[%s612] ss:$16 sm:$0xc0] %vm605, %v604
  %s614 = scalar_lea.vmem %s0, 8
  %v615 = vld [vmem:[%s614] sm:$0xff]
  %616 = vrot.lane.b32.xlu0 %v615, 116
  %v617 = vpop.permute.xlu0 %616
  %vm618 = vcmask 7168
  %s619 = scalar_lea.vmem %s1, 140
  %620 = vst.msk [vmem:[%s619] ss:$16 sm:$0x3] %vm618, %v617
  %s621 = scalar_lea.vmem %s1, 140
  %622 = vst.msk [vmem:[%s621] ss:$16 sm:$0xc] %vm618, %v617
  %s623 = scalar_lea.vmem %s1, 140
  %624 = vst.msk [vmem:[%s623] ss:$16 sm:$0x30] %vm618, %v617
  %s625 = scalar_lea.vmem %s1, 140
  %626 = vst.msk [vmem:[%s625] ss:$16 sm:$0xc0] %vm618, %v617
  %s627 = scalar_lea.vmem %s0, 16
  %v628 = vld [vmem:[%s627] sm:$0xff]
  %629 = vrot.lane.b32.xlu0 %v628, 116
  %v630 = vpop.permute.xlu0 %629
  %vm631 = vcmask 7168
  %s632 = scalar_lea.vmem %s1, 268
  %633 = vst.msk [vmem:[%s632] ss:$16 sm:$0x3] %vm631, %v630
  %s634 = scalar_lea.vmem %s1, 268
  %635 = vst.msk [vmem:[%s634] ss:$16 sm:$0xc] %vm631, %v630
  %s636 = scalar_lea.vmem %s1, 268
  %637 = vst.msk [vmem:[%s636] ss:$16 sm:$0x30] %vm631, %v630
  %s638 = scalar_lea.vmem %s1, 268
  %639 = vst.msk [vmem:[%s638] ss:$16 sm:$0xc0] %vm631, %v630
  %s640 = scalar_lea.vmem %s0, 24
  %v641 = vld [vmem:[%s640] sm:$0xff]
  %642 = vrot.lane.b32.xlu0 %v641, 116
  %v643 = vpop.permute.xlu0 %642
  %vm644 = vcmask 7168
  %s645 = scalar_lea.vmem %s1, 396
  %646 = vst.msk [vmem:[%s645] ss:$16 sm:$0x3] %vm644, %v643
  %s647 = scalar_lea.vmem %s1, 396
  %648 = vst.msk [vmem:[%s647] ss:$16 sm:$0xc] %vm644, %v643
  %s649 = scalar_lea.vmem %s1, 396
  %650 = vst.msk [vmem:[%s649] ss:$16 sm:$0x30] %vm644, %v643
  %s651 = scalar_lea.vmem %s1, 396
  %652 = vst.msk [vmem:[%s651] ss:$16 sm:$0xc0] %vm644, %v643
  %v653 = vld [vmem:[%s0] sm:$0xff]
  %654 = vrot.lane.b32.xlu0 %v653, 115
  %v655 = vpop.permute.xlu0 %654
  %vm656 = vcmask 7168
  %s657 = scalar_lea.vmem %s1, 13
  %658 = vst.msk [vmem:[%s657] ss:$16 sm:$0x3] %vm656, %v655
  %s659 = scalar_lea.vmem %s1, 13
  %660 = vst.msk [vmem:[%s659] ss:$16 sm:$0xc] %vm656, %v655
  %s661 = scalar_lea.vmem %s1, 13
  %662 = vst.msk [vmem:[%s661] ss:$16 sm:$0x30] %vm656, %v655
  %s663 = scalar_lea.vmem %s1, 13
  %664 = vst.msk [vmem:[%s663] ss:$16 sm:$0xc0] %vm656, %v655
  %s665 = scalar_lea.vmem %s0, 8
  %v666 = vld [vmem:[%s665] sm:$0xff]
  %667 = vrot.lane.b32.xlu0 %v666, 115
  %v668 = vpop.permute.xlu0 %667
  %vm669 = vcmask 7168
  %s670 = scalar_lea.vmem %s1, 141
  %671 = vst.msk [vmem:[%s670] ss:$16 sm:$0x3] %vm669, %v668
  %s672 = scalar_lea.vmem %s1, 141
  %673 = vst.msk [vmem:[%s672] ss:$16 sm:$0xc] %vm669, %v668
  %s674 = scalar_lea.vmem %s1, 141
  %675 = vst.msk [vmem:[%s674] ss:$16 sm:$0x30] %vm669, %v668
  %s676 = scalar_lea.vmem %s1, 141
  %677 = vst.msk [vmem:[%s676] ss:$16 sm:$0xc0] %vm669, %v668
  %s678 = scalar_lea.vmem %s0, 16
  %v679 = vld [vmem:[%s678] sm:$0xff]
  %680 = vrot.lane.b32.xlu0 %v679, 115
  %v681 = vpop.permute.xlu0 %680
  %vm682 = vcmask 7168
  %s683 = scalar_lea.vmem %s1, 269
  %684 = vst.msk [vmem:[%s683] ss:$16 sm:$0x3] %vm682, %v681
  %s685 = scalar_lea.vmem %s1, 269
  %686 = vst.msk [vmem:[%s685] ss:$16 sm:$0xc] %vm682, %v681
  %s687 = scalar_lea.vmem %s1, 269
  %688 = vst.msk [vmem:[%s687] ss:$16 sm:$0x30] %vm682, %v681
  %s689 = scalar_lea.vmem %s1, 269
  %690 = vst.msk [vmem:[%s689] ss:$16 sm:$0xc0] %vm682, %v681
  %s691 = scalar_lea.vmem %s0, 24
  %v692 = vld [vmem:[%s691] sm:$0xff]
  %693 = vrot.lane.b32.xlu0 %v692, 115
  %v694 = vpop.permute.xlu0 %693
  %vm695 = vcmask 7168
  %s696 = scalar_lea.vmem %s1, 397
  %697 = vst.msk [vmem:[%s696] ss:$16 sm:$0x3] %vm695, %v694
  %s698 = scalar_lea.vmem %s1, 397
  %699 = vst.msk [vmem:[%s698] ss:$16 sm:$0xc] %vm695, %v694
  %s700 = scalar_lea.vmem %s1, 397
  %701 = vst.msk [vmem:[%s700] ss:$16 sm:$0x30] %vm695, %v694
  %s702 = scalar_lea.vmem %s1, 397
  %703 = vst.msk [vmem:[%s702] ss:$16 sm:$0xc0] %vm695, %v694
  %v704 = vld [vmem:[%s0] sm:$0xff]
  %705 = vrot.lane.b32.xlu0 %v704, 114
  %v706 = vpop.permute.xlu0 %705
  %vm707 = vcmask 7168
  %s708 = scalar_lea.vmem %s1, 14
  %709 = vst.msk [vmem:[%s708] ss:$16 sm:$0x3] %vm707, %v706
  %s710 = scalar_lea.vmem %s1, 14
  %711 = vst.msk [vmem:[%s710] ss:$16 sm:$0xc] %vm707, %v706
  %s712 = scalar_lea.vmem %s1, 14
  %713 = vst.msk [vmem:[%s712] ss:$16 sm:$0x30] %vm707, %v706
  %s714 = scalar_lea.vmem %s1, 14
  %715 = vst.msk [vmem:[%s714] ss:$16 sm:$0xc0] %vm707, %v706
  %s716 = scalar_lea.vmem %s0, 8
  %v717 = vld [vmem:[%s716] sm:$0xff]
  %718 = vrot.lane.b32.xlu0 %v717, 114
  %v719 = vpop.permute.xlu0 %718
  %vm720 = vcmask 7168
  %s721 = scalar_lea.vmem %s1, 142
  %722 = vst.msk [vmem:[%s721] ss:$16 sm:$0x3] %vm720, %v719
  %s723 = scalar_lea.vmem %s1, 142
  %724 = vst.msk [vmem:[%s723] ss:$16 sm:$0xc] %vm720, %v719
  %s725 = scalar_lea.vmem %s1, 142
  %726 = vst.msk [vmem:[%s725] ss:$16 sm:$0x30] %vm720, %v719
  %s727 = scalar_lea.vmem %s1, 142
  %728 = vst.msk [vmem:[%s727] ss:$16 sm:$0xc0] %vm720, %v719
  %s729 = scalar_lea.vmem %s0, 16
  %v730 = vld [vmem:[%s729] sm:$0xff]
  %731 = vrot.lane.b32.xlu0 %v730, 114
  %v732 = vpop.permute.xlu0 %731
  %vm733 = vcmask 7168
  %s734 = scalar_lea.vmem %s1, 270
  %735 = vst.msk [vmem:[%s734] ss:$16 sm:$0x3] %vm733, %v732
  %s736 = scalar_lea.vmem %s1, 270
  %737 = vst.msk [vmem:[%s736] ss:$16 sm:$0xc] %vm733, %v732
  %s738 = scalar_lea.vmem %s1, 270
  %739 = vst.msk [vmem:[%s738] ss:$16 sm:$0x30] %vm733, %v732
  %s740 = scalar_lea.vmem %s1, 270
  %741 = vst.msk [vmem:[%s740] ss:$16 sm:$0xc0] %vm733, %v732
  %s742 = scalar_lea.vmem %s0, 24
  %v743 = vld [vmem:[%s742] sm:$0xff]
  %744 = vrot.lane.b32.xlu0 %v743, 114
  %v745 = vpop.permute.xlu0 %744
  %vm746 = vcmask 7168
  %s747 = scalar_lea.vmem %s1, 398
  %748 = vst.msk [vmem:[%s747] ss:$16 sm:$0x3] %vm746, %v745
  %s749 = scalar_lea.vmem %s1, 398
  %750 = vst.msk [vmem:[%s749] ss:$16 sm:$0xc] %vm746, %v745
  %s751 = scalar_lea.vmem %s1, 398
  %752 = vst.msk [vmem:[%s751] ss:$16 sm:$0x30] %vm746, %v745
  %s753 = scalar_lea.vmem %s1, 398
  %754 = vst.msk [vmem:[%s753] ss:$16 sm:$0xc0] %vm746, %v745
  %v755 = vld [vmem:[%s0] sm:$0xff]
  %756 = vrot.lane.b32.xlu0 %v755, 113
  %v757 = vpop.permute.xlu0 %756
  %vm758 = vcmask 7168
  %s759 = scalar_lea.vmem %s1, 15
  %760 = vst.msk [vmem:[%s759] ss:$16 sm:$0x3] %vm758, %v757
  %s761 = scalar_lea.vmem %s1, 15
  %762 = vst.msk [vmem:[%s761] ss:$16 sm:$0xc] %vm758, %v757
  %s763 = scalar_lea.vmem %s1, 15
  %764 = vst.msk [vmem:[%s763] ss:$16 sm:$0x30] %vm758, %v757
  %s765 = scalar_lea.vmem %s1, 15
  %766 = vst.msk [vmem:[%s765] ss:$16 sm:$0xc0] %vm758, %v757
  %s767 = scalar_lea.vmem %s0, 8
  %v768 = vld [vmem:[%s767] sm:$0xff]
  %769 = vrot.lane.b32.xlu0 %v768, 113
  %v770 = vpop.permute.xlu0 %769
  %vm771 = vcmask 7168
  %s772 = scalar_lea.vmem %s1, 143
  %773 = vst.msk [vmem:[%s772] ss:$16 sm:$0x3] %vm771, %v770
  %s774 = scalar_lea.vmem %s1, 143
  %775 = vst.msk [vmem:[%s774] ss:$16 sm:$0xc] %vm771, %v770
  %s776 = scalar_lea.vmem %s1, 143
  %777 = vst.msk [vmem:[%s776] ss:$16 sm:$0x30] %vm771, %v770
  %s778 = scalar_lea.vmem %s1, 143
  %779 = vst.msk [vmem:[%s778] ss:$16 sm:$0xc0] %vm771, %v770
  %s780 = scalar_lea.vmem %s0, 16
  %v781 = vld [vmem:[%s780] sm:$0xff]
  %782 = vrot.lane.b32.xlu0 %v781, 113
  %v783 = vpop.permute.xlu0 %782
  %vm784 = vcmask 7168
  %s785 = scalar_lea.vmem %s1, 271
  %786 = vst.msk [vmem:[%s785] ss:$16 sm:$0x3] %vm784, %v783
  %s787 = scalar_lea.vmem %s1, 271
  %788 = vst.msk [vmem:[%s787] ss:$16 sm:$0xc] %vm784, %v783
  %s789 = scalar_lea.vmem %s1, 271
  %790 = vst.msk [vmem:[%s789] ss:$16 sm:$0x30] %vm784, %v783
  %s791 = scalar_lea.vmem %s1, 271
  %792 = vst.msk [vmem:[%s791] ss:$16 sm:$0xc0] %vm784, %v783
  %s793 = scalar_lea.vmem %s0, 24
  %v794 = vld [vmem:[%s793] sm:$0xff]
  %795 = vrot.lane.b32.xlu0 %v794, 113
  %v796 = vpop.permute.xlu0 %795
  %vm797 = vcmask 7168
  %s798 = scalar_lea.vmem %s1, 399
  %799 = vst.msk [vmem:[%s798] ss:$16 sm:$0x3] %vm797, %v796
  %s800 = scalar_lea.vmem %s1, 399
  %801 = vst.msk [vmem:[%s800] ss:$16 sm:$0xc] %vm797, %v796
  %s802 = scalar_lea.vmem %s1, 399
  %803 = vst.msk [vmem:[%s802] ss:$16 sm:$0x30] %vm797, %v796
  %s804 = scalar_lea.vmem %s1, 399
  %805 = vst.msk [vmem:[%s804] ss:$16 sm:$0xc0] %vm797, %v796

// kernel: ppgn_forward.1
$region0: #{ppgn_forward.1}
  #allocation0 [shape = 'u32[]', space=smem, size = 0x4, offset = 0x4, fixed_abs, tag = 'smem constant byte address 0x4 - core index']
  #allocation1 [shape = 'u32[144,128]{1,0:T(1,128)}', space=vmem, size = 0x12000, scoped, tag = 'internal scratch']
  #allocation2 [shape = 'f32[1,1]{1,0:T(1,128)S(1)}', space=vmem, size = 0x200, scoped, tag = 'scoped memory for ppgn_forward.1']
  %s0 = inlined_call_operand.vmem [shape: f32[2,256,4], index: 0, kind: input, shape index: {}]
  %s1 = inlined_call_operand.vmem [shape: f32[2,256,1], index: 1, kind: input, shape index: {}]
  %s2 = inlined_call_operand.vmem [shape: f32[4,64], index: 2, kind: input, shape index: {}]
  %s3 = inlined_call_operand.vmem [shape: f32[1,64], index: 3, kind: input, shape index: {}]
  %s4 = inlined_call_operand.vmem [shape: f32[32,32], index: 4, kind: input, shape index: {}]
  %s5 = inlined_call_operand.vmem [shape: f32[4,32], index: 5, kind: input, shape index: {}]
  %s6 = inlined_call_operand.vmem [shape: f32[1,32], index: 6, kind: input, shape index: {}]
  %s7 = inlined_call_operand.vmem [shape: f32[32,64], index: 7, kind: input, shape index: {}]
  %s8 = inlined_call_operand.vmem [shape: f32[1,64], index: 8, kind: input, shape index: {}]
  %s9 = inlined_call_operand.vmem [shape: f32[32,32], index: 9, kind: input, shape index: {}]
  %s10 = inlined_call_operand.vmem [shape: f32[32,32], index: 10, kind: input, shape index: {}]
  %s11 = inlined_call_operand.vmem [shape: f32[1,32], index: 11, kind: input, shape index: {}]
  %s12 = inlined_call_operand.vmem [shape: f32[32,64], index: 12, kind: input, shape index: {}]
  %s13 = inlined_call_operand.vmem [shape: f32[1,64], index: 13, kind: input, shape index: {}]
  %s14 = inlined_call_operand.vmem [shape: f32[32,32], index: 14, kind: input, shape index: {}]
  %s15 = inlined_call_operand.vmem [shape: f32[32,32], index: 15, kind: input, shape index: {}]
  %s16 = inlined_call_operand.vmem [shape: f32[1,32], index: 16, kind: input, shape index: {}]
  %s17 = inlined_call_operand.vmem [shape: f32[96,64], index: 17, kind: input, shape index: {}]
  %s18 = inlined_call_operand.vmem [shape: f32[1,64], index: 18, kind: input, shape index: {}]
  %s19 = inlined_call_operand.vmem [shape: f32[64,1], index: 19, kind: input, shape index: {}]
  %s20 = inlined_call_operand.<no memory space> [shape: f32[1,1], index: 20, kind: input, shape index: {}]
  %s21 = inlined_call_operand.vmem [shape: f32[2,1,1], index: 21, kind: output, shape index: {}]
  %s22 = sld [smem:[#allocation0]]
  $region117: #{ppgn_forward.1} parent=0
    _
  %s24 = ssub.s32 1, %s22
  %s25 = scalar_select 0, %s24, %s22
  %v26 = vstv %s20
  %27 = vst [vmem:[#allocation2] sm:$0x1] %v26
  loop: start=0, step=1, limit=4
  $region2: #{ppgn_forward.1} parent=0 // loop_pre_header
    _
  $region3: #{ppgn_forward.1} parent=0 // loop_header
    %s29 = sphi 0, %s33
    %p30 = scmp.ge.s32.totalorder %s29, 4
    %s39 = sphi 0, %s41
    %s42 = sphi 0, %s39
    %s43 = sphi 0, %s42
    %s59 = sphi 0, %s43
    %s65 = sphi 0, %s67
    %s68 = sphi 0, %s65
    %s69 = sphi 0, %s68
    %s85 = sphi 0, %s69
    %s89 = sphi 0, %s89
    %s91 = sphi 0, %s89
    %s92 = sphi 0, %s91
    %s106 = sphi 0, %s92
    %s110 = sphi 0, %s110
    %s112 = sphi 0, %s110
    %s113 = sphi 0, %s112
    %s127 = sphi 0, %s113
    %s131 = sphi 0, %s131
    %s133 = sphi 0, %s131
    %s134 = sphi 0, %s133
    %s148 = sphi 0, %s134
    %s152 = sphi 0, %s152
    %s154 = sphi 0, %s152
    %s155 = sphi 0, %s154
    %s169 = sphi 0, %s155
    %s173 = sphi 0, %s173
    %s175 = sphi 0, %s173
    %s176 = sphi 0, %s175
    %s190 = sphi 0, %s176
    %s194 = sphi 0, %s194
    %s196 = sphi 0, %s194
    %s197 = sphi 0, %s196
    %s211 = sphi 0, %s197
    %s215 = sphi 0, %s215
    %s217 = sphi 0, %s215
    %s218 = sphi 0, %s217
    %s232 = sphi 0, %s218
    %s236 = sphi 0, %s236
    %s238 = sphi 0, %s236
    %s239 = sphi 0, %s238
    %s253 = sphi 0, %s239
    %s257 = sphi 0, %s257
    %s259 = sphi 0, %s257
    %s260 = sphi 0, %s259
    %s274 = sphi 0, %s260
    %s278 = sphi 0, %s278
    %s280 = sphi 0, %s278
    %s281 = sphi 0, %s280
    %s295 = sphi 0, %s281
    %s299 = sphi 0, %s299
    %s301 = sphi 0, %s299
    %s302 = sphi 0, %s301
    %s316 = sphi 0, %s302
    %s320 = sphi 0, %s320
    %s322 = sphi 0, %s320
    %s323 = sphi 0, %s322
    %s337 = sphi 0, %s323
    %s341 = sphi 0, %s341
    %s343 = sphi 0, %s341
    %s344 = sphi 0, %s343
    %s358 = sphi 0, %s344
    %s362 = sphi 0, %s362
    %s364 = sphi 0, %s362
    %s365 = sphi 0, %s364
    %s379 = sphi 0, %s365
    %s383 = sphi 0, %s383
    %s385 = sphi 0, %s383
    %s386 = sphi 0, %s385
    %s400 = sphi 0, %s386
    %s404 = sphi 0, %s404
    %s406 = sphi 0, %s404
    %s407 = sphi 0, %s406
    %s421 = sphi 0, %s407
    %s425 = sphi 0, %s425
    %s427 = sphi 0, %s425
    %s428 = sphi 0, %s427
    %s442 = sphi 0, %s428
    %s446 = sphi 0, %s446
    %s448 = sphi 0, %s446
    %s449 = sphi 0, %s448
    %s463 = sphi 0, %s449
    %s467 = sphi 0, %s467
    %s469 = sphi 0, %s467
    %s470 = sphi 0, %s469
    %s484 = sphi 0, %s470
    %s490 = sphi 0, %s492
    %s493 = sphi 0, %s490
    %s494 = sphi 0, %s493
    %s510 = sphi 0, %s494
  $region4: #{ppgn_forward.1} parent=0 // loop_header_branch
    %32 = sbr.rel (%p30) target = $region8
  $region5: #{ppgn_forward.1} parent=0 // loop_body
    %s34 = ssub.s32 %s29, 1
    %s35 = ssub.s32 %s29, 2
    %s36 = sadd.s32 %s29, 1
    %s37 = ssub.s32 %s29, %s36
    %p38 = scmp.eq.s32.totalorder %s37, 0
    %s40 = sadd.s32 %s39, 1
    %s41 = scalar_select %p38, %s39, %s40
    %p44 = pneg %p38
    %p45 = scmp.eq.s32.totalorder %s29, 1
    %p46 = por %p44, %p45
    %p47 = scmp.ne.s32.totalorder %s39, %s42
    %p48 = scmp.eq.s32.totalorder %s29, 0
    %p49 = por %p47, %p48
    %p50 = scmp.ne.s32.totalorder %s39, %s42
    %p51 = scmp.eq.s32.totalorder %s34, 1
    %p52 = por %p50, %p51
    %p53 = scmp.ne.s32.totalorder %s42, %s43
    %p54 = scmp.eq.s32.totalorder %s34, 0
    %p55 = por %p53, %p54
    %p56 = scmp.ne.s32.totalorder %s42, %s43
    %p57 = scmp.eq.s32.totalorder %s35, 1
    %p58 = por %p56, %p57
    %p60 = scmp.ne.s32.totalorder %s43, %s59
    %p61 = scmp.eq.s32.totalorder %s35, 0
    %p62 = por %p60, %p61
    %s63 = ssub.s32 %s29, %s36
    %p64 = scmp.eq.s32.totalorder %s63, 0
    %s66 = sadd.s32 %s65, 1
    %s67 = scalar_select %p64, %s65, %s66
    %p70 = pneg %p64
    %p71 = scmp.eq.s32.totalorder %s29, 1
    %p72 = por %p70, %p71
    %p73 = scmp.ne.s32.totalorder %s65, %s68
    %p74 = scmp.eq.s32.totalorder %s29, 0
    %p75 = por %p73, %p74
    %p76 = scmp.ne.s32.totalorder %s65, %s68
    %p77 = scmp.eq.s32.totalorder %s34, 1
    %p78 = por %p76, %p77
    %p79 = scmp.ne.s32.totalorder %s68, %s69
    %p80 = scmp.eq.s32.totalorder %s34, 0
    %p81 = por %p79, %p80
    %p82 = scmp.ne.s32.totalorder %s68, %s69
    %p83 = scmp.eq.s32.totalorder %s35, 1
    %p84 = por %p82, %p83
    %p86 = scmp.ne.s32.totalorder %s69, %s85
    %p87 = scmp.eq.s32.totalorder %s35, 0
    %p88 = por %p86, %p87
    %s90 = sadd.s32 %s89, 1
    %p93 = scmp.eq.s32.totalorder %s29, 1
    %p94 = scmp.ne.s32.totalorder %s89, %s91
    %p95 = scmp.eq.s32.totalorder %s29, 0
    %p96 = por %p94, %p95
    %p97 = scmp.ne.s32.totalorder %s89, %s91
    %p98 = scmp.eq.s32.totalorder %s34, 1
    %p99 = por %p97, %p98
    %p100 = scmp.ne.s32.totalorder %s91, %s92
    %p101 = scmp.eq.s32.totalorder %s34, 0
    %p102 = por %p100, %p101
    %p103 = scmp.ne.s32.totalorder %s91, %s92
    %p104 = scmp.eq.s32.totalorder %s35, 1
    %p105 = por %p103, %p104
    %p107 = scmp.ne.s32.totalorder %s92, %s106
    %p108 = scmp.eq.s32.totalorder %s35, 0
    %p109 = por %p107, %p108
    %s111 = sadd.s32 %s110, 1
    %p114 = scmp.eq.s32.totalorder %s29, 1
    %p115 = scmp.ne.s32.totalorder %s110, %s112
    %p116 = scmp.eq.s32.totalorder %s29, 0
    %p117 = por %p115, %p116
    %p118 = scmp.ne.s32.totalorder %s110, %s112
    %p119 = scmp.eq.s32.totalorder %s34, 1
    %p120 = por %p118, %p119
    %p121 = scmp.ne.s32.totalorder %s112, %s113
    %p122 = scmp.eq.s32.totalorder %s34, 0
    %p123 = por %p121, %p122
    %p124 = scmp.ne.s32.totalorder %s112, %s113
    %p125 = scmp.eq.s32.totalorder %s35, 1
    %p126 = por %p124, %p125
    %p128 = scmp.ne.s32.totalorder %s113, %s127
    %p129 = scmp.eq.s32.totalorder %s35, 0
    %p130 = por %p128, %p129
    %s132 = sadd.s32 %s131, 1
    %p135 = scmp.eq.s32.totalorder %s29, 1
    %p136 = scmp.ne.s32.totalorder %s131, %s133
    %p137 = scmp.eq.s32.totalorder %s29, 0
    %p138 = por %p136, %p137
    %p139 = scmp.ne.s32.totalorder %s131, %s133
    %p140 = scmp.eq.s32.totalorder %s34, 1
    %p141 = por %p139, %p140
    %p142 = scmp.ne.s32.totalorder %s133, %s134
    %p143 = scmp.eq.s32.totalorder %s34, 0
    %p144 = por %p142, %p143
    %p145 = scmp.ne.s32.totalorder %s133, %s134
    %p146 = scmp.eq.s32.totalorder %s35, 1
    %p147 = por %p145, %p146
    %p149 = scmp.ne.s32.totalorder %s134, %s148
    %p150 = scmp.eq.s32.totalorder %s35, 0
    %p151 = por %p149, %p150
    %s153 = sadd.s32 %s152, 1
    %p156 = scmp.eq.s32.totalorder %s29, 1
    %p157 = scmp.ne.s32.totalorder %s152, %s154
    %p158 = scmp.eq.s32.totalorder %s29, 0
    %p159 = por %p157, %p158
    %p160 = scmp.ne.s32.totalorder %s152, %s154
    %p161 = scmp.eq.s32.totalorder %s34, 1
    %p162 = por %p160, %p161
    %p163 = scmp.ne.s32.totalorder %s154, %s155
    %p164 = scmp.eq.s32.totalorder %s34, 0
    %p165 = por %p163, %p164
    %p166 = scmp.ne.s32.totalorder %s154, %s155
    %p167 = scmp.eq.s32.totalorder %s35, 1
    %p168 = por %p166, %p167
    %p170 = scmp.ne.s32.totalorder %s155, %s169
    %p171 = scmp.eq.s32.totalorder %s35, 0
    %p172 = por %p170, %p171
    %s174 = sadd.s32 %s173, 1
    %p177 = scmp.eq.s32.totalorder %s29, 1
    %p178 = scmp.ne.s32.totalorder %s173, %s175
    %p179 = scmp.eq.s32.totalorder %s29, 0
    %p180 = por %p178, %p179
    %p181 = scmp.ne.s32.totalorder %s173, %s175
    %p182 = scmp.eq.s32.totalorder %s34, 1
    %p183 = por %p181, %p182
    %p184 = scmp.ne.s32.totalorder %s175, %s176
    %p185 = scmp.eq.s32.totalorder %s34, 0
    %p186 = por %p184, %p185
    %p187 = scmp.ne.s32.totalorder %s175, %s176
    %p188 = scmp.eq.s32.totalorder %s35, 1
    %p189 = por %p187, %p188
    %p191 = scmp.ne.s32.totalorder %s176, %s190
    %p192 = scmp.eq.s32.totalorder %s35, 0
    %p193 = por %p191, %p192
    %s195 = sadd.s32 %s194, 1
    %p198 = scmp.eq.s32.totalorder %s29, 1
    %p199 = scmp.ne.s32.totalorder %s194, %s196
    %p200 = scmp.eq.s32.totalorder %s29, 0
    %p201 = por %p199, %p200
    %p202 = scmp.ne.s32.totalorder %s194, %s196
    %p203 = scmp.eq.s32.totalorder %s34, 1
    %p204 = por %p202, %p203
    %p205 = scmp.ne.s32.totalorder %s196, %s197
    %p206 = scmp.eq.s32.totalorder %s34, 0
    %p207 = por %p205, %p206
    %p208 = scmp.ne.s32.totalorder %s196, %s197
    %p209 = scmp.eq.s32.totalorder %s35, 1
    %p210 = por %p208, %p209
    %p212 = scmp.ne.s32.totalorder %s197, %s211
    %p213 = scmp.eq.s32.totalorder %s35, 0
    %p214 = por %p212, %p213
    %s216 = sadd.s32 %s215, 1
    %p219 = scmp.eq.s32.totalorder %s29, 1
    %p220 = scmp.ne.s32.totalorder %s215, %s217
    %p221 = scmp.eq.s32.totalorder %s29, 0
    %p222 = por %p220, %p221
    %p223 = scmp.ne.s32.totalorder %s215, %s217
    %p224 = scmp.eq.s32.totalorder %s34, 1
    %p225 = por %p223, %p224
    %p226 = scmp.ne.s32.totalorder %s217, %s218
    %p227 = scmp.eq.s32.totalorder %s34, 0
    %p228 = por %p226, %p227
    %p229 = scmp.ne.s32.totalorder %s217, %s218
    %p230 = scmp.eq.s32.totalorder %s35, 1
    %p231 = por %p229, %p230
    %p233 = scmp.ne.s32.totalorder %s218, %s232
    %p234 = scmp.eq.s32.totalorder %s35, 0
    %p235 = por %p233, %p234
    %s237 = sadd.s32 %s236, 1
    %p240 = scmp.eq.s32.totalorder %s29, 1
    %p241 = scmp.ne.s32.totalorder %s236, %s238
    %p242 = scmp.eq.s32.totalorder %s29, 0
    %p243 = por %p241, %p242
    %p244 = scmp.ne.s32.totalorder %s236, %s238
    %p245 = scmp.eq.s32.totalorder %s34, 1
    %p246 = por %p244, %p245
    %p247 = scmp.ne.s32.totalorder %s238, %s239
    %p248 = scmp.eq.s32.totalorder %s34, 0
    %p249 = por %p247, %p248
    %p250 = scmp.ne.s32.totalorder %s238, %s239
    %p251 = scmp.eq.s32.totalorder %s35, 1
    %p252 = por %p250, %p251
    %p254 = scmp.ne.s32.totalorder %s239, %s253
    %p255 = scmp.eq.s32.totalorder %s35, 0
    %p256 = por %p254, %p255
    %s258 = sadd.s32 %s257, 1
    %p261 = scmp.eq.s32.totalorder %s29, 1
    %p262 = scmp.ne.s32.totalorder %s257, %s259
    %p263 = scmp.eq.s32.totalorder %s29, 0
    %p264 = por %p262, %p263
    %p265 = scmp.ne.s32.totalorder %s257, %s259
    %p266 = scmp.eq.s32.totalorder %s34, 1
    %p267 = por %p265, %p266
    %p268 = scmp.ne.s32.totalorder %s259, %s260
    %p269 = scmp.eq.s32.totalorder %s34, 0
    %p270 = por %p268, %p269
    %p271 = scmp.ne.s32.totalorder %s259, %s260
    %p272 = scmp.eq.s32.totalorder %s35, 1
    %p273 = por %p271, %p272
    %p275 = scmp.ne.s32.totalorder %s260, %s274
    %p276 = scmp.eq.s32.totalorder %s35, 0
    %p277 = por %p275, %p276
    %s279 = sadd.s32 %s278, 1
    %p282 = scmp.eq.s32.totalorder %s29, 1
    %p283 = scmp.ne.s32.totalorder %s278, %s280
    %p284 = scmp.eq.s32.totalorder %s29, 0
    %p285 = por %p283, %p284
    %p286 = scmp.ne.s32.totalorder %s278, %s280
    %p287 = scmp.eq.s32.totalorder %s34, 1
    %p288 = por %p286, %p287
    %p289 = scmp.ne.s32.totalorder %s280, %s281
    %p290 = scmp.eq.s32.totalorder %s34, 0
    %p291 = por %p289, %p290
    %p292 = scmp.ne.s32.totalorder %s280, %s281
    %p293 = scmp.eq.s32.totalorder %s35, 1
    %p294 = por %p292, %p293
    %p296 = scmp.ne.s32.totalorder %s281, %s295
    %p297 = scmp.eq.s32.totalorder %s35, 0
    %p298 = por %p296, %p297
    %s300 = sadd.s32 %s299, 1
    %p303 = scmp.eq.s32.totalorder %s29, 1
    %p304 = scmp.ne.s32.totalorder %s299, %s301
    %p305 = scmp.eq.s32.totalorder %s29, 0
    %p306 = por %p304, %p305
    %p307 = scmp.ne.s32.totalorder %s299, %s301
    %p308 = scmp.eq.s32.totalorder %s34, 1
    %p309 = por %p307, %p308
    %p310 = scmp.ne.s32.totalorder %s301, %s302
    %p311 = scmp.eq.s32.totalorder %s34, 0
    %p312 = por %p310, %p311
    %p313 = scmp.ne.s32.totalorder %s301, %s302
    %p314 = scmp.eq.s32.totalorder %s35, 1
    %p315 = por %p313, %p314
    %p317 = scmp.ne.s32.totalorder %s302, %s316
    %p318 = scmp.eq.s32.totalorder %s35, 0
    %p319 = por %p317, %p318
    %s321 = sadd.s32 %s320, 1
    %p324 = scmp.eq.s32.totalorder %s29, 1
    %p325 = scmp.ne.s32.totalorder %s320, %s322
    %p326 = scmp.eq.s32.totalorder %s29, 0
    %p327 = por %p325, %p326
    %p328 = scmp.ne.s32.totalorder %s320, %s322
    %p329 = scmp.eq.s32.totalorder %s34, 1
    %p330 = por %p328, %p329
    %p331 = scmp.ne.s32.totalorder %s322, %s323
    %p332 = scmp.eq.s32.totalorder %s34, 0
    %p333 = por %p331, %p332
    %p334 = scmp.ne.s32.totalorder %s322, %s323
    %p335 = scmp.eq.s32.totalorder %s35, 1
    %p336 = por %p334, %p335
    %p338 = scmp.ne.s32.totalorder %s323, %s337
    %p339 = scmp.eq.s32.totalorder %s35, 0
    %p340 = por %p338, %p339
    %s342 = sadd.s32 %s341, 1
    %p345 = scmp.eq.s32.totalorder %s29, 1
    %p346 = scmp.ne.s32.totalorder %s341, %s343
    %p347 = scmp.eq.s32.totalorder %s29, 0
    %p348 = por %p346, %p347
    %p349 = scmp.ne.s32.totalorder %s341, %s343
    %p350 = scmp.eq.s32.totalorder %s34, 1
    %p351 = por %p349, %p350
    %p352 = scmp.ne.s32.totalorder %s343, %s344
    %p353 = scmp.eq.s32.totalorder %s34, 0
    %p354 = por %p352, %p353
    %p355 = scmp.ne.s32.totalorder %s343, %s344
    %p356 = scmp.eq.s32.totalorder %s35, 1
    %p357 = por %p355, %p356
    %p359 = scmp.ne.s32.totalorder %s344, %s358
    %p360 = scmp.eq.s32.totalorder %s35, 0
    %p361 = por %p359, %p360
    %s363 = sadd.s32 %s362, 1
    %p366 = scmp.eq.s32.totalorder %s29, 1
    %p367 = scmp.ne.s32.totalorder %s362, %s364
    %p368 = scmp.eq.s32.totalorder %s29, 0
    %p369 = por %p367, %p368
    %p370 = scmp.ne.s32.totalorder %s362, %s364
    %p371 = scmp.eq.s32.totalorder %s34, 1
    %p372 = por %p370, %p371
    %p373 = scmp.ne.s32.totalorder %s364, %s365
    %p374 = scmp.eq.s32.totalorder %s34, 0
    %p375 = por %p373, %p374
    %p376 = scmp.ne.s32.totalorder %s364, %s365
    %p377 = scmp.eq.s32.totalorder %s35, 1
    %p378 = por %p376, %p377
    %p380 = scmp.ne.s32.totalorder %s365, %s379
    %p381 = scmp.eq.s32.totalorder %s35, 0
    %p382 = por %p380, %p381
    %s384 = sadd.s32 %s383, 1
    %p387 = scmp.eq.s32.totalorder %s29, 1
    %p388 = scmp.ne.s32.totalorder %s383, %s385
    %p389 = scmp.eq.s32.totalorder %s29, 0
    %p390 = por %p388, %p389
    %p391 = scmp.ne.s32.totalorder %s383, %s385
    %p392 = scmp.eq.s32.totalorder %s34, 1
    %p393 = por %p391, %p392
    %p394 = scmp.ne.s32.totalorder %s385, %s386
    %p395 = scmp.eq.s32.totalorder %s34, 0
    %p396 = por %p394, %p395
    %p397 = scmp.ne.s32.totalorder %s385, %s386
    %p398 = scmp.eq.s32.totalorder %s35, 1
    %p399 = por %p397, %p398
    %p401 = scmp.ne.s32.totalorder %s386, %s400
    %p402 = scmp.eq.s32.totalorder %s35, 0
    %p403 = por %p401, %p402
    %s405 = sadd.s32 %s404, 1
    %p408 = scmp.eq.s32.totalorder %s29, 1
    %p409 = scmp.ne.s32.totalorder %s404, %s406
    %p410 = scmp.eq.s32.totalorder %s29, 0
    %p411 = por %p409, %p410
    %p412 = scmp.ne.s32.totalorder %s404, %s406
    %p413 = scmp.eq.s32.totalorder %s34, 1
    %p414 = por %p412, %p413
    %p415 = scmp.ne.s32.totalorder %s406, %s407
    %p416 = scmp.eq.s32.totalorder %s34, 0
    %p417 = por %p415, %p416
    %p418 = scmp.ne.s32.totalorder %s406, %s407
    %p419 = scmp.eq.s32.totalorder %s35, 1
    %p420 = por %p418, %p419
    %p422 = scmp.ne.s32.totalorder %s407, %s421
    %p423 = scmp.eq.s32.totalorder %s35, 0
    %p424 = por %p422, %p423
    %s426 = sadd.s32 %s425, 1
    %p429 = scmp.eq.s32.totalorder %s29, 1
    %p430 = scmp.ne.s32.totalorder %s425, %s427
    %p431 = scmp.eq.s32.totalorder %s29, 0
    %p432 = por %p430, %p431
    %p433 = scmp.ne.s32.totalorder %s425, %s427
    %p434 = scmp.eq.s32.totalorder %s34, 1
    %p435 = por %p433, %p434
    %p436 = scmp.ne.s32.totalorder %s427, %s428
    %p437 = scmp.eq.s32.totalorder %s34, 0
    %p438 = por %p436, %p437
    %p439 = scmp.ne.s32.totalorder %s427, %s428
    %p440 = scmp.eq.s32.totalorder %s35, 1
    %p441 = por %p439, %p440
    %p443 = scmp.ne.s32.totalorder %s428, %s442
    %p444 = scmp.eq.s32.totalorder %s35, 0
    %p445 = por %p443, %p444
    %s447 = sadd.s32 %s446, 1
    %p450 = scmp.eq.s32.totalorder %s29, 1
    %p451 = scmp.ne.s32.totalorder %s446, %s448
    %p452 = scmp.eq.s32.totalorder %s29, 0
    %p453 = por %p451, %p452
    %p454 = scmp.ne.s32.totalorder %s446, %s448
    %p455 = scmp.eq.s32.totalorder %s34, 1
    %p456 = por %p454, %p455
    %p457 = scmp.ne.s32.totalorder %s448, %s449
    %p458 = scmp.eq.s32.totalorder %s34, 0
    %p459 = por %p457, %p458
    %p460 = scmp.ne.s32.totalorder %s448, %s449
    %p461 = scmp.eq.s32.totalorder %s35, 1
    %p462 = por %p460, %p461
    %p464 = scmp.ne.s32.totalorder %s449, %s463
    %p465 = scmp.eq.s32.totalorder %s35, 0
    %p466 = por %p464, %p465
    %s468 = sadd.s32 %s467, 1
    %p471 = scmp.eq.s32.totalorder %s29, 1
    %p472 = scmp.ne.s32.totalorder %s467, %s469
    %p473 = scmp.eq.s32.totalorder %s29, 0
    %p474 = por %p472, %p473
    %p475 = scmp.ne.s32.totalorder %s467, %s469
    %p476 = scmp.eq.s32.totalorder %s34, 1
    %p477 = por %p475, %p476
    %p478 = scmp.ne.s32.totalorder %s469, %s470
    %p479 = scmp.eq.s32.totalorder %s34, 0
    %p480 = por %p478, %p479
    %p481 = scmp.ne.s32.totalorder %s469, %s470
    %p482 = scmp.eq.s32.totalorder %s35, 1
    %p483 = por %p481, %p482
    %p485 = scmp.ne.s32.totalorder %s470, %s484
    %p486 = scmp.eq.s32.totalorder %s35, 0
    %p487 = por %p485, %p486
    %s488 = ssub.s32 %s29, %s36
    %p489 = scmp.eq.s32.totalorder %s488, 0
    %s491 = sadd.s32 %s490, 1
    %s492 = scalar_select %p489, %s490, %s491
    %p495 = pneg %p489
    %p496 = scmp.eq.s32.totalorder %s29, 1
    %p497 = por %p495, %p496
    %p498 = scmp.ne.s32.totalorder %s490, %s493
    %p499 = scmp.eq.s32.totalorder %s29, 0
    %p500 = por %p498, %p499
    %p501 = scmp.ne.s32.totalorder %s490, %s493
    %p502 = scmp.eq.s32.totalorder %s34, 1
    %p503 = por %p501, %p502
    %p504 = scmp.ne.s32.totalorder %s493, %s494
    %p505 = scmp.eq.s32.totalorder %s34, 0
    %p506 = por %p504, %p505
    %p507 = scmp.ne.s32.totalorder %s493, %s494
    %p508 = scmp.eq.s32.totalorder %s35, 1
    %p509 = por %p507, %p508
    %p511 = scmp.ne.s32.totalorder %s494, %s510
    %p512 = scmp.eq.s32.totalorder %s35, 0
    %p513 = por %p511, %p512
    %p514 = scmp.le.s32.totalorder 1, %s29
    %p515 = scmp.lt.s32.totalorder %s29, 3
    %p516 = pnand %p514, %p515
    %p517 = pneg %p516
    // Predicated region
    $region9: #{ppgn_forward.1} parent=5 // pred_check
      _
    $region10: #{ppgn_forward.1} parent=5 // pred_check_branch
      %519 = sbr.rel (%p516) target = $region12
    $region11: #{ppgn_forward.1} parent=5 // pred_region
      %s520 = ssub.s32 %s29, 1
      // Predicated region
      $region13: #{ppgn_forward.1} parent=11 // pred_check
        %p521 = pneg %p102
      $region14: #{ppgn_forward.1} parent=11 // pred_check_branch
        %523 = sbr.rel (%p521) target = $region16
      $region15: #{ppgn_forward.1} parent=11 // pred_region
        _
      $region16: #{ppgn_forward.1} parent=11 // pred_fallthru
        _
      // Predicated region
      $region17: #{ppgn_forward.1} parent=11 // pred_check
        %p524 = pneg %p123
      $region18: #{ppgn_forward.1} parent=11 // pred_check_branch
        %526 = sbr.rel (%p524) target = $region20
      $region19: #{ppgn_forward.1} parent=11 // pred_region
        _
      $region20: #{ppgn_forward.1} parent=11 // pred_fallthru
        _
      // Predicated region
      $region21: #{ppgn_forward.1} parent=11 // pred_check
        %p527 = pneg %p144
      $region22: #{ppgn_forward.1} parent=11 // pred_check_branch
        %529 = sbr.rel (%p527) target = $region24
      $region23: #{ppgn_forward.1} parent=11 // pred_region
        _
      $region24: #{ppgn_forward.1} parent=11 // pred_fallthru
        _
      // Predicated region
      $region25: #{ppgn_forward.1} parent=11 // pred_check
        %p530 = pneg %p165
      $region26: #{ppgn_forward.1} parent=11 // pred_check_branch
        %532 = sbr.rel (%p530) target = $region28
      $region27: #{ppgn_forward.1} parent=11 // pred_region
        _
      $region28: #{ppgn_forward.1} parent=11 // pred_fallthru
        _
      // Predicated region
      $region29: #{ppgn_forward.1} parent=11 // pred_check
        %p533 = pneg %p186
      $region30: #{ppgn_forward.1} parent=11 // pred_check_branch
        %535 = sbr.rel (%p533) target = $region32
      $region31: #{ppgn_forward.1} parent=11 // pred_region
        _
      $region32: #{ppgn_forward.1} parent=11 // pred_fallthru
        _
      // Predicated region
      $region33: #{ppgn_forward.1} parent=11 // pred_check
        %p536 = pneg %p207
      $region34: #{ppgn_forward.1} parent=11 // pred_check_branch
        %538 = sbr.rel (%p536) target = $region36
      $region35: #{ppgn_forward.1} parent=11 // pred_region
        _
      $region36: #{ppgn_forward.1} parent=11 // pred_fallthru
        _
      // Predicated region
      $region37: #{ppgn_forward.1} parent=11 // pred_check
        %p539 = pneg %p228
      $region38: #{ppgn_forward.1} parent=11 // pred_check_branch
        %541 = sbr.rel (%p539) target = $region40
      $region39: #{ppgn_forward.1} parent=11 // pred_region
        _
      $region40: #{ppgn_forward.1} parent=11 // pred_fallthru
        _
      // Predicated region
      $region41: #{ppgn_forward.1} parent=11 // pred_check
        %p542 = pneg %p249
      $region42: #{ppgn_forward.1} parent=11 // pred_check_branch
        %544 = sbr.rel (%p542) target = $region44
      $region43: #{ppgn_forward.1} parent=11 // pred_region
        _
      $region44: #{ppgn_forward.1} parent=11 // pred_fallthru
        _
      // Predicated region
      $region45: #{ppgn_forward.1} parent=11 // pred_check
        %p545 = pneg %p270
      $region46: #{ppgn_forward.1} parent=11 // pred_check_branch
        %547 = sbr.rel (%p545) target = $region48
      $region47: #{ppgn_forward.1} parent=11 // pred_region
        _
      $region48: #{ppgn_forward.1} parent=11 // pred_fallthru
        _
      // Predicated region
      $region49: #{ppgn_forward.1} parent=11 // pred_check
        %p548 = pneg %p291
      $region50: #{ppgn_forward.1} parent=11 // pred_check_branch
        %550 = sbr.rel (%p548) target = $region52
      $region51: #{ppgn_forward.1} parent=11 // pred_region
        _
      $region52: #{ppgn_forward.1} parent=11 // pred_fallthru
        _
      // Predicated region
      $region53: #{ppgn_forward.1} parent=11 // pred_check
        %p551 = pneg %p312
      $region54: #{ppgn_forward.1} parent=11 // pred_check_branch
        %553 = sbr.rel (%p551) target = $region56
      $region55: #{ppgn_forward.1} parent=11 // pred_region
        _
      $region56: #{ppgn_forward.1} parent=11 // pred_fallthru
        _
      // Predicated region
      $region57: #{ppgn_forward.1} parent=11 // pred_check
        %p554 = pneg %p333
      $region58: #{ppgn_forward.1} parent=11 // pred_check_branch
        %556 = sbr.rel (%p554) target = $region60
      $region59: #{ppgn_forward.1} parent=11 // pred_region
        _
      $region60: #{ppgn_forward.1} parent=11 // pred_fallthru
        _
      // Predicated region
      $region61: #{ppgn_forward.1} parent=11 // pred_check
        %p557 = pneg %p354
      $region62: #{ppgn_forward.1} parent=11 // pred_check_branch
        %559 = sbr.rel (%p557) target = $region64
      $region63: #{ppgn_forward.1} parent=11 // pred_region
        _
      $region64: #{ppgn_forward.1} parent=11 // pred_fallthru
        _
      // Predicated region
      $region65: #{ppgn_forward.1} parent=11 // pred_check
        %p560 = pneg %p375
      $region66: #{ppgn_forward.1} parent=11 // pred_check_branch
        %562 = sbr.rel (%p560) target = $region68
      $region67: #{ppgn_forward.1} parent=11 // pred_region
        _
      $region68: #{ppgn_forward.1} parent=11 // pred_fallthru
        _
      // Predicated region
      $region69: #{ppgn_forward.1} parent=11 // pred_check
        %p563 = pneg %p396
      $region70: #{ppgn_forward.1} parent=11 // pred_check_branch
        %565 = sbr.rel (%p563) target = $region72
      $region71: #{ppgn_forward.1} parent=11 // pred_region
        _
      $region72: #{ppgn_forward.1} parent=11 // pred_fallthru
        _
      // Predicated region
      $region73: #{ppgn_forward.1} parent=11 // pred_check
        %p566 = pneg %p417
      $region74: #{ppgn_forward.1} parent=11 // pred_check_branch
        %568 = sbr.rel (%p566) target = $region76
      $region75: #{ppgn_forward.1} parent=11 // pred_region
        _
      $region76: #{ppgn_forward.1} parent=11 // pred_fallthru
        _
      // Predicated region
      $region77: #{ppgn_forward.1} parent=11 // pred_check
        %p569 = pneg %p438
      $region78: #{ppgn_forward.1} parent=11 // pred_check_branch
        %571 = sbr.rel (%p569) target = $region80
      $region79: #{ppgn_forward.1} parent=11 // pred_region
        _
      $region80: #{ppgn_forward.1} parent=11 // pred_fallthru
        _
      // Predicated region
      $region81: #{ppgn_forward.1} parent=11 // pred_check
        %p572 = pneg %p459
      $region82: #{ppgn_forward.1} parent=11 // pred_check_branch
        %574 = sbr.rel (%p572) target = $region84
      $region83: #{ppgn_forward.1} parent=11 // pred_region
        _
      $region84: #{ppgn_forward.1} parent=11 // pred_fallthru
        _
      // Predicated region
      $region85: #{ppgn_forward.1} parent=11 // pred_check
        %p575 = pneg %p480
      $region86: #{ppgn_forward.1} parent=11 // pred_check_branch
        %577 = sbr.rel (%p575) target = $region88
      $region87: #{ppgn_forward.1} parent=11 // pred_region
        _
      $region88: #{ppgn_forward.1} parent=11 // pred_fallthru
        _
    $region12: #{ppgn_forward.1} parent=5 // pred_fallthru
      _
    %p578 = scmp.lt.s32.totalorder %s29, 2
    // Predicated region
    $region89: #{ppgn_forward.1} parent=5 // pred_check
      %p579 = pneg %p578
    $region90: #{ppgn_forward.1} parent=5 // pred_check_branch
      %581 = sbr.rel (%p579) target = $region92
    $region91: #{ppgn_forward.1} parent=5 // pred_region
      // Predicated region
      $region93: #{ppgn_forward.1} parent=91 // pred_check
        %p582 = pneg %p49
      $region94: #{ppgn_forward.1} parent=91 // pred_check_branch
        %584 = sbr.rel (%p582) target = $region96
      $region95: #{ppgn_forward.1} parent=91 // pred_region
        %p585 = scmp.lt.s32.totalorder %s29, 1
        %s586 = scalar_select %p585, %s29, 1
        %s587 = smul.addr %s586, 32
        %s588 = smul.addr %s587, 8
        %s589 = scalar_lea.vmem %s0, %s588
      $region96: #{ppgn_forward.1} parent=91 // pred_fallthru
        _
      // Predicated region
      $region97: #{ppgn_forward.1} parent=91 // pred_check
        %p590 = pneg %p75
      $region98: #{ppgn_forward.1} parent=91 // pred_check_branch
        %592 = sbr.rel (%p590) target = $region100
      $region99: #{ppgn_forward.1} parent=91 // pred_region
        %p593 = scmp.lt.s32.totalorder %s29, 1
        %s594 = scalar_select %p593, %s29, 1
        %s595 = smul.addr %s594, 32
        %s596 = smul.addr %s595, 8
        %s597 = scalar_lea.vmem %s1, %s596
      $region100: #{ppgn_forward.1} parent=91 // pred_fallthru
        _
    $region92: #{ppgn_forward.1} parent=5 // pred_fallthru
      _
    %p598 = scmp.le.s32.totalorder 1, %s29
    %p599 = scmp.lt.s32.totalorder %s29, 3
    %p600 = pnand %p598, %p599
    %p601 = pneg %p600
    // Predicated region
    $region101: #{ppgn_forward.1} parent=5 // pred_check
      _
    $region102: #{ppgn_forward.1} parent=5 // pred_check_branch
      %603 = sbr.rel (%p600) target = $region104
    $region103: #{ppgn_forward.1} parent=5 // pred_region
      %s604 = ssub.s32 %s29, 1
      %p605 = scmp.lt.s32.totalorder %s34, 1
      %s606 = scalar_select %p605, %s34, 1
      %s607 = smul.addr %s606, 32
      %s608 = smul.addr %s607, 8
      %s609 = scalar_lea.vmem %s0, %s608
      %p610 = pneg %p55
      %p611 = pneg %p52
      %p612 = scmp.lt.s32.totalorder %s34, 1
      %s613 = scalar_select %p612, %s34, 1
      %s614 = smul.addr %s613, 32
      %s615 = smul.addr %s614, 8
      %s616 = scalar_lea.vmem %s1, %s615
      %p617 = pneg %p81
      %p618 = pneg %p78
      %p619 = pneg %p102
      %p620 = pneg %p99
      %p621 = pneg %p123
      %p622 = pneg %p120
      %p623 = pneg %p144
      %p624 = pneg %p141
      %p625 = pneg %p165
      %p626 = pneg %p162
      %p627 = pneg %p186
      %p628 = pneg %p183
      %p629 = pneg %p207
      %p630 = pneg %p204
      %p631 = pneg %p228
      %p632 = pneg %p225
      %p633 = pneg %p249
      %p634 = pneg %p246
      %p635 = pneg %p270
      %p636 = pneg %p267
      %p637 = pneg %p291
      %p638 = pneg %p288
      %p639 = pneg %p312
      %p640 = pneg %p309
      %p641 = pneg %p333
      %p642 = pneg %p330
      %p643 = pneg %p354
      %p644 = pneg %p351
      %p645 = pneg %p375
      %p646 = pneg %p372
      %p647 = pneg %p396
      %p648 = pneg %p393
      %p649 = pneg %p417
      %p650 = pneg %p414
      %p651 = pneg %p438
      %p652 = pneg %p435
      %p653 = pneg %p459
      %p654 = pneg %p456
      %p655 = pneg %p480
      %p656 = pneg %p477
      %p657 = pneg %p506
      %p658 = pneg %p503
      %p659 = scmp.lt.s32.totalorder %s34, 1
      %s660 = scalar_select %p659, %s34, 1
      %s661 = scalar_lea.vmem %s21, %s660
      %p662 = scmp.lt.s32.totalorder %s34, 1
      %s663 = scalar_select %p662, %s34, 1
      %s664 = smul.addr %s663, 32
      %s665 = smul.addr %s664, 8
      %s666 = scalar_lea.vmem %s0, %s665
      %p667 = scmp.lt.s32.totalorder %s34, 1
      %s668 = scalar_select %p667, %s34, 1
      %s669 = smul.addr %s668, 32
      %s670 = smul.addr %s669, 8
      %s671 = scalar_lea.vmem %s1, %s670
      %p672 = scmp.lt.s32.totalorder %s34, 1
      %s673 = scalar_select %p672, %s34, 1
      %s674 = scalar_lea.vmem %s21, %s673
      %v675 = vld [vmem:[%s666] sm:$0xff]
      %v676 = vld [vmem:[%s666 + $0x8] sm:$0xff]
      %v677 = vld [vmem:[%s666 + $0x10] sm:$0xff]
      %v678 = vld [vmem:[%s666 + $0x18] sm:$0xff]
      %v679 = vld [vmem:[%s666 + $0x20] sm:$0xff]
      %v680 = vld [vmem:[%s666 + $0x28] sm:$0xff]
      %v681 = vld [vmem:[%s666 + $0x30] sm:$0xff]
      %v682 = vld [vmem:[%s666 + $0x38] sm:$0xff]
      %v683 = vld [vmem:[%s666 + $0x40] sm:$0xff]
      %v684 = vld [vmem:[%s666 + $0x48] sm:$0xff]
      %v685 = vld [vmem:[%s666 + $0x50] sm:$0xff]
      %v686 = vld [vmem:[%s666 + $0x58] sm:$0xff]
      %v687 = vld [vmem:[%s666 + $0x60] sm:$0xff]
      %v688 = vld [vmem:[%s666 + $0x68] sm:$0xff]
      %v689 = vld [vmem:[%s666 + $0x70] sm:$0xff]
      %v690 = vld [vmem:[%s666 + $0x78] sm:$0xff]
      %v691 = vld [vmem:[%s666 + $0x80] sm:$0xff]
      %v692 = vld [vmem:[%s666 + $0x88] sm:$0xff]
      %v693 = vld [vmem:[%s666 + $0x90] sm:$0xff]
      %v694 = vld [vmem:[%s666 + $0x98] sm:$0xff]
      %v695 = vld [vmem:[%s666 + $0xa0] sm:$0xff]
      %v696 = vld [vmem:[%s666 + $0xa8] sm:$0xff]
      %v697 = vld [vmem:[%s666 + $0xb0] sm:$0xff]
      %v698 = vld [vmem:[%s666 + $0xb8] sm:$0xff]
      %v699 = vld [vmem:[%s666 + $0xc0] sm:$0xff]
      %v700 = vld [vmem:[%s666 + $0xc8] sm:$0xff]
      %v701 = vld [vmem:[%s666 + $0xd0] sm:$0xff]
      %v702 = vld [vmem:[%s666 + $0xd8] sm:$0xff]
      %v703 = vld [vmem:[%s666 + $0xe0] sm:$0xff]
      %v704 = vld [vmem:[%s666 + $0xe8] sm:$0xff]
      %v705 = vld [vmem:[%s666 + $0xf0] sm:$0xff]
      %v706 = vld [vmem:[%s666 + $0xf8] sm:$0xff]
      %v707 = vld [vmem:[%s671] sm:$0xff]
      %v708 = vld [vmem:[%s671 + $0x8] sm:$0xff]
      %v709 = vld [vmem:[%s671 + $0x10] sm:$0xff]
      %v710 = vld [vmem:[%s671 + $0x18] sm:$0xff]
      %v711 = vld [vmem:[%s671 + $0x20] sm:$0xff]
      %v712 = vld [vmem:[%s671 + $0x28] sm:$0xff]
      %v713 = vld [vmem:[%s671 + $0x30] sm:$0xff]
      %v714 = vld [vmem:[%s671 + $0x38] sm:$0xff]
      %v715 = vld [vmem:[%s671 + $0x40] sm:$0xff]
      %v716 = vld [vmem:[%s671 + $0x48] sm:$0xff]
      %v717 = vld [vmem:[%s671 + $0x50] sm:$0xff]
      %v718 = vld [vmem:[%s671 + $0x58] sm:$0xff]
      %v719 = vld [vmem:[%s671 + $0x60] sm:$0xff]
      %v720 = vld [vmem:[%s671 + $0x68] sm:$0xff]
      %v721 = vld [vmem:[%s671 + $0x70] sm:$0xff]
      %v722 = vld [vmem:[%s671 + $0x78] sm:$0xff]
      %v723 = vld [vmem:[%s671 + $0x80] sm:$0xff]
      %v724 = vld [vmem:[%s671 + $0x88] sm:$0xff]
      %v725 = vld [vmem:[%s671 + $0x90] sm:$0xff]
      %v726 = vld [vmem:[%s671 + $0x98] sm:$0xff]
      %v727 = vld [vmem:[%s671 + $0xa0] sm:$0xff]
      %v728 = vld [vmem:[%s671 + $0xa8] sm:$0xff]
      %v729 = vld [vmem:[%s671 + $0xb0] sm:$0xff]
      %v730 = vld [vmem:[%s671 + $0xb8] sm:$0xff]
      %v731 = vld [vmem:[%s671 + $0xc0] sm:$0xff]
      %v732 = vld [vmem:[%s671 + $0xc8] sm:$0xff]
      %v733 = vld [vmem:[%s671 + $0xd0] sm:$0xff]
      %v734 = vld [vmem:[%s671 + $0xd8] sm:$0xff]
      %v735 = vld [vmem:[%s671 + $0xe0] sm:$0xff]
      %v736 = vld [vmem:[%s671 + $0xe8] sm:$0xff]
      %v737 = vld [vmem:[%s671 + $0xf0] sm:$0xff]
      %v738 = vld [vmem:[%s671 + $0xf8] sm:$0xff]
      %v739 = vld [vmem:[%s2] sm:$0xf]
      %v740 = vld [vmem:[%s3] sm:$0x1]
      %v741 = vld [vmem:[%s4] sm:$0xff]
      %v742 = vld [vmem:[%s4 + $0x8] sm:$0xff]
      %v743 = vld [vmem:[%s4 + $0x10] sm:$0xff]
      %v744 = vld [vmem:[%s4 + $0x18] sm:$0xff]
      %v745 = vld [vmem:[%s5] sm:$0xf]
      %v746 = vld [vmem:[%s6] sm:$0x1]
      %v748 = vlaneseq
      %v749 = vshrl.u32 %v748, 7
      %v750 = vsub.s32 0, %v749
      %v751 = vrot.slane %v740, %v750
      %vm753 = vcmask 31744
      %v755 = vsel %vm753, %v675, 0
      %v758 = vsel %vm753, %v676, 0
      %v761 = vsel %vm753, %v677, 0
      %v764 = vsel %vm753, %v678, 0
      %v767 = vsel %vm753, %v679, 0
      %v770 = vsel %vm753, %v680, 0
      %v773 = vsel %vm753, %v681, 0
      %v776 = vsel %vm753, %v682, 0
      %v779 = vsel %vm753, %v683, 0
      %v782 = vsel %vm753, %v684, 0
      %v785 = vsel %vm753, %v685, 0
      %v788 = vsel %vm753, %v686, 0
      %v791 = vsel %vm753, %v687, 0
      %v794 = vsel %vm753, %v688, 0
      %v797 = vsel %vm753, %v689, 0
      %v800 = vsel %vm753, %v690, 0
      %v803 = vsel %vm753, %v691, 0
      %v806 = vsel %vm753, %v692, 0
      %v809 = vsel %vm753, %v693, 0
      %v812 = vsel %vm753, %v694, 0
      %v815 = vsel %vm753, %v695, 0
      %v818 = vsel %vm753, %v696, 0
      %v821 = vsel %vm753, %v697, 0
      %v824 = vsel %vm753, %v698, 0
      %v827 = vsel %vm753, %v699, 0
      %v830 = vsel %vm753, %v700, 0
      %v833 = vsel %vm753, %v701, 0
      %v836 = vsel %vm753, %v702, 0
      %v839 = vsel %vm753, %v703, 0
      %v842 = vsel %vm753, %v704, 0
      %v845 = vsel %vm753, %v705, 0
      %v848 = vsel %vm753, %v706, 0
      %vm850 = vcmask 1043456
      %v852 = vsel %vm850, %v739, 0
      %854 = vmatprep.subr.mxu0 0.0
      %855 = vmatpush1.msra.mxu0 %v852
      %856 = vmatprep.subr.mxu0 0.0
      %857 = vmatpush1.msra.mxu0 0.0
      %858 = vmatprep.subr.mxu0 0.0
      %859 = vmatpush1.msra.mxu0 0.0
      %860 = vmatprep.subr.mxu0 0.0
      %861 = vmatpush1.msra.mxu0 0.0
      %862 = vmatprep.subr.mxu0 0.0
      %863 = vmatpush1.msra.mxu0 0.0
      %864 = vmatprep.subr.mxu0 0.0
      %865 = vmatpush1.msra.mxu0 0.0
      %866 = vmatprep.subr.mxu0 0.0
      %867 = vmatpush1.msra.mxu0 0.0
      %868 = vmatprep.subr.mxu0 0.0
      %869 = vmatpush1.msra.mxu0 0.0
      %870 = vmatprep.subr.mxu0 0.0
      %871 = vmatpush1.msra.mxu0 0.0
      %872 = vmatprep.subr.mxu0 0.0
      %873 = vmatpush1.msra.mxu0 0.0
      %874 = vmatprep.subr.mxu0 0.0
      %875 = vmatpush1.msra.mxu0 0.0
      %876 = vmatprep.subr.mxu0 0.0
      %877 = vmatpush1.msra.mxu0 0.0
      %878 = vmatprep.subr.mxu0 0.0
      %879 = vmatpush1.msra.mxu0 0.0
      %880 = vmatprep.subr.mxu0 0.0
      %881 = vmatpush1.msra.mxu0 0.0
      %882 = vmatprep.subr.mxu0 0.0
      %883 = vmatpush1.msra.mxu0 0.0
      %884 = vmatprep.subr.mxu0 0.0
      %885 = vmatpush1.msra.mxu0 0.0
      %886 = vmatprep.subr.mxu0 0.0
      %887 = vmatpush1.msra.mxu0 0.0
      %888 = vmatprep.subr.mxu0 0.0
      %889 = vmatpush1.msra.mxu0 0.0
      %890 = vmatprep.subr.mxu0 0.0
      %891 = vmatpush1.msra.mxu0 0.0
      %892 = vmatprep.subr.mxu0 0.0
      %893 = vmatpush1.msra.mxu0 0.0
      %894 = vmatprep.subr.mxu0 0.0
      %895 = vmatpush1.msra.mxu0 0.0
      %896 = vmatprep.subr.mxu0 0.0
      %897 = vmatpush1.msra.mxu0 0.0
      %898 = vmatprep.subr.mxu0 0.0
      %899 = vmatpush1.msra.mxu0 0.0
      %900 = vmatprep.subr.mxu0 0.0
      %901 = vmatpush1.msra.mxu0 0.0
      %902 = vmatprep.subr.mxu0 0.0
      %903 = vmatpush1.msra.mxu0 0.0
      %904 = vmatprep.subr.mxu0 0.0
      %905 = vmatpush1.msra.mxu0 0.0
      %906 = vmatprep.subr.mxu0 0.0
      %907 = vmatpush1.msra.mxu0 0.0
      %908 = vmatprep.subr.mxu0 0.0
      %909 = vmatpush1.msra.mxu0 0.0
      %910 = vmatprep.subr.mxu0 0.0
      %911 = vmatpush1.msra.mxu0 0.0
      %912 = vmatprep.subr.mxu0 0.0
      %913 = vmatpush1.msra.mxu0 0.0
      %914 = vmatprep.subr.mxu0 0.0
      %915 = vmatpush1.msra.mxu0 0.0
      %916 = vmatprep.subr.mxu0 0.0
      %917 = vmatpush1.msra.mxu0 0.0
      %918 = vmatprep.mubr.f32.mxu0 0.0
      %919 = vmatmul.mubr.f32.gmra.mrb[0].mxu0 %v755
      %v920 = vpop.f32.mrb[0].mxu0
      %v921 = vadd.f32 %v751, %v920
      %v922 = vpop.f32.mrb[0].mxu0
      %923 = vmatprep.mubr.f32.mxu0 0.0
      %924 = vmatmul.mubr.f32.gmra.mrb[0].mxu0 %v758
      %v925 = vpop.f32.mrb[0].mxu0
      %v926 = vadd.f32 %v751, %v925
      %v927 = vpop.f32.mrb[0].mxu0
      %928 = vmatprep.mubr.f32.mxu0 0.0
      %929 = vmatmul.mubr.f32.gmra.mrb[0].mxu0 %v761
      %v930 = vpop.f32.mrb[0].mxu0
      %v931 = vadd.f32 %v751, %v930
      %v932 = vpop.f32.mrb[0].mxu0
      %933 = vmatprep.mubr.f32.mxu0 0.0
      %934 = vmatmul.mubr.f32.gmra.mrb[0].mxu0 %v764
      %v935 = vpop.f32.mrb[0].mxu0
      %v936 = vadd.f32 %v751, %v935
      %v937 = vpop.f32.mrb[0].mxu0
      %938 = vmatprep.mubr.f32.mxu0 0.0
      %939 = vmatmul.mubr.f32.gmra.mrb[0].mxu0 %v767
      %v940 = vpop.f32.mrb[0].mxu0
      %v941 = vadd.f32 %v751, %v940
      %v942 = vpop.f32.mrb[0].mxu0
      %943 = vmatprep.mubr.f32.mxu0 0.0
      %944 = vmatmul.mubr.f32.gmra.mrb[0].mxu0 %v770
      %v945 = vpop.f32.mrb[0].mxu0
      %v946 = vadd.f32 %v751, %v945
      %v947 = vpop.f32.mrb[0].mxu0
      %948 = vmatprep.mubr.f32.mxu0 0.0
      %949 = vmatmul.mubr.f32.gmra.mrb[0].mxu0 %v773
      %v950 = vpop.f32.mrb[0].mxu0
      %v951 = vadd.f32 %v751, %v950
      %v952 = vpop.f32.mrb[0].mxu0
      %953 = vmatprep.mubr.f32.mxu0 0.0
      %954 = vmatmul.mubr.f32.gmra.mrb[0].mxu0 %v776
      %v955 = vpop.f32.mrb[0].mxu0
      %v956 = vadd.f32 %v751, %v955
      %v957 = vpop.f32.mrb[0].mxu0
      %958 = vmatprep.mubr.f32.mxu0 0.0
      %959 = vmatmul.mubr.f32.gmra.mrb[0].mxu0 %v779
      %v960 = vpop.f32.mrb[0].mxu0
      %v961 = vadd.f32 %v751, %v960
      %v962 = vpop.f32.mrb[0].mxu0
      %963 = vmatprep.mubr.f32.mxu0 0.0
      %964 = vmatmul.mubr.f32.gmra.mrb[0].mxu0 %v782
      %v965 = vpop.f32.mrb[0].mxu0
      %v966 = vadd.f32 %v751, %v965
      %v967 = vpop.f32.mrb[0].mxu0
      %968 = vmatprep.mubr.f32.mxu0 0.0
      %969 = vmatmul.mubr.f32.gmra.mrb[0].mxu0 %v785
      %v970 = vpop.f32.mrb[0].mxu0
      %v971 = vadd.f32 %v751, %v970
      %v972 = vpop.f32.mrb[0].mxu0
      %973 = vmatprep.mubr.f32.mxu0 0.0
      %974 = vmatmul.mubr.f32.gmra.mrb[0].mxu0 %v788
      %v975 = vpop.f32.mrb[0].mxu0
      %v976 = vadd.f32 %v751, %v975
      %v977 = vpop.f32.mrb[0].mxu0
      %978 = vmatprep.mubr.f32.mxu0 0.0
      %979 = vmatmul.mubr.f32.gmra.mrb[0].mxu0 %v791
      %v980 = vpop.f32.mrb[0].mxu0
      %v981 = vadd.f32 %v751, %v980
      %v982 = vpop.f32.mrb[0].mxu0
      %983 = vmatprep.mubr.f32.mxu0 0.0
      %984 = vmatmul.mubr.f32.gmra.mrb[0].mxu0 %v794
      %v985 = vpop.f32.mrb[0].mxu0
      %v986 = vadd.f32 %v751, %v985
      %v987 = vpop.f32.mrb[0].mxu0
      %988 = vmatprep.mubr.f32.mxu0 0.0
      %989 = vmatmul.mubr.f32.gmra.mrb[0].mxu0 %v797
      %v990 = vpop.f32.mrb[0].mxu0
      %v991 = vadd.f32 %v751, %v990
      %v992 = vpop.f32.mrb[0].mxu0
      %993 = vmatprep.mubr.f32.mxu0 0.0
      %994 = vmatmul.mubr.f32.gmra.mrb[0].mxu0 %v800
      %v995 = vpop.f32.mrb[0].mxu0
      %v996 = vadd.f32 %v751, %v995
      %v997 = vpop.f32.mrb[0].mxu0
      %998 = vmatprep.mubr.f32.mxu0 0.0
      %999 = vmatmul.mubr.f32.gmra.mrb[0].mxu0 %v803
      %v1000 = vpop.f32.mrb[0].mxu0
      %v1001 = vadd.f32 %v751, %v1000
      %v1002 = vpop.f32.mrb[0].mxu0
      %1003 = vmatprep.mubr.f32.mxu0 0.0
      %1004 = vmatmul.mubr.f32.gmra.mrb[0].mxu0 %v806
      %v1005 = vpop.f32.mrb[0].mxu0
      %v1006 = vadd.f32 %v751, %v1005
      %v1007 = vpop.f32.mrb[0].mxu0
      %1008 = vmatprep.mubr.f32.mxu0 0.0
      %1009 = vmatmul.mubr.f32.gmra.mrb[0].mxu0 %v809
      %v1010 = vpop.f32.mrb[0].mxu0
      %v1011 = vadd.f32 %v751, %v1010
      %v1012 = vpop.f32.mrb[0].mxu0
      %1013 = vmatprep.mubr.f32.mxu0 0.0
      %1014 = vmatmul.mubr.f32.gmra.mrb[0].mxu0 %v812
      %v1015 = vpop.f32.mrb[0].mxu0
      %v1016 = vadd.f32 %v751, %v1015
      %v1017 = vpop.f32.mrb[0].mxu0
      %1018 = vmatprep.mubr.f32.mxu0 0.0
      %1019 = vmatmul.mubr.f32.gmra.mrb[0].mxu0 %v815
      %v1020 = vpop.f32.mrb[0].mxu0
      %v1021 = vadd.f32 %v751, %v1020
      %v1022 = vpop.f32.mrb[0].mxu0
      %1023 = vmatprep.mubr.f32.mxu0 0.0
      %1024 = vmatmul.mubr.f32.gmra.mrb[0].mxu0 %v818
      %v1025 = vpop.f32.mrb[0].mxu0
      %v1026 = vadd.f32 %v751, %v1025
      %v1027 = vpop.f32.mrb[0].mxu0
      %1028 = vmatprep.mubr.f32.mxu0 0.0
      %1029 = vmatmul.mubr.f32.gmra.mrb[0].mxu0 %v821
      %v1030 = vpop.f32.mrb[0].mxu0
      %v1031 = vadd.f32 %v751, %v1030
      %v1032 = vpop.f32.mrb[0].mxu0
      %1033 = vmatprep.mubr.f32.mxu0 0.0
      %1034 = vmatmul.mubr.f32.gmra.mrb[0].mxu0 %v824
      %v1035 = vpop.f32.mrb[0].mxu0
      %v1036 = vadd.f32 %v751, %v1035
      %v1037 = vpop.f32.mrb[0].mxu0
      %1038 = vmatprep.mubr.f32.mxu0 0.0
      %1039 = vmatmul.mubr.f32.gmra.mrb[0].mxu0 %v827
      %v1040 = vpop.f32.mrb[0].mxu0
      %v1041 = vadd.f32 %v751, %v1040
      %v1042 = vpop.f32.mrb[0].mxu0
      %1043 = vmatprep.mubr.f32.mxu0 0.0
      %1044 = vmatmul.mubr.f32.gmra.mrb[0].mxu0 %v830
      %v1045 = vpop.f32.mrb[0].mxu0
      %v1046 = vadd.f32 %v751, %v1045
      %v1047 = vpop.f32.mrb[0].mxu0
      %1048 = vmatprep.mubr.f32.mxu0 0.0
      %1049 = vmatmul.mubr.f32.gmra.mrb[0].mxu0 %v833
      %v1050 = vpop.f32.mrb[0].mxu0
      %v1051 = vadd.f32 %v751, %v1050
      %v1052 = vpop.f32.mrb[0].mxu0
      %1053 = vmatprep.mubr.f32.mxu0 0.0
      %1054 = vmatmul.mubr.f32.gmra.mrb[0].mxu0 %v836
      %v1055 = vpop.f32.mrb[0].mxu0
      %v1056 = vadd.f32 %v751, %v1055
      %v1057 = vpop.f32.mrb[0].mxu0
      %1058 = vmatprep.mubr.f32.mxu0 0.0
      %1059 = vmatmul.mubr.f32.gmra.mrb[0].mxu0 %v839
      %v1060 = vpop.f32.mrb[0].mxu0
      %v1061 = vadd.f32 %v751, %v1060
      %v1062 = vpop.f32.mrb[0].mxu0
      %1063 = vmatprep.mubr.f32.mxu0 0.0
      %1064 = vmatmul.mubr.f32.gmra.mrb[0].mxu0 %v842
      %v1065 = vpop.f32.mrb[0].mxu0
      %v1066 = vadd.f32 %v751, %v1065
      %v1067 = vpop.f32.mrb[0].mxu0
      %1068 = vmatprep.mubr.f32.mxu0 0.0
      %1069 = vmatmul.mubr.f32.gmra.mrb[0].mxu0 %v845
      %v1070 = vpop.f32.mrb[0].mxu0
      %v1071 = vadd.f32 %v751, %v1070
      %v1072 = vpop.f32.mrb[0].mxu0
      %1073 = vmatprep.mubr.f32.mxu0 0.0
      %1074 = vmatmul.mubr.f32.gmra.mrb[0].mxu0 %v848
      %v1075 = vpop.f32.mrb[0].mxu0
      %v1076 = vadd.f32 %v751, %v1075
      %v1077 = vpop.f32.mrb[0].mxu0
      %1078 = vdwg.mxu0
      %v1079 = vmax.f32 %v921, 0.0
      %v1080 = vmax.f32 %v926, 0.0
      %v1081 = vmax.f32 %v931, 0.0
      %v1082 = vmax.f32 %v936, 0.0
      %v1083 = vmax.f32 %v941, 0.0
      %v1084 = vmax.f32 %v946, 0.0
      %v1085 = vmax.f32 %v951, 0.0
      %v1086 = vmax.f32 %v956, 0.0
      %v1087 = vmax.f32 %v961, 0.0
      %v1088 = vmax.f32 %v966, 0.0
      %v1089 = vmax.f32 %v971, 0.0
      %v1090 = vmax.f32 %v976, 0.0
      %v1091 = vmax.f32 %v981, 0.0
      %v1092 = vmax.f32 %v986, 0.0
      %v1093 = vmax.f32 %v991, 0.0
      %v1094 = vmax.f32 %v996, 0.0
      %v1095 = vmax.f32 %v1001, 0.0
      %v1096 = vmax.f32 %v1006, 0.0
      %v1097 = vmax.f32 %v1011, 0.0
      %v1098 = vmax.f32 %v1016, 0.0
      %v1099 = vmax.f32 %v1021, 0.0
      %v1100 = vmax.f32 %v1026, 0.0
      %v1101 = vmax.f32 %v1031, 0.0
      %v1102 = vmax.f32 %v1036, 0.0
      %v1103 = vmax.f32 %v1041, 0.0
      %v1104 = vmax.f32 %v1046, 0.0
      %v1105 = vmax.f32 %v1051, 0.0
      %v1106 = vmax.f32 %v1056, 0.0
      %v1107 = vmax.f32 %v1061, 0.0
      %v1108 = vmax.f32 %v1066, 0.0
      %v1109 = vmax.f32 %v1071, 0.0
      %v1110 = vmax.f32 %v1076, 0.0
      %v1111 = vlaneseq
      %v1112 = vshrl.u32 %v1111, 7
      %v1113 = vsub.s32 0, %v1112
      %v1114 = vrot.slane %v1079, %v1113
      %v1115 = vlaneseq
      %v1116 = vshrl.u32 %v1115, 7
      %v1117 = vsub.s32 0, %v1116
      %v1118 = vrot.slane %v1081, %v1117
      %v1119 = vlaneseq
      %v1120 = vshrl.u32 %v1119, 7
      %v1121 = vsub.s32 0, %v1120
      %v1122 = vrot.slane %v1083, %v1121
      %v1123 = vlaneseq
      %v1124 = vshrl.u32 %v1123, 7
      %v1125 = vsub.s32 0, %v1124
      %v1126 = vrot.slane %v1085, %v1125
      %v1127 = vlaneseq
      %v1128 = vshrl.u32 %v1127, 7
      %v1129 = vsub.s32 0, %v1128
      %v1130 = vrot.slane %v1087, %v1129
      %v1131 = vlaneseq
      %v1132 = vshrl.u32 %v1131, 7
      %v1133 = vsub.s32 0, %v1132
      %v1134 = vrot.slane %v1089, %v1133
      %v1135 = vlaneseq
      %v1136 = vshrl.u32 %v1135, 7
      %v1137 = vsub.s32 0, %v1136
      %v1138 = vrot.slane %v1091, %v1137
      %v1139 = vlaneseq
      %v1140 = vshrl.u32 %v1139, 7
      %v1141 = vsub.s32 0, %v1140
      %v1142 = vrot.slane %v1093, %v1141
      %v1143 = vlaneseq
      %v1144 = vshrl.u32 %v1143, 7
      %v1145 = vsub.s32 0, %v1144
      %v1146 = vrot.slane %v1095, %v1145
      %v1147 = vlaneseq
      %v1148 = vshrl.u32 %v1147, 7
      %v1149 = vsub.s32 0, %v1148
      %v1150 = vrot.slane %v1097, %v1149
      %v1151 = vlaneseq
      %v1152 = vshrl.u32 %v1151, 7
      %v1153 = vsub.s32 0, %v1152
      %v1154 = vrot.slane %v1099, %v1153
      %v1155 = vlaneseq
      %v1156 = vshrl.u32 %v1155, 7
      %v1157 = vsub.s32 0, %v1156
      %v1158 = vrot.slane %v1101, %v1157
      %v1159 = vlaneseq
      %v1160 = vshrl.u32 %v1159, 7
      %v1161 = vsub.s32 0, %v1160
      %v1162 = vrot.slane %v1103, %v1161
      %v1163 = vlaneseq
      %v1164 = vshrl.u32 %v1163, 7
      %v1165 = vsub.s32 0, %v1164
      %v1166 = vrot.slane %v1105, %v1165
      %v1167 = vlaneseq
      %v1168 = vshrl.u32 %v1167, 7
      %v1169 = vsub.s32 0, %v1168
      %v1170 = vrot.slane %v1107, %v1169
      %v1171 = vlaneseq
      %v1172 = vshrl.u32 %v1171, 7
      %v1173 = vsub.s32 0, %v1172
      %v1174 = vrot.slane %v1109, %v1173
      %1177 = vrot.lane.b32.xlu0 %v1079, 96
      %v1178 = vpop.permute.xlu0 %1177
      %1179 = vrot.lane.b32.xlu0 %v1080, 96
      %v1180 = vpop.permute.xlu0 %1179
      %v1183 = vmul.f32 %v1114, %v1178
      %v1184 = vmul.f32 %v1114, %v1180
      %v1185 = vmul.f32 %v1118, %v1178
      %v1186 = vmul.f32 %v1118, %v1180
      %v1187 = vmul.f32 %v1122, %v1178
      %v1188 = vmul.f32 %v1122, %v1180
      %v1189 = vmul.f32 %v1126, %v1178
      %v1190 = vmul.f32 %v1126, %v1180
      %v1191 = vmul.f32 %v1130, %v1178
      %v1192 = vmul.f32 %v1130, %v1180
      %v1193 = vmul.f32 %v1134, %v1178
      %v1194 = vmul.f32 %v1134, %v1180
      %v1195 = vmul.f32 %v1138, %v1178
      %v1196 = vmul.f32 %v1138, %v1180
      %v1197 = vmul.f32 %v1142, %v1178
      %v1198 = vmul.f32 %v1142, %v1180
      %v1199 = vmul.f32 %v1146, %v1178
      %v1200 = vmul.f32 %v1146, %v1180
      %v1201 = vmul.f32 %v1150, %v1178
      %v1202 = vmul.f32 %v1150, %v1180
      %v1203 = vmul.f32 %v1154, %v1178
      %v1204 = vmul.f32 %v1154, %v1180
      %v1205 = vmul.f32 %v1158, %v1178
      %v1206 = vmul.f32 %v1158, %v1180
      %v1207 = vmul.f32 %v1162, %v1178
      %v1208 = vmul.f32 %v1162, %v1180
      %v1209 = vmul.f32 %v1166, %v1178
      %v1210 = vmul.f32 %v1166, %v1180
      %v1211 = vmul.f32 %v1170, %v1178
      %v1212 = vmul.f32 %v1170, %v1180
      %v1213 = vmul.f32 %v1174, %v1178
      %v1214 = vmul.f32 %v1174, %v1180
      %v1215 = vlaneseq
      %v1216 = vshrl.u32 %v1215, 7
      %v1217 = vsub.s32 1, %v1216
      %v1218 = vrot.slane %v1079, %v1217
      %v1219 = vlaneseq
      %v1220 = vshrl.u32 %v1219, 7
      %v1221 = vsub.s32 1, %v1220
      %v1222 = vrot.slane %v1081, %v1221
      %v1223 = vlaneseq
      %v1224 = vshrl.u32 %v1223, 7
      %v1225 = vsub.s32 1, %v1224
      %v1226 = vrot.slane %v1083, %v1225
      %v1227 = vlaneseq
      %v1228 = vshrl.u32 %v1227, 7
      %v1229 = vsub.s32 1, %v1228
      %v1230 = vrot.slane %v1085, %v1229
      %v1231 = vlaneseq
      %v1232 = vshrl.u32 %v1231, 7
      %v1233 = vsub.s32 1, %v1232
      %v1234 = vrot.slane %v1087, %v1233
      %v1235 = vlaneseq
      %v1236 = vshrl.u32 %v1235, 7
      %v1237 = vsub.s32 1, %v1236
      %v1238 = vrot.slane %v1089, %v1237
      %v1239 = vlaneseq
      %v1240 = vshrl.u32 %v1239, 7
      %v1241 = vsub.s32 1, %v1240
      %v1242 = vrot.slane %v1091, %v1241
      %v1243 = vlaneseq
      %v1244 = vshrl.u32 %v1243, 7
      %v1245 = vsub.s32 1, %v1244
      %v1246 = vrot.slane %v1093, %v1245
      %v1247 = vlaneseq
      %v1248 = vshrl.u32 %v1247, 7
      %v1249 = vsub.s32 1, %v1248
      %v1250 = vrot.slane %v1095, %v1249
      %v1251 = vlaneseq
      %v1252 = vshrl.u32 %v1251, 7
      %v1253 = vsub.s32 1, %v1252
      %v1254 = vrot.slane %v1097, %v1253
      %v1255 = vlaneseq
      %v1256 = vshrl.u32 %v1255, 7
      %v1257 = vsub.s32 1, %v1256
      %v1258 = vrot.slane %v1099, %v1257
      %v1259 = vlaneseq
      %v1260 = vshrl.u32 %v1259, 7
      %v1261 = vsub.s32 1, %v1260
      %v1262 = vrot.slane %v1101, %v1261
      %v1263 = vlaneseq
      %v1264 = vshrl.u32 %v1263, 7
      %v1265 = vsub.s32 1, %v1264
      %v1266 = vrot.slane %v1103, %v1265
      %v1267 = vlaneseq
      %v1268 = vshrl.u32 %v1267, 7
      %v1269 = vsub.s32 1, %v1268
      %v1270 = vrot.slane %v1105, %v1269
      %v1271 = vlaneseq
      %v1272 = vshrl.u32 %v1271, 7
      %v1273 = vsub.s32 1, %v1272
      %v1274 = vrot.slane %v1107, %v1273
      %v1275 = vlaneseq
      %v1276 = vshrl.u32 %v1275, 7
      %v1277 = vsub.s32 1, %v1276
      %v1278 = vrot.slane %v1109, %v1277
      %1281 = vrot.lane.b32.xlu0 %v1081, 96
      %v1282 = vpop.permute.xlu0 %1281
      %1283 = vrot.lane.b32.xlu0 %v1082, 96
      %v1284 = vpop.permute.xlu0 %1283
      %v1287 = vmul.f32 %v1218, %v1282
      %v1288 = vmul.f32 %v1218, %v1284
      %v1289 = vmul.f32 %v1222, %v1282
      %v1290 = vmul.f32 %v1222, %v1284
      %v1291 = vmul.f32 %v1226, %v1282
      %v1292 = vmul.f32 %v1226, %v1284
      %v1293 = vmul.f32 %v1230, %v1282
      %v1294 = vmul.f32 %v1230, %v1284
      %v1295 = vmul.f32 %v1234, %v1282
      %v1296 = vmul.f32 %v1234, %v1284
      %v1297 = vmul.f32 %v1238, %v1282
      %v1298 = vmul.f32 %v1238, %v1284
      %v1299 = vmul.f32 %v1242, %v1282
      %v1300 = vmul.f32 %v1242, %v1284
      %v1301 = vmul.f32 %v1246, %v1282
      %v1302 = vmul.f32 %v1246, %v1284
      %v1303 = vmul.f32 %v1250, %v1282
      %v1304 = vmul.f32 %v1250, %v1284
      %v1305 = vmul.f32 %v1254, %v1282
      %v1306 = vmul.f32 %v1254, %v1284
      %v1307 = vmul.f32 %v1258, %v1282
      %v1308 = vmul.f32 %v1258, %v1284
      %v1309 = vmul.f32 %v1262, %v1282
      %v1310 = vmul.f32 %v1262, %v1284
      %v1311 = vmul.f32 %v1266, %v1282
      %v1312 = vmul.f32 %v1266, %v1284
      %v1313 = vmul.f32 %v1270, %v1282
      %v1314 = vmul.f32 %v1270, %v1284
      %v1315 = vmul.f32 %v1274, %v1282
      %v1316 = vmul.f32 %v1274, %v1284
      %v1317 = vmul.f32 %v1278, %v1282
      %v1318 = vmul.f32 %v1278, %v1284
      %v1319 = vadd.f32 %v1183, %v1287
      %v1320 = vadd.f32 %v1184, %v1288
      %v1321 = vadd.f32 %v1185, %v1289
      %v1322 = vadd.f32 %v1186, %v1290
      %v1323 = vadd.f32 %v1187, %v1291
      %v1324 = vadd.f32 %v1188, %v1292
      %v1325 = vadd.f32 %v1189, %v1293
      %v1326 = vadd.f32 %v1190, %v1294
      %v1327 = vadd.f32 %v1191, %v1295
      %v1328 = vadd.f32 %v1192, %v1296
      %v1329 = vadd.f32 %v1193, %v1297
      %v1330 = vadd.f32 %v1194, %v1298
      %v1331 = vadd.f32 %v1195, %v1299
      %v1332 = vadd.f32 %v1196, %v1300
      %v1333 = vadd.f32 %v1197, %v1301
      %v1334 = vadd.f32 %v1198, %v1302
      %v1335 = vadd.f32 %v1199, %v1303
      %v1336 = vadd.f32 %v1200, %v1304
      %v1337 = vadd.f32 %v1201, %v1305
      %v1338 = vadd.f32 %v1202, %v1306
      %v1339 = vadd.f32 %v1203, %v1307
      %v1340 = vadd.f32 %v1204, %v1308
      %v1341 = vadd.f32 %v1205, %v1309
      %v1342 = vadd.f32 %v1206, %v1310
      %v1343 = vadd.f32 %v1207, %v1311
      %v1344 = vadd.f32 %v1208, %v1312
      %v1345 = vadd.f32 %v1209, %v1313
      %v1346 = vadd.f32 %v1210, %v1314
      %v1347 = vadd.f32 %v1211, %v1315
      %v1348 = vadd.f32 %v1212, %v1316
      %v1349 = vadd.f32 %v1213, %v1317
      %v1350 = vadd.f32 %v1214, %v1318
      %v1351 = vlaneseq
      %v1352 = vshrl.u32 %v1351, 7
      %v1353 = vsub.s32 2, %v1352
      %v1354 = vrot.slane %v1079, %v1353
      %v1355 = vlaneseq
      %v1356 = vshrl.u32 %v1355, 7
      %v1357 = vsub.s32 2, %v1356
      %v1358 = vrot.slane %v1081, %v1357
      %v1359 = vlaneseq
      %v1360 = vshrl.u32 %v1359, 7
      %v1361 = vsub.s32 2, %v1360
      %v1362 = vrot.slane %v1083, %v1361
      %v1363 = vlaneseq
      %v1364 = vshrl.u32 %v1363, 7
      %v1365 = vsub.s32 2, %v1364
      %v1366 = vrot.slane %v1085, %v1365
      %v1367 = vlaneseq
      %v1368 = vshrl.u32 %v1367, 7
      %v1369 = vsub.s32 2, %v1368
      %v1370 = vrot.slane %v1087, %v1369
      %v1371 = vlaneseq
      %v1372 = vshrl.u32 %v1371, 7
      %v1373 = vsub.s32 2, %v1372
      %v1374 = vrot.slane %v1089, %v1373
      %v1375 = vlaneseq
      %v1376 = vshrl.u32 %v1375, 7
      %v1377 = vsub.s32 2, %v1376
      %v1378 = vrot.slane %v1091, %v1377
      %v1379 = vlaneseq
      %v1380 = vshrl.u32 %v1379, 7
      %v1381 = vsub.s32 2, %v1380
      %v1382 = vrot.slane %v1093, %v1381
      %v1383 = vlaneseq
      %v1384 = vshrl.u32 %v1383, 7
      %v1385 = vsub.s32 2, %v1384
      %v1386 = vrot.slane %v1095, %v1385
      %v1387 = vlaneseq
      %v1388 = vshrl.u32 %v1387, 7
      %v1389 = vsub.s32 2, %v1388
      %v1390 = vrot.slane %v1097, %v1389
      %v1391 = vlaneseq
      %v1392 = vshrl.u32 %v1391, 7
      %v1393 = vsub.s32 2, %v1392
      %v1394 = vrot.slane %v1099, %v1393
      %v1395 = vlaneseq
      %v1396 = vshrl.u32 %v1395, 7
      %v1397 = vsub.s32 2, %v1396
      %v1398 = vrot.slane %v1101, %v1397
      %v1399 = vlaneseq
      %v1400 = vshrl.u32 %v1399, 7
      %v1401 = vsub.s32 2, %v1400
      %v1402 = vrot.slane %v1103, %v1401
      %v1403 = vlaneseq
      %v1404 = vshrl.u32 %v1403, 7
      %v1405 = vsub.s32 2, %v1404
      %v1406 = vrot.slane %v1105, %v1405
      %v1407 = vlaneseq
      %v1408 = vshrl.u32 %v1407, 7
      %v1409 = vsub.s32 2, %v1408
      %v1410 = vrot.slane %v1107, %v1409
      %v1411 = vlaneseq
      %v1412 = vshrl.u32 %v1411, 7
      %v1413 = vsub.s32 2, %v1412
      %v1414 = vrot.slane %v1109, %v1413
      %1417 = vrot.lane.b32.xlu0 %v1083, 96
      %v1418 = vpop.permute.xlu0 %1417
      %1419 = vrot.lane.b32.xlu0 %v1084, 96
      %v1420 = vpop.permute.xlu0 %1419
      %v1423 = vmul.f32 %v1354, %v1418
      %v1424 = vmul.f32 %v1354, %v1420
      %v1425 = vmul.f32 %v1358, %v1418
      %v1426 = vmul.f32 %v1358, %v1420
      %v1427 = vmul.f32 %v1362, %v1418
      %v1428 = vmul.f32 %v1362, %v1420
      %v1429 = vmul.f32 %v1366, %v1418
      %v1430 = vmul.f32 %v1366, %v1420
      %v1431 = vmul.f32 %v1370, %v1418
      %v1432 = vmul.f32 %v1370, %v1420
      %v1433 = vmul.f32 %v1374, %v1418
      %v1434 = vmul.f32 %v1374, %v1420
      %v1435 = vmul.f32 %v1378, %v1418
      %v1436 = vmul.f32 %v1378, %v1420
      %v1437 = vmul.f32 %v1382, %v1418
      %v1438 = vmul.f32 %v1382, %v1420
      %v1439 = vmul.f32 %v1386, %v1418
      %v1440 = vmul.f32 %v1386, %v1420
      %v1441 = vmul.f32 %v1390, %v1418
      %v1442 = vmul.f32 %v1390, %v1420
      %v1443 = vmul.f32 %v1394, %v1418
      %v1444 = vmul.f32 %v1394, %v1420
      %v1445 = vmul.f32 %v1398, %v1418
      %v1446 = vmul.f32 %v1398, %v1420
      %v1447 = vmul.f32 %v1402, %v1418
      %v1448 = vmul.f32 %v1402, %v1420
      %v1449 = vmul.f32 %v1406, %v1418
      %v1450 = vmul.f32 %v1406, %v1420
      %v1451 = vmul.f32 %v1410, %v1418
      %v1452 = vmul.f32 %v1410, %v1420
      %v1453 = vmul.f32 %v1414, %v1418
      %v1454 = vmul.f32 %v1414, %v1420
      %v1455 = vadd.f32 %v1319, %v1423
      %v1456 = vadd.f32 %v1320, %v1424
      %v1457 = vadd.f32 %v1321, %v1425
      %v1458 = vadd.f32 %v1322, %v1426
      %v1459 = vadd.f32 %v1323, %v1427
      %v1460 = vadd.f32 %v1324, %v1428
      %v1461 = vadd.f32 %v1325, %v1429
      %v1462 = vadd.f32 %v1326, %v1430
      %v1463 = vadd.f32 %v1327, %v1431
      %v1464 = vadd.f32 %v1328, %v1432
      %v1465 = vadd.f32 %v1329, %v1433
      %v1466 = vadd.f32 %v1330, %v1434
      %v1467 = vadd.f32 %v1331, %v1435
      %v1468 = vadd.f32 %v1332, %v1436
      %v1469 = vadd.f32 %v1333, %v1437
      %v1470 = vadd.f32 %v1334, %v1438
      %v1471 = vadd.f32 %v1335, %v1439
      %v1472 = vadd.f32 %v1336, %v1440
      %v1473 = vadd.f32 %v1337, %v1441
      %v1474 = vadd.f32 %v1338, %v1442
      %v1475 = vadd.f32 %v1339, %v1443
      %v1476 = vadd.f32 %v1340, %v1444
      %v1477 = vadd.f32 %v1341, %v1445
      %v1478 = vadd.f32 %v1342, %v1446
      %v1479 = vadd.f32 %v1343, %v1447
      %v1480 = vadd.f32 %v1344, %v1448
      %v1481 = vadd.f32 %v1345, %v1449
      %v1482 = vadd.f32 %v1346, %v1450
      %v1483 = vadd.f32 %v1347, %v1451
      %v1484 = vadd.f32 %v1348, %v1452
      %v1485 = vadd.f32 %v1349, %v1453
      %v1486 = vadd.f32 %v1350, %v1454
      %v1487 = vlaneseq
      %v1488 = vshrl.u32 %v1487, 7
      %v1489 = vsub.s32 3, %v1488
      %v1490 = vrot.slane %v1079, %v1489
      %v1491 = vlaneseq
      %v1492 = vshrl.u32 %v1491, 7
      %v1493 = vsub.s32 3, %v1492
      %v1494 = vrot.slane %v1081, %v1493
      %v1495 = vlaneseq
      %v1496 = vshrl.u32 %v1495, 7
      %v1497 = vsub.s32 3, %v1496
      %v1498 = vrot.slane %v1083, %v1497
      %v1499 = vlaneseq
      %v1500 = vshrl.u32 %v1499, 7
      %v1501 = vsub.s32 3, %v1500
      %v1502 = vrot.slane %v1085, %v1501
      %v1503 = vlaneseq
      %v1504 = vshrl.u32 %v1503, 7
      %v1505 = vsub.s32 3, %v1504
      %v1506 = vrot.slane %v1087, %v1505
      %v1507 = vlaneseq
      %v1508 = vshrl.u32 %v1507, 7
      %v1509 = vsub.s32 3, %v1508
      %v1510 = vrot.slane %v1089, %v1509
      %v1511 = vlaneseq
      %v1512 = vshrl.u32 %v1511, 7
      %v1513 = vsub.s32 3, %v1512
      %v1514 = vrot.slane %v1091, %v1513
      %v1515 = vlaneseq
      %v1516 = vshrl.u32 %v1515, 7
      %v1517 = vsub.s32 3, %v1516
      %v1518 = vrot.slane %v1093, %v1517
      %v1519 = vlaneseq
      %v1520 = vshrl.u32 %v1519, 7
      %v1521 = vsub.s32 3, %v1520
      %v1522 = vrot.slane %v1095, %v1521
      %v1523 = vlaneseq
      %v1524 = vshrl.u32 %v1523, 7
      %v1525 = vsub.s32 3, %v1524
      %v1526 = vrot.slane %v1097, %v1525
      %v1527 = vlaneseq
      %v1528 = vshrl.u32 %v1527, 7
      %v1529 = vsub.s32 3, %v1528
      %v1530 = vrot.slane %v1099, %v1529
      %v1531 = vlaneseq
      %v1532 = vshrl.u32 %v1531, 7
      %v1533 = vsub.s32 3, %v1532
      %v1534 = vrot.slane %v1101, %v1533
      %v1535 = vlaneseq
      %v1536 = vshrl.u32 %v1535, 7
      %v1537 = vsub.s32 3, %v1536
      %v1538 = vrot.slane %v1103, %v1537
      %v1539 = vlaneseq
      %v1540 = vshrl.u32 %v1539, 7
      %v1541 = vsub.s32 3, %v1540
      %v1542 = vrot.slane %v1105, %v1541
      %v1543 = vlaneseq
      %v1544 = vshrl.u32 %v1543, 7
      %v1545 = vsub.s32 3, %v1544
      %v1546 = vrot.slane %v1107, %v1545
      %v1547 = vlaneseq
      %v1548 = vshrl.u32 %v1547, 7
      %v1549 = vsub.s32 3, %v1548
      %v1550 = vrot.slane %v1109, %v1549
      %1553 = vrot.lane.b32.xlu0 %v1085, 96
      %v1554 = vpop.permute.xlu0 %1553
      %1555 = vrot.lane.b32.xlu0 %v1086, 96
      %v1556 = vpop.permute.xlu0 %1555
      %v1559 = vmul.f32 %v1490, %v1554
      %v1560 = vmul.f32 %v1490, %v1556
      %v1561 = vmul.f32 %v1494, %v1554
      %v1562 = vmul.f32 %v1494, %v1556
      %v1563 = vmul.f32 %v1498, %v1554
      %v1564 = vmul.f32 %v1498, %v1556
      %v1565 = vmul.f32 %v1502, %v1554
      %v1566 = vmul.f32 %v1502, %v1556
      %v1567 = vmul.f32 %v1506, %v1554
      %v1568 = vmul.f32 %v1506, %v1556
      %v1569 = vmul.f32 %v1510, %v1554
      %v1570 = vmul.f32 %v1510, %v1556
      %v1571 = vmul.f32 %v1514, %v1554
      %v1572 = vmul.f32 %v1514, %v1556
      %v1573 = vmul.f32 %v1518, %v1554
      %v1574 = vmul.f32 %v1518, %v1556
      %v1575 = vmul.f32 %v1522, %v1554
      %v1576 = vmul.f32 %v1522, %v1556
      %v1577 = vmul.f32 %v1526, %v1554
      %v1578 = vmul.f32 %v1526, %v1556
      %v1579 = vmul.f32 %v1530, %v1554
      %v1580 = vmul.f32 %v1530, %v1556
      %v1581 = vmul.f32 %v1534, %v1554
      %v1582 = vmul.f32 %v1534, %v1556
      %v1583 = vmul.f32 %v1538, %v1554
      %v1584 = vmul.f32 %v1538, %v1556
      %v1585 = vmul.f32 %v1542, %v1554
      %v1586 = vmul.f32 %v1542, %v1556
      %v1587 = vmul.f32 %v1546, %v1554
      %v1588 = vmul.f32 %v1546, %v1556
      %v1589 = vmul.f32 %v1550, %v1554
      %v1590 = vmul.f32 %v1550, %v1556
      %v1591 = vadd.f32 %v1455, %v1559
      %v1592 = vadd.f32 %v1456, %v1560
      %v1593 = vadd.f32 %v1457, %v1561
      %v1594 = vadd.f32 %v1458, %v1562
      %v1595 = vadd.f32 %v1459, %v1563
      %v1596 = vadd.f32 %v1460, %v1564
      %v1597 = vadd.f32 %v1461, %v1565
      %v1598 = vadd.f32 %v1462, %v1566
      %v1599 = vadd.f32 %v1463, %v1567
      %v1600 = vadd.f32 %v1464, %v1568
      %v1601 = vadd.f32 %v1465, %v1569
      %v1602 = vadd.f32 %v1466, %v1570
      %v1603 = vadd.f32 %v1467, %v1571
      %v1604 = vadd.f32 %v1468, %v1572
      %v1605 = vadd.f32 %v1469, %v1573
      %v1606 = vadd.f32 %v1470, %v1574
      %v1607 = vadd.f32 %v1471, %v1575
      %v1608 = vadd.f32 %v1472, %v1576
      %v1609 = vadd.f32 %v1473, %v1577
      %v1610 = vadd.f32 %v1474, %v1578
      %v1611 = vadd.f32 %v1475, %v1579
      %v1612 = vadd.f32 %v1476, %v1580
      %v1613 = vadd.f32 %v1477, %v1581
      %v1614 = vadd.f32 %v1478, %v1582
      %v1615 = vadd.f32 %v1479, %v1583
      %v1616 = vadd.f32 %v1480, %v1584
      %v1617 = vadd.f32 %v1481, %v1585
      %v1618 = vadd.f32 %v1482, %v1586
      %v1619 = vadd.f32 %v1483, %v1587
      %v1620 = vadd.f32 %v1484, %v1588
      %v1621 = vadd.f32 %v1485, %v1589
      %v1622 = vadd.f32 %v1486, %v1590
      %v1623 = vlaneseq
      %v1624 = vshrl.u32 %v1623, 7
      %v1625 = vsub.s32 4, %v1624
      %v1626 = vrot.slane %v1079, %v1625
      %v1627 = vlaneseq
      %v1628 = vshrl.u32 %v1627, 7
      %v1629 = vsub.s32 4, %v1628
      %v1630 = vrot.slane %v1081, %v1629
      %v1631 = vlaneseq
      %v1632 = vshrl.u32 %v1631, 7
      %v1633 = vsub.s32 4, %v1632
      %v1634 = vrot.slane %v1083, %v1633
      %v1635 = vlaneseq
      %v1636 = vshrl.u32 %v1635, 7
      %v1637 = vsub.s32 4, %v1636
      %v1638 = vrot.slane %v1085, %v1637
      %v1639 = vlaneseq
      %v1640 = vshrl.u32 %v1639, 7
      %v1641 = vsub.s32 4, %v1640
      %v1642 = vrot.slane %v1087, %v1641
      %v1643 = vlaneseq
      %v1644 = vshrl.u32 %v1643, 7
      %v1645 = vsub.s32 4, %v1644
      %v1646 = vrot.slane %v1089, %v1645
      %v1647 = vlaneseq
      %v1648 = vshrl.u32 %v1647, 7
      %v1649 = vsub.s32 4, %v1648
      %v1650 = vrot.slane %v1091, %v1649
      %v1651 = vlaneseq
      %v1652 = vshrl.u32 %v1651, 7
      %v1653 = vsub.s32 4, %v1652
      %v1654 = vrot.slane %v1093, %v1653
      %v1655 = vlaneseq
      %v1656 = vshrl.u32 %v1655, 7
      %v1657 = vsub.s32 4, %v1656
      %v1658 = vrot.slane %v1095, %v1657
      %v1659 = vlaneseq
      %v1660 = vshrl.u32 %v1659, 7
      %v1661 = vsub.s32 4, %v1660
      %v1662 = vrot.slane %v1097, %v1661
      %v1663 = vlaneseq
      %v1664 = vshrl.u32 %v1663, 7
      %v1665 = vsub.s32 4, %v1664
      %v1666 = vrot.slane %v1099, %v1665
      %v1667 = vlaneseq
      %v1668 = vshrl.u32 %v1667, 7
      %v1669 = vsub.s32 4, %v1668
      %v1670 = vrot.slane %v1101, %v1669
      %v1671 = vlaneseq
      %v1672 = vshrl.u32 %v1671, 7
      %v1673 = vsub.s32 4, %v1672
      %v1674 = vrot.slane %v1103, %v1673
      %v1675 = vlaneseq
      %v1676 = vshrl.u32 %v1675, 7
      %v1677 = vsub.s32 4, %v1676
      %v1678 = vrot.slane %v1105, %v1677
      %v1679 = vlaneseq
      %v1680 = vshrl.u32 %v1679, 7
      %v1681 = vsub.s32 4, %v1680
      %v1682 = vrot.slane %v1107, %v1681
      %v1683 = vlaneseq
      %v1684 = vshrl.u32 %v1683, 7
      %v1685 = vsub.s32 4, %v1684
      %v1686 = vrot.slane %v1109, %v1685
      %1689 = vrot.lane.b32.xlu0 %v1087, 96
      %v1690 = vpop.permute.xlu0 %1689
      %1691 = vrot.lane.b32.xlu0 %v1088, 96
      %v1692 = vpop.permute.xlu0 %1691
      %v1695 = vmul.f32 %v1626, %v1690
      %v1696 = vmul.f32 %v1626, %v1692
      %v1697 = vmul.f32 %v1630, %v1690
      %v1698 = vmul.f32 %v1630, %v1692
      %v1699 = vmul.f32 %v1634, %v1690
      %v1700 = vmul.f32 %v1634, %v1692
      %v1701 = vmul.f32 %v1638, %v1690
      %v1702 = vmul.f32 %v1638, %v1692
      %v1703 = vmul.f32 %v1642, %v1690
      %v1704 = vmul.f32 %v1642, %v1692
      %v1705 = vmul.f32 %v1646, %v1690
      %v1706 = vmul.f32 %v1646, %v1692
      %v1707 = vmul.f32 %v1650, %v1690
      %v1708 = vmul.f32 %v1650, %v1692
      %v1709 = vmul.f32 %v1654, %v1690
      %v1710 = vmul.f32 %v1654, %v1692
      %v1711 = vmul.f32 %v1658, %v1690
      %v1712 = vmul.f32 %v1658, %v1692
      %v1713 = vmul.f32 %v1662, %v1690
      %v1714 = vmul.f32 %v1662, %v1692
      %v1715 = vmul.f32 %v1666, %v1690
      %v1716 = vmul.f32 %v1666, %v1692
      %v1717 = vmul.f32 %v1670, %v1690
      %v1718 = vmul.f32 %v1670, %v1692
      %v1719 = vmul.f32 %v1674, %v1690
      %v1720 = vmul.f32 %v1674, %v1692
      %v1721 = vmul.f32 %v1678, %v1690
      %v1722 = vmul.f32 %v1678, %v1692
      %v1723 = vmul.f32 %v1682, %v1690
      %v1724 = vmul.f32 %v1682, %v1692
      %v1725 = vmul.f32 %v1686, %v1690
      %v1726 = vmul.f32 %v1686, %v1692
      %v1727 = vadd.f32 %v1591, %v1695
      %v1728 = vadd.f32 %v1592, %v1696
      %v1729 = vadd.f32 %v1593, %v1697
      %v1730 = vadd.f32 %v1594, %v1698
      %v1731 = vadd.f32 %v1595, %v1699
      %v1732 = vadd.f32 %v1596, %v1700
      %v1733 = vadd.f32 %v1597, %v1701
      %v1734 = vadd.f32 %v1598, %v1702
      %v1735 = vadd.f32 %v1599, %v1703
      %v1736 = vadd.f32 %v1600, %v1704
      %v1737 = vadd.f32 %v1601, %v1705
      %v1738 = vadd.f32 %v1602, %v1706
      %v1739 = vadd.f32 %v1603, %v1707
      %v1740 = vadd.f32 %v1604, %v1708
      %v1741 = vadd.f32 %v1605, %v1709
      %v1742 = vadd.f32 %v1606, %v1710
      %v1743 = vadd.f32 %v1607, %v1711
      %v1744 = vadd.f32 %v1608, %v1712
      %v1745 = vadd.f32 %v1609, %v1713
      %v1746 = vadd.f32 %v1610, %v1714
      %v1747 = vadd.f32 %v1611, %v1715
      %v1748 = vadd.f32 %v1612, %v1716
      %v1749 = vadd.f32 %v1613, %v1717
      %v1750 = vadd.f32 %v1614, %v1718
      %v1751 = vadd.f32 %v1615, %v1719
      %v1752 = vadd.f32 %v1616, %v1720
      %v1753 = vadd.f32 %v1617, %v1721
      %v1754 = vadd.f32 %v1618, %v1722
      %v1755 = vadd.f32 %v1619, %v1723
      %v1756 = vadd.f32 %v1620, %v1724
      %v1757 = vadd.f32 %v1621, %v1725
      %v1758 = vadd.f32 %v1622, %v1726
      %v1759 = vlaneseq
      %v1760 = vshrl.u32 %v1759, 7
      %v1761 = vsub.s32 5, %v1760
      %v1762 = vrot.slane %v1079, %v1761
      %v1763 = vlaneseq
      %v1764 = vshrl.u32 %v1763, 7
      %v1765 = vsub.s32 5, %v1764
      %v1766 = vrot.slane %v1081, %v1765
      %v1767 = vlaneseq
      %v1768 = vshrl.u32 %v1767, 7
      %v1769 = vsub.s32 5, %v1768
      %v1770 = vrot.slane %v1083, %v1769
      %v1771 = vlaneseq
      %v1772 = vshrl.u32 %v1771, 7
      %v1773 = vsub.s32 5, %v1772
      %v1774 = vrot.slane %v1085, %v1773
      %v1775 = vlaneseq
      %v1776 = vshrl.u32 %v1775, 7
      %v1777 = vsub.s32 5, %v1776
      %v1778 = vrot.slane %v1087, %v1777
      %v1779 = vlaneseq
      %v1780 = vshrl.u32 %v1779, 7
      %v1781 = vsub.s32 5, %v1780
      %v1782 = vrot.slane %v1089, %v1781
      %v1783 = vlaneseq
      %v1784 = vshrl.u32 %v1783, 7
      %v1785 = vsub.s32 5, %v1784
      %v1786 = vrot.slane %v1091, %v1785
      %v1787 = vlaneseq
      %v1788 = vshrl.u32 %v1787, 7
      %v1789 = vsub.s32 5, %v1788
      %v1790 = vrot.slane %v1093, %v1789
      %v1791 = vlaneseq
      %v1792 = vshrl.u32 %v1791, 7
      %v1793 = vsub.s32 5, %v1792
      %v1794 = vrot.slane %v1095, %v1793
      %v1795 = vlaneseq
      %v1796 = vshrl.u32 %v1795, 7
      %v1797 = vsub.s32 5, %v1796
      %v1798 = vrot.slane %v1097, %v1797
      %v1799 = vlaneseq
      %v1800 = vshrl.u32 %v1799, 7
      %v1801 = vsub.s32 5, %v1800
      %v1802 = vrot.slane %v1099, %v1801
      %v1803 = vlaneseq
      %v1804 = vshrl.u32 %v1803, 7
      %v1805 = vsub.s32 5, %v1804
      %v1806 = vrot.slane %v1101, %v1805
      %v1807 = vlaneseq
      %v1808 = vshrl.u32 %v1807, 7
      %v1809 = vsub.s32 5, %v1808
      %v1810 = vrot.slane %v1103, %v1809
      %v1811 = vlaneseq
      %v1812 = vshrl.u32 %v1811, 7
      %v1813 = vsub.s32 5, %v1812
      %v1814 = vrot.slane %v1105, %v1813
      %v1815 = vlaneseq
      %v1816 = vshrl.u32 %v1815, 7
      %v1817 = vsub.s32 5, %v1816
      %v1818 = vrot.slane %v1107, %v1817
      %v1819 = vlaneseq
      %v1820 = vshrl.u32 %v1819, 7
      %v1821 = vsub.s32 5, %v1820
      %v1822 = vrot.slane %v1109, %v1821
      %1825 = vrot.lane.b32.xlu0 %v1089, 96
      %v1826 = vpop.permute.xlu0 %1825
      %1827 = vrot.lane.b32.xlu0 %v1090, 96
      %v1828 = vpop.permute.xlu0 %1827
      %v1831 = vmul.f32 %v1762, %v1826
      %v1832 = vmul.f32 %v1762, %v1828
      %v1833 = vmul.f32 %v1766, %v1826
      %v1834 = vmul.f32 %v1766, %v1828
      %v1835 = vmul.f32 %v1770, %v1826
      %v1836 = vmul.f32 %v1770, %v1828
      %v1837 = vmul.f32 %v1774, %v1826
      %v1838 = vmul.f32 %v1774, %v1828
      %v1839 = vmul.f32 %v1778, %v1826
      %v1840 = vmul.f32 %v1778, %v1828
      %v1841 = vmul.f32 %v1782, %v1826
      %v1842 = vmul.f32 %v1782, %v1828
      %v1843 = vmul.f32 %v1786, %v1826
      %v1844 = vmul.f32 %v1786, %v1828
      %v1845 = vmul.f32 %v1790, %v1826
      %v1846 = vmul.f32 %v1790, %v1828
      %v1847 = vmul.f32 %v1794, %v1826
      %v1848 = vmul.f32 %v1794, %v1828
      %v1849 = vmul.f32 %v1798, %v1826
      %v1850 = vmul.f32 %v1798, %v1828
      %v1851 = vmul.f32 %v1802, %v1826
      %v1852 = vmul.f32 %v1802, %v1828
      %v1853 = vmul.f32 %v1806, %v1826
      %v1854 = vmul.f32 %v1806, %v1828
      %v1855 = vmul.f32 %v1810, %v1826
      %v1856 = vmul.f32 %v1810, %v1828
      %v1857 = vmul.f32 %v1814, %v1826
      %v1858 = vmul.f32 %v1814, %v1828
      %v1859 = vmul.f32 %v1818, %v1826
      %v1860 = vmul.f32 %v1818, %v1828
      %v1861 = vmul.f32 %v1822, %v1826
      %v1862 = vmul.f32 %v1822, %v1828
      %v1863 = vadd.f32 %v1727, %v1831
      %v1864 = vadd.f32 %v1728, %v1832
      %v1865 = vadd.f32 %v1729, %v1833
      %v1866 = vadd.f32 %v1730, %v1834
      %v1867 = vadd.f32 %v1731, %v1835
      %v1868 = vadd.f32 %v1732, %v1836
      %v1869 = vadd.f32 %v1733, %v1837
      %v1870 = vadd.f32 %v1734, %v1838
      %v1871 = vadd.f32 %v1735, %v1839
      %v1872 = vadd.f32 %v1736, %v1840
      %v1873 = vadd.f32 %v1737, %v1841
      %v1874 = vadd.f32 %v1738, %v1842
      %v1875 = vadd.f32 %v1739, %v1843
      %v1876 = vadd.f32 %v1740, %v1844
      %v1877 = vadd.f32 %v1741, %v1845
      %v1878 = vadd.f32 %v1742, %v1846
      %v1879 = vadd.f32 %v1743, %v1847
      %v1880 = vadd.f32 %v1744, %v1848
      %v1881 = vadd.f32 %v1745, %v1849
      %v1882 = vadd.f32 %v1746, %v1850
      %v1883 = vadd.f32 %v1747, %v1851
      %v1884 = vadd.f32 %v1748, %v1852
      %v1885 = vadd.f32 %v1749, %v1853
      %v1886 = vadd.f32 %v1750, %v1854
      %v1887 = vadd.f32 %v1751, %v1855
      %v1888 = vadd.f32 %v1752, %v1856
      %v1889 = vadd.f32 %v1753, %v1857
      %v1890 = vadd.f32 %v1754, %v1858
      %v1891 = vadd.f32 %v1755, %v1859
      %v1892 = vadd.f32 %v1756, %v1860
      %v1893 = vadd.f32 %v1757, %v1861
      %v1894 = vadd.f32 %v1758, %v1862
      %v1895 = vlaneseq
      %v1896 = vshrl.u32 %v1895, 7
      %v1897 = vsub.s32 6, %v1896
      %v1898 = vrot.slane %v1079, %v1897
      %v1899 = vlaneseq
      %v1900 = vshrl.u32 %v1899, 7
      %v1901 = vsub.s32 6, %v1900
      %v1902 = vrot.slane %v1081, %v1901
      %v1903 = vlaneseq
      %v1904 = vshrl.u32 %v1903, 7
      %v1905 = vsub.s32 6, %v1904
      %v1906 = vrot.slane %v1083, %v1905
      %v1907 = vlaneseq
      %v1908 = vshrl.u32 %v1907, 7
      %v1909 = vsub.s32 6, %v1908
      %v1910 = vrot.slane %v1085, %v1909
      %v1911 = vlaneseq
      %v1912 = vshrl.u32 %v1911, 7
      %v1913 = vsub.s32 6, %v1912
      %v1914 = vrot.slane %v1087, %v1913
      %v1915 = vlaneseq
      %v1916 = vshrl.u32 %v1915, 7
      %v1917 = vsub.s32 6, %v1916
      %v1918 = vrot.slane %v1089, %v1917
      %v1919 = vlaneseq
      %v1920 = vshrl.u32 %v1919, 7
      %v1921 = vsub.s32 6, %v1920
      %v1922 = vrot.slane %v1091, %v1921
      %v1923 = vlaneseq
      %v1924 = vshrl.u32 %v1923, 7
      %v1925 = vsub.s32 6, %v1924
      %v1926 = vrot.slane %v1093, %v1925
      %v1927 = vlaneseq
      %v1928 = vshrl.u32 %v1927, 7
      %v1929 = vsub.s32 6, %v1928
      %v1930 = vrot.slane %v1095, %v1929
      %v1931 = vlaneseq
      %v1932 = vshrl.u32 %v1931, 7
      %v1933 = vsub.s32 6, %v1932
      %v1934 = vrot.slane %v1097, %v1933
      %v1935 = vlaneseq
      %v1936 = vshrl.u32 %v1935, 7
      %v1937 = vsub.s32 6, %v1936
      %v1938 = vrot.slane %v1099, %v1937
      %v1939 = vlaneseq
      %v1940 = vshrl.u32 %v1939, 7
      %v1941 = vsub.s32 6, %v1940
      %v1942 = vrot.slane %v1101, %v1941
      %v1943 = vlaneseq
      %v1944 = vshrl.u32 %v1943, 7
      %v1945 = vsub.s32 6, %v1944
      %v1946 = vrot.slane %v1103, %v1945
      %v1947 = vlaneseq
      %v1948 = vshrl.u32 %v1947, 7
      %v1949 = vsub.s32 6, %v1948
      %v1950 = vrot.slane %v1105, %v1949
      %v1951 = vlaneseq
      %v1952 = vshrl.u32 %v1951, 7
      %v1953 = vsub.s32 6, %v1952
      %v1954 = vrot.slane %v1107, %v1953
      %v1955 = vlaneseq
      %v1956 = vshrl.u32 %v1955, 7
      %v1957 = vsub.s32 6, %v1956
      %v1958 = vrot.slane %v1109, %v1957
      %1961 = vrot.lane.b32.xlu0 %v1091, 96
      %v1962 = vpop.permute.xlu0 %1961
      %1963 = vrot.lane.b32.xlu0 %v1092, 96
      %v1964 = vpop.permute.xlu0 %1963
      %v1967 = vmul.f32 %v1898, %v1962
      %v1968 = vmul.f32 %v1898, %v1964
      %v1969 = vmul.f32 %v1902, %v1962
      %v1970 = vmul.f32 %v1902, %v1964
      %v1971 = vmul.f32 %v1906, %v1962
      %v1972 = vmul.f32 %v1906, %v1964
      %v1973 = vmul.f32 %v1910, %v1962
      %v1974 = vmul.f32 %v1910, %v1964
      %v1975 = vmul.f32 %v1914, %v1962
      %v1976 = vmul.f32 %v1914, %v1964
      %v1977 = vmul.f32 %v1918, %v1962
      %v1978 = vmul.f32 %v1918, %v1964
      %v1979 = vmul.f32 %v1922, %v1962
      %v1980 = vmul.f32 %v1922, %v1964
      %v1981 = vmul.f32 %v1926, %v1962
      %v1982 = vmul.f32 %v1926, %v1964
      %v1983 = vmul.f32 %v1930, %v1962
      %v1984 = vmul.f32 %v1930, %v1964
      %v1985 = vmul.f32 %v1934, %v1962
      %v1986 = vmul.f32 %v1934, %v1964
      %v1987 = vmul.f32 %v1938, %v1962
      %v1988 = vmul.f32 %v1938, %v1964
      %v1989 = vmul.f32 %v1942, %v1962
      %v1990 = vmul.f32 %v1942, %v1964
      %v1991 = vmul.f32 %v1946, %v1962
      %v1992 = vmul.f32 %v1946, %v1964
      %v1993 = vmul.f32 %v1950, %v1962
      %v1994 = vmul.f32 %v1950, %v1964
      %v1995 = vmul.f32 %v1954, %v1962
      %v1996 = vmul.f32 %v1954, %v1964
      %v1997 = vmul.f32 %v1958, %v1962
      %v1998 = vmul.f32 %v1958, %v1964
      %v1999 = vadd.f32 %v1863, %v1967
      %v2000 = vadd.f32 %v1864, %v1968
      %v2001 = vadd.f32 %v1865, %v1969
      %v2002 = vadd.f32 %v1866, %v1970
      %v2003 = vadd.f32 %v1867, %v1971
      %v2004 = vadd.f32 %v1868, %v1972
      %v2005 = vadd.f32 %v1869, %v1973
      %v2006 = vadd.f32 %v1870, %v1974
      %v2007 = vadd.f32 %v1871, %v1975
      %v2008 = vadd.f32 %v1872, %v1976
      %v2009 = vadd.f32 %v1873, %v1977
      %v2010 = vadd.f32 %v1874, %v1978
      %v2011 = vadd.f32 %v1875, %v1979
      %v2012 = vadd.f32 %v1876, %v1980
      %v2013 = vadd.f32 %v1877, %v1981
      %v2014 = vadd.f32 %v1878, %v1982
      %v2015 = vadd.f32 %v1879, %v1983
      %v2016 = vadd.f32 %v1880, %v1984
      %v2017 = vadd.f32 %v1881, %v1985
      %v2018 = vadd.f32 %v1882, %v1986
      %v2019 = vadd.f32 %v1883, %v1987
      %v2020 = vadd.f32 %v1884, %v1988
      %v2021 = vadd.f32 %v1885, %v1989
      %v2022 = vadd.f32 %v1886, %v1990
      %v2023 = vadd.f32 %v1887, %v1991
      %v2024 = vadd.f32 %v1888, %v1992
      %v2025 = vadd.f32 %v1889, %v1993
      %v2026 = vadd.f32 %v1890, %v1994
      %v2027 = vadd.f32 %v1891, %v1995
      %v2028 = vadd.f32 %v1892, %v1996
      %v2029 = vadd.f32 %v1893, %v1997
      %v2030 = vadd.f32 %v1894, %v1998
      %v2031 = vlaneseq
      %v2032 = vshrl.u32 %v2031, 7
      %v2033 = vsub.s32 7, %v2032
      %v2034 = vrot.slane %v1079, %v2033
      %v2035 = vlaneseq
      %v2036 = vshrl.u32 %v2035, 7
      %v2037 = vsub.s32 7, %v2036
      %v2038 = vrot.slane %v1081, %v2037
      %v2039 = vlaneseq
      %v2040 = vshrl.u32 %v2039, 7
      %v2041 = vsub.s32 7, %v2040
      %v2042 = vrot.slane %v1083, %v2041
      %v2043 = vlaneseq
      %v2044 = vshrl.u32 %v2043, 7
      %v2045 = vsub.s32 7, %v2044
      %v2046 = vrot.slane %v1085, %v2045
      %v2047 = vlaneseq
      %v2048 = vshrl.u32 %v2047, 7
      %v2049 = vsub.s32 7, %v2048
      %v2050 = vrot.slane %v1087, %v2049
      %v2051 = vlaneseq
      %v2052 = vshrl.u32 %v2051, 7
      %v2053 = vsub.s32 7, %v2052
      %v2054 = vrot.slane %v1089, %v2053
      %v2055 = vlaneseq
      %v2056 = vshrl.u32 %v2055, 7
      %v2057 = vsub.s32 7, %v2056
      %v2058 = vrot.slane %v1091, %v2057
      %v2059 = vlaneseq
      %v2060 = vshrl.u32 %v2059, 7
      %v2061 = vsub.s32 7, %v2060
      %v2062 = vrot.slane %v1093, %v2061
      %v2063 = vlaneseq
      %v2064 = vshrl.u32 %v2063, 7
      %v2065 = vsub.s32 7, %v2064
      %v2066 = vrot.slane %v1095, %v2065
      %v2067 = vlaneseq
      %v2068 = vshrl.u32 %v2067, 7
      %v2069 = vsub.s32 7, %v2068
      %v2070 = vrot.slane %v1097, %v2069
      %v2071 = vlaneseq
      %v2072 = vshrl.u32 %v2071, 7
      %v2073 = vsub.s32 7, %v2072
      %v2074 = vrot.slane %v1099, %v2073
      %v2075 = vlaneseq
      %v2076 = vshrl.u32 %v2075, 7
      %v2077 = vsub.s32 7, %v2076
      %v2078 = vrot.slane %v1101, %v2077
      %v2079 = vlaneseq
      %v2080 = vshrl.u32 %v2079, 7
      %v2081 = vsub.s32 7, %v2080
      %v2082 = vrot.slane %v1103, %v2081
      %v2083 = vlaneseq
      %v2084 = vshrl.u32 %v2083, 7
      %v2085 = vsub.s32 7, %v2084
      %v2086 = vrot.slane %v1105, %v2085
      %v2087 = vlaneseq
      %v2088 = vshrl.u32 %v2087, 7
      %v2089 = vsub.s32 7, %v2088
      %v2090 = vrot.slane %v1107, %v2089
      %v2091 = vlaneseq
      %v2092 = vshrl.u32 %v2091, 7
      %v2093 = vsub.s32 7, %v2092
      %v2094 = vrot.slane %v1109, %v2093
      %2097 = vrot.lane.b32.xlu0 %v1093, 96
      %v2098 = vpop.permute.xlu0 %2097
      %2099 = vrot.lane.b32.xlu0 %v1094, 96
      %v2100 = vpop.permute.xlu0 %2099
      %v2103 = vmul.f32 %v2034, %v2098
      %v2104 = vmul.f32 %v2034, %v2100
      %v2105 = vmul.f32 %v2038, %v2098
      %v2106 = vmul.f32 %v2038, %v2100
      %v2107 = vmul.f32 %v2042, %v2098
      %v2108 = vmul.f32 %v2042, %v2100
      %v2109 = vmul.f32 %v2046, %v2098
      %v2110 = vmul.f32 %v2046, %v2100
      %v2111 = vmul.f32 %v2050, %v2098
      %v2112 = vmul.f32 %v2050, %v2100
      %v2113 = vmul.f32 %v2054, %v2098
      %v2114 = vmul.f32 %v2054, %v2100
      %v2115 = vmul.f32 %v2058, %v2098
      %v2116 = vmul.f32 %v2058, %v2100
      %v2117 = vmul.f32 %v2062, %v2098
      %v2118 = vmul.f32 %v2062, %v2100
      %v2119 = vmul.f32 %v2066, %v2098
      %v2120 = vmul.f32 %v2066, %v2100
      %v2121 = vmul.f32 %v2070, %v2098
      %v2122 = vmul.f32 %v2070, %v2100
      %v2123 = vmul.f32 %v2074, %v2098
      %v2124 = vmul.f32 %v2074, %v2100
      %v2125 = vmul.f32 %v2078, %v2098
      %v2126 = vmul.f32 %v2078, %v2100
      %v2127 = vmul.f32 %v2082, %v2098
      %v2128 = vmul.f32 %v2082, %v2100
      %v2129 = vmul.f32 %v2086, %v2098
      %v2130 = vmul.f32 %v2086, %v2100
      %v2131 = vmul.f32 %v2090, %v2098
      %v2132 = vmul.f32 %v2090, %v2100
      %v2133 = vmul.f32 %v2094, %v2098
      %v2134 = vmul.f32 %v2094, %v2100
      %v2135 = vadd.f32 %v1999, %v2103
      %v2136 = vadd.f32 %v2000, %v2104
      %v2137 = vadd.f32 %v2001, %v2105
      %v2138 = vadd.f32 %v2002, %v2106
      %v2139 = vadd.f32 %v2003, %v2107
      %v2140 = vadd.f32 %v2004, %v2108
      %v2141 = vadd.f32 %v2005, %v2109
      %v2142 = vadd.f32 %v2006, %v2110
      %v2143 = vadd.f32 %v2007, %v2111
      %v2144 = vadd.f32 %v2008, %v2112
      %v2145 = vadd.f32 %v2009, %v2113
      %v2146 = vadd.f32 %v2010, %v2114
      %v2147 = vadd.f32 %v2011, %v2115
      %v2148 = vadd.f32 %v2012, %v2116
      %v2149 = vadd.f32 %v2013, %v2117
      %v2150 = vadd.f32 %v2014, %v2118
      %v2151 = vadd.f32 %v2015, %v2119
      %v2152 = vadd.f32 %v2016, %v2120
      %v2153 = vadd.f32 %v2017, %v2121
      %v2154 = vadd.f32 %v2018, %v2122
      %v2155 = vadd.f32 %v2019, %v2123
      %v2156 = vadd.f32 %v2020, %v2124
      %v2157 = vadd.f32 %v2021, %v2125
      %v2158 = vadd.f32 %v2022, %v2126
      %v2159 = vadd.f32 %v2023, %v2127
      %v2160 = vadd.f32 %v2024, %v2128
      %v2161 = vadd.f32 %v2025, %v2129
      %v2162 = vadd.f32 %v2026, %v2130
      %v2163 = vadd.f32 %v2027, %v2131
      %v2164 = vadd.f32 %v2028, %v2132
      %v2165 = vadd.f32 %v2029, %v2133
      %v2166 = vadd.f32 %v2030, %v2134
      %v2167 = vlaneseq
      %v2168 = vshrl.u32 %v2167, 7
      %v2169 = vsub.s32 0, %v2168
      %v2170 = vrot.slane %v1080, %v2169
      %v2171 = vlaneseq
      %v2172 = vshrl.u32 %v2171, 7
      %v2173 = vsub.s32 0, %v2172
      %v2174 = vrot.slane %v1082, %v2173
      %v2175 = vlaneseq
      %v2176 = vshrl.u32 %v2175, 7
      %v2177 = vsub.s32 0, %v2176
      %v2178 = vrot.slane %v1084, %v2177
      %v2179 = vlaneseq
      %v2180 = vshrl.u32 %v2179, 7
      %v2181 = vsub.s32 0, %v2180
      %v2182 = vrot.slane %v1086, %v2181
      %v2183 = vlaneseq
      %v2184 = vshrl.u32 %v2183, 7
      %v2185 = vsub.s32 0, %v2184
      %v2186 = vrot.slane %v1088, %v2185
      %v2187 = vlaneseq
      %v2188 = vshrl.u32 %v2187, 7
      %v2189 = vsub.s32 0, %v2188
      %v2190 = vrot.slane %v1090, %v2189
      %v2191 = vlaneseq
      %v2192 = vshrl.u32 %v2191, 7
      %v2193 = vsub.s32 0, %v2192
      %v2194 = vrot.slane %v1092, %v2193
      %v2195 = vlaneseq
      %v2196 = vshrl.u32 %v2195, 7
      %v2197 = vsub.s32 0, %v2196
      %v2198 = vrot.slane %v1094, %v2197
      %v2199 = vlaneseq
      %v2200 = vshrl.u32 %v2199, 7
      %v2201 = vsub.s32 0, %v2200
      %v2202 = vrot.slane %v1096, %v2201
      %v2203 = vlaneseq
      %v2204 = vshrl.u32 %v2203, 7
      %v2205 = vsub.s32 0, %v2204
      %v2206 = vrot.slane %v1098, %v2205
      %v2207 = vlaneseq
      %v2208 = vshrl.u32 %v2207, 7
      %v2209 = vsub.s32 0, %v2208
      %v2210 = vrot.slane %v1100, %v2209
      %v2211 = vlaneseq
      %v2212 = vshrl.u32 %v2211, 7
      %v2213 = vsub.s32 0, %v2212
      %v2214 = vrot.slane %v1102, %v2213
      %v2215 = vlaneseq
      %v2216 = vshrl.u32 %v2215, 7
      %v2217 = vsub.s32 0, %v2216
      %v2218 = vrot.slane %v1104, %v2217
      %v2219 = vlaneseq
      %v2220 = vshrl.u32 %v2219, 7
      %v2221 = vsub.s32 0, %v2220
      %v2222 = vrot.slane %v1106, %v2221
      %v2223 = vlaneseq
      %v2224 = vshrl.u32 %v2223, 7
      %v2225 = vsub.s32 0, %v2224
      %v2226 = vrot.slane %v1108, %v2225
      %v2227 = vlaneseq
      %v2228 = vshrl.u32 %v2227, 7
      %v2229 = vsub.s32 0, %v2228
      %v2230 = vrot.slane %v1110, %v2229
      %2233 = vrot.lane.b32.xlu0 %v1095, 96
      %v2234 = vpop.permute.xlu0 %2233
      %2235 = vrot.lane.b32.xlu0 %v1096, 96
      %v2236 = vpop.permute.xlu0 %2235
      %v2239 = vmul.f32 %v2170, %v2234
      %v2240 = vmul.f32 %v2170, %v2236
      %v2241 = vmul.f32 %v2174, %v2234
      %v2242 = vmul.f32 %v2174, %v2236
      %v2243 = vmul.f32 %v2178, %v2234
      %v2244 = vmul.f32 %v2178, %v2236
      %v2245 = vmul.f32 %v2182, %v2234
      %v2246 = vmul.f32 %v2182, %v2236
      %v2247 = vmul.f32 %v2186, %v2234
      %v2248 = vmul.f32 %v2186, %v2236
      %v2249 = vmul.f32 %v2190, %v2234
      %v2250 = vmul.f32 %v2190, %v2236
      %v2251 = vmul.f32 %v2194, %v2234
      %v2252 = vmul.f32 %v2194, %v2236
      %v2253 = vmul.f32 %v2198, %v2234
      %v2254 = vmul.f32 %v2198, %v2236
      %v2255 = vmul.f32 %v2202, %v2234
      %v2256 = vmul.f32 %v2202, %v2236
      %v2257 = vmul.f32 %v2206, %v2234
      %v2258 = vmul.f32 %v2206, %v2236
      %v2259 = vmul.f32 %v2210, %v2234
      %v2260 = vmul.f32 %v2210, %v2236
      %v2261 = vmul.f32 %v2214, %v2234
      %v2262 = vmul.f32 %v2214, %v2236
      %v2263 = vmul.f32 %v2218, %v2234
      %v2264 = vmul.f32 %v2218, %v2236
      %v2265 = vmul.f32 %v2222, %v2234
      %v2266 = vmul.f32 %v2222, %v2236
      %v2267 = vmul.f32 %v2226, %v2234
      %v2268 = vmul.f32 %v2226, %v2236
      %v2269 = vmul.f32 %v2230, %v2234
      %v2270 = vmul.f32 %v2230, %v2236
      %v2271 = vadd.f32 %v2135, %v2239
      %v2272 = vadd.f32 %v2136, %v2240
      %v2273 = vadd.f32 %v2137, %v2241
      %v2274 = vadd.f32 %v2138, %v2242
      %v2275 = vadd.f32 %v2139, %v2243
      %v2276 = vadd.f32 %v2140, %v2244
      %v2277 = vadd.f32 %v2141, %v2245
      %v2278 = vadd.f32 %v2142, %v2246
      %v2279 = vadd.f32 %v2143, %v2247
      %v2280 = vadd.f32 %v2144, %v2248
      %v2281 = vadd.f32 %v2145, %v2249
      %v2282 = vadd.f32 %v2146, %v2250
      %v2283 = vadd.f32 %v2147, %v2251
      %v2284 = vadd.f32 %v2148, %v2252
      %v2285 = vadd.f32 %v2149, %v2253
      %v2286 = vadd.f32 %v2150, %v2254
      %v2287 = vadd.f32 %v2151, %v2255
      %v2288 = vadd.f32 %v2152, %v2256
      %v2289 = vadd.f32 %v2153, %v2257
      %v2290 = vadd.f32 %v2154, %v2258
      %v2291 = vadd.f32 %v2155, %v2259
      %v2292 = vadd.f32 %v2156, %v2260
      %v2293 = vadd.f32 %v2157, %v2261
      %v2294 = vadd.f32 %v2158, %v2262
      %v2295 = vadd.f32 %v2159, %v2263
      %v2296 = vadd.f32 %v2160, %v2264
      %v2297 = vadd.f32 %v2161, %v2265
      %v2298 = vadd.f32 %v2162, %v2266
      %v2299 = vadd.f32 %v2163, %v2267
      %v2300 = vadd.f32 %v2164, %v2268
      %v2301 = vadd.f32 %v2165, %v2269
      %v2302 = vadd.f32 %v2166, %v2270
      %v2303 = vlaneseq
      %v2304 = vshrl.u32 %v2303, 7
      %v2305 = vsub.s32 1, %v2304
      %v2306 = vrot.slane %v1080, %v2305
      %v2307 = vlaneseq
      %v2308 = vshrl.u32 %v2307, 7
      %v2309 = vsub.s32 1, %v2308
      %v2310 = vrot.slane %v1082, %v2309
      %v2311 = vlaneseq
      %v2312 = vshrl.u32 %v2311, 7
      %v2313 = vsub.s32 1, %v2312
      %v2314 = vrot.slane %v1084, %v2313
      %v2315 = vlaneseq
      %v2316 = vshrl.u32 %v2315, 7
      %v2317 = vsub.s32 1, %v2316
      %v2318 = vrot.slane %v1086, %v2317
      %v2319 = vlaneseq
      %v2320 = vshrl.u32 %v2319, 7
      %v2321 = vsub.s32 1, %v2320
      %v2322 = vrot.slane %v1088, %v2321
      %v2323 = vlaneseq
      %v2324 = vshrl.u32 %v2323, 7
      %v2325 = vsub.s32 1, %v2324
      %v2326 = vrot.slane %v1090, %v2325
      %v2327 = vlaneseq
      %v2328 = vshrl.u32 %v2327, 7
      %v2329 = vsub.s32 1, %v2328
      %v2330 = vrot.slane %v1092, %v2329
      %v2331 = vlaneseq
      %v2332 = vshrl.u32 %v2331, 7
      %v2333 = vsub.s32 1, %v2332
      %v2334 = vrot.slane %v1094, %v2333
      %v2335 = vlaneseq
      %v2336 = vshrl.u32 %v2335, 7
      %v2337 = vsub.s32 1, %v2336
      %v2338 = vrot.slane %v1096, %v2337
      %v2339 = vlaneseq
      %v2340 = vshrl.u32 %v2339, 7
      %v2341 = vsub.s32 1, %v2340
      %v2342 = vrot.slane %v1098, %v2341
      %v2343 = vlaneseq
      %v2344 = vshrl.u32 %v2343, 7
      %v2345 = vsub.s32 1, %v2344
      %v2346 = vrot.slane %v1100, %v2345
      %v2347 = vlaneseq
      %v2348 = vshrl.u32 %v2347, 7
      %v2349 = vsub.s32 1, %v2348
      %v2350 = vrot.slane %v1102, %v2349
      %v2351 = vlaneseq
      %v2352 = vshrl.u32 %v2351, 7
      %v2353 = vsub.s32 1, %v2352
      %v2354 = vrot.slane %v1104, %v2353
      %v2355 = vlaneseq
      %v2356 = vshrl.u32 %v2355, 7
      %v2357 = vsub.s32 1, %v2356
      %v2358 = vrot.slane %v1106, %v2357
      %v2359 = vlaneseq
      %v2360 = vshrl.u32 %v2359, 7
      %v2361 = vsub.s32 1, %v2360
      %v2362 = vrot.slane %v1108, %v2361
      %v2363 = vlaneseq
      %v2364 = vshrl.u32 %v2363, 7
      %v2365 = vsub.s32 1, %v2364
      %v2366 = vrot.slane %v1110, %v2365
      %2369 = vrot.lane.b32.xlu0 %v1097, 96
      %v2370 = vpop.permute.xlu0 %2369
      %2371 = vrot.lane.b32.xlu0 %v1098, 96
      %v2372 = vpop.permute.xlu0 %2371
      %v2375 = vmul.f32 %v2306, %v2370
      %v2376 = vmul.f32 %v2306, %v2372
      %v2377 = vmul.f32 %v2310, %v2370
      %v2378 = vmul.f32 %v2310, %v2372
      %v2379 = vmul.f32 %v2314, %v2370
      %v2380 = vmul.f32 %v2314, %v2372
      %v2381 = vmul.f32 %v2318, %v2370
      %v2382 = vmul.f32 %v2318, %v2372
      %v2383 = vmul.f32 %v2322, %v2370
      %v2384 = vmul.f32 %v2322, %v2372
      %v2385 = vmul.f32 %v2326, %v2370
      %v2386 = vmul.f32 %v2326, %v2372
      %v2387 = vmul.f32 %v2330, %v2370
      %v2388 = vmul.f32 %v2330, %v2372
      %v2389 = vmul.f32 %v2334, %v2370
      %v2390 = vmul.f32 %v2334, %v2372
      %v2391 = vmul.f32 %v2338, %v2370
      %v2392 = vmul.f32 %v2338, %v2372
      %v2393 = vmul.f32 %v2342, %v2370
      %v2394 = vmul.f32 %v2342, %v2372
      %v2395 = vmul.f32 %v2346, %v2370
      %v2396 = vmul.f32 %v2346, %v2372
      %v2397 = vmul.f32 %v2350, %v2370
      %v2398 = vmul.f32 %v2350, %v2372
      %v2399 = vmul.f32 %v2354, %v2370
      %v2400 = vmul.f32 %v2354, %v2372
      %v2401 = vmul.f32 %v2358, %v2370
      %v2402 = vmul.f32 %v2358, %v2372
      %v2403 = vmul.f32 %v2362, %v2370
      %v2404 = vmul.f32 %v2362, %v2372
      %v2405 = vmul.f32 %v2366, %v2370
      %v2406 = vmul.f32 %v2366, %v2372
      %v2407 = vadd.f32 %v2271, %v2375
      %v2408 = vadd.f32 %v2272, %v2376
      %v2409 = vadd.f32 %v2273, %v2377
      %v2410 = vadd.f32 %v2274, %v2378
      %v2411 = vadd.f32 %v2275, %v2379
      %v2412 = vadd.f32 %v2276, %v2380
      %v2413 = vadd.f32 %v2277, %v2381
      %v2414 = vadd.f32 %v2278, %v2382
      %v2415 = vadd.f32 %v2279, %v2383
      %v2416 = vadd.f32 %v2280, %v2384
      %v2417 = vadd.f32 %v2281, %v2385
      %v2418 = vadd.f32 %v2282, %v2386
      %v2419 = vadd.f32 %v2283, %v2387
      %v2420 = vadd.f32 %v2284, %v2388
      %v2421 = vadd.f32 %v2285, %v2389
      %v2422 = vadd.f32 %v2286, %v2390
      %v2423 = vadd.f32 %v2287, %v2391
      %v2424 = vadd.f32 %v2288, %v2392
      %v2425 = vadd.f32 %v2289, %v2393
      %v2426 = vadd.f32 %v2290, %v2394
      %v2427 = vadd.f32 %v2291, %v2395
      %v2428 = vadd.f32 %v2292, %v2396
      %v2429 = vadd.f32 %v2293, %v2397
      %v2430 = vadd.f32 %v2294, %v2398
      %v2431 = vadd.f32 %v2295, %v2399
      %v2432 = vadd.f32 %v2296, %v2400
      %v2433 = vadd.f32 %v2297, %v2401
      %v2434 = vadd.f32 %v2298, %v2402
      %v2435 = vadd.f32 %v2299, %v2403
      %v2436 = vadd.f32 %v2300, %v2404
      %v2437 = vadd.f32 %v2301, %v2405
      %v2438 = vadd.f32 %v2302, %v2406
      %v2439 = vlaneseq
      %v2440 = vshrl.u32 %v2439, 7
      %v2441 = vsub.s32 2, %v2440
      %v2442 = vrot.slane %v1080, %v2441
      %v2443 = vlaneseq
      %v2444 = vshrl.u32 %v2443, 7
      %v2445 = vsub.s32 2, %v2444
      %v2446 = vrot.slane %v1082, %v2445
      %v2447 = vlaneseq
      %v2448 = vshrl.u32 %v2447, 7
      %v2449 = vsub.s32 2, %v2448
      %v2450 = vrot.slane %v1084, %v2449
      %v2451 = vlaneseq
      %v2452 = vshrl.u32 %v2451, 7
      %v2453 = vsub.s32 2, %v2452
      %v2454 = vrot.slane %v1086, %v2453
      %v2455 = vlaneseq
      %v2456 = vshrl.u32 %v2455, 7
      %v2457 = vsub.s32 2, %v2456
      %v2458 = vrot.slane %v1088, %v2457
      %v2459 = vlaneseq
      %v2460 = vshrl.u32 %v2459, 7
      %v2461 = vsub.s32 2, %v2460
      %v2462 = vrot.slane %v1090, %v2461
      %v2463 = vlaneseq
      %v2464 = vshrl.u32 %v2463, 7
      %v2465 = vsub.s32 2, %v2464
      %v2466 = vrot.slane %v1092, %v2465
      %v2467 = vlaneseq
      %v2468 = vshrl.u32 %v2467, 7
      %v2469 = vsub.s32 2, %v2468
      %v2470 = vrot.slane %v1094, %v2469
      %v2471 = vlaneseq
      %v2472 = vshrl.u32 %v2471, 7
      %v2473 = vsub.s32 2, %v2472
      %v2474 = vrot.slane %v1096, %v2473
      %v2475 = vlaneseq
      %v2476 = vshrl.u32 %v2475, 7
      %v2477 = vsub.s32 2, %v2476
      %v2478 = vrot.slane %v1098, %v2477
      %v2479 = vlaneseq
      %v2480 = vshrl.u32 %v2479, 7
      %v2481 = vsub.s32 2, %v2480
      %v2482 = vrot.slane %v1100, %v2481
      %v2483 = vlaneseq
      %v2484 = vshrl.u32 %v2483, 7
      %v2485 = vsub.s32 2, %v2484
      %v2486 = vrot.slane %v1102, %v2485
      %v2487 = vlaneseq
      %v2488 = vshrl.u32 %v2487, 7
      %v2489 = vsub.s32 2, %v2488
      %v2490 = vrot.slane %v1104, %v2489
      %v2491 = vlaneseq
      %v2492 = vshrl.u32 %v2491, 7
      %v2493 = vsub.s32 2, %v2492
      %v2494 = vrot.slane %v1106, %v2493
      %v2495 = vlaneseq
      %v2496 = vshrl.u32 %v2495, 7
      %v2497 = vsub.s32 2, %v2496
      %v2498 = vrot.slane %v1108, %v2497
      %v2499 = vlaneseq
      %v2500 = vshrl.u32 %v2499, 7
      %v2501 = vsub.s32 2, %v2500
      %v2502 = vrot.slane %v1110, %v2501
      %2505 = vrot.lane.b32.xlu0 %v1099, 96
      %v2506 = vpop.permute.xlu0 %2505
      %2507 = vrot.lane.b32.xlu0 %v1100, 96
      %v2508 = vpop.permute.xlu0 %2507
      %v2511 = vmul.f32 %v2442, %v2506
      %v2512 = vmul.f32 %v2442, %v2508
      %v2513 = vmul.f32 %v2446, %v2506
      %v2514 = vmul.f32 %v2446, %v2508
      %v2515 = vmul.f32 %v2450, %v2506
      %v2516 = vmul.f32 %v2450, %v2508
      %v2517 = vmul.f32 %v2454, %v2506
      %v2518 = vmul.f32 %v2454, %v2508
      %v2519 = vmul.f32 %v2458, %v2506
      %v2520 = vmul.f32 %v2458, %v2508
      %v2521 = vmul.f32 %v2462, %v2506
      %v2522 = vmul.f32 %v2462, %v2508
      %v2523 = vmul.f32 %v2466, %v2506
      %v2524 = vmul.f32 %v2466, %v2508
      %v2525 = vmul.f32 %v2470, %v2506
      %v2526 = vmul.f32 %v2470, %v2508
      %v2527 = vmul.f32 %v2474, %v2506
      %v2528 = vmul.f32 %v2474, %v2508
      %v2529 = vmul.f32 %v2478, %v2506
      %v2530 = vmul.f32 %v2478, %v2508
      %v2531 = vmul.f32 %v2482, %v2506
      %v2532 = vmul.f32 %v2482, %v2508
      %v2533 = vmul.f32 %v2486, %v2506
      %v2534 = vmul.f32 %v2486, %v2508
      %v2535 = vmul.f32 %v2490, %v2506
      %v2536 = vmul.f32 %v2490, %v2508
      %v2537 = vmul.f32 %v2494, %v2506
      %v2538 = vmul.f32 %v2494, %v2508
      %v2539 = vmul.f32 %v2498, %v2506
      %v2540 = vmul.f32 %v2498, %v2508
      %v2541 = vmul.f32 %v2502, %v2506
      %v2542 = vmul.f32 %v2502, %v2508
      %v2543 = vadd.f32 %v2407, %v2511
      %v2544 = vadd.f32 %v2408, %v2512
      %v2545 = vadd.f32 %v2409, %v2513
      %v2546 = vadd.f32 %v2410, %v2514
      %v2547 = vadd.f32 %v2411, %v2515
      %v2548 = vadd.f32 %v2412, %v2516
      %v2549 = vadd.f32 %v2413, %v2517
      %v2550 = vadd.f32 %v2414, %v2518
      %v2551 = vadd.f32 %v2415, %v2519
      %v2552 = vadd.f32 %v2416, %v2520
      %v2553 = vadd.f32 %v2417, %v2521
      %v2554 = vadd.f32 %v2418, %v2522
      %v2555 = vadd.f32 %v2419, %v2523
      %v2556 = vadd.f32 %v2420, %v2524
      %v2557 = vadd.f32 %v2421, %v2525
      %v2558 = vadd.f32 %v2422, %v2526
      %v2559 = vadd.f32 %v2423, %v2527
      %v2560 = vadd.f32 %v2424, %v2528
      %v2561 = vadd.f32 %v2425, %v2529
      %v2562 = vadd.f32 %v2426, %v2530
      %v2563 = vadd.f32 %v2427, %v2531
      %v2564 = vadd.f32 %v2428, %v2532
      %v2565 = vadd.f32 %v2429, %v2533
      %v2566 = vadd.f32 %v2430, %v2534
      %v2567 = vadd.f32 %v2431, %v2535
      %v2568 = vadd.f32 %v2432, %v2536
      %v2569 = vadd.f32 %v2433, %v2537
      %v2570 = vadd.f32 %v2434, %v2538
      %v2571 = vadd.f32 %v2435, %v2539
      %v2572 = vadd.f32 %v2436, %v2540
      %v2573 = vadd.f32 %v2437, %v2541
      %v2574 = vadd.f32 %v2438, %v2542
      %v2575 = vlaneseq
      %v2576 = vshrl.u32 %v2575, 7
      %v2577 = vsub.s32 3, %v2576
      %v2578 = vrot.slane %v1080, %v2577
      %v2579 = vlaneseq
      %v2580 = vshrl.u32 %v2579, 7
      %v2581 = vsub.s32 3, %v2580
      %v2582 = vrot.slane %v1082, %v2581
      %v2583 = vlaneseq
      %v2584 = vshrl.u32 %v2583, 7
      %v2585 = vsub.s32 3, %v2584
      %v2586 = vrot.slane %v1084, %v2585
      %v2587 = vlaneseq
      %v2588 = vshrl.u32 %v2587, 7
      %v2589 = vsub.s32 3, %v2588
      %v2590 = vrot.slane %v1086, %v2589
      %v2591 = vlaneseq
      %v2592 = vshrl.u32 %v2591, 7
      %v2593 = vsub.s32 3, %v2592
      %v2594 = vrot.slane %v1088, %v2593
      %v2595 = vlaneseq
      %v2596 = vshrl.u32 %v2595, 7
      %v2597 = vsub.s32 3, %v2596
      %v2598 = vrot.slane %v1090, %v2597
      %v2599 = vlaneseq
      %v2600 = vshrl.u32 %v2599, 7
      %v2601 = vsub.s32 3, %v2600
      %v2602 = vrot.slane %v1092, %v2601
      %v2603 = vlaneseq
      %v2604 = vshrl.u32 %v2603, 7
      %v2605 = vsub.s32 3, %v2604
      %v2606 = vrot.slane %v1094, %v2605
      %v2607 = vlaneseq
      %v2608 = vshrl.u32 %v2607, 7
      %v2609 = vsub.s32 3, %v2608
      %v2610 = vrot.slane %v1096, %v2609
      %v2611 = vlaneseq
      %v2612 = vshrl.u32 %v2611, 7
      %v2613 = vsub.s32 3, %v2612
      %v2614 = vrot.slane %v1098, %v2613
      %v2615 = vlaneseq
      %v2616 = vshrl.u32 %v2615, 7
      %v2617 = vsub.s32 3, %v2616
      %v2618 = vrot.slane %v1100, %v2617
      %v2619 = vlaneseq
      %v2620 = vshrl.u32 %v2619, 7
      %v2621 = vsub.s32 3, %v2620
      %v2622 = vrot.slane %v1102, %v2621
      %v2623 = vlaneseq
      %v2624 = vshrl.u32 %v2623, 7
      %v2625 = vsub.s32 3, %v2624
      %v2626 = vrot.slane %v1104, %v2625
      %v2627 = vlaneseq
      %v2628 = vshrl.u32 %v2627, 7
      %v2629 = vsub.s32 3, %v2628
      %v2630 = vrot.slane %v1106, %v2629
      %v2631 = vlaneseq
      %v2632 = vshrl.u32 %v2631, 7
      %v2633 = vsub.s32 3, %v2632
      %v2634 = vrot.slane %v1108, %v2633
      %v2635 = vlaneseq
      %v2636 = vshrl.u32 %v2635, 7
      %v2637 = vsub.s32 3, %v2636
      %v2638 = vrot.slane %v1110, %v2637
      %2641 = vrot.lane.b32.xlu0 %v1101, 96
      %v2642 = vpop.permute.xlu0 %2641
      %2643 = vrot.lane.b32.xlu0 %v1102, 96
      %v2644 = vpop.permute.xlu0 %2643
      %v2647 = vmul.f32 %v2578, %v2642
      %v2648 = vmul.f32 %v2578, %v2644
      %v2649 = vmul.f32 %v2582, %v2642
      %v2650 = vmul.f32 %v2582, %v2644
      %v2651 = vmul.f32 %v2586, %v2642
      %v2652 = vmul.f32 %v2586, %v2644
      %v2653 = vmul.f32 %v2590, %v2642
      %v2654 = vmul.f32 %v2590, %v2644
      %v2655 = vmul.f32 %v2594, %v2642
      %v2656 = vmul.f32 %v2594, %v2644
      %v2657 = vmul.f32 %v2598, %v2642
      %v2658 = vmul.f32 %v2598, %v2644
      %v2659 = vmul.f32 %v2602, %v2642
      %v2660 = vmul.f32 %v2602, %v2644
      %v2661 = vmul.f32 %v2606, %v2642
      %v2662 = vmul.f32 %v2606, %v2644
      %v2663 = vmul.f32 %v2610, %v2642
      %v2664 = vmul.f32 %v2610, %v2644
      %v2665 = vmul.f32 %v2614, %v2642
      %v2666 = vmul.f32 %v2614, %v2644
      %v2667 = vmul.f32 %v2618, %v2642
      %v2668 = vmul.f32 %v2618, %v2644
      %v2669 = vmul.f32 %v2622, %v2642
      %v2670 = vmul.f32 %v2622, %v2644
      %v2671 = vmul.f32 %v2626, %v2642
      %v2672 = vmul.f32 %v2626, %v2644
      %v2673 = vmul.f32 %v2630, %v2642
      %v2674 = vmul.f32 %v2630, %v2644
      %v2675 = vmul.f32 %v2634, %v2642
      %v2676 = vmul.f32 %v2634, %v2644
      %v2677 = vmul.f32 %v2638, %v2642
      %v2678 = vmul.f32 %v2638, %v2644
      %v2679 = vadd.f32 %v2543, %v2647
      %v2680 = vadd.f32 %v2544, %v2648
      %v2681 = vadd.f32 %v2545, %v2649
      %v2682 = vadd.f32 %v2546, %v2650
      %v2683 = vadd.f32 %v2547, %v2651
      %v2684 = vadd.f32 %v2548, %v2652
      %v2685 = vadd.f32 %v2549, %v2653
      %v2686 = vadd.f32 %v2550, %v2654
      %v2687 = vadd.f32 %v2551, %v2655
      %v2688 = vadd.f32 %v2552, %v2656
      %v2689 = vadd.f32 %v2553, %v2657
      %v2690 = vadd.f32 %v2554, %v2658
      %v2691 = vadd.f32 %v2555, %v2659
      %v2692 = vadd.f32 %v2556, %v2660
      %v2693 = vadd.f32 %v2557, %v2661
      %v2694 = vadd.f32 %v2558, %v2662
      %v2695 = vadd.f32 %v2559, %v2663
      %v2696 = vadd.f32 %v2560, %v2664
      %v2697 = vadd.f32 %v2561, %v2665
      %v2698 = vadd.f32 %v2562, %v2666
      %v2699 = vadd.f32 %v2563, %v2667
      %v2700 = vadd.f32 %v2564, %v2668
      %v2701 = vadd.f32 %v2565, %v2669
      %v2702 = vadd.f32 %v2566, %v2670
      %v2703 = vadd.f32 %v2567, %v2671
      %v2704 = vadd.f32 %v2568, %v2672
      %v2705 = vadd.f32 %v2569, %v2673
      %v2706 = vadd.f32 %v2570, %v2674
      %v2707 = vadd.f32 %v2571, %v2675
      %v2708 = vadd.f32 %v2572, %v2676
      %v2709 = vadd.f32 %v2573, %v2677
      %v2710 = vadd.f32 %v2574, %v2678
      %v2711 = vlaneseq
      %v2712 = vshrl.u32 %v2711, 7
      %v2713 = vsub.s32 4, %v2712
      %v2714 = vrot.slane %v1080, %v2713
      %v2715 = vlaneseq
      %v2716 = vshrl.u32 %v2715, 7
      %v2717 = vsub.s32 4, %v2716
      %v2718 = vrot.slane %v1082, %v2717
      %v2719 = vlaneseq
      %v2720 = vshrl.u32 %v2719, 7
      %v2721 = vsub.s32 4, %v2720
      %v2722 = vrot.slane %v1084, %v2721
      %v2723 = vlaneseq
      %v2724 = vshrl.u32 %v2723, 7
      %v2725 = vsub.s32 4, %v2724
      %v2726 = vrot.slane %v1086, %v2725
      %v2727 = vlaneseq
      %v2728 = vshrl.u32 %v2727, 7
      %v2729 = vsub.s32 4, %v2728
      %v2730 = vrot.slane %v1088, %v2729
      %v2731 = vlaneseq
      %v2732 = vshrl.u32 %v2731, 7
      %v2733 = vsub.s32 4, %v2732
      %v2734 = vrot.slane %v1090, %v2733
      %v2735 = vlaneseq
      %v2736 = vshrl.u32 %v2735, 7
      %v2737 = vsub.s32 4, %v2736
      %v2738 = vrot.slane %v1092, %v2737
      %v2739 = vlaneseq
      %v2740 = vshrl.u32 %v2739, 7
      %v2741 = vsub.s32 4, %v2740
      %v2742 = vrot.slane %v1094, %v2741
      %v2743 = vlaneseq
      %v2744 = vshrl.u32 %v2743, 7
      %v2745 = vsub.s32 4, %v2744
      %v2746 = vrot.slane %v1096, %v2745
      %v2747 = vlaneseq
      %v2748 = vshrl.u32 %v2747, 7
      %v2749 = vsub.s32 4, %v2748
      %v2750 = vrot.slane %v1098, %v2749
      %v2751 = vlaneseq
      %v2752 = vshrl.u32 %v2751, 7
      %v2753 = vsub.s32 4, %v2752
      %v2754 = vrot.slane %v1100, %v2753
      %v2755 = vlaneseq
      %v2756 = vshrl.u32 %v2755, 7
      %v2757 = vsub.s32 4, %v2756
      %v2758 = vrot.slane %v1102, %v2757
      %v2759 = vlaneseq
      %v2760 = vshrl.u32 %v2759, 7
      %v2761 = vsub.s32 4, %v2760
      %v2762 = vrot.slane %v1104, %v2761
      %v2763 = vlaneseq
      %v2764 = vshrl.u32 %v2763, 7
      %v2765 = vsub.s32 4, %v2764
      %v2766 = vrot.slane %v1106, %v2765
      %v2767 = vlaneseq
      %v2768 = vshrl.u32 %v2767, 7
      %v2769 = vsub.s32 4, %v2768
      %v2770 = vrot.slane %v1108, %v2769
      %v2771 = vlaneseq
      %v2772 = vshrl.u32 %v2771, 7
      %v2773 = vsub.s32 4, %v2772
      %v2774 = vrot.slane %v1110, %v2773
      %2777 = vrot.lane.b32.xlu0 %v1103, 96
      %v2778 = vpop.permute.xlu0 %2777
      %2779 = vrot.lane.b32.xlu0 %v1104, 96
      %v2780 = vpop.permute.xlu0 %2779
      %v2783 = vmul.f32 %v2714, %v2778
      %v2784 = vmul.f32 %v2714, %v2780
      %v2785 = vmul.f32 %v2718, %v2778
      %v2786 = vmul.f32 %v2718, %v2780
      %v2787 = vmul.f32 %v2722, %v2778
      %v2788 = vmul.f32 %v2722, %v2780
      %v2789 = vmul.f32 %v2726, %v2778
      %v2790 = vmul.f32 %v2726, %v2780
      %v2791 = vmul.f32 %v2730, %v2778
      %v2792 = vmul.f32 %v2730, %v2780
      %v2793 = vmul.f32 %v2734, %v2778
      %v2794 = vmul.f32 %v2734, %v2780
      %v2795 = vmul.f32 %v2738, %v2778
      %v2796 = vmul.f32 %v2738, %v2780
      %v2797 = vmul.f32 %v2742, %v2778
      %v2798 = vmul.f32 %v2742, %v2780
      %v2799 = vmul.f32 %v2746, %v2778
      %v2800 = vmul.f32 %v2746, %v2780
      %v2801 = vmul.f32 %v2750, %v2778
      %v2802 = vmul.f32 %v2750, %v2780
      %v2803 = vmul.f32 %v2754, %v2778
      %v2804 = vmul.f32 %v2754, %v2780
      %v2805 = vmul.f32 %v2758, %v2778
      %v2806 = vmul.f32 %v2758, %v2780
      %v2807 = vmul.f32 %v2762, %v2778
      %v2808 = vmul.f32 %v2762, %v2780
      %v2809 = vmul.f32 %v2766, %v2778
      %v2810 = vmul.f32 %v2766, %v2780
      %v2811 = vmul.f32 %v2770, %v2778
      %v2812 = vmul.f32 %v2770, %v2780
      %v2813 = vmul.f32 %v2774, %v2778
      %v2814 = vmul.f32 %v2774, %v2780
      %v2815 = vadd.f32 %v2679, %v2783
      %v2816 = vadd.f32 %v2680, %v2784
      %v2817 = vadd.f32 %v2681, %v2785
      %v2818 = vadd.f32 %v2682, %v2786
      %v2819 = vadd.f32 %v2683, %v2787
      %v2820 = vadd.f32 %v2684, %v2788
      %v2821 = vadd.f32 %v2685, %v2789
      %v2822 = vadd.f32 %v2686, %v2790
      %v2823 = vadd.f32 %v2687, %v2791
      %v2824 = vadd.f32 %v2688, %v2792
      %v2825 = vadd.f32 %v2689, %v2793
      %v2826 = vadd.f32 %v2690, %v2794
      %v2827 = vadd.f32 %v2691, %v2795
      %v2828 = vadd.f32 %v2692, %v2796
      %v2829 = vadd.f32 %v2693, %v2797
      %v2830 = vadd.f32 %v2694, %v2798
      %v2831 = vadd.f32 %v2695, %v2799
      %v2832 = vadd.f32 %v2696, %v2800
      %v2833 = vadd.f32 %v2697, %v2801
      %v2834 = vadd.f32 %v2698, %v2802
      %v2835 = vadd.f32 %v2699, %v2803
      %v2836 = vadd.f32 %v2700, %v2804
      %v2837 = vadd.f32 %v2701, %v2805
      %v2838 = vadd.f32 %v2702, %v2806
      %v2839 = vadd.f32 %v2703, %v2807
      %v2840 = vadd.f32 %v2704, %v2808
      %v2841 = vadd.f32 %v2705, %v2809
      %v2842 = vadd.f32 %v2706, %v2810
      %v2843 = vadd.f32 %v2707, %v2811
      %v2844 = vadd.f32 %v2708, %v2812
      %v2845 = vadd.f32 %v2709, %v2813
      %v2846 = vadd.f32 %v2710, %v2814
      %v2847 = vlaneseq
      %v2848 = vshrl.u32 %v2847, 7
      %v2849 = vsub.s32 5, %v2848
      %v2850 = vrot.slane %v1080, %v2849
      %v2851 = vlaneseq
      %v2852 = vshrl.u32 %v2851, 7
      %v2853 = vsub.s32 5, %v2852
      %v2854 = vrot.slane %v1082, %v2853
      %v2855 = vlaneseq
      %v2856 = vshrl.u32 %v2855, 7
      %v2857 = vsub.s32 5, %v2856
      %v2858 = vrot.slane %v1084, %v2857
      %v2859 = vlaneseq
      %v2860 = vshrl.u32 %v2859, 7
      %v2861 = vsub.s32 5, %v2860
      %v2862 = vrot.slane %v1086, %v2861
      %v2863 = vlaneseq
      %v2864 = vshrl.u32 %v2863, 7
      %v2865 = vsub.s32 5, %v2864
      %v2866 = vrot.slane %v1088, %v2865
      %v2867 = vlaneseq
      %v2868 = vshrl.u32 %v2867, 7
      %v2869 = vsub.s32 5, %v2868
      %v2870 = vrot.slane %v1090, %v2869
      %v2871 = vlaneseq
      %v2872 = vshrl.u32 %v2871, 7
      %v2873 = vsub.s32 5, %v2872
      %v2874 = vrot.slane %v1092, %v2873
      %v2875 = vlaneseq
      %v2876 = vshrl.u32 %v2875, 7
      %v2877 = vsub.s32 5, %v2876
      %v2878 = vrot.slane %v1094, %v2877
      %v2879 = vlaneseq
      %v2880 = vshrl.u32 %v2879, 7
      %v2881 = vsub.s32 5, %v2880
      %v2882 = vrot.slane %v1096, %v2881
      %v2883 = vlaneseq
      %v2884 = vshrl.u32 %v2883, 7
      %v2885 = vsub.s32 5, %v2884
      %v2886 = vrot.slane %v1098, %v2885
      %v2887 = vlaneseq
      %v2888 = vshrl.u32 %v2887, 7
      %v2889 = vsub.s32 5, %v2888
      %v2890 = vrot.slane %v1100, %v2889
      %v2891 = vlaneseq
      %v2892 = vshrl.u32 %v2891, 7
      %v2893 = vsub.s32 5, %v2892
      %v2894 = vrot.slane %v1102, %v2893
      %v2895 = vlaneseq
      %v2896 = vshrl.u32 %v2895, 7
      %v2897 = vsub.s32 5, %v2896
      %v2898 = vrot.slane %v1104, %v2897
      %v2899 = vlaneseq
      %v2900 = vshrl.u32 %v2899, 7
      %v2901 = vsub.s32 5, %v2900
      %v2902 = vrot.slane %v1106, %v2901
      %v2903 = vlaneseq
      %v2904 = vshrl.u32 %v2903, 7
      %v2905 = vsub.s32 5, %v2904
      %v2906 = vrot.slane %v1108, %v2905
      %v2907 = vlaneseq
      %v2908 = vshrl.u32 %v2907, 7
      %v2909 = vsub.s32 5, %v2908
      %v2910 = vrot.slane %v1110, %v2909
      %2913 = vrot.lane.b32.xlu0 %v1105, 96
      %v2914 = vpop.permute.xlu0 %2913
      %2915 = vrot.lane.b32.xlu0 %v1106, 96
      %v2916 = vpop.permute.xlu0 %2915
      %v2919 = vmul.f32 %v2850, %v2914
      %v2920 = vmul.f32 %v2850, %v2916
      %v2921 = vmul.f32 %v2854, %v2914
      %v2922 = vmul.f32 %v2854, %v2916
      %v2923 = vmul.f32 %v2858, %v2914
      %v2924 = vmul.f32 %v2858, %v2916
      %v2925 = vmul.f32 %v2862, %v2914
      %v2926 = vmul.f32 %v2862, %v2916
      %v2927 = vmul.f32 %v2866, %v2914
      %v2928 = vmul.f32 %v2866, %v2916
      %v2929 = vmul.f32 %v2870, %v2914
      %v2930 = vmul.f32 %v2870, %v2916
      %v2931 = vmul.f32 %v2874, %v2914
      %v2932 = vmul.f32 %v2874, %v2916
      %v2933 = vmul.f32 %v2878, %v2914
      %v2934 = vmul.f32 %v2878, %v2916
      %v2935 = vmul.f32 %v2882, %v2914
      %v2936 = vmul.f32 %v2882, %v2916
      %v2937 = vmul.f32 %v2886, %v2914
      %v2938 = vmul.f32 %v2886, %v2916
      %v2939 = vmul.f32 %v2890, %v2914
      %v2940 = vmul.f32 %v2890, %v2916
      %v2941 = vmul.f32 %v2894, %v2914
      %v2942 = vmul.f32 %v2894, %v2916
      %v2943 = vmul.f32 %v2898, %v2914
      %v2944 = vmul.f32 %v2898, %v2916
      %v2945 = vmul.f32 %v2902, %v2914
      %v2946 = vmul.f32 %v2902, %v2916
      %v2947 = vmul.f32 %v2906, %v2914
      %v2948 = vmul.f32 %v2906, %v2916
      %v2949 = vmul.f32 %v2910, %v2914
      %v2950 = vmul.f32 %v2910, %v2916
      %v2951 = vadd.f32 %v2815, %v2919
      %v2952 = vadd.f32 %v2816, %v2920
      %v2953 = vadd.f32 %v2817, %v2921
      %v2954 = vadd.f32 %v2818, %v2922
      %v2955 = vadd.f32 %v2819, %v2923
      %v2956 = vadd.f32 %v2820, %v2924
      %v2957 = vadd.f32 %v2821, %v2925
      %v2958 = vadd.f32 %v2822, %v2926
      %v2959 = vadd.f32 %v2823, %v2927
      %v2960 = vadd.f32 %v2824, %v2928
      %v2961 = vadd.f32 %v2825, %v2929
      %v2962 = vadd.f32 %v2826, %v2930
      %v2963 = vadd.f32 %v2827, %v2931
      %v2964 = vadd.f32 %v2828, %v2932
      %v2965 = vadd.f32 %v2829, %v2933
      %v2966 = vadd.f32 %v2830, %v2934
      %v2967 = vadd.f32 %v2831, %v2935
      %v2968 = vadd.f32 %v2832, %v2936
      %v2969 = vadd.f32 %v2833, %v2937
      %v2970 = vadd.f32 %v2834, %v2938
      %v2971 = vadd.f32 %v2835, %v2939
      %v2972 = vadd.f32 %v2836, %v2940
      %v2973 = vadd.f32 %v2837, %v2941
      %v2974 = vadd.f32 %v2838, %v2942
      %v2975 = vadd.f32 %v2839, %v2943
      %v2976 = vadd.f32 %v2840, %v2944
      %v2977 = vadd.f32 %v2841, %v2945
      %v2978 = vadd.f32 %v2842, %v2946
      %v2979 = vadd.f32 %v2843, %v2947
      %v2980 = vadd.f32 %v2844, %v2948
      %v2981 = vadd.f32 %v2845, %v2949
      %v2982 = vadd.f32 %v2846, %v2950
      %v2983 = vlaneseq
      %v2984 = vshrl.u32 %v2983, 7
      %v2985 = vsub.s32 6, %v2984
      %v2986 = vrot.slane %v1080, %v2985
      %v2987 = vlaneseq
      %v2988 = vshrl.u32 %v2987, 7
      %v2989 = vsub.s32 6, %v2988
      %v2990 = vrot.slane %v1082, %v2989
      %v2991 = vlaneseq
      %v2992 = vshrl.u32 %v2991, 7
      %v2993 = vsub.s32 6, %v2992
      %v2994 = vrot.slane %v1084, %v2993
      %v2995 = vlaneseq
      %v2996 = vshrl.u32 %v2995, 7
      %v2997 = vsub.s32 6, %v2996
      %v2998 = vrot.slane %v1086, %v2997
      %v2999 = vlaneseq
      %v3000 = vshrl.u32 %v2999, 7
      %v3001 = vsub.s32 6, %v3000
      %v3002 = vrot.slane %v1088, %v3001
      %v3003 = vlaneseq
      %v3004 = vshrl.u32 %v3003, 7
      %v3005 = vsub.s32 6, %v3004
      %v3006 = vrot.slane %v1090, %v3005
      %v3007 = vlaneseq
      %v3008 = vshrl.u32 %v3007, 7
      %v3009 = vsub.s32 6, %v3008
      %v3010 = vrot.slane %v1092, %v3009
      %v3011 = vlaneseq
      %v3012 = vshrl.u32 %v3011, 7
      %v3013 = vsub.s32 6, %v3012
      %v3014 = vrot.slane %v1094, %v3013
      %v3015 = vlaneseq
      %v3016 = vshrl.u32 %v3015, 7
      %v3017 = vsub.s32 6, %v3016
      %v3018 = vrot.slane %v1096, %v3017
      %v3019 = vlaneseq
      %v3020 = vshrl.u32 %v3019, 7
      %v3021 = vsub.s32 6, %v3020
      %v3022 = vrot.slane %v1098, %v3021
      %v3023 = vlaneseq
      %v3024 = vshrl.u32 %v3023, 7
      %v3025 = vsub.s32 6, %v3024
      %v3026 = vrot.slane %v1100, %v3025
      %v3027 = vlaneseq
      %v3028 = vshrl.u32 %v3027, 7
      %v3029 = vsub.s32 6, %v3028
      %v3030 = vrot.slane %v1102, %v3029
      %v3031 = vlaneseq
      %v3032 = vshrl.u32 %v3031, 7
      %v3033 = vsub.s32 6, %v3032
      %v3034 = vrot.slane %v1104, %v3033
      %v3035 = vlaneseq
      %v3036 = vshrl.u32 %v3035, 7
      %v3037 = vsub.s32 6, %v3036
      %v3038 = vrot.slane %v1106, %v3037
      %v3039 = vlaneseq
      %v3040 = vshrl.u32 %v3039, 7
      %v3041 = vsub.s32 6, %v3040
      %v3042 = vrot.slane %v1108, %v3041
      %v3043 = vlaneseq
      %v3044 = vshrl.u32 %v3043, 7
      %v3045 = vsub.s32 6, %v3044
      %v3046 = vrot.slane %v1110, %v3045
      %3049 = vrot.lane.b32.xlu0 %v1107, 96
      %v3050 = vpop.permute.xlu0 %3049
      %3051 = vrot.lane.b32.xlu0 %v1108, 96
      %v3052 = vpop.permute.xlu0 %3051
      %v3055 = vmul.f32 %v2986, %v3050
      %v3056 = vmul.f32 %v2986, %v3052
      %v3057 = vmul.f32 %v2990, %v3050
      %v3058 = vmul.f32 %v2990, %v3052
      %v3059 = vmul.f32 %v2994, %v3050
      %v3060 = vmul.f32 %v2994, %v3052
      %v3061 = vmul.f32 %v2998, %v3050
      %v3062 = vmul.f32 %v2998, %v3052
      %v3063 = vmul.f32 %v3002, %v3050
      %v3064 = vmul.f32 %v3002, %v3052
      %v3065 = vmul.f32 %v3006, %v3050
      %v3066 = vmul.f32 %v3006, %v3052
      %v3067 = vmul.f32 %v3010, %v3050
      %v3068 = vmul.f32 %v3010, %v3052
      %v3069 = vmul.f32 %v3014, %v3050
      %v3070 = vmul.f32 %v3014, %v3052
      %v3071 = vmul.f32 %v3018, %v3050
      %v3072 = vmul.f32 %v3018, %v3052
      %v3073 = vmul.f32 %v3022, %v3050
      %v3074 = vmul.f32 %v3022, %v3052
      %v3075 = vmul.f32 %v3026, %v3050
      %v3076 = vmul.f32 %v3026, %v3052
      %v3077 = vmul.f32 %v3030, %v3050
      %v3078 = vmul.f32 %v3030, %v3052
      %v3079 = vmul.f32 %v3034, %v3050
      %v3080 = vmul.f32 %v3034, %v3052
      %v3081 = vmul.f32 %v3038, %v3050
      %v3082 = vmul.f32 %v3038, %v3052
      %v3083 = vmul.f32 %v3042, %v3050
      %v3084 = vmul.f32 %v3042, %v3052
      %v3085 = vmul.f32 %v3046, %v3050
      %v3086 = vmul.f32 %v3046, %v3052
      %v3087 = vadd.f32 %v2951, %v3055
      %v3088 = vadd.f32 %v2952, %v3056
      %v3089 = vadd.f32 %v2953, %v3057
      %v3090 = vadd.f32 %v2954, %v3058
      %v3091 = vadd.f32 %v2955, %v3059
      %v3092 = vadd.f32 %v2956, %v3060
      %v3093 = vadd.f32 %v2957, %v3061
      %v3094 = vadd.f32 %v2958, %v3062
      %v3095 = vadd.f32 %v2959, %v3063
      %v3096 = vadd.f32 %v2960, %v3064
      %v3097 = vadd.f32 %v2961, %v3065
      %v3098 = vadd.f32 %v2962, %v3066
      %v3099 = vadd.f32 %v2963, %v3067
      %v3100 = vadd.f32 %v2964, %v3068
      %v3101 = vadd.f32 %v2965, %v3069
      %v3102 = vadd.f32 %v2966, %v3070
      %v3103 = vadd.f32 %v2967, %v3071
      %v3104 = vadd.f32 %v2968, %v3072
      %v3105 = vadd.f32 %v2969, %v3073
      %v3106 = vadd.f32 %v2970, %v3074
      %v3107 = vadd.f32 %v2971, %v3075
      %v3108 = vadd.f32 %v2972, %v3076
      %v3109 = vadd.f32 %v2973, %v3077
      %v3110 = vadd.f32 %v2974, %v3078
      %v3111 = vadd.f32 %v2975, %v3079
      %v3112 = vadd.f32 %v2976, %v3080
      %v3113 = vadd.f32 %v2977, %v3081
      %v3114 = vadd.f32 %v2978, %v3082
      %v3115 = vadd.f32 %v2979, %v3083
      %v3116 = vadd.f32 %v2980, %v3084
      %v3117 = vadd.f32 %v2981, %v3085
      %v3118 = vadd.f32 %v2982, %v3086
      %v3119 = vlaneseq
      %v3120 = vshrl.u32 %v3119, 7
      %v3121 = vsub.s32 7, %v3120
      %v3122 = vrot.slane %v1080, %v3121
      %v3123 = vlaneseq
      %v3124 = vshrl.u32 %v3123, 7
      %v3125 = vsub.s32 7, %v3124
      %v3126 = vrot.slane %v1082, %v3125
      %v3127 = vlaneseq
      %v3128 = vshrl.u32 %v3127, 7
      %v3129 = vsub.s32 7, %v3128
      %v3130 = vrot.slane %v1084, %v3129
      %v3131 = vlaneseq
      %v3132 = vshrl.u32 %v3131, 7
      %v3133 = vsub.s32 7, %v3132
      %v3134 = vrot.slane %v1086, %v3133
      %v3135 = vlaneseq
      %v3136 = vshrl.u32 %v3135, 7
      %v3137 = vsub.s32 7, %v3136
      %v3138 = vrot.slane %v1088, %v3137
      %v3139 = vlaneseq
      %v3140 = vshrl.u32 %v3139, 7
      %v3141 = vsub.s32 7, %v3140
      %v3142 = vrot.slane %v1090, %v3141
      %v3143 = vlaneseq
      %v3144 = vshrl.u32 %v3143, 7
      %v3145 = vsub.s32 7, %v3144
      %v3146 = vrot.slane %v1092, %v3145
      %v3147 = vlaneseq
      %v3148 = vshrl.u32 %v3147, 7
      %v3149 = vsub.s32 7, %v3148
      %v3150 = vrot.slane %v1094, %v3149
      %v3151 = vlaneseq
      %v3152 = vshrl.u32 %v3151, 7
      %v3153 = vsub.s32 7, %v3152
      %v3154 = vrot.slane %v1096, %v3153
      %v3155 = vlaneseq
      %v3156 = vshrl.u32 %v3155, 7
      %v3157 = vsub.s32 7, %v3156
      %v3158 = vrot.slane %v1098, %v3157
      %v3159 = vlaneseq
      %v3160 = vshrl.u32 %v3159, 7
      %v3161 = vsub.s32 7, %v3160
      %v3162 = vrot.slane %v1100, %v3161
      %v3163 = vlaneseq
      %v3164 = vshrl.u32 %v3163, 7
      %v3165 = vsub.s32 7, %v3164
      %v3166 = vrot.slane %v1102, %v3165
      %v3167 = vlaneseq
      %v3168 = vshrl.u32 %v3167, 7
      %v3169 = vsub.s32 7, %v3168
      %v3170 = vrot.slane %v1104, %v3169
      %v3171 = vlaneseq
      %v3172 = vshrl.u32 %v3171, 7
      %v3173 = vsub.s32 7, %v3172
      %v3174 = vrot.slane %v1106, %v3173
      %v3175 = vlaneseq
      %v3176 = vshrl.u32 %v3175, 7
      %v3177 = vsub.s32 7, %v3176
      %v3178 = vrot.slane %v1108, %v3177
      %v3179 = vlaneseq
      %v3180 = vshrl.u32 %v3179, 7
      %v3181 = vsub.s32 7, %v3180
      %v3182 = vrot.slane %v1110, %v3181
      %3185 = vrot.lane.b32.xlu0 %v1109, 96
      %v3186 = vpop.permute.xlu0 %3185
      %3187 = vrot.lane.b32.xlu0 %v1110, 96
      %v3188 = vpop.permute.xlu0 %3187
      %v3191 = vmul.f32 %v3122, %v3186
      %v3192 = vmul.f32 %v3122, %v3188
      %v3193 = vmul.f32 %v3126, %v3186
      %v3194 = vmul.f32 %v3126, %v3188
      %v3195 = vmul.f32 %v3130, %v3186
      %v3196 = vmul.f32 %v3130, %v3188
      %v3197 = vmul.f32 %v3134, %v3186
      %v3198 = vmul.f32 %v3134, %v3188
      %v3199 = vmul.f32 %v3138, %v3186
      %v3200 = vmul.f32 %v3138, %v3188
      %v3201 = vmul.f32 %v3142, %v3186
      %v3202 = vmul.f32 %v3142, %v3188
      %v3203 = vmul.f32 %v3146, %v3186
      %v3204 = vmul.f32 %v3146, %v3188
      %v3205 = vmul.f32 %v3150, %v3186
      %v3206 = vmul.f32 %v3150, %v3188
      %v3207 = vmul.f32 %v3154, %v3186
      %v3208 = vmul.f32 %v3154, %v3188
      %v3209 = vmul.f32 %v3158, %v3186
      %v3210 = vmul.f32 %v3158, %v3188
      %v3211 = vmul.f32 %v3162, %v3186
      %v3212 = vmul.f32 %v3162, %v3188
      %v3213 = vmul.f32 %v3166, %v3186
      %v3214 = vmul.f32 %v3166, %v3188
      %v3215 = vmul.f32 %v3170, %v3186
      %v3216 = vmul.f32 %v3170, %v3188
      %v3217 = vmul.f32 %v3174, %v3186
      %v3218 = vmul.f32 %v3174, %v3188
      %v3219 = vmul.f32 %v3178, %v3186
      %v3220 = vmul.f32 %v3178, %v3188
      %v3221 = vmul.f32 %v3182, %v3186
      %v3222 = vmul.f32 %v3182, %v3188
      %v3223 = vadd.f32 %v3087, %v3191
      %v3224 = vadd.f32 %v3088, %v3192
      %v3225 = vadd.f32 %v3089, %v3193
      %v3226 = vadd.f32 %v3090, %v3194
      %v3227 = vadd.f32 %v3091, %v3195
      %v3228 = vadd.f32 %v3092, %v3196
      %v3229 = vadd.f32 %v3093, %v3197
      %v3230 = vadd.f32 %v3094, %v3198
      %v3231 = vadd.f32 %v3095, %v3199
      %v3232 = vadd.f32 %v3096, %v3200
      %v3233 = vadd.f32 %v3097, %v3201
      %v3234 = vadd.f32 %v3098, %v3202
      %v3235 = vadd.f32 %v3099, %v3203
      %v3236 = vadd.f32 %v3100, %v3204
      %v3237 = vadd.f32 %v3101, %v3205
      %v3238 = vadd.f32 %v3102, %v3206
      %v3239 = vadd.f32 %v3103, %v3207
      %v3240 = vadd.f32 %v3104, %v3208
      %v3241 = vadd.f32 %v3105, %v3209
      %v3242 = vadd.f32 %v3106, %v3210
      %v3243 = vadd.f32 %v3107, %v3211
      %v3244 = vadd.f32 %v3108, %v3212
      %v3245 = vadd.f32 %v3109, %v3213
      %v3246 = vadd.f32 %v3110, %v3214
      %v3247 = vadd.f32 %v3111, %v3215
      %v3248 = vadd.f32 %v3112, %v3216
      %v3249 = vadd.f32 %v3113, %v3217
      %v3250 = vadd.f32 %v3114, %v3218
      %v3251 = vadd.f32 %v3115, %v3219
      %v3252 = vadd.f32 %v3116, %v3220
      %v3253 = vadd.f32 %v3117, %v3221
      %v3254 = vadd.f32 %v3118, %v3222
      %v3256 = vsel %vm850, %v745, 0
      %3258 = vmatprep.subr.mxu0 0.0
      %3259 = vmatpush1.msra.mxu0 %v3256
      %3260 = vmatprep.subr.mxu0 0.0
      %3261 = vmatpush1.msra.mxu0 0.0
      %3262 = vmatprep.subr.mxu0 0.0
      %3263 = vmatpush1.msra.mxu0 0.0
      %3264 = vmatprep.subr.mxu0 0.0
      %3265 = vmatpush1.msra.mxu0 0.0
      %3266 = vmatprep.subr.mxu0 0.0
      %3267 = vmatpush1.msra.mxu0 0.0
      %3268 = vmatprep.subr.mxu0 0.0
      %3269 = vmatpush1.msra.mxu0 0.0
      %3270 = vmatprep.subr.mxu0 0.0
      %3271 = vmatpush1.msra.mxu0 0.0
      %3272 = vmatprep.subr.mxu0 0.0
      %3273 = vmatpush1.msra.mxu0 0.0
      %3274 = vmatprep.subr.mxu0 0.0
      %3275 = vmatpush1.msra.mxu0 0.0
      %3276 = vmatprep.subr.mxu0 0.0
      %3277 = vmatpush1.msra.mxu0 0.0
      %3278 = vmatprep.subr.mxu0 0.0
      %3279 = vmatpush1.msra.mxu0 0.0
      %3280 = vmatprep.subr.mxu0 0.0
      %3281 = vmatpush1.msra.mxu0 0.0
      %3282 = vmatprep.subr.mxu0 0.0
      %3283 = vmatpush1.msra.mxu0 0.0
      %3284 = vmatprep.subr.mxu0 0.0
      %3285 = vmatpush1.msra.mxu0 0.0
      %3286 = vmatprep.subr.mxu0 0.0
      %3287 = vmatpush1.msra.mxu0 0.0
      %3288 = vmatprep.subr.mxu0 0.0
      %3289 = vmatpush1.msra.mxu0 0.0
      %3290 = vmatprep.subr.mxu0 0.0
      %3291 = vmatpush1.msra.mxu0 0.0
      %3292 = vmatprep.subr.mxu0 0.0
      %3293 = vmatpush1.msra.mxu0 0.0
      %3294 = vmatprep.subr.mxu0 0.0
      %3295 = vmatpush1.msra.mxu0 0.0
      %3296 = vmatprep.subr.mxu0 0.0
      %3297 = vmatpush1.msra.mxu0 0.0
      %3298 = vmatprep.subr.mxu0 0.0
      %3299 = vmatpush1.msra.mxu0 0.0
      %3300 = vmatprep.subr.mxu0 0.0
      %3301 = vmatpush1.msra.mxu0 0.0
      %3302 = vmatprep.subr.mxu0 0.0
      %3303 = vmatpush1.msra.mxu0 0.0
      %3304 = vmatprep.subr.mxu0 0.0
      %3305 = vmatpush1.msra.mxu0 0.0
      %3306 = vmatprep.subr.mxu0 0.0
      %3307 = vmatpush1.msra.mxu0 0.0
      %3308 = vmatprep.subr.mxu0 0.0
      %3309 = vmatpush1.msra.mxu0 0.0
      %3310 = vmatprep.subr.mxu0 0.0
      %3311 = vmatpush1.msra.mxu0 0.0
      %3312 = vmatprep.subr.mxu0 0.0
      %3313 = vmatpush1.msra.mxu0 0.0
      %3314 = vmatprep.subr.mxu0 0.0
      %3315 = vmatpush1.msra.mxu0 0.0
      %3316 = vmatprep.subr.mxu0 0.0
      %3317 = vmatpush1.msra.mxu0 0.0
      %3318 = vmatprep.subr.mxu0 0.0
      %3319 = vmatpush1.msra.mxu0 0.0
      %3320 = vmatprep.subr.mxu0 0.0
      %3321 = vmatpush1.msra.mxu0 0.0
      %3322 = vmatprep.mubr.f32.mxu0 0.0
      %3323 = vmatmul.mubr.f32.gmra.mrb[0].mxu0 %v755
      %v3324 = vpop.f32.mrb[0].mxu0
      %v3325 = vadd.f32 0.0, %v3324
      %v3326 = vpop.f32.mrb[0].mxu0
      %3327 = vmatprep.mubr.f32.mxu0 0.0
      %3328 = vmatmul.mubr.f32.gmra.mrb[0].mxu0 %v758
      %v3329 = vpop.f32.mrb[0].mxu0
      %v3330 = vadd.f32 0.0, %v3329
      %v3331 = vpop.f32.mrb[0].mxu0
      %3332 = vmatprep.mubr.f32.mxu0 0.0
      %3333 = vmatmul.mubr.f32.gmra.mrb[0].mxu0 %v761
      %v3334 = vpop.f32.mrb[0].mxu0
      %v3335 = vadd.f32 0.0, %v3334
      %v3336 = vpop.f32.mrb[0].mxu0
      %3337 = vmatprep.mubr.f32.mxu0 0.0
      %3338 = vmatmul.mubr.f32.gmra.mrb[0].mxu0 %v764
      %v3339 = vpop.f32.mrb[0].mxu0
      %v3340 = vadd.f32 0.0, %v3339
      %v3341 = vpop.f32.mrb[0].mxu0
      %3342 = vmatprep.mubr.f32.mxu0 0.0
      %3343 = vmatmul.mubr.f32.gmra.mrb[0].mxu0 %v767
      %v3344 = vpop.f32.mrb[0].mxu0
      %v3345 = vadd.f32 0.0, %v3344
      %v3346 = vpop.f32.mrb[0].mxu0
      %3347 = vmatprep.mubr.f32.mxu0 0.0
      %3348 = vmatmul.mubr.f32.gmra.mrb[0].mxu0 %v770
      %v3349 = vpop.f32.mrb[0].mxu0
      %v3350 = vadd.f32 0.0, %v3349
      %v3351 = vpop.f32.mrb[0].mxu0
      %3352 = vmatprep.mubr.f32.mxu0 0.0
      %3353 = vmatmul.mubr.f32.gmra.mrb[0].mxu0 %v773
      %v3354 = vpop.f32.mrb[0].mxu0
      %v3355 = vadd.f32 0.0, %v3354
      %v3356 = vpop.f32.mrb[0].mxu0
      %3357 = vmatprep.mubr.f32.mxu0 0.0
      %3358 = vmatmul.mubr.f32.gmra.mrb[0].mxu0 %v776
      %v3359 = vpop.f32.mrb[0].mxu0
      %v3360 = vadd.f32 0.0, %v3359
      %v3361 = vpop.f32.mrb[0].mxu0
      %3362 = vmatprep.mubr.f32.mxu0 0.0
      %3363 = vmatmul.mubr.f32.gmra.mrb[0].mxu0 %v779
      %v3364 = vpop.f32.mrb[0].mxu0
      %v3365 = vadd.f32 0.0, %v3364
      %v3366 = vpop.f32.mrb[0].mxu0
      %3367 = vmatprep.mubr.f32.mxu0 0.0
      %3368 = vmatmul.mubr.f32.gmra.mrb[0].mxu0 %v782
      %v3369 = vpop.f32.mrb[0].mxu0
      %v3370 = vadd.f32 0.0, %v3369
      %v3371 = vpop.f32.mrb[0].mxu0
      %3372 = vmatprep.mubr.f32.mxu0 0.0
      %3373 = vmatmul.mubr.f32.gmra.mrb[0].mxu0 %v785
      %v3374 = vpop.f32.mrb[0].mxu0
      %v3375 = vadd.f32 0.0, %v3374
      %v3376 = vpop.f32.mrb[0].mxu0
      %3377 = vmatprep.mubr.f32.mxu0 0.0
      %3378 = vmatmul.mubr.f32.gmra.mrb[0].mxu0 %v788
      %v3379 = vpop.f32.mrb[0].mxu0
      %v3380 = vadd.f32 0.0, %v3379
      %v3381 = vpop.f32.mrb[0].mxu0
      %3382 = vmatprep.mubr.f32.mxu0 0.0
      %3383 = vmatmul.mubr.f32.gmra.mrb[0].mxu0 %v791
      %v3384 = vpop.f32.mrb[0].mxu0
      %v3385 = vadd.f32 0.0, %v3384
      %v3386 = vpop.f32.mrb[0].mxu0
      %3387 = vmatprep.mubr.f32.mxu0 0.0
      %3388 = vmatmul.mubr.f32.gmra.mrb[0].mxu0 %v794
      %v3389 = vpop.f32.mrb[0].mxu0
      %v3390 = vadd.f32 0.0, %v3389
      %v3391 = vpop.f32.mrb[0].mxu0
      %3392 = vmatprep.mubr.f32.mxu0 0.0
      %3393 = vmatmul.mubr.f32.gmra.mrb[0].mxu0 %v797
      %v3394 = vpop.f32.mrb[0].mxu0
      %v3395 = vadd.f32 0.0, %v3394
      %v3396 = vpop.f32.mrb[0].mxu0
      %3397 = vmatprep.mubr.f32.mxu0 0.0
      %3398 = vmatmul.mubr.f32.gmra.mrb[0].mxu0 %v800
      %v3399 = vpop.f32.mrb[0].mxu0
      %v3400 = vadd.f32 0.0, %v3399
      %v3401 = vpop.f32.mrb[0].mxu0
      %3402 = vmatprep.mubr.f32.mxu0 0.0
      %3403 = vmatmul.mubr.f32.gmra.mrb[0].mxu0 %v803
      %v3404 = vpop.f32.mrb[0].mxu0
      %v3405 = vadd.f32 0.0, %v3404
      %v3406 = vpop.f32.mrb[0].mxu0
      %3407 = vmatprep.mubr.f32.mxu0 0.0
      %3408 = vmatmul.mubr.f32.gmra.mrb[0].mxu0 %v806
      %v3409 = vpop.f32.mrb[0].mxu0
      %v3410 = vadd.f32 0.0, %v3409
      %v3411 = vpop.f32.mrb[0].mxu0
      %3412 = vmatprep.mubr.f32.mxu0 0.0
      %3413 = vmatmul.mubr.f32.gmra.mrb[0].mxu0 %v809
      %v3414 = vpop.f32.mrb[0].mxu0
      %v3415 = vadd.f32 0.0, %v3414
      %v3416 = vpop.f32.mrb[0].mxu0
      %3417 = vmatprep.mubr.f32.mxu0 0.0
      %3418 = vmatmul.mubr.f32.gmra.mrb[0].mxu0 %v812
      %v3419 = vpop.f32.mrb[0].mxu0
      %v3420 = vadd.f32 0.0, %v3419
      %v3421 = vpop.f32.mrb[0].mxu0
      %3422 = vmatprep.mubr.f32.mxu0 0.0
      %3423 = vmatmul.mubr.f32.gmra.mrb[0].mxu0 %v815
      %v3424 = vpop.f32.mrb[0].mxu0
      %v3425 = vadd.f32 0.0, %v3424
      %v3426 = vpop.f32.mrb[0].mxu0
      %3427 = vmatprep.mubr.f32.mxu0 0.0
      %3428 = vmatmul.mubr.f32.gmra.mrb[0].mxu0 %v818
      %v3429 = vpop.f32.mrb[0].mxu0
      %v3430 = vadd.f32 0.0, %v3429
      %v3431 = vpop.f32.mrb[0].mxu0
      %3432 = vmatprep.mubr.f32.mxu0 0.0
      %3433 = vmatmul.mubr.f32.gmra.mrb[0].mxu0 %v821
      %v3434 = vpop.f32.mrb[0].mxu0
      %v3435 = vadd.f32 0.0, %v3434
      %v3436 = vpop.f32.mrb[0].mxu0
      %3437 = vmatprep.mubr.f32.mxu0 0.0
      %3438 = vmatmul.mubr.f32.gmra.mrb[0].mxu0 %v824
      %v3439 = vpop.f32.mrb[0].mxu0
      %v3440 = vadd.f32 0.0, %v3439
      %v3441 = vpop.f32.mrb[0].mxu0
      %3442 = vmatprep.mubr.f32.mxu0 0.0
      %3443 = vmatmul.mubr.f32.gmra.mrb[0].mxu0 %v827
      %v3444 = vpop.f32.mrb[0].mxu0
      %v3445 = vadd.f32 0.0, %v3444
      %v3446 = vpop.f32.mrb[0].mxu0
      %3447 = vmatprep.mubr.f32.mxu0 0.0
      %3448 = vmatmul.mubr.f32.gmra.mrb[0].mxu0 %v830
      %v3449 = vpop.f32.mrb[0].mxu0
      %v3450 = vadd.f32 0.0, %v3449
      %v3451 = vpop.f32.mrb[0].mxu0
      %3452 = vmatprep.mubr.f32.mxu0 0.0
      %3453 = vmatmul.mubr.f32.gmra.mrb[0].mxu0 %v833
      %v3454 = vpop.f32.mrb[0].mxu0
      %v3455 = vadd.f32 0.0, %v3454
      %v3456 = vpop.f32.mrb[0].mxu0
      %3457 = vmatprep.mubr.f32.mxu0 0.0
      %3458 = vmatmul.mubr.f32.gmra.mrb[0].mxu0 %v836
      %v3459 = vpop.f32.mrb[0].mxu0
      %v3460 = vadd.f32 0.0, %v3459
      %v3461 = vpop.f32.mrb[0].mxu0
      %3462 = vmatprep.mubr.f32.mxu0 0.0
      %3463 = vmatmul.mubr.f32.gmra.mrb[0].mxu0 %v839
      %v3464 = vpop.f32.mrb[0].mxu0
      %v3465 = vadd.f32 0.0, %v3464
      %v3466 = vpop.f32.mrb[0].mxu0
      %3467 = vmatprep.mubr.f32.mxu0 0.0
      %3468 = vmatmul.mubr.f32.gmra.mrb[0].mxu0 %v842
      %v3469 = vpop.f32.mrb[0].mxu0
      %v3470 = vadd.f32 0.0, %v3469
      %v3471 = vpop.f32.mrb[0].mxu0
      %3472 = vmatprep.mubr.f32.mxu0 0.0
      %3473 = vmatmul.mubr.f32.gmra.mrb[0].mxu0 %v845
      %v3474 = vpop.f32.mrb[0].mxu0
      %v3475 = vadd.f32 0.0, %v3474
      %v3476 = vpop.f32.mrb[0].mxu0
      %3477 = vmatprep.mubr.f32.mxu0 0.0
      %3478 = vmatmul.mubr.f32.gmra.mrb[0].mxu0 %v848
      %v3479 = vpop.f32.mrb[0].mxu0
      %v3480 = vadd.f32 0.0, %v3479
      %v3481 = vpop.f32.mrb[0].mxu0
      %3482 = vdwg.mxu0
      %vm3483 = vcmask 261120
      %v3485 = vsel %vm3483, %v3223, 0
      %v3488 = vsel %vm3483, %v3224, 0
      %v3491 = vsel %vm3483, %v3225, 0
      %v3494 = vsel %vm3483, %v3226, 0
      %v3497 = vsel %vm3483, %v3227, 0
      %v3500 = vsel %vm3483, %v3228, 0
      %v3503 = vsel %vm3483, %v3229, 0
      %v3506 = vsel %vm3483, %v3230, 0
      %v3509 = vsel %vm3483, %v3231, 0
      %v3512 = vsel %vm3483, %v3232, 0
      %v3515 = vsel %vm3483, %v3233, 0
      %v3518 = vsel %vm3483, %v3234, 0
      %v3521 = vsel %vm3483, %v3235, 0
      %v3524 = vsel %vm3483, %v3236, 0
      %v3527 = vsel %vm3483, %v3237, 0
      %v3530 = vsel %vm3483, %v3238, 0
      %v3533 = vsel %vm3483, %v3239, 0
      %v3536 = vsel %vm3483, %v3240, 0
      %v3539 = vsel %vm3483, %v3241, 0
      %v3542 = vsel %vm3483, %v3242, 0
      %v3545 = vsel %vm3483, %v3243, 0
      %v3548 = vsel %vm3483, %v3244, 0
      %v3551 = vsel %vm3483, %v3245, 0
      %v3554 = vsel %vm3483, %v3246, 0
      %v3557 = vsel %vm3483, %v3247, 0
      %v3560 = vsel %vm3483, %v3248, 0
      %v3563 = vsel %vm3483, %v3249, 0
      %v3566 = vsel %vm3483, %v3250, 0
      %v3569 = vsel %vm3483, %v3251, 0
      %v3572 = vsel %vm3483, %v3252, 0
      %v3575 = vsel %vm3483, %v3253, 0
      %v3578 = vsel %vm3483, %v3254, 0
      %3580 = vmatprep.subr.mxu0 0.0
      %3581 = vmatpush1.msra.mxu0 %v741
      %3582 = vmatprep.subr.mxu0 0.0
      %3583 = vmatpush1.msra.mxu0 %v742
      %3584 = vmatprep.subr.mxu0 0.0
      %3585 = vmatpush1.msra.mxu0 %v743
      %3586 = vmatprep.subr.mxu0 0.0
      %3587 = vmatpush1.msra.mxu0 %v744
      %3588 = vmatprep.subr.mxu0 0.0
      %3589 = vmatpush1.msra.mxu0 0.0
      %3590 = vmatprep.subr.mxu0 0.0
      %3591 = vmatpush1.msra.mxu0 0.0
      %3592 = vmatprep.subr.mxu0 0.0
      %3593 = vmatpush1.msra.mxu0 0.0
      %3594 = vmatprep.subr.mxu0 0.0
      %3595 = vmatpush1.msra.mxu0 0.0
      %3596 = vmatprep.subr.mxu0 0.0
      %3597 = vmatpush1.msra.mxu0 0.0
      %3598 = vmatprep.subr.mxu0 0.0
      %3599 = vmatpush1.msra.mxu0 0.0
      %3600 = vmatprep.subr.mxu0 0.0
      %3601 = vmatpush1.msra.mxu0 0.0
      %3602 = vmatprep.subr.mxu0 0.0
      %3603 = vmatpush1.msra.mxu0 0.0
      %3604 = vmatprep.subr.mxu0 0.0
      %3605 = vmatpush1.msra.mxu0 0.0
      %3606 = vmatprep.subr.mxu0 0.0
      %3607 = vmatpush1.msra.mxu0 0.0
      %3608 = vmatprep.subr.mxu0 0.0
      %3609 = vmatpush1.msra.mxu0 0.0
      %3610 = vmatprep.subr.mxu0 0.0
      %3611 = vmatpush1.msra.mxu0 0.0
      %3612 = vmatprep.subr.mxu0 0.0
      %3613 = vmatpush1.msra.mxu0 0.0
      %3614 = vmatprep.subr.mxu0 0.0
      %3615 = vmatpush1.msra.mxu0 0.0
      %3616 = vmatprep.subr.mxu0 0.0
      %3617 = vmatpush1.msra.mxu0 0.0
      %3618 = vmatprep.subr.mxu0 0.0
      %3619 = vmatpush1.msra.mxu0 0.0
      %3620 = vmatprep.subr.mxu0 0.0
      %3621 = vmatpush1.msra.mxu0 0.0
      %3622 = vmatprep.subr.mxu0 0.0
      %3623 = vmatpush1.msra.mxu0 0.0
      %3624 = vmatprep.subr.mxu0 0.0
      %3625 = vmatpush1.msra.mxu0 0.0
      %3626 = vmatprep.subr.mxu0 0.0
      %3627 = vmatpush1.msra.mxu0 0.0
      %3628 = vmatprep.subr.mxu0 0.0
      %3629 = vmatpush1.msra.mxu0 0.0
      %3630 = vmatprep.subr.mxu0 0.0
      %3631 = vmatpush1.msra.mxu0 0.0
      %3632 = vmatprep.subr.mxu0 0.0
      %3633 = vmatpush1.msra.mxu0 0.0
      %3634 = vmatprep.subr.mxu0 0.0
      %3635 = vmatpush1.msra.mxu0 0.0
      %3636 = vmatprep.subr.mxu0 0.0
      %3637 = vmatpush1.msra.mxu0 0.0
      %3638 = vmatprep.subr.mxu0 0.0
      %3639 = vmatpush1.msra.mxu0 0.0
      %3640 = vmatprep.subr.mxu0 0.0
      %3641 = vmatpush1.msra.mxu0 0.0
      %3642 = vmatprep.subr.mxu0 0.0
      %3643 = vmatpush1.msra.mxu0 0.0
      %3644 = vmatprep.mubr.f32.mxu0 0.0
      %3645 = vmatmul.mubr.f32.gmra.mrb[0].mxu0 %v3485
      %v3646 = vpop.f32.mrb[0].mxu0
      %v3647 = vadd.f32 %v3325, %v3646
      %v3648 = vpop.f32.mrb[0].mxu0
      %3649 = vmatprep.mubr.f32.mxu0 0.0
      %3650 = vmatmul.mubr.f32.gmra.mrb[0].mxu0 %v3488
      %v3651 = vpop.f32.mrb[0].mxu0
      %v3652 = vadd.f32 %v3330, %v3651
      %v3653 = vpop.f32.mrb[0].mxu0
      %3654 = vmatprep.mubr.f32.mxu0 0.0
      %3655 = vmatmul.mubr.f32.gmra.mrb[0].mxu0 %v3491
      %v3656 = vpop.f32.mrb[0].mxu0
      %v3657 = vadd.f32 %v3335, %v3656
      %v3658 = vpop.f32.mrb[0].mxu0
      %3659 = vmatprep.mubr.f32.mxu0 0.0
      %3660 = vmatmul.mubr.f32.gmra.mrb[0].mxu0 %v3494
      %v3661 = vpop.f32.mrb[0].mxu0
      %v3662 = vadd.f32 %v3340, %v3661
      %v3663 = vpop.f32.mrb[0].mxu0
      %3664 = vmatprep.mubr.f32.mxu0 0.0
      %3665 = vmatmul.mubr.f32.gmra.mrb[0].mxu0 %v3497
      %v3666 = vpop.f32.mrb[0].mxu0
      %v3667 = vadd.f32 %v3345, %v3666
      %v3668 = vpop.f32.mrb[0].mxu0
      %3669 = vmatprep.mubr.f32.mxu0 0.0
      %3670 = vmatmul.mubr.f32.gmra.mrb[0].mxu0 %v3500
      %v3671 = vpop.f32.mrb[0].mxu0
      %v3672 = vadd.f32 %v3350, %v3671
      %v3673 = vpop.f32.mrb[0].mxu0
      %3674 = vmatprep.mubr.f32.mxu0 0.0
      %3675 = vmatmul.mubr.f32.gmra.mrb[0].mxu0 %v3503
      %v3676 = vpop.f32.mrb[0].mxu0
      %v3677 = vadd.f32 %v3355, %v3676
      %v3678 = vpop.f32.mrb[0].mxu0
      %3679 = vmatprep.mubr.f32.mxu0 0.0
      %3680 = vmatmul.mubr.f32.gmra.mrb[0].mxu0 %v3506
      %v3681 = vpop.f32.mrb[0].mxu0
      %v3682 = vadd.f32 %v3360, %v3681
      %v3683 = vpop.f32.mrb[0].mxu0
      %3684 = vmatprep.mubr.f32.mxu0 0.0
      %3685 = vmatmul.mubr.f32.gmra.mrb[0].mxu0 %v3509
      %v3686 = vpop.f32.mrb[0].mxu0
      %v3687 = vadd.f32 %v3365, %v3686
      %v3688 = vpop.f32.mrb[0].mxu0
      %3689 = vmatprep.mubr.f32.mxu0 0.0
      %3690 = vmatmul.mubr.f32.gmra.mrb[0].mxu0 %v3512
      %v3691 = vpop.f32.mrb[0].mxu0
      %v3692 = vadd.f32 %v3370, %v3691
      %v3693 = vpop.f32.mrb[0].mxu0
      %3694 = vmatprep.mubr.f32.mxu0 0.0
      %3695 = vmatmul.mubr.f32.gmra.mrb[0].mxu0 %v3515
      %v3696 = vpop.f32.mrb[0].mxu0
      %v3697 = vadd.f32 %v3375, %v3696
      %v3698 = vpop.f32.mrb[0].mxu0
      %3699 = vmatprep.mubr.f32.mxu0 0.0
      %3700 = vmatmul.mubr.f32.gmra.mrb[0].mxu0 %v3518
      %v3701 = vpop.f32.mrb[0].mxu0
      %v3702 = vadd.f32 %v3380, %v3701
      %v3703 = vpop.f32.mrb[0].mxu0
      %3704 = vmatprep.mubr.f32.mxu0 0.0
      %3705 = vmatmul.mubr.f32.gmra.mrb[0].mxu0 %v3521
      %v3706 = vpop.f32.mrb[0].mxu0
      %v3707 = vadd.f32 %v3385, %v3706
      %v3708 = vpop.f32.mrb[0].mxu0
      %3709 = vmatprep.mubr.f32.mxu0 0.0
      %3710 = vmatmul.mubr.f32.gmra.mrb[0].mxu0 %v3524
      %v3711 = vpop.f32.mrb[0].mxu0
      %v3712 = vadd.f32 %v3390, %v3711
      %v3713 = vpop.f32.mrb[0].mxu0
      %3714 = vmatprep.mubr.f32.mxu0 0.0
      %3715 = vmatmul.mubr.f32.gmra.mrb[0].mxu0 %v3527
      %v3716 = vpop.f32.mrb[0].mxu0
      %v3717 = vadd.f32 %v3395, %v3716
      %v3718 = vpop.f32.mrb[0].mxu0
      %3719 = vmatprep.mubr.f32.mxu0 0.0
      %3720 = vmatmul.mubr.f32.gmra.mrb[0].mxu0 %v3530
      %v3721 = vpop.f32.mrb[0].mxu0
      %v3722 = vadd.f32 %v3400, %v3721
      %v3723 = vpop.f32.mrb[0].mxu0
      %3724 = vmatprep.mubr.f32.mxu0 0.0
      %3725 = vmatmul.mubr.f32.gmra.mrb[0].mxu0 %v3533
      %v3726 = vpop.f32.mrb[0].mxu0
      %v3727 = vadd.f32 %v3405, %v3726
      %v3728 = vpop.f32.mrb[0].mxu0
      %3729 = vmatprep.mubr.f32.mxu0 0.0
      %3730 = vmatmul.mubr.f32.gmra.mrb[0].mxu0 %v3536
      %v3731 = vpop.f32.mrb[0].mxu0
      %v3732 = vadd.f32 %v3410, %v3731
      %v3733 = vpop.f32.mrb[0].mxu0
      %3734 = vmatprep.mubr.f32.mxu0 0.0
      %3735 = vmatmul.mubr.f32.gmra.mrb[0].mxu0 %v3539
      %v3736 = vpop.f32.mrb[0].mxu0
      %v3737 = vadd.f32 %v3415, %v3736
      %v3738 = vpop.f32.mrb[0].mxu0
      %3739 = vmatprep.mubr.f32.mxu0 0.0
      %3740 = vmatmul.mubr.f32.gmra.mrb[0].mxu0 %v3542
      %v3741 = vpop.f32.mrb[0].mxu0
      %v3742 = vadd.f32 %v3420, %v3741
      %v3743 = vpop.f32.mrb[0].mxu0
      %3744 = vmatprep.mubr.f32.mxu0 0.0
      %3745 = vmatmul.mubr.f32.gmra.mrb[0].mxu0 %v3545
      %v3746 = vpop.f32.mrb[0].mxu0
      %v3747 = vadd.f32 %v3425, %v3746
      %v3748 = vpop.f32.mrb[0].mxu0
      %3749 = vmatprep.mubr.f32.mxu0 0.0
      %3750 = vmatmul.mubr.f32.gmra.mrb[0].mxu0 %v3548
      %v3751 = vpop.f32.mrb[0].mxu0
      %v3752 = vadd.f32 %v3430, %v3751
      %v3753 = vpop.f32.mrb[0].mxu0
      %3754 = vmatprep.mubr.f32.mxu0 0.0
      %3755 = vmatmul.mubr.f32.gmra.mrb[0].mxu0 %v3551
      %v3756 = vpop.f32.mrb[0].mxu0
      %v3757 = vadd.f32 %v3435, %v3756
      %v3758 = vpop.f32.mrb[0].mxu0
      %3759 = vmatprep.mubr.f32.mxu0 0.0
      %3760 = vmatmul.mubr.f32.gmra.mrb[0].mxu0 %v3554
      %v3761 = vpop.f32.mrb[0].mxu0
      %v3762 = vadd.f32 %v3440, %v3761
      %v3763 = vpop.f32.mrb[0].mxu0
      %3764 = vmatprep.mubr.f32.mxu0 0.0
      %3765 = vmatmul.mubr.f32.gmra.mrb[0].mxu0 %v3557
      %v3766 = vpop.f32.mrb[0].mxu0
      %v3767 = vadd.f32 %v3445, %v3766
      %v3768 = vpop.f32.mrb[0].mxu0
      %3769 = vmatprep.mubr.f32.mxu0 0.0
      %3770 = vmatmul.mubr.f32.gmra.mrb[0].mxu0 %v3560
      %v3771 = vpop.f32.mrb[0].mxu0
      %v3772 = vadd.f32 %v3450, %v3771
      %v3773 = vpop.f32.mrb[0].mxu0
      %3774 = vmatprep.mubr.f32.mxu0 0.0
      %3775 = vmatmul.mubr.f32.gmra.mrb[0].mxu0 %v3563
      %v3776 = vpop.f32.mrb[0].mxu0
      %v3777 = vadd.f32 %v3455, %v3776
      %v3778 = vpop.f32.mrb[0].mxu0
      %3779 = vmatprep.mubr.f32.mxu0 0.0
      %3780 = vmatmul.mubr.f32.gmra.mrb[0].mxu0 %v3566
      %v3781 = vpop.f32.mrb[0].mxu0
      %v3782 = vadd.f32 %v3460, %v3781
      %v3783 = vpop.f32.mrb[0].mxu0
      %3784 = vmatprep.mubr.f32.mxu0 0.0
      %3785 = vmatmul.mubr.f32.gmra.mrb[0].mxu0 %v3569
      %v3786 = vpop.f32.mrb[0].mxu0
      %v3787 = vadd.f32 %v3465, %v3786
      %v3788 = vpop.f32.mrb[0].mxu0
      %3789 = vmatprep.mubr.f32.mxu0 0.0
      %3790 = vmatmul.mubr.f32.gmra.mrb[0].mxu0 %v3572
      %v3791 = vpop.f32.mrb[0].mxu0
      %v3792 = vadd.f32 %v3470, %v3791
      %v3793 = vpop.f32.mrb[0].mxu0
      %3794 = vmatprep.mubr.f32.mxu0 0.0
      %3795 = vmatmul.mubr.f32.gmra.mrb[0].mxu0 %v3575
      %v3796 = vpop.f32.mrb[0].mxu0
      %v3797 = vadd.f32 %v3475, %v3796
      %v3798 = vpop.f32.mrb[0].mxu0
      %3799 = vmatprep.mubr.f32.mxu0 0.0
      %3800 = vmatmul.mubr.f32.gmra.mrb[0].mxu0 %v3578
      %v3801 = vpop.f32.mrb[0].mxu0
      %v3802 = vadd.f32 %v3480, %v3801
      %v3803 = vpop.f32.mrb[0].mxu0
      %3804 = vdwg.mxu0
      %v3806 = vlaneseq
      %v3807 = vshrl.u32 %v3806, 7
      %v3808 = vsub.s32 0, %v3807
      %v3809 = vrot.slane %v746, %v3808
      %v3811 = vadd.f32 %v3647, %v3809
      %v3812 = vadd.f32 %v3652, %v3809
      %v3813 = vadd.f32 %v3657, %v3809
      %v3814 = vadd.f32 %v3662, %v3809
      %v3815 = vadd.f32 %v3667, %v3809
      %v3816 = vadd.f32 %v3672, %v3809
      %v3817 = vadd.f32 %v3677, %v3809
      %v3818 = vadd.f32 %v3682, %v3809
      %v3819 = vadd.f32 %v3687, %v3809
      %v3820 = vadd.f32 %v3692, %v3809
      %v3821 = vadd.f32 %v3697, %v3809
      %v3822 = vadd.f32 %v3702, %v3809
      %v3823 = vadd.f32 %v3707, %v3809
      %v3824 = vadd.f32 %v3712, %v3809
      %v3825 = vadd.f32 %v3717, %v3809
      %v3826 = vadd.f32 %v3722, %v3809
      %v3827 = vadd.f32 %v3727, %v3809
      %v3828 = vadd.f32 %v3732, %v3809
      %v3829 = vadd.f32 %v3737, %v3809
      %v3830 = vadd.f32 %v3742, %v3809
      %v3831 = vadd.f32 %v3747, %v3809
      %v3832 = vadd.f32 %v3752, %v3809
      %v3833 = vadd.f32 %v3757, %v3809
      %v3834 = vadd.f32 %v3762, %v3809
      %v3835 = vadd.f32 %v3767, %v3809
      %v3836 = vadd.f32 %v3772, %v3809
      %v3837 = vadd.f32 %v3777, %v3809
      %v3838 = vadd.f32 %v3782, %v3809
      %v3839 = vadd.f32 %v3787, %v3809
      %v3840 = vadd.f32 %v3792, %v3809
      %v3841 = vadd.f32 %v3797, %v3809
      %v3842 = vadd.f32 %v3802, %v3809
      %v3843 = vmax.f32 %v3811, 0.0
      %v3844 = vmax.f32 %v3812, 0.0
      %v3845 = vmax.f32 %v3813, 0.0
      %v3846 = vmax.f32 %v3814, 0.0
      %v3847 = vmax.f32 %v3815, 0.0
      %v3848 = vmax.f32 %v3816, 0.0
      %v3849 = vmax.f32 %v3817, 0.0
      %v3850 = vmax.f32 %v3818, 0.0
      %v3851 = vmax.f32 %v3819, 0.0
      %v3852 = vmax.f32 %v3820, 0.0
      %v3853 = vmax.f32 %v3821, 0.0
      %v3854 = vmax.f32 %v3822, 0.0
      %v3855 = vmax.f32 %v3823, 0.0
      %v3856 = vmax.f32 %v3824, 0.0
      %v3857 = vmax.f32 %v3825, 0.0
      %v3858 = vmax.f32 %v3826, 0.0
      %v3859 = vmax.f32 %v3827, 0.0
      %v3860 = vmax.f32 %v3828, 0.0
      %v3861 = vmax.f32 %v3829, 0.0
      %v3862 = vmax.f32 %v3830, 0.0
      %v3863 = vmax.f32 %v3831, 0.0
      %v3864 = vmax.f32 %v3832, 0.0
      %v3865 = vmax.f32 %v3833, 0.0
      %v3866 = vmax.f32 %v3834, 0.0
      %v3867 = vmax.f32 %v3835, 0.0
      %v3868 = vmax.f32 %v3836, 0.0
      %v3869 = vmax.f32 %v3837, 0.0
      %v3870 = vmax.f32 %v3838, 0.0
      %v3871 = vmax.f32 %v3839, 0.0
      %v3872 = vmax.f32 %v3840, 0.0
      %v3873 = vmax.f32 %v3841, 0.0
      %v3874 = vmax.f32 %v3842, 0.0
      %3876 = vset.pattern.permute.xlu0 0
      %3877 = vperm.xlu0 %3876, %v707
      %v3878 = vpop.permute.xlu0 %3877
      %3881 = vset.pattern.permute.xlu0 0
      %3882 = vperm.xlu0 %3881, %v708
      %v3883 = vpop.permute.xlu0 %3882
      %3886 = vset.pattern.permute.xlu0 0
      %3887 = vperm.xlu0 %3886, %v709
      %v3888 = vpop.permute.xlu0 %3887
      %3891 = vset.pattern.permute.xlu0 0
      %3892 = vperm.xlu0 %3891, %v710
      %v3893 = vpop.permute.xlu0 %3892
      %3896 = vset.pattern.permute.xlu0 0
      %3897 = vperm.xlu0 %3896, %v711
      %v3898 = vpop.permute.xlu0 %3897
      %3901 = vset.pattern.permute.xlu0 0
      %3902 = vperm.xlu0 %3901, %v712
      %v3903 = vpop.permute.xlu0 %3902
      %3906 = vset.pattern.permute.xlu0 0
      %3907 = vperm.xlu0 %3906, %v713
      %v3908 = vpop.permute.xlu0 %3907
      %3911 = vset.pattern.permute.xlu0 0
      %3912 = vperm.xlu0 %3911, %v714
      %v3913 = vpop.permute.xlu0 %3912
      %3916 = vset.pattern.permute.xlu0 0
      %3917 = vperm.xlu0 %3916, %v715
      %v3918 = vpop.permute.xlu0 %3917
      %3921 = vset.pattern.permute.xlu0 0
      %3922 = vperm.xlu0 %3921, %v716
      %v3923 = vpop.permute.xlu0 %3922
      %3926 = vset.pattern.permute.xlu0 0
      %3927 = vperm.xlu0 %3926, %v717
      %v3928 = vpop.permute.xlu0 %3927
      %3931 = vset.pattern.permute.xlu0 0
      %3932 = vperm.xlu0 %3931, %v718
      %v3933 = vpop.permute.xlu0 %3932
      %3936 = vset.pattern.permute.xlu0 0
      %3937 = vperm.xlu0 %3936, %v719
      %v3938 = vpop.permute.xlu0 %3937
      %3941 = vset.pattern.permute.xlu0 0
      %3942 = vperm.xlu0 %3941, %v720
      %v3943 = vpop.permute.xlu0 %3942
      %3946 = vset.pattern.permute.xlu0 0
      %3947 = vperm.xlu0 %3946, %v721
      %v3948 = vpop.permute.xlu0 %3947
      %3951 = vset.pattern.permute.xlu0 0
      %3952 = vperm.xlu0 %3951, %v722
      %v3953 = vpop.permute.xlu0 %3952
      %3956 = vset.pattern.permute.xlu0 0
      %3957 = vperm.xlu0 %3956, %v723
      %v3958 = vpop.permute.xlu0 %3957
      %3961 = vset.pattern.permute.xlu0 0
      %3962 = vperm.xlu0 %3961, %v724
      %v3963 = vpop.permute.xlu0 %3962
      %3966 = vset.pattern.permute.xlu0 0
      %3967 = vperm.xlu0 %3966, %v725
      %v3968 = vpop.permute.xlu0 %3967
      %3971 = vset.pattern.permute.xlu0 0
      %3972 = vperm.xlu0 %3971, %v726
      %v3973 = vpop.permute.xlu0 %3972
      %3976 = vset.pattern.permute.xlu0 0
      %3977 = vperm.xlu0 %3976, %v727
      %v3978 = vpop.permute.xlu0 %3977
      %3981 = vset.pattern.permute.xlu0 0
      %3982 = vperm.xlu0 %3981, %v728
      %v3983 = vpop.permute.xlu0 %3982
      %3986 = vset.pattern.permute.xlu0 0
      %3987 = vperm.xlu0 %3986, %v729
      %v3988 = vpop.permute.xlu0 %3987
      %3991 = vset.pattern.permute.xlu0 0
      %3992 = vperm.xlu0 %3991, %v730
      %v3993 = vpop.permute.xlu0 %3992
      %3996 = vset.pattern.permute.xlu0 0
      %3997 = vperm.xlu0 %3996, %v731
      %v3998 = vpop.permute.xlu0 %3997
      %4001 = vset.pattern.permute.xlu0 0
      %4002 = vperm.xlu0 %4001, %v732
      %v4003 = vpop.permute.xlu0 %4002
      %4006 = vset.pattern.permute.xlu0 0
      %4007 = vperm.xlu0 %4006, %v733
      %v4008 = vpop.permute.xlu0 %4007
      %4011 = vset.pattern.permute.xlu0 0
      %4012 = vperm.xlu0 %4011, %v734
      %v4013 = vpop.permute.xlu0 %4012
      %4016 = vset.pattern.permute.xlu0 0
      %4017 = vperm.xlu0 %4016, %v735
      %v4018 = vpop.permute.xlu0 %4017
      %4021 = vset.pattern.permute.xlu0 0
      %4022 = vperm.xlu0 %4021, %v736
      %v4023 = vpop.permute.xlu0 %4022
      %4026 = vset.pattern.permute.xlu0 0
      %4027 = vperm.xlu0 %4026, %v737
      %v4028 = vpop.permute.xlu0 %4027
      %4031 = vset.pattern.permute.xlu0 0
      %4032 = vperm.xlu0 %4031, %v738
      %v4033 = vpop.permute.xlu0 %4032
      %v4035 = vmul.f32 %v3843, %v3878
      %v4036 = vmul.f32 %v3844, %v3883
      %v4037 = vmul.f32 %v3845, %v3888
      %v4038 = vmul.f32 %v3846, %v3893
      %v4039 = vmul.f32 %v3847, %v3898
      %v4040 = vmul.f32 %v3848, %v3903
      %v4041 = vmul.f32 %v3849, %v3908
      %v4042 = vmul.f32 %v3850, %v3913
      %v4043 = vmul.f32 %v3851, %v3918
      %v4044 = vmul.f32 %v3852, %v3923
      %v4045 = vmul.f32 %v3853, %v3928
      %v4046 = vmul.f32 %v3854, %v3933
      %v4047 = vmul.f32 %v3855, %v3938
      %v4048 = vmul.f32 %v3856, %v3943
      %v4049 = vmul.f32 %v3857, %v3948
      %v4050 = vmul.f32 %v3858, %v3953
      %v4051 = vmul.f32 %v3859, %v3958
      %v4052 = vmul.f32 %v3860, %v3963
      %v4053 = vmul.f32 %v3861, %v3968
      %v4054 = vmul.f32 %v3862, %v3973
      %v4055 = vmul.f32 %v3863, %v3978
      %v4056 = vmul.f32 %v3864, %v3983
      %v4057 = vmul.f32 %v3865, %v3988
      %v4058 = vmul.f32 %v3866, %v3993
      %v4059 = vmul.f32 %v3867, %v3998
      %v4060 = vmul.f32 %v3868, %v4003
      %v4061 = vmul.f32 %v3869, %v4008
      %v4062 = vmul.f32 %v3870, %v4013
      %v4063 = vmul.f32 %v3871, %v4018
      %v4064 = vmul.f32 %v3872, %v4023
      %v4065 = vmul.f32 %v3873, %v4028
      %v4066 = vmul.f32 %v3874, %v4033
      %v4067 = vsel %vm3483, %v4035, 0.0
      %v4068 = vsel %vm3483, %v4036, 0.0
      %v4069 = vadd.f32 %v4067, %v4068
      %v4070 = vrot.slane %v4069, 4
      %v4071 = vadd.f32 %v4069, %v4070
      %v4072 = vrot.slane %v4071, 2
      %v4073 = vadd.f32 %v4071, %v4072
      %v4074 = vrot.slane %v4073, 1
      %v4075 = vadd.f32 %v4073, %v4074
      %v4076 = vsel %vm3483, %v4037, 0.0
      %v4077 = vsel %vm3483, %v4038, 0.0
      %v4078 = vadd.f32 %v4076, %v4077
      %v4079 = vrot.slane %v4078, 4
      %v4080 = vadd.f32 %v4078, %v4079
      %v4081 = vrot.slane %v4080, 2
      %v4082 = vadd.f32 %v4080, %v4081
      %v4083 = vrot.slane %v4082, 1
      %v4084 = vadd.f32 %v4082, %v4083
      %v4085 = vsel %vm3483, %v4039, 0.0
      %v4086 = vsel %vm3483, %v4040, 0.0
      %v4087 = vadd.f32 %v4085, %v4086
      %v4088 = vrot.slane %v4087, 4
      %v4089 = vadd.f32 %v4087, %v4088
      %v4090 = vrot.slane %v4089, 2
      %v4091 = vadd.f32 %v4089, %v4090
      %v4092 = vrot.slane %v4091, 1
      %v4093 = vadd.f32 %v4091, %v4092
      %v4094 = vsel %vm3483, %v4041, 0.0
      %v4095 = vsel %vm3483, %v4042, 0.0
      %v4096 = vadd.f32 %v4094, %v4095
      %v4097 = vrot.slane %v4096, 4
      %v4098 = vadd.f32 %v4096, %v4097
      %v4099 = vrot.slane %v4098, 2
      %v4100 = vadd.f32 %v4098, %v4099
      %v4101 = vrot.slane %v4100, 1
      %v4102 = vadd.f32 %v4100, %v4101
      %v4103 = vsel %vm3483, %v4043, 0.0
      %v4104 = vsel %vm3483, %v4044, 0.0
      %v4105 = vadd.f32 %v4103, %v4104
      %v4106 = vrot.slane %v4105, 4
      %v4107 = vadd.f32 %v4105, %v4106
      %v4108 = vrot.slane %v4107, 2
      %v4109 = vadd.f32 %v4107, %v4108
      %v4110 = vrot.slane %v4109, 1
      %v4111 = vadd.f32 %v4109, %v4110
      %v4112 = vsel %vm3483, %v4045, 0.0
      %v4113 = vsel %vm3483, %v4046, 0.0
      %v4114 = vadd.f32 %v4112, %v4113
      %v4115 = vrot.slane %v4114, 4
      %v4116 = vadd.f32 %v4114, %v4115
      %v4117 = vrot.slane %v4116, 2
      %v4118 = vadd.f32 %v4116, %v4117
      %v4119 = vrot.slane %v4118, 1
      %v4120 = vadd.f32 %v4118, %v4119
      %v4121 = vsel %vm3483, %v4047, 0.0
      %v4122 = vsel %vm3483, %v4048, 0.0
      %v4123 = vadd.f32 %v4121, %v4122
      %v4124 = vrot.slane %v4123, 4
      %v4125 = vadd.f32 %v4123, %v4124
      %v4126 = vrot.slane %v4125, 2
      %v4127 = vadd.f32 %v4125, %v4126
      %v4128 = vrot.slane %v4127, 1
      %v4129 = vadd.f32 %v4127, %v4128
      %v4130 = vsel %vm3483, %v4049, 0.0
      %v4131 = vsel %vm3483, %v4050, 0.0
      %v4132 = vadd.f32 %v4130, %v4131
      %v4133 = vrot.slane %v4132, 4
      %v4134 = vadd.f32 %v4132, %v4133
      %v4135 = vrot.slane %v4134, 2
      %v4136 = vadd.f32 %v4134, %v4135
      %v4137 = vrot.slane %v4136, 1
      %v4138 = vadd.f32 %v4136, %v4137
      %v4139 = vsel %vm3483, %v4051, 0.0
      %v4140 = vsel %vm3483, %v4052, 0.0
      %v4141 = vadd.f32 %v4139, %v4140
      %v4142 = vrot.slane %v4141, 4
      %v4143 = vadd.f32 %v4141, %v4142
      %v4144 = vrot.slane %v4143, 2
      %v4145 = vadd.f32 %v4143, %v4144
      %v4146 = vrot.slane %v4145, 1
      %v4147 = vadd.f32 %v4145, %v4146
      %v4148 = vsel %vm3483, %v4053, 0.0
      %v4149 = vsel %vm3483, %v4054, 0.0
      %v4150 = vadd.f32 %v4148, %v4149
      %v4151 = vrot.slane %v4150, 4
      %v4152 = vadd.f32 %v4150, %v4151
      %v4153 = vrot.slane %v4152, 2
      %v4154 = vadd.f32 %v4152, %v4153
      %v4155 = vrot.slane %v4154, 1
      %v4156 = vadd.f32 %v4154, %v4155
      %v4157 = vsel %vm3483, %v4055, 0.0
      %v4158 = vsel %vm3483, %v4056, 0.0
      %v4159 = vadd.f32 %v4157, %v4158
      %v4160 = vrot.slane %v4159, 4
      %v4161 = vadd.f32 %v4159, %v4160
      %v4162 = vrot.slane %v4161, 2
      %v4163 = vadd.f32 %v4161, %v4162
      %v4164 = vrot.slane %v4163, 1
      %v4165 = vadd.f32 %v4163, %v4164
      %v4166 = vsel %vm3483, %v4057, 0.0
      %v4167 = vsel %vm3483, %v4058, 0.0
      %v4168 = vadd.f32 %v4166, %v4167
      %v4169 = vrot.slane %v4168, 4
      %v4170 = vadd.f32 %v4168, %v4169
      %v4171 = vrot.slane %v4170, 2
      %v4172 = vadd.f32 %v4170, %v4171
      %v4173 = vrot.slane %v4172, 1
      %v4174 = vadd.f32 %v4172, %v4173
      %v4175 = vsel %vm3483, %v4059, 0.0
      %v4176 = vsel %vm3483, %v4060, 0.0
      %v4177 = vadd.f32 %v4175, %v4176
      %v4178 = vrot.slane %v4177, 4
      %v4179 = vadd.f32 %v4177, %v4178
      %v4180 = vrot.slane %v4179, 2
      %v4181 = vadd.f32 %v4179, %v4180
      %v4182 = vrot.slane %v4181, 1
      %v4183 = vadd.f32 %v4181, %v4182
      %v4184 = vsel %vm3483, %v4061, 0.0
      %v4185 = vsel %vm3483, %v4062, 0.0
      %v4186 = vadd.f32 %v4184, %v4185
      %v4187 = vrot.slane %v4186, 4
      %v4188 = vadd.f32 %v4186, %v4187
      %v4189 = vrot.slane %v4188, 2
      %v4190 = vadd.f32 %v4188, %v4189
      %v4191 = vrot.slane %v4190, 1
      %v4192 = vadd.f32 %v4190, %v4191
      %v4193 = vsel %vm3483, %v4063, 0.0
      %v4194 = vsel %vm3483, %v4064, 0.0
      %v4195 = vadd.f32 %v4193, %v4194
      %v4196 = vrot.slane %v4195, 4
      %v4197 = vadd.f32 %v4195, %v4196
      %v4198 = vrot.slane %v4197, 2
      %v4199 = vadd.f32 %v4197, %v4198
      %v4200 = vrot.slane %v4199, 1
      %v4201 = vadd.f32 %v4199, %v4200
      %v4202 = vsel %vm3483, %v4065, 0.0
      %v4203 = vsel %vm3483, %v4066, 0.0
      %v4204 = vadd.f32 %v4202, %v4203
      %v4205 = vrot.slane %v4204, 4
      %v4206 = vadd.f32 %v4204, %v4205
      %v4207 = vrot.slane %v4206, 2
      %v4208 = vadd.f32 %v4206, %v4207
      %v4209 = vrot.slane %v4208, 1
      %v4210 = vadd.f32 %v4208, %v4209
      %v4211 = vld [vmem:[%s7] sm:$0xff]
      %v4212 = vld [vmem:[%s7 + $0x8] sm:$0xff]
      %v4213 = vld [vmem:[%s7 + $0x10] sm:$0xff]
      %v4214 = vld [vmem:[%s7 + $0x18] sm:$0xff]
      %v4215 = vld [vmem:[%s8] sm:$0x1]
      %v4216 = vld [vmem:[%s9] sm:$0xff]
      %v4217 = vld [vmem:[%s9 + $0x8] sm:$0xff]
      %v4218 = vld [vmem:[%s9 + $0x10] sm:$0xff]
      %v4219 = vld [vmem:[%s9 + $0x18] sm:$0xff]
      %v4220 = vld [vmem:[%s10] sm:$0xff]
      %v4221 = vld [vmem:[%s10 + $0x8] sm:$0xff]
      %v4222 = vld [vmem:[%s10 + $0x10] sm:$0xff]
      %v4223 = vld [vmem:[%s10 + $0x18] sm:$0xff]
      %v4224 = vld [vmem:[%s11] sm:$0x1]
      %v4226 = vlaneseq
      %v4227 = vshrl.u32 %v4226, 7
      %v4228 = vsub.s32 0, %v4227
      %v4229 = vrot.slane %v4215, %v4228
      %v4232 = vsel %vm3483, %v3843, 0
      %v4235 = vsel %vm3483, %v3844, 0
      %v4238 = vsel %vm3483, %v3845, 0
      %v4241 = vsel %vm3483, %v3846, 0
      %v4244 = vsel %vm3483, %v3847, 0
      %v4247 = vsel %vm3483, %v3848, 0
      %v4250 = vsel %vm3483, %v3849, 0
      %v4253 = vsel %vm3483, %v3850, 0
      %v4256 = vsel %vm3483, %v3851, 0
      %v4259 = vsel %vm3483, %v3852, 0
      %v4262 = vsel %vm3483, %v3853, 0
      %v4265 = vsel %vm3483, %v3854, 0
      %v4268 = vsel %vm3483, %v3855, 0
      %v4271 = vsel %vm3483, %v3856, 0
      %v4274 = vsel %vm3483, %v3857, 0
      %v4277 = vsel %vm3483, %v3858, 0
      %v4280 = vsel %vm3483, %v3859, 0
      %v4283 = vsel %vm3483, %v3860, 0
      %v4286 = vsel %vm3483, %v3861, 0
      %v4289 = vsel %vm3483, %v3862, 0
      %v4292 = vsel %vm3483, %v3863, 0
      %v4295 = vsel %vm3483, %v3864, 0
      %v4298 = vsel %vm3483, %v3865, 0
      %v4301 = vsel %vm3483, %v3866, 0
      %v4304 = vsel %vm3483, %v3867, 0
      %v4307 = vsel %vm3483, %v3868, 0
      %v4310 = vsel %vm3483, %v3869, 0
      %v4313 = vsel %vm3483, %v3870, 0
      %v4316 = vsel %vm3483, %v3871, 0
      %v4319 = vsel %vm3483, %v3872, 0
      %v4322 = vsel %vm3483, %v3873, 0
      %v4325 = vsel %vm3483, %v3874, 0
      %4327 = vmatprep.subr.mxu0 0.0
      %4328 = vmatpush1.msra.mxu0 %v4211
      %4329 = vmatprep.subr.mxu0 0.0
      %4330 = vmatpush1.msra.mxu0 %v4212
      %4331 = vmatprep.subr.mxu0 0.0
      %4332 = vmatpush1.msra.mxu0 %v4213
      %4333 = vmatprep.subr.mxu0 0.0
      %4334 = vmatpush1.msra.mxu0 %v4214
      %4335 = vmatprep.subr.mxu0 0.0
      %4336 = vmatpush1.msra.mxu0 0.0
      %4337 = vmatprep.subr.mxu0 0.0
      %4338 = vmatpush1.msra.mxu0 0.0
      %4339 = vmatprep.subr.mxu0 0.0
      %4340 = vmatpush1.msra.mxu0 0.0
      %4341 = vmatprep.subr.mxu0 0.0
      %4342 = vmatpush1.msra.mxu0 0.0
      %4343 = vmatprep.subr.mxu0 0.0
      %4344 = vmatpush1.msra.mxu0 0.0
      %4345 = vmatprep.subr.mxu0 0.0
      %4346 = vmatpush1.msra.mxu0 0.0
      %4347 = vmatprep.subr.mxu0 0.0
      %4348 = vmatpush1.msra.mxu0 0.0
      %4349 = vmatprep.subr.mxu0 0.0
      %4350 = vmatpush1.msra.mxu0 0.0
      %4351 = vmatprep.subr.mxu0 0.0
      %4352 = vmatpush1.msra.mxu0 0.0
      %4353 = vmatprep.subr.mxu0 0.0
      %4354 = vmatpush1.msra.mxu0 0.0
      %4355 = vmatprep.subr.mxu0 0.0
      %4356 = vmatpush1.msra.mxu0 0.0
      %4357 = vmatprep.subr.mxu0 0.0
      %4358 = vmatpush1.msra.mxu0 0.0
      %4359 = vmatprep.subr.mxu0 0.0
      %4360 = vmatpush1.msra.mxu0 0.0
      %4361 = vmatprep.subr.mxu0 0.0
      %4362 = vmatpush1.msra.mxu0 0.0
      %4363 = vmatprep.subr.mxu0 0.0
      %4364 = vmatpush1.msra.mxu0 0.0
      %4365 = vmatprep.subr.mxu0 0.0
      %4366 = vmatpush1.msra.mxu0 0.0
      %4367 = vmatprep.subr.mxu0 0.0
      %4368 = vmatpush1.msra.mxu0 0.0
      %4369 = vmatprep.subr.mxu0 0.0
      %4370 = vmatpush1.msra.mxu0 0.0
      %4371 = vmatprep.subr.mxu0 0.0
      %4372 = vmatpush1.msra.mxu0 0.0
      %4373 = vmatprep.subr.mxu0 0.0
      %4374 = vmatpush1.msra.mxu0 0.0
      %4375 = vmatprep.subr.mxu0 0.0
      %4376 = vmatpush1.msra.mxu0 0.0
      %4377 = vmatprep.subr.mxu0 0.0
      %4378 = vmatpush1.msra.mxu0 0.0
      %4379 = vmatprep.subr.mxu0 0.0
      %4380 = vmatpush1.msra.mxu0 0.0
      %4381 = vmatprep.subr.mxu0 0.0
      %4382 = vmatpush1.msra.mxu0 0.0
      %4383 = vmatprep.subr.mxu0 0.0
      %4384 = vmatpush1.msra.mxu0 0.0
      %4385 = vmatprep.subr.mxu0 0.0
      %4386 = vmatpush1.msra.mxu0 0.0
      %4387 = vmatprep.subr.mxu0 0.0
      %4388 = vmatpush1.msra.mxu0 0.0
      %4389 = vmatprep.subr.mxu0 0.0
      %4390 = vmatpush1.msra.mxu0 0.0
      %4391 = vmatprep.mubr.f32.mxu0 0.0
      %4392 = vmatmul.mubr.f32.gmra.mrb[0].mxu0 %v4232
      %v4393 = vpop.f32.mrb[0].mxu0
      %v4394 = vadd.f32 %v4229, %v4393
      %v4395 = vpop.f32.mrb[0].mxu0
      %4396 = vmatprep.mubr.f32.mxu0 0.0
      %4397 = vmatmul.mubr.f32.gmra.mrb[0].mxu0 %v4235
      %v4398 = vpop.f32.mrb[0].mxu0
      %v4399 = vadd.f32 %v4229, %v4398
      %v4400 = vpop.f32.mrb[0].mxu0
      %4401 = vmatprep.mubr.f32.mxu0 0.0
      %4402 = vmatmul.mubr.f32.gmra.mrb[0].mxu0 %v4238
      %v4403 = vpop.f32.mrb[0].mxu0
      %v4404 = vadd.f32 %v4229, %v4403
      %v4405 = vpop.f32.mrb[0].mxu0
      %4406 = vmatprep.mubr.f32.mxu0 0.0
      %4407 = vmatmul.mubr.f32.gmra.mrb[0].mxu0 %v4241
      %v4408 = vpop.f32.mrb[0].mxu0
      %v4409 = vadd.f32 %v4229, %v4408
      %v4410 = vpop.f32.mrb[0].mxu0
      %4411 = vmatprep.mubr.f32.mxu0 0.0
      %4412 = vmatmul.mubr.f32.gmra.mrb[0].mxu0 %v4244
      %v4413 = vpop.f32.mrb[0].mxu0
      %v4414 = vadd.f32 %v4229, %v4413
      %v4415 = vpop.f32.mrb[0].mxu0
      %4416 = vmatprep.mubr.f32.mxu0 0.0
      %4417 = vmatmul.mubr.f32.gmra.mrb[0].mxu0 %v4247
      %v4418 = vpop.f32.mrb[0].mxu0
      %v4419 = vadd.f32 %v4229, %v4418
      %v4420 = vpop.f32.mrb[0].mxu0
      %4421 = vmatprep.mubr.f32.mxu0 0.0
      %4422 = vmatmul.mubr.f32.gmra.mrb[0].mxu0 %v4250
      %v4423 = vpop.f32.mrb[0].mxu0
      %v4424 = vadd.f32 %v4229, %v4423
      %v4425 = vpop.f32.mrb[0].mxu0
      %4426 = vmatprep.mubr.f32.mxu0 0.0
      %4427 = vmatmul.mubr.f32.gmra.mrb[0].mxu0 %v4253
      %v4428 = vpop.f32.mrb[0].mxu0
      %v4429 = vadd.f32 %v4229, %v4428
      %v4430 = vpop.f32.mrb[0].mxu0
      %4431 = vmatprep.mubr.f32.mxu0 0.0
      %4432 = vmatmul.mubr.f32.gmra.mrb[0].mxu0 %v4256
      %v4433 = vpop.f32.mrb[0].mxu0
      %v4434 = vadd.f32 %v4229, %v4433
      %v4435 = vpop.f32.mrb[0].mxu0
      %4436 = vmatprep.mubr.f32.mxu0 0.0
      %4437 = vmatmul.mubr.f32.gmra.mrb[0].mxu0 %v4259
      %v4438 = vpop.f32.mrb[0].mxu0
      %v4439 = vadd.f32 %v4229, %v4438
      %v4440 = vpop.f32.mrb[0].mxu0
      %4441 = vmatprep.mubr.f32.mxu0 0.0
      %4442 = vmatmul.mubr.f32.gmra.mrb[0].mxu0 %v4262
      %v4443 = vpop.f32.mrb[0].mxu0
      %v4444 = vadd.f32 %v4229, %v4443
      %v4445 = vpop.f32.mrb[0].mxu0
      %4446 = vmatprep.mubr.f32.mxu0 0.0
      %4447 = vmatmul.mubr.f32.gmra.mrb[0].mxu0 %v4265
      %v4448 = vpop.f32.mrb[0].mxu0
      %v4449 = vadd.f32 %v4229, %v4448
      %v4450 = vpop.f32.mrb[0].mxu0
      %4451 = vmatprep.mubr.f32.mxu0 0.0
      %4452 = vmatmul.mubr.f32.gmra.mrb[0].mxu0 %v4268
      %v4453 = vpop.f32.mrb[0].mxu0
      %v4454 = vadd.f32 %v4229, %v4453
      %v4455 = vpop.f32.mrb[0].mxu0
      %4456 = vmatprep.mubr.f32.mxu0 0.0
      %4457 = vmatmul.mubr.f32.gmra.mrb[0].mxu0 %v4271
      %v4458 = vpop.f32.mrb[0].mxu0
      %v4459 = vadd.f32 %v4229, %v4458
      %v4460 = vpop.f32.mrb[0].mxu0
      %4461 = vmatprep.mubr.f32.mxu0 0.0
      %4462 = vmatmul.mubr.f32.gmra.mrb[0].mxu0 %v4274
      %v4463 = vpop.f32.mrb[0].mxu0
      %v4464 = vadd.f32 %v4229, %v4463
      %v4465 = vpop.f32.mrb[0].mxu0
      %4466 = vmatprep.mubr.f32.mxu0 0.0
      %4467 = vmatmul.mubr.f32.gmra.mrb[0].mxu0 %v4277
      %v4468 = vpop.f32.mrb[0].mxu0
      %v4469 = vadd.f32 %v4229, %v4468
      %v4470 = vpop.f32.mrb[0].mxu0
      %4471 = vmatprep.mubr.f32.mxu0 0.0
      %4472 = vmatmul.mubr.f32.gmra.mrb[0].mxu0 %v4280
      %v4473 = vpop.f32.mrb[0].mxu0
      %v4474 = vadd.f32 %v4229, %v4473
      %v4475 = vpop.f32.mrb[0].mxu0
      %4476 = vmatprep.mubr.f32.mxu0 0.0
      %4477 = vmatmul.mubr.f32.gmra.mrb[0].mxu0 %v4283
      %v4478 = vpop.f32.mrb[0].mxu0
      %v4479 = vadd.f32 %v4229, %v4478
      %v4480 = vpop.f32.mrb[0].mxu0
      %4481 = vmatprep.mubr.f32.mxu0 0.0
      %4482 = vmatmul.mubr.f32.gmra.mrb[0].mxu0 %v4286
      %v4483 = vpop.f32.mrb[0].mxu0
      %v4484 = vadd.f32 %v4229, %v4483
      %v4485 = vpop.f32.mrb[0].mxu0
      %4486 = vmatprep.mubr.f32.mxu0 0.0
      %4487 = vmatmul.mubr.f32.gmra.mrb[0].mxu0 %v4289
      %v4488 = vpop.f32.mrb[0].mxu0
      %v4489 = vadd.f32 %v4229, %v4488
      %v4490 = vpop.f32.mrb[0].mxu0
      %4491 = vmatprep.mubr.f32.mxu0 0.0
      %4492 = vmatmul.mubr.f32.gmra.mrb[0].mxu0 %v4292
      %v4493 = vpop.f32.mrb[0].mxu0
      %v4494 = vadd.f32 %v4229, %v4493
      %v4495 = vpop.f32.mrb[0].mxu0
      %4496 = vmatprep.mubr.f32.mxu0 0.0
      %4497 = vmatmul.mubr.f32.gmra.mrb[0].mxu0 %v4295
      %v4498 = vpop.f32.mrb[0].mxu0
      %v4499 = vadd.f32 %v4229, %v4498
      %v4500 = vpop.f32.mrb[0].mxu0
      %4501 = vmatprep.mubr.f32.mxu0 0.0
      %4502 = vmatmul.mubr.f32.gmra.mrb[0].mxu0 %v4298
      %v4503 = vpop.f32.mrb[0].mxu0
      %v4504 = vadd.f32 %v4229, %v4503
      %v4505 = vpop.f32.mrb[0].mxu0
      %4506 = vmatprep.mubr.f32.mxu0 0.0
      %4507 = vmatmul.mubr.f32.gmra.mrb[0].mxu0 %v4301
      %v4508 = vpop.f32.mrb[0].mxu0
      %v4509 = vadd.f32 %v4229, %v4508
      %v4510 = vpop.f32.mrb[0].mxu0
      %4511 = vmatprep.mubr.f32.mxu0 0.0
      %4512 = vmatmul.mubr.f32.gmra.mrb[0].mxu0 %v4304
      %v4513 = vpop.f32.mrb[0].mxu0
      %v4514 = vadd.f32 %v4229, %v4513
      %v4515 = vpop.f32.mrb[0].mxu0
      %4516 = vmatprep.mubr.f32.mxu0 0.0
      %4517 = vmatmul.mubr.f32.gmra.mrb[0].mxu0 %v4307
      %v4518 = vpop.f32.mrb[0].mxu0
      %v4519 = vadd.f32 %v4229, %v4518
      %v4520 = vpop.f32.mrb[0].mxu0
      %4521 = vmatprep.mubr.f32.mxu0 0.0
      %4522 = vmatmul.mubr.f32.gmra.mrb[0].mxu0 %v4310
      %v4523 = vpop.f32.mrb[0].mxu0
      %v4524 = vadd.f32 %v4229, %v4523
      %v4525 = vpop.f32.mrb[0].mxu0
      %4526 = vmatprep.mubr.f32.mxu0 0.0
      %4527 = vmatmul.mubr.f32.gmra.mrb[0].mxu0 %v4313
      %v4528 = vpop.f32.mrb[0].mxu0
      %v4529 = vadd.f32 %v4229, %v4528
      %v4530 = vpop.f32.mrb[0].mxu0
      %4531 = vmatprep.mubr.f32.mxu0 0.0
      %4532 = vmatmul.mubr.f32.gmra.mrb[0].mxu0 %v4316
      %v4533 = vpop.f32.mrb[0].mxu0
      %v4534 = vadd.f32 %v4229, %v4533
      %v4535 = vpop.f32.mrb[0].mxu0
      %4536 = vmatprep.mubr.f32.mxu0 0.0
      %4537 = vmatmul.mubr.f32.gmra.mrb[0].mxu0 %v4319
      %v4538 = vpop.f32.mrb[0].mxu0
      %v4539 = vadd.f32 %v4229, %v4538
      %v4540 = vpop.f32.mrb[0].mxu0
      %4541 = vmatprep.mubr.f32.mxu0 0.0
      %4542 = vmatmul.mubr.f32.gmra.mrb[0].mxu0 %v4322
      %v4543 = vpop.f32.mrb[0].mxu0
      %v4544 = vadd.f32 %v4229, %v4543
      %v4545 = vpop.f32.mrb[0].mxu0
      %4546 = vmatprep.mubr.f32.mxu0 0.0
      %4547 = vmatmul.mubr.f32.gmra.mrb[0].mxu0 %v4325
      %v4548 = vpop.f32.mrb[0].mxu0
      %v4549 = vadd.f32 %v4229, %v4548
      %v4550 = vpop.f32.mrb[0].mxu0
      %4551 = vdwg.mxu0
      %v4552 = vmax.f32 %v4394, 0.0
      %v4553 = vmax.f32 %v4399, 0.0
      %v4554 = vmax.f32 %v4404, 0.0
      %v4555 = vmax.f32 %v4409, 0.0
      %v4556 = vmax.f32 %v4414, 0.0
      %v4557 = vmax.f32 %v4419, 0.0
      %v4558 = vmax.f32 %v4424, 0.0
      %v4559 = vmax.f32 %v4429, 0.0
      %v4560 = vmax.f32 %v4434, 0.0
      %v4561 = vmax.f32 %v4439, 0.0
      %v4562 = vmax.f32 %v4444, 0.0
      %v4563 = vmax.f32 %v4449, 0.0
      %v4564 = vmax.f32 %v4454, 0.0
      %v4565 = vmax.f32 %v4459, 0.0
      %v4566 = vmax.f32 %v4464, 0.0
      %v4567 = vmax.f32 %v4469, 0.0
      %v4568 = vmax.f32 %v4474, 0.0
      %v4569 = vmax.f32 %v4479, 0.0
      %v4570 = vmax.f32 %v4484, 0.0
      %v4571 = vmax.f32 %v4489, 0.0
      %v4572 = vmax.f32 %v4494, 0.0
      %v4573 = vmax.f32 %v4499, 0.0
      %v4574 = vmax.f32 %v4504, 0.0
      %v4575 = vmax.f32 %v4509, 0.0
      %v4576 = vmax.f32 %v4514, 0.0
      %v4577 = vmax.f32 %v4519, 0.0
      %v4578 = vmax.f32 %v4524, 0.0
      %v4579 = vmax.f32 %v4529, 0.0
      %v4580 = vmax.f32 %v4534, 0.0
      %v4581 = vmax.f32 %v4539, 0.0
      %v4582 = vmax.f32 %v4544, 0.0
      %v4583 = vmax.f32 %v4549, 0.0
      %v4584 = vlaneseq
      %v4585 = vshrl.u32 %v4584, 7
      %v4586 = vsub.s32 0, %v4585
      %v4587 = vrot.slane %v4552, %v4586
      %v4588 = vlaneseq
      %v4589 = vshrl.u32 %v4588, 7
      %v4590 = vsub.s32 0, %v4589
      %v4591 = vrot.slane %v4554, %v4590
      %v4592 = vlaneseq
      %v4593 = vshrl.u32 %v4592, 7
      %v4594 = vsub.s32 0, %v4593
      %v4595 = vrot.slane %v4556, %v4594
      %v4596 = vlaneseq
      %v4597 = vshrl.u32 %v4596, 7
      %v4598 = vsub.s32 0, %v4597
      %v4599 = vrot.slane %v4558, %v4598
      %v4600 = vlaneseq
      %v4601 = vshrl.u32 %v4600, 7
      %v4602 = vsub.s32 0, %v4601
      %v4603 = vrot.slane %v4560, %v4602
      %v4604 = vlaneseq
      %v4605 = vshrl.u32 %v4604, 7
      %v4606 = vsub.s32 0, %v4605
      %v4607 = vrot.slane %v4562, %v4606
      %v4608 = vlaneseq
      %v4609 = vshrl.u32 %v4608, 7
      %v4610 = vsub.s32 0, %v4609
      %v4611 = vrot.slane %v4564, %v4610
      %v4612 = vlaneseq
      %v4613 = vshrl.u32 %v4612, 7
      %v4614 = vsub.s32 0, %v4613
      %v4615 = vrot.slane %v4566, %v4614
      %v4616 = vlaneseq
      %v4617 = vshrl.u32 %v4616, 7
      %v4618 = vsub.s32 0, %v4617
      %v4619 = vrot.slane %v4568, %v4618
      %v4620 = vlaneseq
      %v4621 = vshrl.u32 %v4620, 7
      %v4622 = vsub.s32 0, %v4621
      %v4623 = vrot.slane %v4570, %v4622
      %v4624 = vlaneseq
      %v4625 = vshrl.u32 %v4624, 7
      %v4626 = vsub.s32 0, %v4625
      %v4627 = vrot.slane %v4572, %v4626
      %v4628 = vlaneseq
      %v4629 = vshrl.u32 %v4628, 7
      %v4630 = vsub.s32 0, %v4629
      %v4631 = vrot.slane %v4574, %v4630
      %v4632 = vlaneseq
      %v4633 = vshrl.u32 %v4632, 7
      %v4634 = vsub.s32 0, %v4633
      %v4635 = vrot.slane %v4576, %v4634
      %v4636 = vlaneseq
      %v4637 = vshrl.u32 %v4636, 7
      %v4638 = vsub.s32 0, %v4637
      %v4639 = vrot.slane %v4578, %v4638
      %v4640 = vlaneseq
      %v4641 = vshrl.u32 %v4640, 7
      %v4642 = vsub.s32 0, %v4641
      %v4643 = vrot.slane %v4580, %v4642
      %v4644 = vlaneseq
      %v4645 = vshrl.u32 %v4644, 7
      %v4646 = vsub.s32 0, %v4645
      %v4647 = vrot.slane %v4582, %v4646
      %4650 = vrot.lane.b32.xlu0 %v4552, 96
      %v4651 = vpop.permute.xlu0 %4650
      %4652 = vrot.lane.b32.xlu0 %v4553, 96
      %v4653 = vpop.permute.xlu0 %4652
      %v4656 = vmul.f32 %v4587, %v4651
      %v4657 = vmul.f32 %v4587, %v4653
      %v4658 = vmul.f32 %v4591, %v4651
      %v4659 = vmul.f32 %v4591, %v4653
      %v4660 = vmul.f32 %v4595, %v4651
      %v4661 = vmul.f32 %v4595, %v4653
      %v4662 = vmul.f32 %v4599, %v4651
      %v4663 = vmul.f32 %v4599, %v4653
      %v4664 = vmul.f32 %v4603, %v4651
      %v4665 = vmul.f32 %v4603, %v4653
      %v4666 = vmul.f32 %v4607, %v4651
      %v4667 = vmul.f32 %v4607, %v4653
      %v4668 = vmul.f32 %v4611, %v4651
      %v4669 = vmul.f32 %v4611, %v4653
      %v4670 = vmul.f32 %v4615, %v4651
      %v4671 = vmul.f32 %v4615, %v4653
      %v4672 = vmul.f32 %v4619, %v4651
      %v4673 = vmul.f32 %v4619, %v4653
      %v4674 = vmul.f32 %v4623, %v4651
      %v4675 = vmul.f32 %v4623, %v4653
      %v4676 = vmul.f32 %v4627, %v4651
      %v4677 = vmul.f32 %v4627, %v4653
      %v4678 = vmul.f32 %v4631, %v4651
      %v4679 = vmul.f32 %v4631, %v4653
      %v4680 = vmul.f32 %v4635, %v4651
      %v4681 = vmul.f32 %v4635, %v4653
      %v4682 = vmul.f32 %v4639, %v4651
      %v4683 = vmul.f32 %v4639, %v4653
      %v4684 = vmul.f32 %v4643, %v4651
      %v4685 = vmul.f32 %v4643, %v4653
      %v4686 = vmul.f32 %v4647, %v4651
      %v4687 = vmul.f32 %v4647, %v4653
      %v4688 = vlaneseq
      %v4689 = vshrl.u32 %v4688, 7
      %v4690 = vsub.s32 1, %v4689
      %v4691 = vrot.slane %v4552, %v4690
      %v4692 = vlaneseq
      %v4693 = vshrl.u32 %v4692, 7
      %v4694 = vsub.s32 1, %v4693
      %v4695 = vrot.slane %v4554, %v4694
      %v4696 = vlaneseq
      %v4697 = vshrl.u32 %v4696, 7
      %v4698 = vsub.s32 1, %v4697
      %v4699 = vrot.slane %v4556, %v4698
      %v4700 = vlaneseq
      %v4701 = vshrl.u32 %v4700, 7
      %v4702 = vsub.s32 1, %v4701
      %v4703 = vrot.slane %v4558, %v4702
      %v4704 = vlaneseq
      %v4705 = vshrl.u32 %v4704, 7
      %v4706 = vsub.s32 1, %v4705
      %v4707 = vrot.slane %v4560, %v4706
      %v4708 = vlaneseq
      %v4709 = vshrl.u32 %v4708, 7
      %v4710 = vsub.s32 1, %v4709
      %v4711 = vrot.slane %v4562, %v4710
      %v4712 = vlaneseq
      %v4713 = vshrl.u32 %v4712, 7
      %v4714 = vsub.s32 1, %v4713
      %v4715 = vrot.slane %v4564, %v4714
      %v4716 = vlaneseq
      %v4717 = vshrl.u32 %v4716, 7
      %v4718 = vsub.s32 1, %v4717
      %v4719 = vrot.slane %v4566, %v4718
      %v4720 = vlaneseq
      %v4721 = vshrl.u32 %v4720, 7
      %v4722 = vsub.s32 1, %v4721
      %v4723 = vrot.slane %v4568, %v4722
      %v4724 = vlaneseq
      %v4725 = vshrl.u32 %v4724, 7
      %v4726 = vsub.s32 1, %v4725
      %v4727 = vrot.slane %v4570, %v4726
      %v4728 = vlaneseq
      %v4729 = vshrl.u32 %v4728, 7
      %v4730 = vsub.s32 1, %v4729
      %v4731 = vrot.slane %v4572, %v4730
      %v4732 = vlaneseq
      %v4733 = vshrl.u32 %v4732, 7
      %v4734 = vsub.s32 1, %v4733
      %v4735 = vrot.slane %v4574, %v4734
      %v4736 = vlaneseq
      %v4737 = vshrl.u32 %v4736, 7
      %v4738 = vsub.s32 1, %v4737
      %v4739 = vrot.slane %v4576, %v4738
      %v4740 = vlaneseq
      %v4741 = vshrl.u32 %v4740, 7
      %v4742 = vsub.s32 1, %v4741
      %v4743 = vrot.slane %v4578, %v4742
      %v4744 = vlaneseq
      %v4745 = vshrl.u32 %v4744, 7
      %v4746 = vsub.s32 1, %v4745
      %v4747 = vrot.slane %v4580, %v4746
      %v4748 = vlaneseq
      %v4749 = vshrl.u32 %v4748, 7
      %v4750 = vsub.s32 1, %v4749
      %v4751 = vrot.slane %v4582, %v4750
      %4754 = vrot.lane.b32.xlu0 %v4554, 96
      %v4755 = vpop.permute.xlu0 %4754
      %4756 = vrot.lane.b32.xlu0 %v4555, 96
      %v4757 = vpop.permute.xlu0 %4756
      %v4760 = vmul.f32 %v4691, %v4755
      %v4761 = vmul.f32 %v4691, %v4757
      %v4762 = vmul.f32 %v4695, %v4755
      %v4763 = vmul.f32 %v4695, %v4757
      %v4764 = vmul.f32 %v4699, %v4755
      %v4765 = vmul.f32 %v4699, %v4757
      %v4766 = vmul.f32 %v4703, %v4755
      %v4767 = vmul.f32 %v4703, %v4757
      %v4768 = vmul.f32 %v4707, %v4755
      %v4769 = vmul.f32 %v4707, %v4757
      %v4770 = vmul.f32 %v4711, %v4755
      %v4771 = vmul.f32 %v4711, %v4757
      %v4772 = vmul.f32 %v4715, %v4755
      %v4773 = vmul.f32 %v4715, %v4757
      %v4774 = vmul.f32 %v4719, %v4755
      %v4775 = vmul.f32 %v4719, %v4757
      %v4776 = vmul.f32 %v4723, %v4755
      %v4777 = vmul.f32 %v4723, %v4757
      %v4778 = vmul.f32 %v4727, %v4755
      %v4779 = vmul.f32 %v4727, %v4757
      %v4780 = vmul.f32 %v4731, %v4755
      %v4781 = vmul.f32 %v4731, %v4757
      %v4782 = vmul.f32 %v4735, %v4755
      %v4783 = vmul.f32 %v4735, %v4757
      %v4784 = vmul.f32 %v4739, %v4755
      %v4785 = vmul.f32 %v4739, %v4757
      %v4786 = vmul.f32 %v4743, %v4755
      %v4787 = vmul.f32 %v4743, %v4757
      %v4788 = vmul.f32 %v4747, %v4755
      %v4789 = vmul.f32 %v4747, %v4757
      %v4790 = vmul.f32 %v4751, %v4755
      %v4791 = vmul.f32 %v4751, %v4757
      %v4792 = vadd.f32 %v4656, %v4760
      %v4793 = vadd.f32 %v4657, %v4761
      %v4794 = vadd.f32 %v4658, %v4762
      %v4795 = vadd.f32 %v4659, %v4763
      %v4796 = vadd.f32 %v4660, %v4764
      %v4797 = vadd.f32 %v4661, %v4765
      %v4798 = vadd.f32 %v4662, %v4766
      %v4799 = vadd.f32 %v4663, %v4767
      %v4800 = vadd.f32 %v4664, %v4768
      %v4801 = vadd.f32 %v4665, %v4769
      %v4802 = vadd.f32 %v4666, %v4770
      %v4803 = vadd.f32 %v4667, %v4771
      %v4804 = vadd.f32 %v4668, %v4772
      %v4805 = vadd.f32 %v4669, %v4773
      %v4806 = vadd.f32 %v4670, %v4774
      %v4807 = vadd.f32 %v4671, %v4775
      %v4808 = vadd.f32 %v4672, %v4776
      %v4809 = vadd.f32 %v4673, %v4777
      %v4810 = vadd.f32 %v4674, %v4778
      %v4811 = vadd.f32 %v4675, %v4779
      %v4812 = vadd.f32 %v4676, %v4780
      %v4813 = vadd.f32 %v4677, %v4781
      %v4814 = vadd.f32 %v4678, %v4782
      %v4815 = vadd.f32 %v4679, %v4783
      %v4816 = vadd.f32 %v4680, %v4784
      %v4817 = vadd.f32 %v4681, %v4785
      %v4818 = vadd.f32 %v4682, %v4786
      %v4819 = vadd.f32 %v4683, %v4787
      %v4820 = vadd.f32 %v4684, %v4788
      %v4821 = vadd.f32 %v4685, %v4789
      %v4822 = vadd.f32 %v4686, %v4790
      %v4823 = vadd.f32 %v4687, %v4791
      %v4824 = vlaneseq
      %v4825 = vshrl.u32 %v4824, 7
      %v4826 = vsub.s32 2, %v4825
      %v4827 = vrot.slane %v4552, %v4826
      %v4828 = vlaneseq
      %v4829 = vshrl.u32 %v4828, 7
      %v4830 = vsub.s32 2, %v4829
      %v4831 = vrot.slane %v4554, %v4830
      %v4832 = vlaneseq
      %v4833 = vshrl.u32 %v4832, 7
      %v4834 = vsub.s32 2, %v4833
      %v4835 = vrot.slane %v4556, %v4834
      %v4836 = vlaneseq
      %v4837 = vshrl.u32 %v4836, 7
      %v4838 = vsub.s32 2, %v4837
      %v4839 = vrot.slane %v4558, %v4838
      %v4840 = vlaneseq
      %v4841 = vshrl.u32 %v4840, 7
      %v4842 = vsub.s32 2, %v4841
      %v4843 = vrot.slane %v4560, %v4842
      %v4844 = vlaneseq
      %v4845 = vshrl.u32 %v4844, 7
      %v4846 = vsub.s32 2, %v4845
      %v4847 = vrot.slane %v4562, %v4846
      %v4848 = vlaneseq
      %v4849 = vshrl.u32 %v4848, 7
      %v4850 = vsub.s32 2, %v4849
      %v4851 = vrot.slane %v4564, %v4850
      %v4852 = vlaneseq
      %v4853 = vshrl.u32 %v4852, 7
      %v4854 = vsub.s32 2, %v4853
      %v4855 = vrot.slane %v4566, %v4854
      %v4856 = vlaneseq
      %v4857 = vshrl.u32 %v4856, 7
      %v4858 = vsub.s32 2, %v4857
      %v4859 = vrot.slane %v4568, %v4858
      %v4860 = vlaneseq
      %v4861 = vshrl.u32 %v4860, 7
      %v4862 = vsub.s32 2, %v4861
      %v4863 = vrot.slane %v4570, %v4862
      %v4864 = vlaneseq
      %v4865 = vshrl.u32 %v4864, 7
      %v4866 = vsub.s32 2, %v4865
      %v4867 = vrot.slane %v4572, %v4866
      %v4868 = vlaneseq
      %v4869 = vshrl.u32 %v4868, 7
      %v4870 = vsub.s32 2, %v4869
      %v4871 = vrot.slane %v4574, %v4870
      %v4872 = vlaneseq
      %v4873 = vshrl.u32 %v4872, 7
      %v4874 = vsub.s32 2, %v4873
      %v4875 = vrot.slane %v4576, %v4874
      %v4876 = vlaneseq
      %v4877 = vshrl.u32 %v4876, 7
      %v4878 = vsub.s32 2, %v4877
      %v4879 = vrot.slane %v4578, %v4878
      %v4880 = vlaneseq
      %v4881 = vshrl.u32 %v4880, 7
      %v4882 = vsub.s32 2, %v4881
      %v4883 = vrot.slane %v4580, %v4882
      %v4884 = vlaneseq
      %v4885 = vshrl.u32 %v4884, 7
      %v4886 = vsub.s32 2, %v4885
      %v4887 = vrot.slane %v4582, %v4886
      %4890 = vrot.lane.b32.xlu0 %v4556, 96
      %v4891 = vpop.permute.xlu0 %4890
      %4892 = vrot.lane.b32.xlu0 %v4557, 96
      %v4893 = vpop.permute.xlu0 %4892
      %v4896 = vmul.f32 %v4827, %v4891
      %v4897 = vmul.f32 %v4827, %v4893
      %v4898 = vmul.f32 %v4831, %v4891
      %v4899 = vmul.f32 %v4831, %v4893
      %v4900 = vmul.f32 %v4835, %v4891
      %v4901 = vmul.f32 %v4835, %v4893
      %v4902 = vmul.f32 %v4839, %v4891
      %v4903 = vmul.f32 %v4839, %v4893
      %v4904 = vmul.f32 %v4843, %v4891
      %v4905 = vmul.f32 %v4843, %v4893
      %v4906 = vmul.f32 %v4847, %v4891
      %v4907 = vmul.f32 %v4847, %v4893
      %v4908 = vmul.f32 %v4851, %v4891
      %v4909 = vmul.f32 %v4851, %v4893
      %v4910 = vmul.f32 %v4855, %v4891
      %v4911 = vmul.f32 %v4855, %v4893
      %v4912 = vmul.f32 %v4859, %v4891
      %v4913 = vmul.f32 %v4859, %v4893
      %v4914 = vmul.f32 %v4863, %v4891
      %v4915 = vmul.f32 %v4863, %v4893
      %v4916 = vmul.f32 %v4867, %v4891
      %v4917 = vmul.f32 %v4867, %v4893
      %v4918 = vmul.f32 %v4871, %v4891
      %v4919 = vmul.f32 %v4871, %v4893
      %v4920 = vmul.f32 %v4875, %v4891
      %v4921 = vmul.f32 %v4875, %v4893
      %v4922 = vmul.f32 %v4879, %v4891
      %v4923 = vmul.f32 %v4879, %v4893
      %v4924 = vmul.f32 %v4883, %v4891
      %v4925 = vmul.f32 %v4883, %v4893
      %v4926 = vmul.f32 %v4887, %v4891
      %v4927 = vmul.f32 %v4887, %v4893
      %v4928 = vadd.f32 %v4792, %v4896
      %v4929 = vadd.f32 %v4793, %v4897
      %v4930 = vadd.f32 %v4794, %v4898
      %v4931 = vadd.f32 %v4795, %v4899
      %v4932 = vadd.f32 %v4796, %v4900
      %v4933 = vadd.f32 %v4797, %v4901
      %v4934 = vadd.f32 %v4798, %v4902
      %v4935 = vadd.f32 %v4799, %v4903
      %v4936 = vadd.f32 %v4800, %v4904
      %v4937 = vadd.f32 %v4801, %v4905
      %v4938 = vadd.f32 %v4802, %v4906
      %v4939 = vadd.f32 %v4803, %v4907
      %v4940 = vadd.f32 %v4804, %v4908
      %v4941 = vadd.f32 %v4805, %v4909
      %v4942 = vadd.f32 %v4806, %v4910
      %v4943 = vadd.f32 %v4807, %v4911
      %v4944 = vadd.f32 %v4808, %v4912
      %v4945 = vadd.f32 %v4809, %v4913
      %v4946 = vadd.f32 %v4810, %v4914
      %v4947 = vadd.f32 %v4811, %v4915
      %v4948 = vadd.f32 %v4812, %v4916
      %v4949 = vadd.f32 %v4813, %v4917
      %v4950 = vadd.f32 %v4814, %v4918
      %v4951 = vadd.f32 %v4815, %v4919
      %v4952 = vadd.f32 %v4816, %v4920
      %v4953 = vadd.f32 %v4817, %v4921
      %v4954 = vadd.f32 %v4818, %v4922
      %v4955 = vadd.f32 %v4819, %v4923
      %v4956 = vadd.f32 %v4820, %v4924
      %v4957 = vadd.f32 %v4821, %v4925
      %v4958 = vadd.f32 %v4822, %v4926
      %v4959 = vadd.f32 %v4823, %v4927
      %v4960 = vlaneseq
      %v4961 = vshrl.u32 %v4960, 7
      %v4962 = vsub.s32 3, %v4961
      %v4963 = vrot.slane %v4552, %v4962
      %v4964 = vlaneseq
      %v4965 = vshrl.u32 %v4964, 7
      %v4966 = vsub.s32 3, %v4965
      %v4967 = vrot.slane %v4554, %v4966
      %v4968 = vlaneseq
      %v4969 = vshrl.u32 %v4968, 7
      %v4970 = vsub.s32 3, %v4969
      %v4971 = vrot.slane %v4556, %v4970
      %v4972 = vlaneseq
      %v4973 = vshrl.u32 %v4972, 7
      %v4974 = vsub.s32 3, %v4973
      %v4975 = vrot.slane %v4558, %v4974
      %v4976 = vlaneseq
      %v4977 = vshrl.u32 %v4976, 7
      %v4978 = vsub.s32 3, %v4977
      %v4979 = vrot.slane %v4560, %v4978
      %v4980 = vlaneseq
      %v4981 = vshrl.u32 %v4980, 7
      %v4982 = vsub.s32 3, %v4981
      %v4983 = vrot.slane %v4562, %v4982
      %v4984 = vlaneseq
      %v4985 = vshrl.u32 %v4984, 7
      %v4986 = vsub.s32 3, %v4985
      %v4987 = vrot.slane %v4564, %v4986
      %v4988 = vlaneseq
      %v4989 = vshrl.u32 %v4988, 7
      %v4990 = vsub.s32 3, %v4989
      %v4991 = vrot.slane %v4566, %v4990
      %v4992 = vlaneseq
      %v4993 = vshrl.u32 %v4992, 7
      %v4994 = vsub.s32 3, %v4993
      %v4995 = vrot.slane %v4568, %v4994
      %v4996 = vlaneseq
      %v4997 = vshrl.u32 %v4996, 7
      %v4998 = vsub.s32 3, %v4997
      %v4999 = vrot.slane %v4570, %v4998
      %v5000 = vlaneseq
      %v5001 = vshrl.u32 %v5000, 7
      %v5002 = vsub.s32 3, %v5001
      %v5003 = vrot.slane %v4572, %v5002
      %v5004 = vlaneseq
      %v5005 = vshrl.u32 %v5004, 7
      %v5006 = vsub.s32 3, %v5005
      %v5007 = vrot.slane %v4574, %v5006
      %v5008 = vlaneseq
      %v5009 = vshrl.u32 %v5008, 7
      %v5010 = vsub.s32 3, %v5009
      %v5011 = vrot.slane %v4576, %v5010
      %v5012 = vlaneseq
      %v5013 = vshrl.u32 %v5012, 7
      %v5014 = vsub.s32 3, %v5013
      %v5015 = vrot.slane %v4578, %v5014
      %v5016 = vlaneseq
      %v5017 = vshrl.u32 %v5016, 7
      %v5018 = vsub.s32 3, %v5017
      %v5019 = vrot.slane %v4580, %v5018
      %v5020 = vlaneseq
      %v5021 = vshrl.u32 %v5020, 7
      %v5022 = vsub.s32 3, %v5021
      %v5023 = vrot.slane %v4582, %v5022
      %5026 = vrot.lane.b32.xlu0 %v4558, 96
      %v5027 = vpop.permute.xlu0 %5026
      %5028 = vrot.lane.b32.xlu0 %v4559, 96
      %v5029 = vpop.permute.xlu0 %5028
      %v5032 = vmul.f32 %v4963, %v5027
      %v5033 = vmul.f32 %v4963, %v5029
      %v5034 = vmul.f32 %v4967, %v5027
      %v5035 = vmul.f32 %v4967, %v5029
      %v5036 = vmul.f32 %v4971, %v5027
      %v5037 = vmul.f32 %v4971, %v5029
      %v5038 = vmul.f32 %v4975, %v5027
      %v5039 = vmul.f32 %v4975, %v5029
      %v5040 = vmul.f32 %v4979, %v5027
      %v5041 = vmul.f32 %v4979, %v5029
      %v5042 = vmul.f32 %v4983, %v5027
      %v5043 = vmul.f32 %v4983, %v5029
      %v5044 = vmul.f32 %v4987, %v5027
      %v5045 = vmul.f32 %v4987, %v5029
      %v5046 = vmul.f32 %v4991, %v5027
      %v5047 = vmul.f32 %v4991, %v5029
      %v5048 = vmul.f32 %v4995, %v5027
      %v5049 = vmul.f32 %v4995, %v5029
      %v5050 = vmul.f32 %v4999, %v5027
      %v5051 = vmul.f32 %v4999, %v5029
      %v5052 = vmul.f32 %v5003, %v5027
      %v5053 = vmul.f32 %v5003, %v5029
      %v5054 = vmul.f32 %v5007, %v5027
      %v5055 = vmul.f32 %v5007, %v5029
      %v5056 = vmul.f32 %v5011, %v5027
      %v5057 = vmul.f32 %v5011, %v5029
      %v5058 = vmul.f32 %v5015, %v5027
      %v5059 = vmul.f32 %v5015, %v5029
      %v5060 = vmul.f32 %v5019, %v5027
      %v5061 = vmul.f32 %v5019, %v5029
      %v5062 = vmul.f32 %v5023, %v5027
      %v5063 = vmul.f32 %v5023, %v5029
      %v5064 = vadd.f32 %v4928, %v5032
      %v5065 = vadd.f32 %v4929, %v5033
      %v5066 = vadd.f32 %v4930, %v5034
      %v5067 = vadd.f32 %v4931, %v5035
      %v5068 = vadd.f32 %v4932, %v5036
      %v5069 = vadd.f32 %v4933, %v5037
      %v5070 = vadd.f32 %v4934, %v5038
      %v5071 = vadd.f32 %v4935, %v5039
      %v5072 = vadd.f32 %v4936, %v5040
      %v5073 = vadd.f32 %v4937, %v5041
      %v5074 = vadd.f32 %v4938, %v5042
      %v5075 = vadd.f32 %v4939, %v5043
      %v5076 = vadd.f32 %v4940, %v5044
      %v5077 = vadd.f32 %v4941, %v5045
      %v5078 = vadd.f32 %v4942, %v5046
      %v5079 = vadd.f32 %v4943, %v5047
      %v5080 = vadd.f32 %v4944, %v5048
      %v5081 = vadd.f32 %v4945, %v5049
      %v5082 = vadd.f32 %v4946, %v5050
      %v5083 = vadd.f32 %v4947, %v5051
      %v5084 = vadd.f32 %v4948, %v5052
      %v5085 = vadd.f32 %v4949, %v5053
      %v5086 = vadd.f32 %v4950, %v5054
      %v5087 = vadd.f32 %v4951, %v5055
      %v5088 = vadd.f32 %v4952, %v5056
      %v5089 = vadd.f32 %v4953, %v5057
      %v5090 = vadd.f32 %v4954, %v5058
      %v5091 = vadd.f32 %v4955, %v5059
      %v5092 = vadd.f32 %v4956, %v5060
      %v5093 = vadd.f32 %v4957, %v5061
      %v5094 = vadd.f32 %v4958, %v5062
      %v5095 = vadd.f32 %v4959, %v5063
      %v5096 = vlaneseq
      %v5097 = vshrl.u32 %v5096, 7
      %v5098 = vsub.s32 4, %v5097
      %v5099 = vrot.slane %v4552, %v5098
      %v5100 = vlaneseq
      %v5101 = vshrl.u32 %v5100, 7
      %v5102 = vsub.s32 4, %v5101
      %v5103 = vrot.slane %v4554, %v5102
      %v5104 = vlaneseq
      %v5105 = vshrl.u32 %v5104, 7
      %v5106 = vsub.s32 4, %v5105
      %v5107 = vrot.slane %v4556, %v5106
      %v5108 = vlaneseq
      %v5109 = vshrl.u32 %v5108, 7
      %v5110 = vsub.s32 4, %v5109
      %v5111 = vrot.slane %v4558, %v5110
      %v5112 = vlaneseq
      %v5113 = vshrl.u32 %v5112, 7
      %v5114 = vsub.s32 4, %v5113
      %v5115 = vrot.slane %v4560, %v5114
      %v5116 = vlaneseq
      %v5117 = vshrl.u32 %v5116, 7
      %v5118 = vsub.s32 4, %v5117
      %v5119 = vrot.slane %v4562, %v5118
      %v5120 = vlaneseq
      %v5121 = vshrl.u32 %v5120, 7
      %v5122 = vsub.s32 4, %v5121
      %v5123 = vrot.slane %v4564, %v5122
      %v5124 = vlaneseq
      %v5125 = vshrl.u32 %v5124, 7
      %v5126 = vsub.s32 4, %v5125
      %v5127 = vrot.slane %v4566, %v5126
      %v5128 = vlaneseq
      %v5129 = vshrl.u32 %v5128, 7
      %v5130 = vsub.s32 4, %v5129
      %v5131 = vrot.slane %v4568, %v5130
      %v5132 = vlaneseq
      %v5133 = vshrl.u32 %v5132, 7
      %v5134 = vsub.s32 4, %v5133
      %v5135 = vrot.slane %v4570, %v5134
      %v5136 = vlaneseq
      %v5137 = vshrl.u32 %v5136, 7
      %v5138 = vsub.s32 4, %v5137
      %v5139 = vrot.slane %v4572, %v5138
      %v5140 = vlaneseq
      %v5141 = vshrl.u32 %v5140, 7
      %v5142 = vsub.s32 4, %v5141
      %v5143 = vrot.slane %v4574, %v5142
      %v5144 = vlaneseq
      %v5145 = vshrl.u32 %v5144, 7
      %v5146 = vsub.s32 4, %v5145
      %v5147 = vrot.slane %v4576, %v5146
      %v5148 = vlaneseq
      %v5149 = vshrl.u32 %v5148, 7
      %v5150 = vsub.s32 4, %v5149
      %v5151 = vrot.slane %v4578, %v5150
      %v5152 = vlaneseq
      %v5153 = vshrl.u32 %v5152, 7
      %v5154 = vsub.s32 4, %v5153
      %v5155 = vrot.slane %v4580, %v5154
      %v5156 = vlaneseq
      %v5157 = vshrl.u32 %v5156, 7
      %v5158 = vsub.s32 4, %v5157
      %v5159 = vrot.slane %v4582, %v5158
      %5162 = vrot.lane.b32.xlu0 %v4560, 96
      %v5163 = vpop.permute.xlu0 %5162
      %5164 = vrot.lane.b32.xlu0 %v4561, 96
      %v5165 = vpop.permute.xlu0 %5164
      %v5168 = vmul.f32 %v5099, %v5163
      %v5169 = vmul.f32 %v5099, %v5165
      %v5170 = vmul.f32 %v5103, %v5163
      %v5171 = vmul.f32 %v5103, %v5165
      %v5172 = vmul.f32 %v5107, %v5163
      %v5173 = vmul.f32 %v5107, %v5165
      %v5174 = vmul.f32 %v5111, %v5163
      %v5175 = vmul.f32 %v5111, %v5165
      %v5176 = vmul.f32 %v5115, %v5163
      %v5177 = vmul.f32 %v5115, %v5165
      %v5178 = vmul.f32 %v5119, %v5163
      %v5179 = vmul.f32 %v5119, %v5165
      %v5180 = vmul.f32 %v5123, %v5163
      %v5181 = vmul.f32 %v5123, %v5165
      %v5182 = vmul.f32 %v5127, %v5163
      %v5183 = vmul.f32 %v5127, %v5165
      %v5184 = vmul.f32 %v5131, %v5163
      %v5185 = vmul.f32 %v5131, %v5165
      %v5186 = vmul.f32 %v5135, %v5163
      %v5187 = vmul.f32 %v5135, %v5165
      %v5188 = vmul.f32 %v5139, %v5163
      %v5189 = vmul.f32 %v5139, %v5165
      %v5190 = vmul.f32 %v5143, %v5163
      %v5191 = vmul.f32 %v5143, %v5165
      %v5192 = vmul.f32 %v5147, %v5163
      %v5193 = vmul.f32 %v5147, %v5165
      %v5194 = vmul.f32 %v5151, %v5163
      %v5195 = vmul.f32 %v5151, %v5165
      %v5196 = vmul.f32 %v5155, %v5163
      %v5197 = vmul.f32 %v5155, %v5165
      %v5198 = vmul.f32 %v5159, %v5163
      %v5199 = vmul.f32 %v5159, %v5165
      %v5200 = vadd.f32 %v5064, %v5168
      %v5201 = vadd.f32 %v5065, %v5169
      %v5202 = vadd.f32 %v5066, %v5170
      %v5203 = vadd.f32 %v5067, %v5171
      %v5204 = vadd.f32 %v5068, %v5172
      %v5205 = vadd.f32 %v5069, %v5173
      %v5206 = vadd.f32 %v5070, %v5174
      %v5207 = vadd.f32 %v5071, %v5175
      %v5208 = vadd.f32 %v5072, %v5176
      %v5209 = vadd.f32 %v5073, %v5177
      %v5210 = vadd.f32 %v5074, %v5178
      %v5211 = vadd.f32 %v5075, %v5179
      %v5212 = vadd.f32 %v5076, %v5180
      %v5213 = vadd.f32 %v5077, %v5181
      %v5214 = vadd.f32 %v5078, %v5182
      %v5215 = vadd.f32 %v5079, %v5183
      %v5216 = vadd.f32 %v5080, %v5184
      %v5217 = vadd.f32 %v5081, %v5185
      %v5218 = vadd.f32 %v5082, %v5186
      %v5219 = vadd.f32 %v5083, %v5187
      %v5220 = vadd.f32 %v5084, %v5188
      %v5221 = vadd.f32 %v5085, %v5189
      %v5222 = vadd.f32 %v5086, %v5190
      %v5223 = vadd.f32 %v5087, %v5191
      %v5224 = vadd.f32 %v5088, %v5192
      %v5225 = vadd.f32 %v5089, %v5193
      %v5226 = vadd.f32 %v5090, %v5194
      %v5227 = vadd.f32 %v5091, %v5195
      %v5228 = vadd.f32 %v5092, %v5196
      %v5229 = vadd.f32 %v5093, %v5197
      %v5230 = vadd.f32 %v5094, %v5198
      %v5231 = vadd.f32 %v5095, %v5199
      %v5232 = vlaneseq
      %v5233 = vshrl.u32 %v5232, 7
      %v5234 = vsub.s32 5, %v5233
      %v5235 = vrot.slane %v4552, %v5234
      %v5236 = vlaneseq
      %v5237 = vshrl.u32 %v5236, 7
      %v5238 = vsub.s32 5, %v5237
      %v5239 = vrot.slane %v4554, %v5238
      %v5240 = vlaneseq
      %v5241 = vshrl.u32 %v5240, 7
      %v5242 = vsub.s32 5, %v5241
      %v5243 = vrot.slane %v4556, %v5242
      %v5244 = vlaneseq
      %v5245 = vshrl.u32 %v5244, 7
      %v5246 = vsub.s32 5, %v5245
      %v5247 = vrot.slane %v4558, %v5246
      %v5248 = vlaneseq
      %v5249 = vshrl.u32 %v5248, 7
      %v5250 = vsub.s32 5, %v5249
      %v5251 = vrot.slane %v4560, %v5250
      %v5252 = vlaneseq
      %v5253 = vshrl.u32 %v5252, 7
      %v5254 = vsub.s32 5, %v5253
      %v5255 = vrot.slane %v4562, %v5254
      %v5256 = vlaneseq
      %v5257 = vshrl.u32 %v5256, 7
      %v5258 = vsub.s32 5, %v5257
      %v5259 = vrot.slane %v4564, %v5258
      %v5260 = vlaneseq
      %v5261 = vshrl.u32 %v5260, 7
      %v5262 = vsub.s32 5, %v5261
      %v5263 = vrot.slane %v4566, %v5262
      %v5264 = vlaneseq
      %v5265 = vshrl.u32 %v5264, 7
      %v5266 = vsub.s32 5, %v5265
      %v5267 = vrot.slane %v4568, %v5266
      %v5268 = vlaneseq
      %v5269 = vshrl.u32 %v5268, 7
      %v5270 = vsub.s32 5, %v5269
      %v5271 = vrot.slane %v4570, %v5270
      %v5272 = vlaneseq
      %v5273 = vshrl.u32 %v5272, 7
      %v5274 = vsub.s32 5, %v5273
      %v5275 = vrot.slane %v4572, %v5274
      %v5276 = vlaneseq
      %v5277 = vshrl.u32 %v5276, 7
      %v5278 = vsub.s32 5, %v5277
      %v5279 = vrot.slane %v4574, %v5278
      %v5280 = vlaneseq
      %v5281 = vshrl.u32 %v5280, 7
      %v5282 = vsub.s32 5, %v5281
      %v5283 = vrot.slane %v4576, %v5282
      %v5284 = vlaneseq
      %v5285 = vshrl.u32 %v5284, 7
      %v5286 = vsub.s32 5, %v5285
      %v5287 = vrot.slane %v4578, %v5286
      %v5288 = vlaneseq
      %v5289 = vshrl.u32 %v5288, 7
      %v5290 = vsub.s32 5, %v5289
      %v5291 = vrot.slane %v4580, %v5290
      %v5292 = vlaneseq
      %v5293 = vshrl.u32 %v5292, 7
      %v5294 = vsub.s32 5, %v5293
      %v5295 = vrot.slane %v4582, %v5294
      %5298 = vrot.lane.b32.xlu0 %v4562, 96
      %v5299 = vpop.permute.xlu0 %5298
      %5300 = vrot.lane.b32.xlu0 %v4563, 96
      %v5301 = vpop.permute.xlu0 %5300
      %v5304 = vmul.f32 %v5235, %v5299
      %v5305 = vmul.f32 %v5235, %v5301
      %v5306 = vmul.f32 %v5239, %v5299
      %v5307 = vmul.f32 %v5239, %v5301
      %v5308 = vmul.f32 %v5243, %v5299
      %v5309 = vmul.f32 %v5243, %v5301
      %v5310 = vmul.f32 %v5247, %v5299
      %v5311 = vmul.f32 %v5247, %v5301
      %v5312 = vmul.f32 %v5251, %v5299
      %v5313 = vmul.f32 %v5251, %v5301
      %v5314 = vmul.f32 %v5255, %v5299
      %v5315 = vmul.f32 %v5255, %v5301
      %v5316 = vmul.f32 %v5259, %v5299
      %v5317 = vmul.f32 %v5259, %v5301
      %v5318 = vmul.f32 %v5263, %v5299
      %v5319 = vmul.f32 %v5263, %v5301
      %v5320 = vmul.f32 %v5267, %v5299
      %v5321 = vmul.f32 %v5267, %v5301
      %v5322 = vmul.f32 %v5271, %v5299
      %v5323 = vmul.f32 %v5271, %v5301
      %v5324 = vmul.f32 %v5275, %v5299
      %v5325 = vmul.f32 %v5275, %v5301
      %v5326 = vmul.f32 %v5279, %v5299
      %v5327 = vmul.f32 %v5279, %v5301
      %v5328 = vmul.f32 %v5283, %v5299
      %v5329 = vmul.f32 %v5283, %v5301
      %v5330 = vmul.f32 %v5287, %v5299
      %v5331 = vmul.f32 %v5287, %v5301
      %v5332 = vmul.f32 %v5291, %v5299
      %v5333 = vmul.f32 %v5291, %v5301
      %v5334 = vmul.f32 %v5295, %v5299
      %v5335 = vmul.f32 %v5295, %v5301
      %v5336 = vadd.f32 %v5200, %v5304
      %v5337 = vadd.f32 %v5201, %v5305
      %v5338 = vadd.f32 %v5202, %v5306
      %v5339 = vadd.f32 %v5203, %v5307
      %v5340 = vadd.f32 %v5204, %v5308
      %v5341 = vadd.f32 %v5205, %v5309
      %v5342 = vadd.f32 %v5206, %v5310
      %v5343 = vadd.f32 %v5207, %v5311
      %v5344 = vadd.f32 %v5208, %v5312
      %v5345 = vadd.f32 %v5209, %v5313
      %v5346 = vadd.f32 %v5210, %v5314
      %v5347 = vadd.f32 %v5211, %v5315
      %v5348 = vadd.f32 %v5212, %v5316
      %v5349 = vadd.f32 %v5213, %v5317
      %v5350 = vadd.f32 %v5214, %v5318
      %v5351 = vadd.f32 %v5215, %v5319
      %v5352 = vadd.f32 %v5216, %v5320
      %v5353 = vadd.f32 %v5217, %v5321
      %v5354 = vadd.f32 %v5218, %v5322
      %v5355 = vadd.f32 %v5219, %v5323
      %v5356 = vadd.f32 %v5220, %v5324
      %v5357 = vadd.f32 %v5221, %v5325
      %v5358 = vadd.f32 %v5222, %v5326
      %v5359 = vadd.f32 %v5223, %v5327
      %v5360 = vadd.f32 %v5224, %v5328
      %v5361 = vadd.f32 %v5225, %v5329
      %v5362 = vadd.f32 %v5226, %v5330
      %v5363 = vadd.f32 %v5227, %v5331
      %v5364 = vadd.f32 %v5228, %v5332
      %v5365 = vadd.f32 %v5229, %v5333
      %v5366 = vadd.f32 %v5230, %v5334
      %v5367 = vadd.f32 %v5231, %v5335
      %v5368 = vlaneseq
      %v5369 = vshrl.u32 %v5368, 7
      %v5370 = vsub.s32 6, %v5369
      %v5371 = vrot.slane %v4552, %v5370
      %v5372 = vlaneseq
      %v5373 = vshrl.u32 %v5372, 7
      %v5374 = vsub.s32 6, %v5373
      %v5375 = vrot.slane %v4554, %v5374
      %v5376 = vlaneseq
      %v5377 = vshrl.u32 %v5376, 7
      %v5378 = vsub.s32 6, %v5377
      %v5379 = vrot.slane %v4556, %v5378
      %v5380 = vlaneseq
      %v5381 = vshrl.u32 %v5380, 7
      %v5382 = vsub.s32 6, %v5381
      %v5383 = vrot.slane %v4558, %v5382
      %v5384 = vlaneseq
      %v5385 = vshrl.u32 %v5384, 7
      %v5386 = vsub.s32 6, %v5385
      %v5387 = vrot.slane %v4560, %v5386
      %v5388 = vlaneseq
      %v5389 = vshrl.u32 %v5388, 7
      %v5390 = vsub.s32 6, %v5389
      %v5391 = vrot.slane %v4562, %v5390
      %v5392 = vlaneseq
      %v5393 = vshrl.u32 %v5392, 7
      %v5394 = vsub.s32 6, %v5393
      %v5395 = vrot.slane %v4564, %v5394
      %v5396 = vlaneseq
      %v5397 = vshrl.u32 %v5396, 7
      %v5398 = vsub.s32 6, %v5397
      %v5399 = vrot.slane %v4566, %v5398
      %v5400 = vlaneseq
      %v5401 = vshrl.u32 %v5400, 7
      %v5402 = vsub.s32 6, %v5401
      %v5403 = vrot.slane %v4568, %v5402
      %v5404 = vlaneseq
      %v5405 = vshrl.u32 %v5404, 7
      %v5406 = vsub.s32 6, %v5405
      %v5407 = vrot.slane %v4570, %v5406
      %v5408 = vlaneseq
      %v5409 = vshrl.u32 %v5408, 7
      %v5410 = vsub.s32 6, %v5409
      %v5411 = vrot.slane %v4572, %v5410
      %v5412 = vlaneseq
      %v5413 = vshrl.u32 %v5412, 7
      %v5414 = vsub.s32 6, %v5413
      %v5415 = vrot.slane %v4574, %v5414
      %v5416 = vlaneseq
      %v5417 = vshrl.u32 %v5416, 7
      %v5418 = vsub.s32 6, %v5417
      %v5419 = vrot.slane %v4576, %v5418
      %v5420 = vlaneseq
      %v5421 = vshrl.u32 %v5420, 7
      %v5422 = vsub.s32 6, %v5421
      %v5423 = vrot.slane %v4578, %v5422
      %v5424 = vlaneseq
      %v5425 = vshrl.u32 %v5424, 7
      %v5426 = vsub.s32 6, %v5425
      %v5427 = vrot.slane %v4580, %v5426
      %v5428 = vlaneseq
      %v5429 = vshrl.u32 %v5428, 7
      %v5430 = vsub.s32 6, %v5429
      %v5431 = vrot.slane %v4582, %v5430
      %5434 = vrot.lane.b32.xlu0 %v4564, 96
      %v5435 = vpop.permute.xlu0 %5434
      %5436 = vrot.lane.b32.xlu0 %v4565, 96
      %v5437 = vpop.permute.xlu0 %5436
      %v5440 = vmul.f32 %v5371, %v5435
      %v5441 = vmul.f32 %v5371, %v5437
      %v5442 = vmul.f32 %v5375, %v5435
      %v5443 = vmul.f32 %v5375, %v5437
      %v5444 = vmul.f32 %v5379, %v5435
      %v5445 = vmul.f32 %v5379, %v5437
      %v5446 = vmul.f32 %v5383, %v5435
      %v5447 = vmul.f32 %v5383, %v5437
      %v5448 = vmul.f32 %v5387, %v5435
      %v5449 = vmul.f32 %v5387, %v5437
      %v5450 = vmul.f32 %v5391, %v5435
      %v5451 = vmul.f32 %v5391, %v5437
      %v5452 = vmul.f32 %v5395, %v5435
      %v5453 = vmul.f32 %v5395, %v5437
      %v5454 = vmul.f32 %v5399, %v5435
      %v5455 = vmul.f32 %v5399, %v5437
      %v5456 = vmul.f32 %v5403, %v5435
      %v5457 = vmul.f32 %v5403, %v5437
      %v5458 = vmul.f32 %v5407, %v5435
      %v5459 = vmul.f32 %v5407, %v5437
      %v5460 = vmul.f32 %v5411, %v5435
      %v5461 = vmul.f32 %v5411, %v5437
      %v5462 = vmul.f32 %v5415, %v5435
      %v5463 = vmul.f32 %v5415, %v5437
      %v5464 = vmul.f32 %v5419, %v5435
      %v5465 = vmul.f32 %v5419, %v5437
      %v5466 = vmul.f32 %v5423, %v5435
      %v5467 = vmul.f32 %v5423, %v5437
      %v5468 = vmul.f32 %v5427, %v5435
      %v5469 = vmul.f32 %v5427, %v5437
      %v5470 = vmul.f32 %v5431, %v5435
      %v5471 = vmul.f32 %v5431, %v5437
      %v5472 = vadd.f32 %v5336, %v5440
      %v5473 = vadd.f32 %v5337, %v5441
      %v5474 = vadd.f32 %v5338, %v5442
      %v5475 = vadd.f32 %v5339, %v5443
      %v5476 = vadd.f32 %v5340, %v5444
      %v5477 = vadd.f32 %v5341, %v5445
      %v5478 = vadd.f32 %v5342, %v5446
      %v5479 = vadd.f32 %v5343, %v5447
      %v5480 = vadd.f32 %v5344, %v5448
      %v5481 = vadd.f32 %v5345, %v5449
      %v5482 = vadd.f32 %v5346, %v5450
      %v5483 = vadd.f32 %v5347, %v5451
      %v5484 = vadd.f32 %v5348, %v5452
      %v5485 = vadd.f32 %v5349, %v5453
      %v5486 = vadd.f32 %v5350, %v5454
      %v5487 = vadd.f32 %v5351, %v5455
      %v5488 = vadd.f32 %v5352, %v5456
      %v5489 = vadd.f32 %v5353, %v5457
      %v5490 = vadd.f32 %v5354, %v5458
      %v5491 = vadd.f32 %v5355, %v5459
      %v5492 = vadd.f32 %v5356, %v5460
      %v5493 = vadd.f32 %v5357, %v5461
      %v5494 = vadd.f32 %v5358, %v5462
      %v5495 = vadd.f32 %v5359, %v5463
      %v5496 = vadd.f32 %v5360, %v5464
      %v5497 = vadd.f32 %v5361, %v5465
      %v5498 = vadd.f32 %v5362, %v5466
      %v5499 = vadd.f32 %v5363, %v5467
      %v5500 = vadd.f32 %v5364, %v5468
      %v5501 = vadd.f32 %v5365, %v5469
      %v5502 = vadd.f32 %v5366, %v5470
      %v5503 = vadd.f32 %v5367, %v5471
      %v5504 = vlaneseq
      %v5505 = vshrl.u32 %v5504, 7
      %v5506 = vsub.s32 7, %v5505
      %v5507 = vrot.slane %v4552, %v5506
      %v5508 = vlaneseq
      %v5509 = vshrl.u32 %v5508, 7
      %v5510 = vsub.s32 7, %v5509
      %v5511 = vrot.slane %v4554, %v5510
      %v5512 = vlaneseq
      %v5513 = vshrl.u32 %v5512, 7
      %v5514 = vsub.s32 7, %v5513
      %v5515 = vrot.slane %v4556, %v5514
      %v5516 = vlaneseq
      %v5517 = vshrl.u32 %v5516, 7
      %v5518 = vsub.s32 7, %v5517
      %v5519 = vrot.slane %v4558, %v5518
      %v5520 = vlaneseq
      %v5521 = vshrl.u32 %v5520, 7
      %v5522 = vsub.s32 7, %v5521
      %v5523 = vrot.slane %v4560, %v5522
      %v5524 = vlaneseq
      %v5525 = vshrl.u32 %v5524, 7
      %v5526 = vsub.s32 7, %v5525
      %v5527 = vrot.slane %v4562, %v5526
      %v5528 = vlaneseq
      %v5529 = vshrl.u32 %v5528, 7
      %v5530 = vsub.s32 7, %v5529
      %v5531 = vrot.slane %v4564, %v5530
      %v5532 = vlaneseq
      %v5533 = vshrl.u32 %v5532, 7
      %v5534 = vsub.s32 7, %v5533
      %v5535 = vrot.slane %v4566, %v5534
      %v5536 = vlaneseq
      %v5537 = vshrl.u32 %v5536, 7
      %v5538 = vsub.s32 7, %v5537
      %v5539 = vrot.slane %v4568, %v5538
      %v5540 = vlaneseq
      %v5541 = vshrl.u32 %v5540, 7
      %v5542 = vsub.s32 7, %v5541
      %v5543 = vrot.slane %v4570, %v5542
      %v5544 = vlaneseq
      %v5545 = vshrl.u32 %v5544, 7
      %v5546 = vsub.s32 7, %v5545
      %v5547 = vrot.slane %v4572, %v5546
      %v5548 = vlaneseq
      %v5549 = vshrl.u32 %v5548, 7
      %v5550 = vsub.s32 7, %v5549
      %v5551 = vrot.slane %v4574, %v5550
      %v5552 = vlaneseq
      %v5553 = vshrl.u32 %v5552, 7
      %v5554 = vsub.s32 7, %v5553
      %v5555 = vrot.slane %v4576, %v5554
      %v5556 = vlaneseq
      %v5557 = vshrl.u32 %v5556, 7
      %v5558 = vsub.s32 7, %v5557
      %v5559 = vrot.slane %v4578, %v5558
      %v5560 = vlaneseq
      %v5561 = vshrl.u32 %v5560, 7
      %v5562 = vsub.s32 7, %v5561
      %v5563 = vrot.slane %v4580, %v5562
      %v5564 = vlaneseq
      %v5565 = vshrl.u32 %v5564, 7
      %v5566 = vsub.s32 7, %v5565
      %v5567 = vrot.slane %v4582, %v5566
      %5570 = vrot.lane.b32.xlu0 %v4566, 96
      %v5571 = vpop.permute.xlu0 %5570
      %5572 = vrot.lane.b32.xlu0 %v4567, 96
      %v5573 = vpop.permute.xlu0 %5572
      %v5576 = vmul.f32 %v5507, %v5571
      %v5577 = vmul.f32 %v5507, %v5573
      %v5578 = vmul.f32 %v5511, %v5571
      %v5579 = vmul.f32 %v5511, %v5573
      %v5580 = vmul.f32 %v5515, %v5571
      %v5581 = vmul.f32 %v5515, %v5573
      %v5582 = vmul.f32 %v5519, %v5571
      %v5583 = vmul.f32 %v5519, %v5573
      %v5584 = vmul.f32 %v5523, %v5571
      %v5585 = vmul.f32 %v5523, %v5573
      %v5586 = vmul.f32 %v5527, %v5571
      %v5587 = vmul.f32 %v5527, %v5573
      %v5588 = vmul.f32 %v5531, %v5571
      %v5589 = vmul.f32 %v5531, %v5573
      %v5590 = vmul.f32 %v5535, %v5571
      %v5591 = vmul.f32 %v5535, %v5573
      %v5592 = vmul.f32 %v5539, %v5571
      %v5593 = vmul.f32 %v5539, %v5573
      %v5594 = vmul.f32 %v5543, %v5571
      %v5595 = vmul.f32 %v5543, %v5573
      %v5596 = vmul.f32 %v5547, %v5571
      %v5597 = vmul.f32 %v5547, %v5573
      %v5598 = vmul.f32 %v5551, %v5571
      %v5599 = vmul.f32 %v5551, %v5573
      %v5600 = vmul.f32 %v5555, %v5571
      %v5601 = vmul.f32 %v5555, %v5573
      %v5602 = vmul.f32 %v5559, %v5571
      %v5603 = vmul.f32 %v5559, %v5573
      %v5604 = vmul.f32 %v5563, %v5571
      %v5605 = vmul.f32 %v5563, %v5573
      %v5606 = vmul.f32 %v5567, %v5571
      %v5607 = vmul.f32 %v5567, %v5573
      %v5608 = vadd.f32 %v5472, %v5576
      %v5609 = vadd.f32 %v5473, %v5577
      %v5610 = vadd.f32 %v5474, %v5578
      %v5611 = vadd.f32 %v5475, %v5579
      %v5612 = vadd.f32 %v5476, %v5580
      %v5613 = vadd.f32 %v5477, %v5581
      %v5614 = vadd.f32 %v5478, %v5582
      %v5615 = vadd.f32 %v5479, %v5583
      %v5616 = vadd.f32 %v5480, %v5584
      %v5617 = vadd.f32 %v5481, %v5585
      %v5618 = vadd.f32 %v5482, %v5586
      %v5619 = vadd.f32 %v5483, %v5587
      %v5620 = vadd.f32 %v5484, %v5588
      %v5621 = vadd.f32 %v5485, %v5589
      %v5622 = vadd.f32 %v5486, %v5590
      %v5623 = vadd.f32 %v5487, %v5591
      %v5624 = vadd.f32 %v5488, %v5592
      %v5625 = vadd.f32 %v5489, %v5593
      %v5626 = vadd.f32 %v5490, %v5594
      %v5627 = vadd.f32 %v5491, %v5595
      %v5628 = vadd.f32 %v5492, %v5596
      %v5629 = vadd.f32 %v5493, %v5597
      %v5630 = vadd.f32 %v5494, %v5598
      %v5631 = vadd.f32 %v5495, %v5599
      %v5632 = vadd.f32 %v5496, %v5600
      %v5633 = vadd.f32 %v5497, %v5601
      %v5634 = vadd.f32 %v5498, %v5602
      %v5635 = vadd.f32 %v5499, %v5603
      %v5636 = vadd.f32 %v5500, %v5604
      %v5637 = vadd.f32 %v5501, %v5605
      %v5638 = vadd.f32 %v5502, %v5606
      %v5639 = vadd.f32 %v5503, %v5607
      %v5640 = vlaneseq
      %v5641 = vshrl.u32 %v5640, 7
      %v5642 = vsub.s32 0, %v5641
      %v5643 = vrot.slane %v4553, %v5642
      %v5644 = vlaneseq
      %v5645 = vshrl.u32 %v5644, 7
      %v5646 = vsub.s32 0, %v5645
      %v5647 = vrot.slane %v4555, %v5646
      %v5648 = vlaneseq
      %v5649 = vshrl.u32 %v5648, 7
      %v5650 = vsub.s32 0, %v5649
      %v5651 = vrot.slane %v4557, %v5650
      %v5652 = vlaneseq
      %v5653 = vshrl.u32 %v5652, 7
      %v5654 = vsub.s32 0, %v5653
      %v5655 = vrot.slane %v4559, %v5654
      %v5656 = vlaneseq
      %v5657 = vshrl.u32 %v5656, 7
      %v5658 = vsub.s32 0, %v5657
      %v5659 = vrot.slane %v4561, %v5658
      %v5660 = vlaneseq
      %v5661 = vshrl.u32 %v5660, 7
      %v5662 = vsub.s32 0, %v5661
      %v5663 = vrot.slane %v4563, %v5662
      %v5664 = vlaneseq
      %v5665 = vshrl.u32 %v5664, 7
      %v5666 = vsub.s32 0, %v5665
      %v5667 = vrot.slane %v4565, %v5666
      %v5668 = vlaneseq
      %v5669 = vshrl.u32 %v5668, 7
      %v5670 = vsub.s32 0, %v5669
      %v5671 = vrot.slane %v4567, %v5670
      %v5672 = vlaneseq
      %v5673 = vshrl.u32 %v5672, 7
      %v5674 = vsub.s32 0, %v5673
      %v5675 = vrot.slane %v4569, %v5674
      %v5676 = vlaneseq
      %v5677 = vshrl.u32 %v5676, 7
      %v5678 = vsub.s32 0, %v5677
      %v5679 = vrot.slane %v4571, %v5678
      %v5680 = vlaneseq
      %v5681 = vshrl.u32 %v5680, 7
      %v5682 = vsub.s32 0, %v5681
      %v5683 = vrot.slane %v4573, %v5682
      %v5684 = vlaneseq
      %v5685 = vshrl.u32 %v5684, 7
      %v5686 = vsub.s32 0, %v5685
      %v5687 = vrot.slane %v4575, %v5686
      %v5688 = vlaneseq
      %v5689 = vshrl.u32 %v5688, 7
      %v5690 = vsub.s32 0, %v5689
      %v5691 = vrot.slane %v4577, %v5690
      %v5692 = vlaneseq
      %v5693 = vshrl.u32 %v5692, 7
      %v5694 = vsub.s32 0, %v5693
      %v5695 = vrot.slane %v4579, %v5694
      %v5696 = vlaneseq
      %v5697 = vshrl.u32 %v5696, 7
      %v5698 = vsub.s32 0, %v5697
      %v5699 = vrot.slane %v4581, %v5698
      %v5700 = vlaneseq
      %v5701 = vshrl.u32 %v5700, 7
      %v5702 = vsub.s32 0, %v5701
      %v5703 = vrot.slane %v4583, %v5702
      %5706 = vrot.lane.b32.xlu0 %v4568, 96
      %v5707 = vpop.permute.xlu0 %5706
      %5708 = vrot.lane.b32.xlu0 %v4569, 96
      %v5709 = vpop.permute.xlu0 %5708
      %v5712 = vmul.f32 %v5643, %v5707
      %v5713 = vmul.f32 %v5643, %v5709
      %v5714 = vmul.f32 %v5647, %v5707
      %v5715 = vmul.f32 %v5647, %v5709
      %v5716 = vmul.f32 %v5651, %v5707
      %v5717 = vmul.f32 %v5651, %v5709
      %v5718 = vmul.f32 %v5655, %v5707
      %v5719 = vmul.f32 %v5655, %v5709
      %v5720 = vmul.f32 %v5659, %v5707
      %v5721 = vmul.f32 %v5659, %v5709
      %v5722 = vmul.f32 %v5663, %v5707
      %v5723 = vmul.f32 %v5663, %v5709
      %v5724 = vmul.f32 %v5667, %v5707
      %v5725 = vmul.f32 %v5667, %v5709
      %v5726 = vmul.f32 %v5671, %v5707
      %v5727 = vmul.f32 %v5671, %v5709
      %v5728 = vmul.f32 %v5675, %v5707
      %v5729 = vmul.f32 %v5675, %v5709
      %v5730 = vmul.f32 %v5679, %v5707
      %v5731 = vmul.f32 %v5679, %v5709
      %v5732 = vmul.f32 %v5683, %v5707
      %v5733 = vmul.f32 %v5683, %v5709
      %v5734 = vmul.f32 %v5687, %v5707
      %v5735 = vmul.f32 %v5687, %v5709
      %v5736 = vmul.f32 %v5691, %v5707
      %v5737 = vmul.f32 %v5691, %v5709
      %v5738 = vmul.f32 %v5695, %v5707
      %v5739 = vmul.f32 %v5695, %v5709
      %v5740 = vmul.f32 %v5699, %v5707
      %v5741 = vmul.f32 %v5699, %v5709
      %v5742 = vmul.f32 %v5703, %v5707
      %v5743 = vmul.f32 %v5703, %v5709
      %v5744 = vadd.f32 %v5608, %v5712
      %v5745 = vadd.f32 %v5609, %v5713
      %v5746 = vadd.f32 %v5610, %v5714
      %v5747 = vadd.f32 %v5611, %v5715
      %v5748 = vadd.f32 %v5612, %v5716
      %v5749 = vadd.f32 %v5613, %v5717
      %v5750 = vadd.f32 %v5614, %v5718
      %v5751 = vadd.f32 %v5615, %v5719
      %v5752 = vadd.f32 %v5616, %v5720
      %v5753 = vadd.f32 %v5617, %v5721
      %v5754 = vadd.f32 %v5618, %v5722
      %v5755 = vadd.f32 %v5619, %v5723
      %v5756 = vadd.f32 %v5620, %v5724
      %v5757 = vadd.f32 %v5621, %v5725
      %v5758 = vadd.f32 %v5622, %v5726
      %v5759 = vadd.f32 %v5623, %v5727
      %v5760 = vadd.f32 %v5624, %v5728
      %v5761 = vadd.f32 %v5625, %v5729
      %v5762 = vadd.f32 %v5626, %v5730
      %v5763 = vadd.f32 %v5627, %v5731
      %v5764 = vadd.f32 %v5628, %v5732
      %v5765 = vadd.f32 %v5629, %v5733
      %v5766 = vadd.f32 %v5630, %v5734
      %v5767 = vadd.f32 %v5631, %v5735
      %v5768 = vadd.f32 %v5632, %v5736
      %v5769 = vadd.f32 %v5633, %v5737
      %v5770 = vadd.f32 %v5634, %v5738
      %v5771 = vadd.f32 %v5635, %v5739
      %v5772 = vadd.f32 %v5636, %v5740
      %v5773 = vadd.f32 %v5637, %v5741
      %v5774 = vadd.f32 %v5638, %v5742
      %v5775 = vadd.f32 %v5639, %v5743
      %v5776 = vlaneseq
      %v5777 = vshrl.u32 %v5776, 7
      %v5778 = vsub.s32 1, %v5777
      %v5779 = vrot.slane %v4553, %v5778
      %v5780 = vlaneseq
      %v5781 = vshrl.u32 %v5780, 7
      %v5782 = vsub.s32 1, %v5781
      %v5783 = vrot.slane %v4555, %v5782
      %v5784 = vlaneseq
      %v5785 = vshrl.u32 %v5784, 7
      %v5786 = vsub.s32 1, %v5785
      %v5787 = vrot.slane %v4557, %v5786
      %v5788 = vlaneseq
      %v5789 = vshrl.u32 %v5788, 7
      %v5790 = vsub.s32 1, %v5789
      %v5791 = vrot.slane %v4559, %v5790
      %v5792 = vlaneseq
      %v5793 = vshrl.u32 %v5792, 7
      %v5794 = vsub.s32 1, %v5793
      %v5795 = vrot.slane %v4561, %v5794
      %v5796 = vlaneseq
      %v5797 = vshrl.u32 %v5796, 7
      %v5798 = vsub.s32 1, %v5797
      %v5799 = vrot.slane %v4563, %v5798
      %v5800 = vlaneseq
      %v5801 = vshrl.u32 %v5800, 7
      %v5802 = vsub.s32 1, %v5801
      %v5803 = vrot.slane %v4565, %v5802
      %v5804 = vlaneseq
      %v5805 = vshrl.u32 %v5804, 7
      %v5806 = vsub.s32 1, %v5805
      %v5807 = vrot.slane %v4567, %v5806
      %v5808 = vlaneseq
      %v5809 = vshrl.u32 %v5808, 7
      %v5810 = vsub.s32 1, %v5809
      %v5811 = vrot.slane %v4569, %v5810
      %v5812 = vlaneseq
      %v5813 = vshrl.u32 %v5812, 7
      %v5814 = vsub.s32 1, %v5813
      %v5815 = vrot.slane %v4571, %v5814
      %v5816 = vlaneseq
      %v5817 = vshrl.u32 %v5816, 7
      %v5818 = vsub.s32 1, %v5817
      %v5819 = vrot.slane %v4573, %v5818
      %v5820 = vlaneseq
      %v5821 = vshrl.u32 %v5820, 7
      %v5822 = vsub.s32 1, %v5821
      %v5823 = vrot.slane %v4575, %v5822
      %v5824 = vlaneseq
      %v5825 = vshrl.u32 %v5824, 7
      %v5826 = vsub.s32 1, %v5825
      %v5827 = vrot.slane %v4577, %v5826
      %v5828 = vlaneseq
      %v5829 = vshrl.u32 %v5828, 7
      %v5830 = vsub.s32 1, %v5829
      %v5831 = vrot.slane %v4579, %v5830
      %v5832 = vlaneseq
      %v5833 = vshrl.u32 %v5832, 7
      %v5834 = vsub.s32 1, %v5833
      %v5835 = vrot.slane %v4581, %v5834
      %v5836 = vlaneseq
      %v5837 = vshrl.u32 %v5836, 7
      %v5838 = vsub.s32 1, %v5837
      %v5839 = vrot.slane %v4583, %v5838
      %5842 = vrot.lane.b32.xlu0 %v4570, 96
      %v5843 = vpop.permute.xlu0 %5842
      %5844 = vrot.lane.b32.xlu0 %v4571, 96
      %v5845 = vpop.permute.xlu0 %5844
      %v5848 = vmul.f32 %v5779, %v5843
      %v5849 = vmul.f32 %v5779, %v5845
      %v5850 = vmul.f32 %v5783, %v5843
      %v5851 = vmul.f32 %v5783, %v5845
      %v5852 = vmul.f32 %v5787, %v5843
      %v5853 = vmul.f32 %v5787, %v5845
      %v5854 = vmul.f32 %v5791, %v5843
      %v5855 = vmul.f32 %v5791, %v5845
      %v5856 = vmul.f32 %v5795, %v5843
      %v5857 = vmul.f32 %v5795, %v5845
      %v5858 = vmul.f32 %v5799, %v5843
      %v5859 = vmul.f32 %v5799, %v5845
      %v5860 = vmul.f32 %v5803, %v5843
      %v5861 = vmul.f32 %v5803, %v5845
      %v5862 = vmul.f32 %v5807, %v5843
      %v5863 = vmul.f32 %v5807, %v5845
      %v5864 = vmul.f32 %v5811, %v5843
      %v5865 = vmul.f32 %v5811, %v5845
      %v5866 = vmul.f32 %v5815, %v5843
      %v5867 = vmul.f32 %v5815, %v5845
      %v5868 = vmul.f32 %v5819, %v5843
      %v5869 = vmul.f32 %v5819, %v5845
      %v5870 = vmul.f32 %v5823, %v5843
      %v5871 = vmul.f32 %v5823, %v5845
      %v5872 = vmul.f32 %v5827, %v5843
      %v5873 = vmul.f32 %v5827, %v5845
      %v5874 = vmul.f32 %v5831, %v5843
      %v5875 = vmul.f32 %v5831, %v5845
      %v5876 = vmul.f32 %v5835, %v5843
      %v5877 = vmul.f32 %v5835, %v5845
      %v5878 = vmul.f32 %v5839, %v5843
      %v5879 = vmul.f32 %v5839, %v5845
      %v5880 = vadd.f32 %v5744, %v5848
      %v5881 = vadd.f32 %v5745, %v5849
      %v5882 = vadd.f32 %v5746, %v5850
      %v5883 = vadd.f32 %v5747, %v5851
      %v5884 = vadd.f32 %v5748, %v5852
      %v5885 = vadd.f32 %v5749, %v5853
      %v5886 = vadd.f32 %v5750, %v5854
      %v5887 = vadd.f32 %v5751, %v5855
      %v5888 = vadd.f32 %v5752, %v5856
      %v5889 = vadd.f32 %v5753, %v5857
      %v5890 = vadd.f32 %v5754, %v5858
      %v5891 = vadd.f32 %v5755, %v5859
      %v5892 = vadd.f32 %v5756, %v5860
      %v5893 = vadd.f32 %v5757, %v5861
      %v5894 = vadd.f32 %v5758, %v5862
      %v5895 = vadd.f32 %v5759, %v5863
      %v5896 = vadd.f32 %v5760, %v5864
      %v5897 = vadd.f32 %v5761, %v5865
      %v5898 = vadd.f32 %v5762, %v5866
      %v5899 = vadd.f32 %v5763, %v5867
      %v5900 = vadd.f32 %v5764, %v5868
      %v5901 = vadd.f32 %v5765, %v5869
      %v5902 = vadd.f32 %v5766, %v5870
      %v5903 = vadd.f32 %v5767, %v5871
      %v5904 = vadd.f32 %v5768, %v5872
      %v5905 = vadd.f32 %v5769, %v5873
      %v5906 = vadd.f32 %v5770, %v5874
      %v5907 = vadd.f32 %v5771, %v5875
      %v5908 = vadd.f32 %v5772, %v5876
      %v5909 = vadd.f32 %v5773, %v5877
      %v5910 = vadd.f32 %v5774, %v5878
      %v5911 = vadd.f32 %v5775, %v5879
      %v5912 = vlaneseq
      %v5913 = vshrl.u32 %v5912, 7
      %v5914 = vsub.s32 2, %v5913
      %v5915 = vrot.slane %v4553, %v5914
      %v5916 = vlaneseq
      %v5917 = vshrl.u32 %v5916, 7
      %v5918 = vsub.s32 2, %v5917
      %v5919 = vrot.slane %v4555, %v5918
      %v5920 = vlaneseq
      %v5921 = vshrl.u32 %v5920, 7
      %v5922 = vsub.s32 2, %v5921
      %v5923 = vrot.slane %v4557, %v5922
      %v5924 = vlaneseq
      %v5925 = vshrl.u32 %v5924, 7
      %v5926 = vsub.s32 2, %v5925
      %v5927 = vrot.slane %v4559, %v5926
      %v5928 = vlaneseq
      %v5929 = vshrl.u32 %v5928, 7
      %v5930 = vsub.s32 2, %v5929
      %v5931 = vrot.slane %v4561, %v5930
      %v5932 = vlaneseq
      %v5933 = vshrl.u32 %v5932, 7
      %v5934 = vsub.s32 2, %v5933
      %v5935 = vrot.slane %v4563, %v5934
      %v5936 = vlaneseq
      %v5937 = vshrl.u32 %v5936, 7
      %v5938 = vsub.s32 2, %v5937
      %v5939 = vrot.slane %v4565, %v5938
      %v5940 = vlaneseq
      %v5941 = vshrl.u32 %v5940, 7
      %v5942 = vsub.s32 2, %v5941
      %v5943 = vrot.slane %v4567, %v5942
      %v5944 = vlaneseq
      %v5945 = vshrl.u32 %v5944, 7
      %v5946 = vsub.s32 2, %v5945
      %v5947 = vrot.slane %v4569, %v5946
      %v5948 = vlaneseq
      %v5949 = vshrl.u32 %v5948, 7
      %v5950 = vsub.s32 2, %v5949
      %v5951 = vrot.slane %v4571, %v5950
      %v5952 = vlaneseq
      %v5953 = vshrl.u32 %v5952, 7
      %v5954 = vsub.s32 2, %v5953
      %v5955 = vrot.slane %v4573, %v5954
      %v5956 = vlaneseq
      %v5957 = vshrl.u32 %v5956, 7
      %v5958 = vsub.s32 2, %v5957
      %v5959 = vrot.slane %v4575, %v5958
      %v5960 = vlaneseq
      %v5961 = vshrl.u32 %v5960, 7
      %v5962 = vsub.s32 2, %v5961
      %v5963 = vrot.slane %v4577, %v5962
      %v5964 = vlaneseq
      %v5965 = vshrl.u32 %v5964, 7
      %v5966 = vsub.s32 2, %v5965
      %v5967 = vrot.slane %v4579, %v5966
      %v5968 = vlaneseq
      %v5969 = vshrl.u32 %v5968, 7
      %v5970 = vsub.s32 2, %v5969
      %v5971 = vrot.slane %v4581, %v5970
      %v5972 = vlaneseq
      %v5973 = vshrl.u32 %v5972, 7
      %v5974 = vsub.s32 2, %v5973
      %v5975 = vrot.slane %v4583, %v5974
      %5978 = vrot.lane.b32.xlu0 %v4572, 96
      %v5979 = vpop.permute.xlu0 %5978
      %5980 = vrot.lane.b32.xlu0 %v4573, 96
      %v5981 = vpop.permute.xlu0 %5980
      %v5984 = vmul.f32 %v5915, %v5979
      %v5985 = vmul.f32 %v5915, %v5981
      %v5986 = vmul.f32 %v5919, %v5979
      %v5987 = vmul.f32 %v5919, %v5981
      %v5988 = vmul.f32 %v5923, %v5979
      %v5989 = vmul.f32 %v5923, %v5981
      %v5990 = vmul.f32 %v5927, %v5979
      %v5991 = vmul.f32 %v5927, %v5981
      %v5992 = vmul.f32 %v5931, %v5979
      %v5993 = vmul.f32 %v5931, %v5981
      %v5994 = vmul.f32 %v5935, %v5979
      %v5995 = vmul.f32 %v5935, %v5981
      %v5996 = vmul.f32 %v5939, %v5979
      %v5997 = vmul.f32 %v5939, %v5981
      %v5998 = vmul.f32 %v5943, %v5979
      %v5999 = vmul.f32 %v5943, %v5981
      %v6000 = vmul.f32 %v5947, %v5979
      %v6001 = vmul.f32 %v5947, %v5981
      %v6002 = vmul.f32 %v5951, %v5979
      %v6003 = vmul.f32 %v5951, %v5981
      %v6004 = vmul.f32 %v5955, %v5979
      %v6005 = vmul.f32 %v5955, %v5981
      %v6006 = vmul.f32 %v5959, %v5979
      %v6007 = vmul.f32 %v5959, %v5981
      %v6008 = vmul.f32 %v5963, %v5979
      %v6009 = vmul.f32 %v5963, %v5981
      %v6010 = vmul.f32 %v5967, %v5979
      %v6011 = vmul.f32 %v5967, %v5981
      %v6012 = vmul.f32 %v5971, %v5979
      %v6013 = vmul.f32 %v5971, %v5981
      %v6014 = vmul.f32 %v5975, %v5979
      %v6015 = vmul.f32 %v5975, %v5981
      %v6016 = vadd.f32 %v5880, %v5984
      %v6017 = vadd.f32 %v5881, %v5985
      %v6018 = vadd.f32 %v5882, %v5986
      %v6019 = vadd.f32 %v5883, %v5987
      %v6020 = vadd.f32 %v5884, %v5988
      %v6021 = vadd.f32 %v5885, %v5989
      %v6022 = vadd.f32 %v5886, %v5990
      %v6023 = vadd.f32 %v5887, %v5991
      %v6024 = vadd.f32 %v5888, %v5992
      %v6025 = vadd.f32 %v5889, %v5993
      %v6026 = vadd.f32 %v5890, %v5994
      %v6027 = vadd.f32 %v5891, %v5995
      %v6028 = vadd.f32 %v5892, %v5996
      %v6029 = vadd.f32 %v5893, %v5997
      %v6030 = vadd.f32 %v5894, %v5998
      %v6031 = vadd.f32 %v5895, %v5999
      %v6032 = vadd.f32 %v5896, %v6000
      %v6033 = vadd.f32 %v5897, %v6001
      %v6034 = vadd.f32 %v5898, %v6002
      %v6035 = vadd.f32 %v5899, %v6003
      %v6036 = vadd.f32 %v5900, %v6004
      %v6037 = vadd.f32 %v5901, %v6005
      %v6038 = vadd.f32 %v5902, %v6006
      %v6039 = vadd.f32 %v5903, %v6007
      %v6040 = vadd.f32 %v5904, %v6008
      %v6041 = vadd.f32 %v5905, %v6009
      %v6042 = vadd.f32 %v5906, %v6010
      %v6043 = vadd.f32 %v5907, %v6011
      %v6044 = vadd.f32 %v5908, %v6012
      %v6045 = vadd.f32 %v5909, %v6013
      %v6046 = vadd.f32 %v5910, %v6014
      %v6047 = vadd.f32 %v5911, %v6015
      %v6048 = vlaneseq
      %v6049 = vshrl.u32 %v6048, 7
      %v6050 = vsub.s32 3, %v6049
      %v6051 = vrot.slane %v4553, %v6050
      %v6052 = vlaneseq
      %v6053 = vshrl.u32 %v6052, 7
      %v6054 = vsub.s32 3, %v6053
      %v6055 = vrot.slane %v4555, %v6054
      %v6056 = vlaneseq
      %v6057 = vshrl.u32 %v6056, 7
      %v6058 = vsub.s32 3, %v6057
      %v6059 = vrot.slane %v4557, %v6058
      %v6060 = vlaneseq
      %v6061 = vshrl.u32 %v6060, 7
      %v6062 = vsub.s32 3, %v6061
      %v6063 = vrot.slane %v4559, %v6062
      %v6064 = vlaneseq
      %v6065 = vshrl.u32 %v6064, 7
      %v6066 = vsub.s32 3, %v6065
      %v6067 = vrot.slane %v4561, %v6066
      %v6068 = vlaneseq
      %v6069 = vshrl.u32 %v6068, 7
      %v6070 = vsub.s32 3, %v6069
      %v6071 = vrot.slane %v4563, %v6070
      %v6072 = vlaneseq
      %v6073 = vshrl.u32 %v6072, 7
      %v6074 = vsub.s32 3, %v6073
      %v6075 = vrot.slane %v4565, %v6074
      %v6076 = vlaneseq
      %v6077 = vshrl.u32 %v6076, 7
      %v6078 = vsub.s32 3, %v6077
      %v6079 = vrot.slane %v4567, %v6078
      %v6080 = vlaneseq
      %v6081 = vshrl.u32 %v6080, 7
      %v6082 = vsub.s32 3, %v6081
      %v6083 = vrot.slane %v4569, %v6082
      %v6084 = vlaneseq
      %v6085 = vshrl.u32 %v6084, 7
      %v6086 = vsub.s32 3, %v6085
      %v6087 = vrot.slane %v4571, %v6086
      %v6088 = vlaneseq
      %v6089 = vshrl.u32 %v6088, 7
      %v6090 = vsub.s32 3, %v6089
      %v6091 = vrot.slane %v4573, %v6090
      %v6092 = vlaneseq
      %v6093 = vshrl.u32 %v6092, 7
      %v6094 = vsub.s32 3, %v6093
      %v6095 = vrot.slane %v4575, %v6094
      %v6096 = vlaneseq
      %v6097 = vshrl.u32 %v6096, 7
      %v6098 = vsub.s32 3, %v6097
      %v6099 = vrot.slane %v4577, %v6098
      %v6100 = vlaneseq
      %v6101 = vshrl.u32 %v6100, 7
      %v6102 = vsub.s32 3, %v6101
      %v6103 = vrot.slane %v4579, %v6102
      %v6104 = vlaneseq
      %v6105 = vshrl.u32 %v6104, 7
      %v6106 = vsub.s32 3, %v6105
      %v6107 = vrot.slane %v4581, %v6106
      %v6108 = vlaneseq
      %v6109 = vshrl.u32 %v6108, 7
      %v6110 = vsub.s32 3, %v6109
      %v6111 = vrot.slane %v4583, %v6110
      %6114 = vrot.lane.b32.xlu0 %v4574, 96
      %v6115 = vpop.permute.xlu0 %6114
      %6116 = vrot.lane.b32.xlu0 %v4575, 96
      %v6117 = vpop.permute.xlu0 %6116
      %v6120 = vmul.f32 %v6051, %v6115
      %v6121 = vmul.f32 %v6051, %v6117
      %v6122 = vmul.f32 %v6055, %v6115
      %v6123 = vmul.f32 %v6055, %v6117
      %v6124 = vmul.f32 %v6059, %v6115
      %v6125 = vmul.f32 %v6059, %v6117
      %v6126 = vmul.f32 %v6063, %v6115
      %v6127 = vmul.f32 %v6063, %v6117
      %v6128 = vmul.f32 %v6067, %v6115
      %v6129 = vmul.f32 %v6067, %v6117
      %v6130 = vmul.f32 %v6071, %v6115
      %v6131 = vmul.f32 %v6071, %v6117
      %v6132 = vmul.f32 %v6075, %v6115
      %v6133 = vmul.f32 %v6075, %v6117
      %v6134 = vmul.f32 %v6079, %v6115
      %v6135 = vmul.f32 %v6079, %v6117
      %v6136 = vmul.f32 %v6083, %v6115
      %v6137 = vmul.f32 %v6083, %v6117
      %v6138 = vmul.f32 %v6087, %v6115
      %v6139 = vmul.f32 %v6087, %v6117
      %v6140 = vmul.f32 %v6091, %v6115
      %v6141 = vmul.f32 %v6091, %v6117
      %v6142 = vmul.f32 %v6095, %v6115
      %v6143 = vmul.f32 %v6095, %v6117
      %v6144 = vmul.f32 %v6099, %v6115
      %v6145 = vmul.f32 %v6099, %v6117
      %v6146 = vmul.f32 %v6103, %v6115
      %v6147 = vmul.f32 %v6103, %v6117
      %v6148 = vmul.f32 %v6107, %v6115
      %v6149 = vmul.f32 %v6107, %v6117
      %v6150 = vmul.f32 %v6111, %v6115
      %v6151 = vmul.f32 %v6111, %v6117
      %v6152 = vadd.f32 %v6016, %v6120
      %v6153 = vadd.f32 %v6017, %v6121
      %v6154 = vadd.f32 %v6018, %v6122
      %v6155 = vadd.f32 %v6019, %v6123
      %v6156 = vadd.f32 %v6020, %v6124
      %v6157 = vadd.f32 %v6021, %v6125
      %v6158 = vadd.f32 %v6022, %v6126
      %v6159 = vadd.f32 %v6023, %v6127
      %v6160 = vadd.f32 %v6024, %v6128
      %v6161 = vadd.f32 %v6025, %v6129
      %v6162 = vadd.f32 %v6026, %v6130
      %v6163 = vadd.f32 %v6027, %v6131
      %v6164 = vadd.f32 %v6028, %v6132
      %v6165 = vadd.f32 %v6029, %v6133
      %v6166 = vadd.f32 %v6030, %v6134
      %v6167 = vadd.f32 %v6031, %v6135
      %v6168 = vadd.f32 %v6032, %v6136
      %v6169 = vadd.f32 %v6033, %v6137
      %v6170 = vadd.f32 %v6034, %v6138
      %v6171 = vadd.f32 %v6035, %v6139
      %v6172 = vadd.f32 %v6036, %v6140
      %v6173 = vadd.f32 %v6037, %v6141
      %v6174 = vadd.f32 %v6038, %v6142
      %v6175 = vadd.f32 %v6039, %v6143
      %v6176 = vadd.f32 %v6040, %v6144
      %v6177 = vadd.f32 %v6041, %v6145
      %v6178 = vadd.f32 %v6042, %v6146
      %v6179 = vadd.f32 %v6043, %v6147
      %v6180 = vadd.f32 %v6044, %v6148
      %v6181 = vadd.f32 %v6045, %v6149
      %v6182 = vadd.f32 %v6046, %v6150
      %v6183 = vadd.f32 %v6047, %v6151
      %v6184 = vlaneseq
      %v6185 = vshrl.u32 %v6184, 7
      %v6186 = vsub.s32 4, %v6185
      %v6187 = vrot.slane %v4553, %v6186
      %v6188 = vlaneseq
      %v6189 = vshrl.u32 %v6188, 7
      %v6190 = vsub.s32 4, %v6189
      %v6191 = vrot.slane %v4555, %v6190
      %v6192 = vlaneseq
      %v6193 = vshrl.u32 %v6192, 7
      %v6194 = vsub.s32 4, %v6193
      %v6195 = vrot.slane %v4557, %v6194
      %v6196 = vlaneseq
      %v6197 = vshrl.u32 %v6196, 7
      %v6198 = vsub.s32 4, %v6197
      %v6199 = vrot.slane %v4559, %v6198
      %v6200 = vlaneseq
      %v6201 = vshrl.u32 %v6200, 7
      %v6202 = vsub.s32 4, %v6201
      %v6203 = vrot.slane %v4561, %v6202
      %v6204 = vlaneseq
      %v6205 = vshrl.u32 %v6204, 7
      %v6206 = vsub.s32 4, %v6205
      %v6207 = vrot.slane %v4563, %v6206
      %v6208 = vlaneseq
      %v6209 = vshrl.u32 %v6208, 7
      %v6210 = vsub.s32 4, %v6209
      %v6211 = vrot.slane %v4565, %v6210
      %v6212 = vlaneseq
      %v6213 = vshrl.u32 %v6212, 7
      %v6214 = vsub.s32 4, %v6213
      %v6215 = vrot.slane %v4567, %v6214
      %v6216 = vlaneseq
      %v6217 = vshrl.u32 %v6216, 7
      %v6218 = vsub.s32 4, %v6217
      %v6219 = vrot.slane %v4569, %v6218
      %v6220 = vlaneseq
      %v6221 = vshrl.u32 %v6220, 7
      %v6222 = vsub.s32 4, %v6221
      %v6223 = vrot.slane %v4571, %v6222
      %v6224 = vlaneseq
      %v6225 = vshrl.u32 %v6224, 7
      %v6226 = vsub.s32 4, %v6225
      %v6227 = vrot.slane %v4573, %v6226
      %v6228 = vlaneseq
      %v6229 = vshrl.u32 %v6228, 7
      %v6230 = vsub.s32 4, %v6229
      %v6231 = vrot.slane %v4575, %v6230
      %v6232 = vlaneseq
      %v6233 = vshrl.u32 %v6232, 7
      %v6234 = vsub.s32 4, %v6233
      %v6235 = vrot.slane %v4577, %v6234
      %v6236 = vlaneseq
      %v6237 = vshrl.u32 %v6236, 7
      %v6238 = vsub.s32 4, %v6237
      %v6239 = vrot.slane %v4579, %v6238
      %v6240 = vlaneseq
      %v6241 = vshrl.u32 %v6240, 7
      %v6242 = vsub.s32 4, %v6241
      %v6243 = vrot.slane %v4581, %v6242
      %v6244 = vlaneseq
      %v6245 = vshrl.u32 %v6244, 7
      %v6246 = vsub.s32 4, %v6245
      %v6247 = vrot.slane %v4583, %v6246
      %6250 = vrot.lane.b32.xlu0 %v4576, 96
      %v6251 = vpop.permute.xlu0 %6250
      %6252 = vrot.lane.b32.xlu0 %v4577, 96
      %v6253 = vpop.permute.xlu0 %6252
      %v6256 = vmul.f32 %v6187, %v6251
      %v6257 = vmul.f32 %v6187, %v6253
      %v6258 = vmul.f32 %v6191, %v6251
      %v6259 = vmul.f32 %v6191, %v6253
      %v6260 = vmul.f32 %v6195, %v6251
      %v6261 = vmul.f32 %v6195, %v6253
      %v6262 = vmul.f32 %v6199, %v6251
      %v6263 = vmul.f32 %v6199, %v6253
      %v6264 = vmul.f32 %v6203, %v6251
      %v6265 = vmul.f32 %v6203, %v6253
      %v6266 = vmul.f32 %v6207, %v6251
      %v6267 = vmul.f32 %v6207, %v6253
      %v6268 = vmul.f32 %v6211, %v6251
      %v6269 = vmul.f32 %v6211, %v6253
      %v6270 = vmul.f32 %v6215, %v6251
      %v6271 = vmul.f32 %v6215, %v6253
      %v6272 = vmul.f32 %v6219, %v6251
      %v6273 = vmul.f32 %v6219, %v6253
      %v6274 = vmul.f32 %v6223, %v6251
      %v6275 = vmul.f32 %v6223, %v6253
      %v6276 = vmul.f32 %v6227, %v6251
      %v6277 = vmul.f32 %v6227, %v6253
      %v6278 = vmul.f32 %v6231, %v6251
      %v6279 = vmul.f32 %v6231, %v6253
      %v6280 = vmul.f32 %v6235, %v6251
      %v6281 = vmul.f32 %v6235, %v6253
      %v6282 = vmul.f32 %v6239, %v6251
      %v6283 = vmul.f32 %v6239, %v6253
      %v6284 = vmul.f32 %v6243, %v6251
      %v6285 = vmul.f32 %v6243, %v6253
      %v6286 = vmul.f32 %v6247, %v6251
      %v6287 = vmul.f32 %v6247, %v6253
      %v6288 = vadd.f32 %v6152, %v6256
      %v6289 = vadd.f32 %v6153, %v6257
      %v6290 = vadd.f32 %v6154, %v6258
      %v6291 = vadd.f32 %v6155, %v6259
      %v6292 = vadd.f32 %v6156, %v6260
      %v6293 = vadd.f32 %v6157, %v6261
      %v6294 = vadd.f32 %v6158, %v6262
      %v6295 = vadd.f32 %v6159, %v6263
      %v6296 = vadd.f32 %v6160, %v6264
      %v6297 = vadd.f32 %v6161, %v6265
      %v6298 = vadd.f32 %v6162, %v6266
      %v6299 = vadd.f32 %v6163, %v6267
      %v6300 = vadd.f32 %v6164, %v6268
      %v6301 = vadd.f32 %v6165, %v6269
      %v6302 = vadd.f32 %v6166, %v6270
      %v6303 = vadd.f32 %v6167, %v6271
      %v6304 = vadd.f32 %v6168, %v6272
      %v6305 = vadd.f32 %v6169, %v6273
      %v6306 = vadd.f32 %v6170, %v6274
      %v6307 = vadd.f32 %v6171, %v6275
      %v6308 = vadd.f32 %v6172, %v6276
      %v6309 = vadd.f32 %v6173, %v6277
      %v6310 = vadd.f32 %v6174, %v6278
      %v6311 = vadd.f32 %v6175, %v6279
      %v6312 = vadd.f32 %v6176, %v6280
      %v6313 = vadd.f32 %v6177, %v6281
      %v6314 = vadd.f32 %v6178, %v6282
      %v6315 = vadd.f32 %v6179, %v6283
      %v6316 = vadd.f32 %v6180, %v6284
      %v6317 = vadd.f32 %v6181, %v6285
      %v6318 = vadd.f32 %v6182, %v6286
      %v6319 = vadd.f32 %v6183, %v6287
      %v6320 = vlaneseq
      %v6321 = vshrl.u32 %v6320, 7
      %v6322 = vsub.s32 5, %v6321
      %v6323 = vrot.slane %v4553, %v6322
      %v6324 = vlaneseq
      %v6325 = vshrl.u32 %v6324, 7
      %v6326 = vsub.s32 5, %v6325
      %v6327 = vrot.slane %v4555, %v6326
      %v6328 = vlaneseq
      %v6329 = vshrl.u32 %v6328, 7
      %v6330 = vsub.s32 5, %v6329
      %v6331 = vrot.slane %v4557, %v6330
      %v6332 = vlaneseq
      %v6333 = vshrl.u32 %v6332, 7
      %v6334 = vsub.s32 5, %v6333
      %v6335 = vrot.slane %v4559, %v6334
      %v6336 = vlaneseq
      %v6337 = vshrl.u32 %v6336, 7
      %v6338 = vsub.s32 5, %v6337
      %v6339 = vrot.slane %v4561, %v6338
      %v6340 = vlaneseq
      %v6341 = vshrl.u32 %v6340, 7
      %v6342 = vsub.s32 5, %v6341
      %v6343 = vrot.slane %v4563, %v6342
      %v6344 = vlaneseq
      %v6345 = vshrl.u32 %v6344, 7
      %v6346 = vsub.s32 5, %v6345
      %v6347 = vrot.slane %v4565, %v6346
      %v6348 = vlaneseq
      %v6349 = vshrl.u32 %v6348, 7
      %v6350 = vsub.s32 5, %v6349
      %v6351 = vrot.slane %v4567, %v6350
      %v6352 = vlaneseq
      %v6353 = vshrl.u32 %v6352, 7
      %v6354 = vsub.s32 5, %v6353
      %v6355 = vrot.slane %v4569, %v6354
      %v6356 = vlaneseq
      %v6357 = vshrl.u32 %v6356, 7
      %v6358 = vsub.s32 5, %v6357
      %v6359 = vrot.slane %v4571, %v6358
      %v6360 = vlaneseq
      %v6361 = vshrl.u32 %v6360, 7
      %v6362 = vsub.s32 5, %v6361
      %v6363 = vrot.slane %v4573, %v6362
      %v6364 = vlaneseq
      %v6365 = vshrl.u32 %v6364, 7
      %v6366 = vsub.s32 5, %v6365
      %v6367 = vrot.slane %v4575, %v6366
      %v6368 = vlaneseq
      %v6369 = vshrl.u32 %v6368, 7
      %v6370 = vsub.s32 5, %v6369
      %v6371 = vrot.slane %v4577, %v6370
      %v6372 = vlaneseq
      %v6373 = vshrl.u32 %v6372, 7
      %v6374 = vsub.s32 5, %v6373
      %v6375 = vrot.slane %v4579, %v6374
      %v6376 = vlaneseq
      %v6377 = vshrl.u32 %v6376, 7
      %v6378 = vsub.s32 5, %v6377
      %v6379 = vrot.slane %v4581, %v6378
      %v6380 = vlaneseq
      %v6381 = vshrl.u32 %v6380, 7
      %v6382 = vsub.s32 5, %v6381
      %v6383 = vrot.slane %v4583, %v6382
      %6386 = vrot.lane.b32.xlu0 %v4578, 96
      %v6387 = vpop.permute.xlu0 %6386
      %6388 = vrot.lane.b32.xlu0 %v4579, 96
      %v6389 = vpop.permute.xlu0 %6388
      %v6392 = vmul.f32 %v6323, %v6387
      %v6393 = vmul.f32 %v6323, %v6389
      %v6394 = vmul.f32 %v6327, %v6387
      %v6395 = vmul.f32 %v6327, %v6389
      %v6396 = vmul.f32 %v6331, %v6387
      %v6397 = vmul.f32 %v6331, %v6389
      %v6398 = vmul.f32 %v6335, %v6387
      %v6399 = vmul.f32 %v6335, %v6389
      %v6400 = vmul.f32 %v6339, %v6387
      %v6401 = vmul.f32 %v6339, %v6389
      %v6402 = vmul.f32 %v6343, %v6387
      %v6403 = vmul.f32 %v6343, %v6389
      %v6404 = vmul.f32 %v6347, %v6387
      %v6405 = vmul.f32 %v6347, %v6389
      %v6406 = vmul.f32 %v6351, %v6387
      %v6407 = vmul.f32 %v6351, %v6389
      %v6408 = vmul.f32 %v6355, %v6387
      %v6409 = vmul.f32 %v6355, %v6389
      %v6410 = vmul.f32 %v6359, %v6387
      %v6411 = vmul.f32 %v6359, %v6389
      %v6412 = vmul.f32 %v6363, %v6387
      %v6413 = vmul.f32 %v6363, %v6389
      %v6414 = vmul.f32 %v6367, %v6387
      %v6415 = vmul.f32 %v6367, %v6389
      %v6416 = vmul.f32 %v6371, %v6387
      %v6417 = vmul.f32 %v6371, %v6389
      %v6418 = vmul.f32 %v6375, %v6387
      %v6419 = vmul.f32 %v6375, %v6389
      %v6420 = vmul.f32 %v6379, %v6387
      %v6421 = vmul.f32 %v6379, %v6389
      %v6422 = vmul.f32 %v6383, %v6387
      %v6423 = vmul.f32 %v6383, %v6389
      %v6424 = vadd.f32 %v6288, %v6392
      %v6425 = vadd.f32 %v6289, %v6393
      %v6426 = vadd.f32 %v6290, %v6394
      %v6427 = vadd.f32 %v6291, %v6395
      %v6428 = vadd.f32 %v6292, %v6396
      %v6429 = vadd.f32 %v6293, %v6397
      %v6430 = vadd.f32 %v6294, %v6398
      %v6431 = vadd.f32 %v6295, %v6399
      %v6432 = vadd.f32 %v6296, %v6400
      %v6433 = vadd.f32 %v6297, %v6401
      %v6434 = vadd.f32 %v6298, %v6402
      %v6435 = vadd.f32 %v6299, %v6403
      %v6436 = vadd.f32 %v6300, %v6404
      %v6437 = vadd.f32 %v6301, %v6405
      %v6438 = vadd.f32 %v6302, %v6406
      %v6439 = vadd.f32 %v6303, %v6407
      %v6440 = vadd.f32 %v6304, %v6408
      %v6441 = vadd.f32 %v6305, %v6409
      %v6442 = vadd.f32 %v6306, %v6410
      %v6443 = vadd.f32 %v6307, %v6411
      %v6444 = vadd.f32 %v6308, %v6412
      %v6445 = vadd.f32 %v6309, %v6413
      %v6446 = vadd.f32 %v6310, %v6414
      %v6447 = vadd.f32 %v6311, %v6415
      %v6448 = vadd.f32 %v6312, %v6416
      %v6449 = vadd.f32 %v6313, %v6417
      %v6450 = vadd.f32 %v6314, %v6418
      %v6451 = vadd.f32 %v6315, %v6419
      %v6452 = vadd.f32 %v6316, %v6420
      %v6453 = vadd.f32 %v6317, %v6421
      %v6454 = vadd.f32 %v6318, %v6422
      %v6455 = vadd.f32 %v6319, %v6423
      %v6456 = vlaneseq
      %v6457 = vshrl.u32 %v6456, 7
      %v6458 = vsub.s32 6, %v6457
      %v6459 = vrot.slane %v4553, %v6458
      %v6460 = vlaneseq
      %v6461 = vshrl.u32 %v6460, 7
      %v6462 = vsub.s32 6, %v6461
      %v6463 = vrot.slane %v4555, %v6462
      %v6464 = vlaneseq
      %v6465 = vshrl.u32 %v6464, 7
      %v6466 = vsub.s32 6, %v6465
      %v6467 = vrot.slane %v4557, %v6466
      %v6468 = vlaneseq
      %v6469 = vshrl.u32 %v6468, 7
      %v6470 = vsub.s32 6, %v6469
      %v6471 = vrot.slane %v4559, %v6470
      %v6472 = vlaneseq
      %v6473 = vshrl.u32 %v6472, 7
      %v6474 = vsub.s32 6, %v6473
      %v6475 = vrot.slane %v4561, %v6474
      %v6476 = vlaneseq
      %v6477 = vshrl.u32 %v6476, 7
      %v6478 = vsub.s32 6, %v6477
      %v6479 = vrot.slane %v4563, %v6478
      %v6480 = vlaneseq
      %v6481 = vshrl.u32 %v6480, 7
      %v6482 = vsub.s32 6, %v6481
      %v6483 = vrot.slane %v4565, %v6482
      %v6484 = vlaneseq
      %v6485 = vshrl.u32 %v6484, 7
      %v6486 = vsub.s32 6, %v6485
      %v6487 = vrot.slane %v4567, %v6486
      %v6488 = vlaneseq
      %v6489 = vshrl.u32 %v6488, 7
      %v6490 = vsub.s32 6, %v6489
      %v6491 = vrot.slane %v4569, %v6490
      %v6492 = vlaneseq
      %v6493 = vshrl.u32 %v6492, 7
      %v6494 = vsub.s32 6, %v6493
      %v6495 = vrot.slane %v4571, %v6494
      %v6496 = vlaneseq
      %v6497 = vshrl.u32 %v6496, 7
      %v6498 = vsub.s32 6, %v6497
      %v6499 = vrot.slane %v4573, %v6498
      %v6500 = vlaneseq
      %v6501 = vshrl.u32 %v6500, 7
      %v6502 = vsub.s32 6, %v6501
      %v6503 = vrot.slane %v4575, %v6502
      %v6504 = vlaneseq
      %v6505 = vshrl.u32 %v6504, 7
      %v6506 = vsub.s32 6, %v6505
      %v6507 = vrot.slane %v4577, %v6506
      %v6508 = vlaneseq
      %v6509 = vshrl.u32 %v6508, 7
      %v6510 = vsub.s32 6, %v6509
      %v6511 = vrot.slane %v4579, %v6510
      %v6512 = vlaneseq
      %v6513 = vshrl.u32 %v6512, 7
      %v6514 = vsub.s32 6, %v6513
      %v6515 = vrot.slane %v4581, %v6514
      %v6516 = vlaneseq
      %v6517 = vshrl.u32 %v6516, 7
      %v6518 = vsub.s32 6, %v6517
      %v6519 = vrot.slane %v4583, %v6518
      %6522 = vrot.lane.b32.xlu0 %v4580, 96
      %v6523 = vpop.permute.xlu0 %6522
      %6524 = vrot.lane.b32.xlu0 %v4581, 96
      %v6525 = vpop.permute.xlu0 %6524
      %v6528 = vmul.f32 %v6459, %v6523
      %v6529 = vmul.f32 %v6459, %v6525
      %v6530 = vmul.f32 %v6463, %v6523
      %v6531 = vmul.f32 %v6463, %v6525
      %v6532 = vmul.f32 %v6467, %v6523
      %v6533 = vmul.f32 %v6467, %v6525
      %v6534 = vmul.f32 %v6471, %v6523
      %v6535 = vmul.f32 %v6471, %v6525
      %v6536 = vmul.f32 %v6475, %v6523
      %v6537 = vmul.f32 %v6475, %v6525
      %v6538 = vmul.f32 %v6479, %v6523
      %v6539 = vmul.f32 %v6479, %v6525
      %v6540 = vmul.f32 %v6483, %v6523
      %v6541 = vmul.f32 %v6483, %v6525
      %v6542 = vmul.f32 %v6487, %v6523
      %v6543 = vmul.f32 %v6487, %v6525
      %v6544 = vmul.f32 %v6491, %v6523
      %v6545 = vmul.f32 %v6491, %v6525
      %v6546 = vmul.f32 %v6495, %v6523
      %v6547 = vmul.f32 %v6495, %v6525
      %v6548 = vmul.f32 %v6499, %v6523
      %v6549 = vmul.f32 %v6499, %v6525
      %v6550 = vmul.f32 %v6503, %v6523
      %v6551 = vmul.f32 %v6503, %v6525
      %v6552 = vmul.f32 %v6507, %v6523
      %v6553 = vmul.f32 %v6507, %v6525
      %v6554 = vmul.f32 %v6511, %v6523
      %v6555 = vmul.f32 %v6511, %v6525
      %v6556 = vmul.f32 %v6515, %v6523
      %v6557 = vmul.f32 %v6515, %v6525
      %v6558 = vmul.f32 %v6519, %v6523
      %v6559 = vmul.f32 %v6519, %v6525
      %v6560 = vadd.f32 %v6424, %v6528
      %v6561 = vadd.f32 %v6425, %v6529
      %v6562 = vadd.f32 %v6426, %v6530
      %v6563 = vadd.f32 %v6427, %v6531
      %v6564 = vadd.f32 %v6428, %v6532
      %v6565 = vadd.f32 %v6429, %v6533
      %v6566 = vadd.f32 %v6430, %v6534
      %v6567 = vadd.f32 %v6431, %v6535
      %v6568 = vadd.f32 %v6432, %v6536
      %v6569 = vadd.f32 %v6433, %v6537
      %v6570 = vadd.f32 %v6434, %v6538
      %v6571 = vadd.f32 %v6435, %v6539
      %v6572 = vadd.f32 %v6436, %v6540
      %v6573 = vadd.f32 %v6437, %v6541
      %v6574 = vadd.f32 %v6438, %v6542
      %v6575 = vadd.f32 %v6439, %v6543
      %v6576 = vadd.f32 %v6440, %v6544
      %v6577 = vadd.f32 %v6441, %v6545
      %v6578 = vadd.f32 %v6442, %v6546
      %v6579 = vadd.f32 %v6443, %v6547
      %v6580 = vadd.f32 %v6444, %v6548
      %v6581 = vadd.f32 %v6445, %v6549
      %v6582 = vadd.f32 %v6446, %v6550
      %v6583 = vadd.f32 %v6447, %v6551
      %v6584 = vadd.f32 %v6448, %v6552
      %v6585 = vadd.f32 %v6449, %v6553
      %v6586 = vadd.f32 %v6450, %v6554
      %v6587 = vadd.f32 %v6451, %v6555
      %v6588 = vadd.f32 %v6452, %v6556
      %v6589 = vadd.f32 %v6453, %v6557
      %v6590 = vadd.f32 %v6454, %v6558
      %v6591 = vadd.f32 %v6455, %v6559
      %v6592 = vlaneseq
      %v6593 = vshrl.u32 %v6592, 7
      %v6594 = vsub.s32 7, %v6593
      %v6595 = vrot.slane %v4553, %v6594
      %v6596 = vlaneseq
      %v6597 = vshrl.u32 %v6596, 7
      %v6598 = vsub.s32 7, %v6597
      %v6599 = vrot.slane %v4555, %v6598
      %v6600 = vlaneseq
      %v6601 = vshrl.u32 %v6600, 7
      %v6602 = vsub.s32 7, %v6601
      %v6603 = vrot.slane %v4557, %v6602
      %v6604 = vlaneseq
      %v6605 = vshrl.u32 %v6604, 7
      %v6606 = vsub.s32 7, %v6605
      %v6607 = vrot.slane %v4559, %v6606
      %v6608 = vlaneseq
      %v6609 = vshrl.u32 %v6608, 7
      %v6610 = vsub.s32 7, %v6609
      %v6611 = vrot.slane %v4561, %v6610
      %v6612 = vlaneseq
      %v6613 = vshrl.u32 %v6612, 7
      %v6614 = vsub.s32 7, %v6613
      %v6615 = vrot.slane %v4563, %v6614
      %v6616 = vlaneseq
      %v6617 = vshrl.u32 %v6616, 7
      %v6618 = vsub.s32 7, %v6617
      %v6619 = vrot.slane %v4565, %v6618
      %v6620 = vlaneseq
      %v6621 = vshrl.u32 %v6620, 7
      %v6622 = vsub.s32 7, %v6621
      %v6623 = vrot.slane %v4567, %v6622
      %v6624 = vlaneseq
      %v6625 = vshrl.u32 %v6624, 7
      %v6626 = vsub.s32 7, %v6625
      %v6627 = vrot.slane %v4569, %v6626
      %v6628 = vlaneseq
      %v6629 = vshrl.u32 %v6628, 7
      %v6630 = vsub.s32 7, %v6629
      %v6631 = vrot.slane %v4571, %v6630
      %v6632 = vlaneseq
      %v6633 = vshrl.u32 %v6632, 7
      %v6634 = vsub.s32 7, %v6633
      %v6635 = vrot.slane %v4573, %v6634
      %v6636 = vlaneseq
      %v6637 = vshrl.u32 %v6636, 7
      %v6638 = vsub.s32 7, %v6637
      %v6639 = vrot.slane %v4575, %v6638
      %v6640 = vlaneseq
      %v6641 = vshrl.u32 %v6640, 7
      %v6642 = vsub.s32 7, %v6641
      %v6643 = vrot.slane %v4577, %v6642
      %v6644 = vlaneseq
      %v6645 = vshrl.u32 %v6644, 7
      %v6646 = vsub.s32 7, %v6645
      %v6647 = vrot.slane %v4579, %v6646
      %v6648 = vlaneseq
      %v6649 = vshrl.u32 %v6648, 7
      %v6650 = vsub.s32 7, %v6649
      %v6651 = vrot.slane %v4581, %v6650
      %v6652 = vlaneseq
      %v6653 = vshrl.u32 %v6652, 7
      %v6654 = vsub.s32 7, %v6653
      %v6655 = vrot.slane %v4583, %v6654
      %6658 = vrot.lane.b32.xlu0 %v4582, 96
      %v6659 = vpop.permute.xlu0 %6658
      %6660 = vrot.lane.b32.xlu0 %v4583, 96
      %v6661 = vpop.permute.xlu0 %6660
      %v6664 = vmul.f32 %v6595, %v6659
      %v6665 = vmul.f32 %v6595, %v6661
      %v6666 = vmul.f32 %v6599, %v6659
      %v6667 = vmul.f32 %v6599, %v6661
      %v6668 = vmul.f32 %v6603, %v6659
      %v6669 = vmul.f32 %v6603, %v6661
      %v6670 = vmul.f32 %v6607, %v6659
      %v6671 = vmul.f32 %v6607, %v6661
      %v6672 = vmul.f32 %v6611, %v6659
      %v6673 = vmul.f32 %v6611, %v6661
      %v6674 = vmul.f32 %v6615, %v6659
      %v6675 = vmul.f32 %v6615, %v6661
      %v6676 = vmul.f32 %v6619, %v6659
      %v6677 = vmul.f32 %v6619, %v6661
      %v6678 = vmul.f32 %v6623, %v6659
      %v6679 = vmul.f32 %v6623, %v6661
      %v6680 = vmul.f32 %v6627, %v6659
      %v6681 = vmul.f32 %v6627, %v6661
      %v6682 = vmul.f32 %v6631, %v6659
      %v6683 = vmul.f32 %v6631, %v6661
      %v6684 = vmul.f32 %v6635, %v6659
      %v6685 = vmul.f32 %v6635, %v6661
      %v6686 = vmul.f32 %v6639, %v6659
      %v6687 = vmul.f32 %v6639, %v6661
      %v6688 = vmul.f32 %v6643, %v6659
      %v6689 = vmul.f32 %v6643, %v6661
      %v6690 = vmul.f32 %v6647, %v6659
      %v6691 = vmul.f32 %v6647, %v6661
      %v6692 = vmul.f32 %v6651, %v6659
      %v6693 = vmul.f32 %v6651, %v6661
      %v6694 = vmul.f32 %v6655, %v6659
      %v6695 = vmul.f32 %v6655, %v6661
      %v6696 = vadd.f32 %v6560, %v6664
      %v6697 = vadd.f32 %v6561, %v6665
      %v6698 = vadd.f32 %v6562, %v6666
      %v6699 = vadd.f32 %v6563, %v6667
      %v6700 = vadd.f32 %v6564, %v6668
      %v6701 = vadd.f32 %v6565, %v6669
      %v6702 = vadd.f32 %v6566, %v6670
      %v6703 = vadd.f32 %v6567, %v6671
      %v6704 = vadd.f32 %v6568, %v6672
      %v6705 = vadd.f32 %v6569, %v6673
      %v6706 = vadd.f32 %v6570, %v6674
      %v6707 = vadd.f32 %v6571, %v6675
      %v6708 = vadd.f32 %v6572, %v6676
      %v6709 = vadd.f32 %v6573, %v6677
      %v6710 = vadd.f32 %v6574, %v6678
      %v6711 = vadd.f32 %v6575, %v6679
      %v6712 = vadd.f32 %v6576, %v6680
      %v6713 = vadd.f32 %v6577, %v6681
      %v6714 = vadd.f32 %v6578, %v6682
      %v6715 = vadd.f32 %v6579, %v6683
      %v6716 = vadd.f32 %v6580, %v6684
      %v6717 = vadd.f32 %v6581, %v6685
      %v6718 = vadd.f32 %v6582, %v6686
      %v6719 = vadd.f32 %v6583, %v6687
      %v6720 = vadd.f32 %v6584, %v6688
      %v6721 = vadd.f32 %v6585, %v6689
      %v6722 = vadd.f32 %v6586, %v6690
      %v6723 = vadd.f32 %v6587, %v6691
      %v6724 = vadd.f32 %v6588, %v6692
      %v6725 = vadd.f32 %v6589, %v6693
      %v6726 = vadd.f32 %v6590, %v6694
      %v6727 = vadd.f32 %v6591, %v6695
      %6728 = vmatprep.subr.mxu0 0.0
      %6729 = vmatpush1.msra.mxu0 %v4220
      %6730 = vmatprep.subr.mxu0 0.0
      %6731 = vmatpush1.msra.mxu0 %v4221
      %6732 = vmatprep.subr.mxu0 0.0
      %6733 = vmatpush1.msra.mxu0 %v4222
      %6734 = vmatprep.subr.mxu0 0.0
      %6735 = vmatpush1.msra.mxu0 %v4223
      %6736 = vmatprep.subr.mxu0 0.0
      %6737 = vmatpush1.msra.mxu0 0.0
      %6738 = vmatprep.subr.mxu0 0.0
      %6739 = vmatpush1.msra.mxu0 0.0
      %6740 = vmatprep.subr.mxu0 0.0
      %6741 = vmatpush1.msra.mxu0 0.0
      %6742 = vmatprep.subr.mxu0 0.0
      %6743 = vmatpush1.msra.mxu0 0.0
      %6744 = vmatprep.subr.mxu0 0.0
      %6745 = vmatpush1.msra.mxu0 0.0
      %6746 = vmatprep.subr.mxu0 0.0
      %6747 = vmatpush1.msra.mxu0 0.0
      %6748 = vmatprep.subr.mxu0 0.0
      %6749 = vmatpush1.msra.mxu0 0.0
      %6750 = vmatprep.subr.mxu0 0.0
      %6751 = vmatpush1.msra.mxu0 0.0
      %6752 = vmatprep.subr.mxu0 0.0
      %6753 = vmatpush1.msra.mxu0 0.0
      %6754 = vmatprep.subr.mxu0 0.0
      %6755 = vmatpush1.msra.mxu0 0.0
      %6756 = vmatprep.subr.mxu0 0.0
      %6757 = vmatpush1.msra.mxu0 0.0
      %6758 = vmatprep.subr.mxu0 0.0
      %6759 = vmatpush1.msra.mxu0 0.0
      %6760 = vmatprep.subr.mxu0 0.0
      %6761 = vmatpush1.msra.mxu0 0.0
      %6762 = vmatprep.subr.mxu0 0.0
      %6763 = vmatpush1.msra.mxu0 0.0
      %6764 = vmatprep.subr.mxu0 0.0
      %6765 = vmatpush1.msra.mxu0 0.0
      %6766 = vmatprep.subr.mxu0 0.0
      %6767 = vmatpush1.msra.mxu0 0.0
      %6768 = vmatprep.subr.mxu0 0.0
      %6769 = vmatpush1.msra.mxu0 0.0
      %6770 = vmatprep.subr.mxu0 0.0
      %6771 = vmatpush1.msra.mxu0 0.0
      %6772 = vmatprep.subr.mxu0 0.0
      %6773 = vmatpush1.msra.mxu0 0.0
      %6774 = vmatprep.subr.mxu0 0.0
      %6775 = vmatpush1.msra.mxu0 0.0
      %6776 = vmatprep.subr.mxu0 0.0
      %6777 = vmatpush1.msra.mxu0 0.0
      %6778 = vmatprep.subr.mxu0 0.0
      %6779 = vmatpush1.msra.mxu0 0.0
      %6780 = vmatprep.subr.mxu0 0.0
      %6781 = vmatpush1.msra.mxu0 0.0
      %6782 = vmatprep.subr.mxu0 0.0
      %6783 = vmatpush1.msra.mxu0 0.0
      %6784 = vmatprep.subr.mxu0 0.0
      %6785 = vmatpush1.msra.mxu0 0.0
      %6786 = vmatprep.subr.mxu0 0.0
      %6787 = vmatpush1.msra.mxu0 0.0
      %6788 = vmatprep.subr.mxu0 0.0
      %6789 = vmatpush1.msra.mxu0 0.0
      %6790 = vmatprep.subr.mxu0 0.0
      %6791 = vmatpush1.msra.mxu0 0.0
      %6792 = vmatprep.mubr.f32.mxu0 0.0
      %6793 = vmatmul.mubr.f32.gmra.mrb[0].mxu0 %v4232
      %v6794 = vpop.f32.mrb[0].mxu0
      %v6795 = vadd.f32 0.0, %v6794
      %v6796 = vpop.f32.mrb[0].mxu0
      %6797 = vmatprep.mubr.f32.mxu0 0.0
      %6798 = vmatmul.mubr.f32.gmra.mrb[0].mxu0 %v4235
      %v6799 = vpop.f32.mrb[0].mxu0
      %v6800 = vadd.f32 0.0, %v6799
      %v6801 = vpop.f32.mrb[0].mxu0
      %6802 = vmatprep.mubr.f32.mxu0 0.0
      %6803 = vmatmul.mubr.f32.gmra.mrb[0].mxu0 %v4238
      %v6804 = vpop.f32.mrb[0].mxu0
      %v6805 = vadd.f32 0.0, %v6804
      %v6806 = vpop.f32.mrb[0].mxu0
      %6807 = vmatprep.mubr.f32.mxu0 0.0
      %6808 = vmatmul.mubr.f32.gmra.mrb[0].mxu0 %v4241
      %v6809 = vpop.f32.mrb[0].mxu0
      %v6810 = vadd.f32 0.0, %v6809
      %v6811 = vpop.f32.mrb[0].mxu0
      %6812 = vmatprep.mubr.f32.mxu0 0.0
      %6813 = vmatmul.mubr.f32.gmra.mrb[0].mxu0 %v4244
      %v6814 = vpop.f32.mrb[0].mxu0
      %v6815 = vadd.f32 0.0, %v6814
      %v6816 = vpop.f32.mrb[0].mxu0
      %6817 = vmatprep.mubr.f32.mxu0 0.0
      %6818 = vmatmul.mubr.f32.gmra.mrb[0].mxu0 %v4247
      %v6819 = vpop.f32.mrb[0].mxu0
      %v6820 = vadd.f32 0.0, %v6819
      %v6821 = vpop.f32.mrb[0].mxu0
      %6822 = vmatprep.mubr.f32.mxu0 0.0
      %6823 = vmatmul.mubr.f32.gmra.mrb[0].mxu0 %v4250
      %v6824 = vpop.f32.mrb[0].mxu0
      %v6825 = vadd.f32 0.0, %v6824
      %v6826 = vpop.f32.mrb[0].mxu0
      %6827 = vmatprep.mubr.f32.mxu0 0.0
      %6828 = vmatmul.mubr.f32.gmra.mrb[0].mxu0 %v4253
      %v6829 = vpop.f32.mrb[0].mxu0
      %v6830 = vadd.f32 0.0, %v6829
      %v6831 = vpop.f32.mrb[0].mxu0
      %6832 = vmatprep.mubr.f32.mxu0 0.0
      %6833 = vmatmul.mubr.f32.gmra.mrb[0].mxu0 %v4256
      %v6834 = vpop.f32.mrb[0].mxu0
      %v6835 = vadd.f32 0.0, %v6834
      %v6836 = vpop.f32.mrb[0].mxu0
      %6837 = vmatprep.mubr.f32.mxu0 0.0
      %6838 = vmatmul.mubr.f32.gmra.mrb[0].mxu0 %v4259
      %v6839 = vpop.f32.mrb[0].mxu0
      %v6840 = vadd.f32 0.0, %v6839
      %v6841 = vpop.f32.mrb[0].mxu0
      %6842 = vmatprep.mubr.f32.mxu0 0.0
      %6843 = vmatmul.mubr.f32.gmra.mrb[0].mxu0 %v4262
      %v6844 = vpop.f32.mrb[0].mxu0
      %v6845 = vadd.f32 0.0, %v6844
      %v6846 = vpop.f32.mrb[0].mxu0
      %6847 = vmatprep.mubr.f32.mxu0 0.0
      %6848 = vmatmul.mubr.f32.gmra.mrb[0].mxu0 %v4265
      %v6849 = vpop.f32.mrb[0].mxu0
      %v6850 = vadd.f32 0.0, %v6849
      %v6851 = vpop.f32.mrb[0].mxu0
      %6852 = vmatprep.mubr.f32.mxu0 0.0
      %6853 = vmatmul.mubr.f32.gmra.mrb[0].mxu0 %v4268
      %v6854 = vpop.f32.mrb[0].mxu0
      %v6855 = vadd.f32 0.0, %v6854
      %v6856 = vpop.f32.mrb[0].mxu0
      %6857 = vmatprep.mubr.f32.mxu0 0.0
      %6858 = vmatmul.mubr.f32.gmra.mrb[0].mxu0 %v4271
      %v6859 = vpop.f32.mrb[0].mxu0
      %v6860 = vadd.f32 0.0, %v6859
      %v6861 = vpop.f32.mrb[0].mxu0
      %6862 = vmatprep.mubr.f32.mxu0 0.0
      %6863 = vmatmul.mubr.f32.gmra.mrb[0].mxu0 %v4274
      %v6864 = vpop.f32.mrb[0].mxu0
      %v6865 = vadd.f32 0.0, %v6864
      %v6866 = vpop.f32.mrb[0].mxu0
      %6867 = vmatprep.mubr.f32.mxu0 0.0
      %6868 = vmatmul.mubr.f32.gmra.mrb[0].mxu0 %v4277
      %v6869 = vpop.f32.mrb[0].mxu0
      %v6870 = vadd.f32 0.0, %v6869
      %v6871 = vpop.f32.mrb[0].mxu0
      %6872 = vmatprep.mubr.f32.mxu0 0.0
      %6873 = vmatmul.mubr.f32.gmra.mrb[0].mxu0 %v4280
      %v6874 = vpop.f32.mrb[0].mxu0
      %v6875 = vadd.f32 0.0, %v6874
      %v6876 = vpop.f32.mrb[0].mxu0
      %6877 = vmatprep.mubr.f32.mxu0 0.0
      %6878 = vmatmul.mubr.f32.gmra.mrb[0].mxu0 %v4283
      %v6879 = vpop.f32.mrb[0].mxu0
      %v6880 = vadd.f32 0.0, %v6879
      %v6881 = vpop.f32.mrb[0].mxu0
      %6882 = vmatprep.mubr.f32.mxu0 0.0
      %6883 = vmatmul.mubr.f32.gmra.mrb[0].mxu0 %v4286
      %v6884 = vpop.f32.mrb[0].mxu0
      %v6885 = vadd.f32 0.0, %v6884
      %v6886 = vpop.f32.mrb[0].mxu0
      %6887 = vmatprep.mubr.f32.mxu0 0.0
      %6888 = vmatmul.mubr.f32.gmra.mrb[0].mxu0 %v4289
      %v6889 = vpop.f32.mrb[0].mxu0
      %v6890 = vadd.f32 0.0, %v6889
      %v6891 = vpop.f32.mrb[0].mxu0
      %6892 = vmatprep.mubr.f32.mxu0 0.0
      %6893 = vmatmul.mubr.f32.gmra.mrb[0].mxu0 %v4292
      %v6894 = vpop.f32.mrb[0].mxu0
      %v6895 = vadd.f32 0.0, %v6894
      %v6896 = vpop.f32.mrb[0].mxu0
      %6897 = vmatprep.mubr.f32.mxu0 0.0
      %6898 = vmatmul.mubr.f32.gmra.mrb[0].mxu0 %v4295
      %v6899 = vpop.f32.mrb[0].mxu0
      %v6900 = vadd.f32 0.0, %v6899
      %v6901 = vpop.f32.mrb[0].mxu0
      %6902 = vmatprep.mubr.f32.mxu0 0.0
      %6903 = vmatmul.mubr.f32.gmra.mrb[0].mxu0 %v4298
      %v6904 = vpop.f32.mrb[0].mxu0
      %v6905 = vadd.f32 0.0, %v6904
      %v6906 = vpop.f32.mrb[0].mxu0
      %6907 = vmatprep.mubr.f32.mxu0 0.0
      %6908 = vmatmul.mubr.f32.gmra.mrb[0].mxu0 %v4301
      %v6909 = vpop.f32.mrb[0].mxu0
      %v6910 = vadd.f32 0.0, %v6909
      %v6911 = vpop.f32.mrb[0].mxu0
      %6912 = vmatprep.mubr.f32.mxu0 0.0
      %6913 = vmatmul.mubr.f32.gmra.mrb[0].mxu0 %v4304
      %v6914 = vpop.f32.mrb[0].mxu0
      %v6915 = vadd.f32 0.0, %v6914
      %v6916 = vpop.f32.mrb[0].mxu0
      %6917 = vmatprep.mubr.f32.mxu0 0.0
      %6918 = vmatmul.mubr.f32.gmra.mrb[0].mxu0 %v4307
      %v6919 = vpop.f32.mrb[0].mxu0
      %v6920 = vadd.f32 0.0, %v6919
      %v6921 = vpop.f32.mrb[0].mxu0
      %6922 = vmatprep.mubr.f32.mxu0 0.0
      %6923 = vmatmul.mubr.f32.gmra.mrb[0].mxu0 %v4310
      %v6924 = vpop.f32.mrb[0].mxu0
      %v6925 = vadd.f32 0.0, %v6924
      %v6926 = vpop.f32.mrb[0].mxu0
      %6927 = vmatprep.mubr.f32.mxu0 0.0
      %6928 = vmatmul.mubr.f32.gmra.mrb[0].mxu0 %v4313
      %v6929 = vpop.f32.mrb[0].mxu0
      %v6930 = vadd.f32 0.0, %v6929
      %v6931 = vpop.f32.mrb[0].mxu0
      %6932 = vmatprep.mubr.f32.mxu0 0.0
      %6933 = vmatmul.mubr.f32.gmra.mrb[0].mxu0 %v4316
      %v6934 = vpop.f32.mrb[0].mxu0
      %v6935 = vadd.f32 0.0, %v6934
      %v6936 = vpop.f32.mrb[0].mxu0
      %6937 = vmatprep.mubr.f32.mxu0 0.0
      %6938 = vmatmul.mubr.f32.gmra.mrb[0].mxu0 %v4319
      %v6939 = vpop.f32.mrb[0].mxu0
      %v6940 = vadd.f32 0.0, %v6939
      %v6941 = vpop.f32.mrb[0].mxu0
      %6942 = vmatprep.mubr.f32.mxu0 0.0
      %6943 = vmatmul.mubr.f32.gmra.mrb[0].mxu0 %v4322
      %v6944 = vpop.f32.mrb[0].mxu0
      %v6945 = vadd.f32 0.0, %v6944
      %v6946 = vpop.f32.mrb[0].mxu0
      %6947 = vmatprep.mubr.f32.mxu0 0.0
      %6948 = vmatmul.mubr.f32.gmra.mrb[0].mxu0 %v4325
      %v6949 = vpop.f32.mrb[0].mxu0
      %v6950 = vadd.f32 0.0, %v6949
      %v6951 = vpop.f32.mrb[0].mxu0
      %6952 = vdwg.mxu0
      %v6954 = vsel %vm3483, %v6696, 0
      %v6957 = vsel %vm3483, %v6697, 0
      %v6960 = vsel %vm3483, %v6698, 0
      %v6963 = vsel %vm3483, %v6699, 0
      %v6966 = vsel %vm3483, %v6700, 0
      %v6969 = vsel %vm3483, %v6701, 0
      %v6972 = vsel %vm3483, %v6702, 0
      %v6975 = vsel %vm3483, %v6703, 0
      %v6978 = vsel %vm3483, %v6704, 0
      %v6981 = vsel %vm3483, %v6705, 0
      %v6984 = vsel %vm3483, %v6706, 0
      %v6987 = vsel %vm3483, %v6707, 0
      %v6990 = vsel %vm3483, %v6708, 0
      %v6993 = vsel %vm3483, %v6709, 0
      %v6996 = vsel %vm3483, %v6710, 0
      %v6999 = vsel %vm3483, %v6711, 0
      %v7002 = vsel %vm3483, %v6712, 0
      %v7005 = vsel %vm3483, %v6713, 0
      %v7008 = vsel %vm3483, %v6714, 0
      %v7011 = vsel %vm3483, %v6715, 0
      %v7014 = vsel %vm3483, %v6716, 0
      %v7017 = vsel %vm3483, %v6717, 0
      %v7020 = vsel %vm3483, %v6718, 0
      %v7023 = vsel %vm3483, %v6719, 0
      %v7026 = vsel %vm3483, %v6720, 0
      %v7029 = vsel %vm3483, %v6721, 0
      %v7032 = vsel %vm3483, %v6722, 0
      %v7035 = vsel %vm3483, %v6723, 0
      %v7038 = vsel %vm3483, %v6724, 0
      %v7041 = vsel %vm3483, %v6725, 0
      %v7044 = vsel %vm3483, %v6726, 0
      %v7047 = vsel %vm3483, %v6727, 0
      %7049 = vmatprep.subr.mxu0 0.0
      %7050 = vmatpush1.msra.mxu0 %v4216
      %7051 = vmatprep.subr.mxu0 0.0
      %7052 = vmatpush1.msra.mxu0 %v4217
      %7053 = vmatprep.subr.mxu0 0.0
      %7054 = vmatpush1.msra.mxu0 %v4218
      %7055 = vmatprep.subr.mxu0 0.0
      %7056 = vmatpush1.msra.mxu0 %v4219
      %7057 = vmatprep.subr.mxu0 0.0
      %7058 = vmatpush1.msra.mxu0 0.0
      %7059 = vmatprep.subr.mxu0 0.0
      %7060 = vmatpush1.msra.mxu0 0.0
      %7061 = vmatprep.subr.mxu0 0.0
      %7062 = vmatpush1.msra.mxu0 0.0
      %7063 = vmatprep.subr.mxu0 0.0
      %7064 = vmatpush1.msra.mxu0 0.0
      %7065 = vmatprep.subr.mxu0 0.0
      %7066 = vmatpush1.msra.mxu0 0.0
      %7067 = vmatprep.subr.mxu0 0.0
      %7068 = vmatpush1.msra.mxu0 0.0
      %7069 = vmatprep.subr.mxu0 0.0
      %7070 = vmatpush1.msra.mxu0 0.0
      %7071 = vmatprep.subr.mxu0 0.0
      %7072 = vmatpush1.msra.mxu0 0.0
      %7073 = vmatprep.subr.mxu0 0.0
      %7074 = vmatpush1.msra.mxu0 0.0
      %7075 = vmatprep.subr.mxu0 0.0
      %7076 = vmatpush1.msra.mxu0 0.0
      %7077 = vmatprep.subr.mxu0 0.0
      %7078 = vmatpush1.msra.mxu0 0.0
      %7079 = vmatprep.subr.mxu0 0.0
      %7080 = vmatpush1.msra.mxu0 0.0
      %7081 = vmatprep.subr.mxu0 0.0
      %7082 = vmatpush1.msra.mxu0 0.0
      %7083 = vmatprep.subr.mxu0 0.0
      %7084 = vmatpush1.msra.mxu0 0.0
      %7085 = vmatprep.subr.mxu0 0.0
      %7086 = vmatpush1.msra.mxu0 0.0
      %7087 = vmatprep.subr.mxu0 0.0
      %7088 = vmatpush1.msra.mxu0 0.0
      %7089 = vmatprep.subr.mxu0 0.0
      %7090 = vmatpush1.msra.mxu0 0.0
      %7091 = vmatprep.subr.mxu0 0.0
      %7092 = vmatpush1.msra.mxu0 0.0
      %7093 = vmatprep.subr.mxu0 0.0
      %7094 = vmatpush1.msra.mxu0 0.0
      %7095 = vmatprep.subr.mxu0 0.0
      %7096 = vmatpush1.msra.mxu0 0.0
      %7097 = vmatprep.subr.mxu0 0.0
      %7098 = vmatpush1.msra.mxu0 0.0
      %7099 = vmatprep.subr.mxu0 0.0
      %7100 = vmatpush1.msra.mxu0 0.0
      %7101 = vmatprep.subr.mxu0 0.0
      %7102 = vmatpush1.msra.mxu0 0.0
      %7103 = vmatprep.subr.mxu0 0.0
      %7104 = vmatpush1.msra.mxu0 0.0
      %7105 = vmatprep.subr.mxu0 0.0
      %7106 = vmatpush1.msra.mxu0 0.0
      %7107 = vmatprep.subr.mxu0 0.0
      %7108 = vmatpush1.msra.mxu0 0.0
      %7109 = vmatprep.subr.mxu0 0.0
      %7110 = vmatpush1.msra.mxu0 0.0
      %7111 = vmatprep.subr.mxu0 0.0
      %7112 = vmatpush1.msra.mxu0 0.0
      %7113 = vmatprep.mubr.f32.mxu0 0.0
      %7114 = vmatmul.mubr.f32.gmra.mrb[0].mxu0 %v6954
      %v7115 = vpop.f32.mrb[0].mxu0
      %v7116 = vadd.f32 %v6795, %v7115
      %v7117 = vpop.f32.mrb[0].mxu0
      %7118 = vmatprep.mubr.f32.mxu0 0.0
      %7119 = vmatmul.mubr.f32.gmra.mrb[0].mxu0 %v6957
      %v7120 = vpop.f32.mrb[0].mxu0
      %v7121 = vadd.f32 %v6800, %v7120
      %v7122 = vpop.f32.mrb[0].mxu0
      %7123 = vmatprep.mubr.f32.mxu0 0.0
      %7124 = vmatmul.mubr.f32.gmra.mrb[0].mxu0 %v6960
      %v7125 = vpop.f32.mrb[0].mxu0
      %v7126 = vadd.f32 %v6805, %v7125
      %v7127 = vpop.f32.mrb[0].mxu0
      %7128 = vmatprep.mubr.f32.mxu0 0.0
      %7129 = vmatmul.mubr.f32.gmra.mrb[0].mxu0 %v6963
      %v7130 = vpop.f32.mrb[0].mxu0
      %v7131 = vadd.f32 %v6810, %v7130
      %v7132 = vpop.f32.mrb[0].mxu0
      %7133 = vmatprep.mubr.f32.mxu0 0.0
      %7134 = vmatmul.mubr.f32.gmra.mrb[0].mxu0 %v6966
      %v7135 = vpop.f32.mrb[0].mxu0
      %v7136 = vadd.f32 %v6815, %v7135
      %v7137 = vpop.f32.mrb[0].mxu0
      %7138 = vmatprep.mubr.f32.mxu0 0.0
      %7139 = vmatmul.mubr.f32.gmra.mrb[0].mxu0 %v6969
      %v7140 = vpop.f32.mrb[0].mxu0
      %v7141 = vadd.f32 %v6820, %v7140
      %v7142 = vpop.f32.mrb[0].mxu0
      %7143 = vmatprep.mubr.f32.mxu0 0.0
      %7144 = vmatmul.mubr.f32.gmra.mrb[0].mxu0 %v6972
      %v7145 = vpop.f32.mrb[0].mxu0
      %v7146 = vadd.f32 %v6825, %v7145
      %v7147 = vpop.f32.mrb[0].mxu0
      %7148 = vmatprep.mubr.f32.mxu0 0.0
      %7149 = vmatmul.mubr.f32.gmra.mrb[0].mxu0 %v6975
      %v7150 = vpop.f32.mrb[0].mxu0
      %v7151 = vadd.f32 %v6830, %v7150
      %v7152 = vpop.f32.mrb[0].mxu0
      %7153 = vmatprep.mubr.f32.mxu0 0.0
      %7154 = vmatmul.mubr.f32.gmra.mrb[0].mxu0 %v6978
      %v7155 = vpop.f32.mrb[0].mxu0
      %v7156 = vadd.f32 %v6835, %v7155
      %v7157 = vpop.f32.mrb[0].mxu0
      %7158 = vmatprep.mubr.f32.mxu0 0.0
      %7159 = vmatmul.mubr.f32.gmra.mrb[0].mxu0 %v6981
      %v7160 = vpop.f32.mrb[0].mxu0
      %v7161 = vadd.f32 %v6840, %v7160
      %v7162 = vpop.f32.mrb[0].mxu0
      %7163 = vmatprep.mubr.f32.mxu0 0.0
      %7164 = vmatmul.mubr.f32.gmra.mrb[0].mxu0 %v6984
      %v7165 = vpop.f32.mrb[0].mxu0
      %v7166 = vadd.f32 %v6845, %v7165
      %v7167 = vpop.f32.mrb[0].mxu0
      %7168 = vmatprep.mubr.f32.mxu0 0.0
      %7169 = vmatmul.mubr.f32.gmra.mrb[0].mxu0 %v6987
      %v7170 = vpop.f32.mrb[0].mxu0
      %v7171 = vadd.f32 %v6850, %v7170
      %v7172 = vpop.f32.mrb[0].mxu0
      %7173 = vmatprep.mubr.f32.mxu0 0.0
      %7174 = vmatmul.mubr.f32.gmra.mrb[0].mxu0 %v6990
      %v7175 = vpop.f32.mrb[0].mxu0
      %v7176 = vadd.f32 %v6855, %v7175
      %v7177 = vpop.f32.mrb[0].mxu0
      %7178 = vmatprep.mubr.f32.mxu0 0.0
      %7179 = vmatmul.mubr.f32.gmra.mrb[0].mxu0 %v6993
      %v7180 = vpop.f32.mrb[0].mxu0
      %v7181 = vadd.f32 %v6860, %v7180
      %v7182 = vpop.f32.mrb[0].mxu0
      %7183 = vmatprep.mubr.f32.mxu0 0.0
      %7184 = vmatmul.mubr.f32.gmra.mrb[0].mxu0 %v6996
      %v7185 = vpop.f32.mrb[0].mxu0
      %v7186 = vadd.f32 %v6865, %v7185
      %v7187 = vpop.f32.mrb[0].mxu0
      %7188 = vmatprep.mubr.f32.mxu0 0.0
      %7189 = vmatmul.mubr.f32.gmra.mrb[0].mxu0 %v6999
      %v7190 = vpop.f32.mrb[0].mxu0
      %v7191 = vadd.f32 %v6870, %v7190
      %v7192 = vpop.f32.mrb[0].mxu0
      %7193 = vmatprep.mubr.f32.mxu0 0.0
      %7194 = vmatmul.mubr.f32.gmra.mrb[0].mxu0 %v7002
      %v7195 = vpop.f32.mrb[0].mxu0
      %v7196 = vadd.f32 %v6875, %v7195
      %v7197 = vpop.f32.mrb[0].mxu0
      %7198 = vmatprep.mubr.f32.mxu0 0.0
      %7199 = vmatmul.mubr.f32.gmra.mrb[0].mxu0 %v7005
      %v7200 = vpop.f32.mrb[0].mxu0
      %v7201 = vadd.f32 %v6880, %v7200
      %v7202 = vpop.f32.mrb[0].mxu0
      %7203 = vmatprep.mubr.f32.mxu0 0.0
      %7204 = vmatmul.mubr.f32.gmra.mrb[0].mxu0 %v7008
      %v7205 = vpop.f32.mrb[0].mxu0
      %v7206 = vadd.f32 %v6885, %v7205
      %v7207 = vpop.f32.mrb[0].mxu0
      %7208 = vmatprep.mubr.f32.mxu0 0.0
      %7209 = vmatmul.mubr.f32.gmra.mrb[0].mxu0 %v7011
      %v7210 = vpop.f32.mrb[0].mxu0
      %v7211 = vadd.f32 %v6890, %v7210
      %v7212 = vpop.f32.mrb[0].mxu0
      %7213 = vmatprep.mubr.f32.mxu0 0.0
      %7214 = vmatmul.mubr.f32.gmra.mrb[0].mxu0 %v7014
      %v7215 = vpop.f32.mrb[0].mxu0
      %v7216 = vadd.f32 %v6895, %v7215
      %v7217 = vpop.f32.mrb[0].mxu0
      %7218 = vmatprep.mubr.f32.mxu0 0.0
      %7219 = vmatmul.mubr.f32.gmra.mrb[0].mxu0 %v7017
      %v7220 = vpop.f32.mrb[0].mxu0
      %v7221 = vadd.f32 %v6900, %v7220
      %v7222 = vpop.f32.mrb[0].mxu0
      %7223 = vmatprep.mubr.f32.mxu0 0.0
      %7224 = vmatmul.mubr.f32.gmra.mrb[0].mxu0 %v7020
      %v7225 = vpop.f32.mrb[0].mxu0
      %v7226 = vadd.f32 %v6905, %v7225
      %v7227 = vpop.f32.mrb[0].mxu0
      %7228 = vmatprep.mubr.f32.mxu0 0.0
      %7229 = vmatmul.mubr.f32.gmra.mrb[0].mxu0 %v7023
      %v7230 = vpop.f32.mrb[0].mxu0
      %v7231 = vadd.f32 %v6910, %v7230
      %v7232 = vpop.f32.mrb[0].mxu0
      %7233 = vmatprep.mubr.f32.mxu0 0.0
      %7234 = vmatmul.mubr.f32.gmra.mrb[0].mxu0 %v7026
      %v7235 = vpop.f32.mrb[0].mxu0
      %v7236 = vadd.f32 %v6915, %v7235
      %v7237 = vpop.f32.mrb[0].mxu0
      %7238 = vmatprep.mubr.f32.mxu0 0.0
      %7239 = vmatmul.mubr.f32.gmra.mrb[0].mxu0 %v7029
      %v7240 = vpop.f32.mrb[0].mxu0
      %v7241 = vadd.f32 %v6920, %v7240
      %v7242 = vpop.f32.mrb[0].mxu0
      %7243 = vmatprep.mubr.f32.mxu0 0.0
      %7244 = vmatmul.mubr.f32.gmra.mrb[0].mxu0 %v7032
      %v7245 = vpop.f32.mrb[0].mxu0
      %v7246 = vadd.f32 %v6925, %v7245
      %v7247 = vpop.f32.mrb[0].mxu0
      %7248 = vmatprep.mubr.f32.mxu0 0.0
      %7249 = vmatmul.mubr.f32.gmra.mrb[0].mxu0 %v7035
      %v7250 = vpop.f32.mrb[0].mxu0
      %v7251 = vadd.f32 %v6930, %v7250
      %v7252 = vpop.f32.mrb[0].mxu0
      %7253 = vmatprep.mubr.f32.mxu0 0.0
      %7254 = vmatmul.mubr.f32.gmra.mrb[0].mxu0 %v7038
      %v7255 = vpop.f32.mrb[0].mxu0
      %v7256 = vadd.f32 %v6935, %v7255
      %v7257 = vpop.f32.mrb[0].mxu0
      %7258 = vmatprep.mubr.f32.mxu0 0.0
      %7259 = vmatmul.mubr.f32.gmra.mrb[0].mxu0 %v7041
      %v7260 = vpop.f32.mrb[0].mxu0
      %v7261 = vadd.f32 %v6940, %v7260
      %v7262 = vpop.f32.mrb[0].mxu0
      %7263 = vmatprep.mubr.f32.mxu0 0.0
      %7264 = vmatmul.mubr.f32.gmra.mrb[0].mxu0 %v7044
      %v7265 = vpop.f32.mrb[0].mxu0
      %v7266 = vadd.f32 %v6945, %v7265
      %v7267 = vpop.f32.mrb[0].mxu0
      %7268 = vmatprep.mubr.f32.mxu0 0.0
      %7269 = vmatmul.mubr.f32.gmra.mrb[0].mxu0 %v7047
      %v7270 = vpop.f32.mrb[0].mxu0
      %v7271 = vadd.f32 %v6950, %v7270
      %v7272 = vpop.f32.mrb[0].mxu0
      %7273 = vdwg.mxu0
      %v7275 = vlaneseq
      %v7276 = vshrl.u32 %v7275, 7
      %v7277 = vsub.s32 0, %v7276
      %v7278 = vrot.slane %v4224, %v7277
      %v7280 = vadd.f32 %v7116, %v7278
      %v7281 = vadd.f32 %v7121, %v7278
      %v7282 = vadd.f32 %v7126, %v7278
      %v7283 = vadd.f32 %v7131, %v7278
      %v7284 = vadd.f32 %v7136, %v7278
      %v7285 = vadd.f32 %v7141, %v7278
      %v7286 = vadd.f32 %v7146, %v7278
      %v7287 = vadd.f32 %v7151, %v7278
      %v7288 = vadd.f32 %v7156, %v7278
      %v7289 = vadd.f32 %v7161, %v7278
      %v7290 = vadd.f32 %v7166, %v7278
      %v7291 = vadd.f32 %v7171, %v7278
      %v7292 = vadd.f32 %v7176, %v7278
      %v7293 = vadd.f32 %v7181, %v7278
      %v7294 = vadd.f32 %v7186, %v7278
      %v7295 = vadd.f32 %v7191, %v7278
      %v7296 = vadd.f32 %v7196, %v7278
      %v7297 = vadd.f32 %v7201, %v7278
      %v7298 = vadd.f32 %v7206, %v7278
      %v7299 = vadd.f32 %v7211, %v7278
      %v7300 = vadd.f32 %v7216, %v7278
      %v7301 = vadd.f32 %v7221, %v7278
      %v7302 = vadd.f32 %v7226, %v7278
      %v7303 = vadd.f32 %v7231, %v7278
      %v7304 = vadd.f32 %v7236, %v7278
      %v7305 = vadd.f32 %v7241, %v7278
      %v7306 = vadd.f32 %v7246, %v7278
      %v7307 = vadd.f32 %v7251, %v7278
      %v7308 = vadd.f32 %v7256, %v7278
      %v7309 = vadd.f32 %v7261, %v7278
      %v7310 = vadd.f32 %v7266, %v7278
      %v7311 = vadd.f32 %v7271, %v7278
      %v7312 = vmax.f32 %v7280, 0.0
      %v7313 = vmax.f32 %v7281, 0.0
      %v7314 = vmax.f32 %v7282, 0.0
      %v7315 = vmax.f32 %v7283, 0.0
      %v7316 = vmax.f32 %v7284, 0.0
      %v7317 = vmax.f32 %v7285, 0.0
      %v7318 = vmax.f32 %v7286, 0.0
      %v7319 = vmax.f32 %v7287, 0.0
      %v7320 = vmax.f32 %v7288, 0.0
      %v7321 = vmax.f32 %v7289, 0.0
      %v7322 = vmax.f32 %v7290, 0.0
      %v7323 = vmax.f32 %v7291, 0.0
      %v7324 = vmax.f32 %v7292, 0.0
      %v7325 = vmax.f32 %v7293, 0.0
      %v7326 = vmax.f32 %v7294, 0.0
      %v7327 = vmax.f32 %v7295, 0.0
      %v7328 = vmax.f32 %v7296, 0.0
      %v7329 = vmax.f32 %v7297, 0.0
      %v7330 = vmax.f32 %v7298, 0.0
      %v7331 = vmax.f32 %v7299, 0.0
      %v7332 = vmax.f32 %v7300, 0.0
      %v7333 = vmax.f32 %v7301, 0.0
      %v7334 = vmax.f32 %v7302, 0.0
      %v7335 = vmax.f32 %v7303, 0.0
      %v7336 = vmax.f32 %v7304, 0.0
      %v7337 = vmax.f32 %v7305, 0.0
      %v7338 = vmax.f32 %v7306, 0.0
      %v7339 = vmax.f32 %v7307, 0.0
      %v7340 = vmax.f32 %v7308, 0.0
      %v7341 = vmax.f32 %v7309, 0.0
      %v7342 = vmax.f32 %v7310, 0.0
      %v7343 = vmax.f32 %v7311, 0.0
      %v7344 = vmul.f32 %v7312, %v3878
      %v7345 = vmul.f32 %v7313, %v3883
      %v7346 = vmul.f32 %v7314, %v3888
      %v7347 = vmul.f32 %v7315, %v3893
      %v7348 = vmul.f32 %v7316, %v3898
      %v7349 = vmul.f32 %v7317, %v3903
      %v7350 = vmul.f32 %v7318, %v3908
      %v7351 = vmul.f32 %v7319, %v3913
      %v7352 = vmul.f32 %v7320, %v3918
      %v7353 = vmul.f32 %v7321, %v3923
      %v7354 = vmul.f32 %v7322, %v3928
      %v7355 = vmul.f32 %v7323, %v3933
      %v7356 = vmul.f32 %v7324, %v3938
      %v7357 = vmul.f32 %v7325, %v3943
      %v7358 = vmul.f32 %v7326, %v3948
      %v7359 = vmul.f32 %v7327, %v3953
      %v7360 = vmul.f32 %v7328, %v3958
      %v7361 = vmul.f32 %v7329, %v3963
      %v7362 = vmul.f32 %v7330, %v3968
      %v7363 = vmul.f32 %v7331, %v3973
      %v7364 = vmul.f32 %v7332, %v3978
      %v7365 = vmul.f32 %v7333, %v3983
      %v7366 = vmul.f32 %v7334, %v3988
      %v7367 = vmul.f32 %v7335, %v3993
      %v7368 = vmul.f32 %v7336, %v3998
      %v7369 = vmul.f32 %v7337, %v4003
      %v7370 = vmul.f32 %v7338, %v4008
      %v7371 = vmul.f32 %v7339, %v4013
      %v7372 = vmul.f32 %v7340, %v4018
      %v7373 = vmul.f32 %v7341, %v4023
      %v7374 = vmul.f32 %v7342, %v4028
      %v7375 = vmul.f32 %v7343, %v4033
      %v7376 = vsel %vm3483, %v7344, 0.0
      %v7377 = vsel %vm3483, %v7345, 0.0
      %v7378 = vadd.f32 %v7376, %v7377
      %v7379 = vrot.slane %v7378, 4
      %v7380 = vadd.f32 %v7378, %v7379
      %v7381 = vrot.slane %v7380, 2
      %v7382 = vadd.f32 %v7380, %v7381
      %v7383 = vrot.slane %v7382, 1
      %v7384 = vadd.f32 %v7382, %v7383
      %v7385 = vsel %vm3483, %v7346, 0.0
      %v7386 = vsel %vm3483, %v7347, 0.0
      %v7387 = vadd.f32 %v7385, %v7386
      %v7388 = vrot.slane %v7387, 4
      %v7389 = vadd.f32 %v7387, %v7388
      %v7390 = vrot.slane %v7389, 2
      %v7391 = vadd.f32 %v7389, %v7390
      %v7392 = vrot.slane %v7391, 1
      %v7393 = vadd.f32 %v7391, %v7392
      %v7394 = vsel %vm3483, %v7348, 0.0
      %v7395 = vsel %vm3483, %v7349, 0.0
      %v7396 = vadd.f32 %v7394, %v7395
      %v7397 = vrot.slane %v7396, 4
      %v7398 = vadd.f32 %v7396, %v7397
      %v7399 = vrot.slane %v7398, 2
      %v7400 = vadd.f32 %v7398, %v7399
      %v7401 = vrot.slane %v7400, 1
      %v7402 = vadd.f32 %v7400, %v7401
      %v7403 = vsel %vm3483, %v7350, 0.0
      %v7404 = vsel %vm3483, %v7351, 0.0
      %v7405 = vadd.f32 %v7403, %v7404
      %v7406 = vrot.slane %v7405, 4
      %v7407 = vadd.f32 %v7405, %v7406
      %v7408 = vrot.slane %v7407, 2
      %v7409 = vadd.f32 %v7407, %v7408
      %v7410 = vrot.slane %v7409, 1
      %v7411 = vadd.f32 %v7409, %v7410
      %v7412 = vsel %vm3483, %v7352, 0.0
      %v7413 = vsel %vm3483, %v7353, 0.0
      %v7414 = vadd.f32 %v7412, %v7413
      %v7415 = vrot.slane %v7414, 4
      %v7416 = vadd.f32 %v7414, %v7415
      %v7417 = vrot.slane %v7416, 2
      %v7418 = vadd.f32 %v7416, %v7417
      %v7419 = vrot.slane %v7418, 1
      %v7420 = vadd.f32 %v7418, %v7419
      %v7421 = vsel %vm3483, %v7354, 0.0
      %v7422 = vsel %vm3483, %v7355, 0.0
      %v7423 = vadd.f32 %v7421, %v7422
      %v7424 = vrot.slane %v7423, 4
      %v7425 = vadd.f32 %v7423, %v7424
      %v7426 = vrot.slane %v7425, 2
      %v7427 = vadd.f32 %v7425, %v7426
      %v7428 = vrot.slane %v7427, 1
      %v7429 = vadd.f32 %v7427, %v7428
      %v7430 = vsel %vm3483, %v7356, 0.0
      %v7431 = vsel %vm3483, %v7357, 0.0
      %v7432 = vadd.f32 %v7430, %v7431
      %v7433 = vrot.slane %v7432, 4
      %v7434 = vadd.f32 %v7432, %v7433
      %v7435 = vrot.slane %v7434, 2
      %v7436 = vadd.f32 %v7434, %v7435
      %v7437 = vrot.slane %v7436, 1
      %v7438 = vadd.f32 %v7436, %v7437
      %v7439 = vsel %vm3483, %v7358, 0.0
      %v7440 = vsel %vm3483, %v7359, 0.0
      %v7441 = vadd.f32 %v7439, %v7440
      %v7442 = vrot.slane %v7441, 4
      %v7443 = vadd.f32 %v7441, %v7442
      %v7444 = vrot.slane %v7443, 2
      %v7445 = vadd.f32 %v7443, %v7444
      %v7446 = vrot.slane %v7445, 1
      %v7447 = vadd.f32 %v7445, %v7446
      %v7448 = vsel %vm3483, %v7360, 0.0
      %v7449 = vsel %vm3483, %v7361, 0.0
      %v7450 = vadd.f32 %v7448, %v7449
      %v7451 = vrot.slane %v7450, 4
      %v7452 = vadd.f32 %v7450, %v7451
      %v7453 = vrot.slane %v7452, 2
      %v7454 = vadd.f32 %v7452, %v7453
      %v7455 = vrot.slane %v7454, 1
      %v7456 = vadd.f32 %v7454, %v7455
      %v7457 = vsel %vm3483, %v7362, 0.0
      %v7458 = vsel %vm3483, %v7363, 0.0
      %v7459 = vadd.f32 %v7457, %v7458
      %v7460 = vrot.slane %v7459, 4
      %v7461 = vadd.f32 %v7459, %v7460
      %v7462 = vrot.slane %v7461, 2
      %v7463 = vadd.f32 %v7461, %v7462
      %v7464 = vrot.slane %v7463, 1
      %v7465 = vadd.f32 %v7463, %v7464
      %v7466 = vsel %vm3483, %v7364, 0.0
      %v7467 = vsel %vm3483, %v7365, 0.0
      %v7468 = vadd.f32 %v7466, %v7467
      %v7469 = vrot.slane %v7468, 4
      %v7470 = vadd.f32 %v7468, %v7469
      %v7471 = vrot.slane %v7470, 2
      %v7472 = vadd.f32 %v7470, %v7471
      %v7473 = vrot.slane %v7472, 1
      %v7474 = vadd.f32 %v7472, %v7473
      %v7475 = vsel %vm3483, %v7366, 0.0
      %v7476 = vsel %vm3483, %v7367, 0.0
      %v7477 = vadd.f32 %v7475, %v7476
      %v7478 = vrot.slane %v7477, 4
      %v7479 = vadd.f32 %v7477, %v7478
      %v7480 = vrot.slane %v7479, 2
      %v7481 = vadd.f32 %v7479, %v7480
      %v7482 = vrot.slane %v7481, 1
      %v7483 = vadd.f32 %v7481, %v7482
      %v7484 = vsel %vm3483, %v7368, 0.0
      %v7485 = vsel %vm3483, %v7369, 0.0
      %v7486 = vadd.f32 %v7484, %v7485
      %v7487 = vrot.slane %v7486, 4
      %v7488 = vadd.f32 %v7486, %v7487
      %v7489 = vrot.slane %v7488, 2
      %v7490 = vadd.f32 %v7488, %v7489
      %v7491 = vrot.slane %v7490, 1
      %v7492 = vadd.f32 %v7490, %v7491
      %v7493 = vsel %vm3483, %v7370, 0.0
      %v7494 = vsel %vm3483, %v7371, 0.0
      %v7495 = vadd.f32 %v7493, %v7494
      %v7496 = vrot.slane %v7495, 4
      %v7497 = vadd.f32 %v7495, %v7496
      %v7498 = vrot.slane %v7497, 2
      %v7499 = vadd.f32 %v7497, %v7498
      %v7500 = vrot.slane %v7499, 1
      %v7501 = vadd.f32 %v7499, %v7500
      %v7502 = vsel %vm3483, %v7372, 0.0
      %v7503 = vsel %vm3483, %v7373, 0.0
      %v7504 = vadd.f32 %v7502, %v7503
      %v7505 = vrot.slane %v7504, 4
      %v7506 = vadd.f32 %v7504, %v7505
      %v7507 = vrot.slane %v7506, 2
      %v7508 = vadd.f32 %v7506, %v7507
      %v7509 = vrot.slane %v7508, 1
      %v7510 = vadd.f32 %v7508, %v7509
      %v7511 = vsel %vm3483, %v7374, 0.0
      %v7512 = vsel %vm3483, %v7375, 0.0
      %v7513 = vadd.f32 %v7511, %v7512
      %v7514 = vrot.slane %v7513, 4
      %v7515 = vadd.f32 %v7513, %v7514
      %v7516 = vrot.slane %v7515, 2
      %v7517 = vadd.f32 %v7515, %v7516
      %v7518 = vrot.slane %v7517, 1
      %v7519 = vadd.f32 %v7517, %v7518
      %v7520 = vld [vmem:[%s12] sm:$0xff]
      %v7521 = vld [vmem:[%s12 + $0x8] sm:$0xff]
      %v7522 = vld [vmem:[%s12 + $0x10] sm:$0xff]
      %v7523 = vld [vmem:[%s12 + $0x18] sm:$0xff]
      %v7524 = vld [vmem:[%s13] sm:$0x1]
      %v7525 = vld [vmem:[%s14] sm:$0xff]
      %v7526 = vld [vmem:[%s14 + $0x8] sm:$0xff]
      %v7527 = vld [vmem:[%s14 + $0x10] sm:$0xff]
      %v7528 = vld [vmem:[%s14 + $0x18] sm:$0xff]
      %v7529 = vld [vmem:[%s15] sm:$0xff]
      %v7530 = vld [vmem:[%s15 + $0x8] sm:$0xff]
      %v7531 = vld [vmem:[%s15 + $0x10] sm:$0xff]
      %v7532 = vld [vmem:[%s15 + $0x18] sm:$0xff]
      %v7533 = vld [vmem:[%s16] sm:$0x1]
      %v7535 = vlaneseq
      %v7536 = vshrl.u32 %v7535, 7
      %v7537 = vsub.s32 0, %v7536
      %v7538 = vrot.slane %v7524, %v7537
      %v7541 = vsel %vm3483, %v7312, 0
      %v7544 = vsel %vm3483, %v7313, 0
      %v7547 = vsel %vm3483, %v7314, 0
      %v7550 = vsel %vm3483, %v7315, 0
      %v7553 = vsel %vm3483, %v7316, 0
      %v7556 = vsel %vm3483, %v7317, 0
      %v7559 = vsel %vm3483, %v7318, 0
      %v7562 = vsel %vm3483, %v7319, 0
      %v7565 = vsel %vm3483, %v7320, 0
      %v7568 = vsel %vm3483, %v7321, 0
      %v7571 = vsel %vm3483, %v7322, 0
      %v7574 = vsel %vm3483, %v7323, 0
      %v7577 = vsel %vm3483, %v7324, 0
      %v7580 = vsel %vm3483, %v7325, 0
      %v7583 = vsel %vm3483, %v7326, 0
      %v7586 = vsel %vm3483, %v7327, 0
      %v7589 = vsel %vm3483, %v7328, 0
      %v7592 = vsel %vm3483, %v7329, 0
      %v7595 = vsel %vm3483, %v7330, 0
      %v7598 = vsel %vm3483, %v7331, 0
      %v7601 = vsel %vm3483, %v7332, 0
      %v7604 = vsel %vm3483, %v7333, 0
      %v7607 = vsel %vm3483, %v7334, 0
      %v7610 = vsel %vm3483, %v7335, 0
      %v7613 = vsel %vm3483, %v7336, 0
      %v7616 = vsel %vm3483, %v7337, 0
      %v7619 = vsel %vm3483, %v7338, 0
      %v7622 = vsel %vm3483, %v7339, 0
      %v7625 = vsel %vm3483, %v7340, 0
      %v7628 = vsel %vm3483, %v7341, 0
      %v7631 = vsel %vm3483, %v7342, 0
      %v7634 = vsel %vm3483, %v7343, 0
      %7636 = vmatprep.subr.mxu0 0.0
      %7637 = vmatpush1.msra.mxu0 %v7520
      %7638 = vmatprep.subr.mxu0 0.0
      %7639 = vmatpush1.msra.mxu0 %v7521
      %7640 = vmatprep.subr.mxu0 0.0
      %7641 = vmatpush1.msra.mxu0 %v7522
      %7642 = vmatprep.subr.mxu0 0.0
      %7643 = vmatpush1.msra.mxu0 %v7523
      %7644 = vmatprep.subr.mxu0 0.0
      %7645 = vmatpush1.msra.mxu0 0.0
      %7646 = vmatprep.subr.mxu0 0.0
      %7647 = vmatpush1.msra.mxu0 0.0
      %7648 = vmatprep.subr.mxu0 0.0
      %7649 = vmatpush1.msra.mxu0 0.0
      %7650 = vmatprep.subr.mxu0 0.0
      %7651 = vmatpush1.msra.mxu0 0.0
      %7652 = vmatprep.subr.mxu0 0.0
      %7653 = vmatpush1.msra.mxu0 0.0
      %7654 = vmatprep.subr.mxu0 0.0
      %7655 = vmatpush1.msra.mxu0 0.0
      %7656 = vmatprep.subr.mxu0 0.0
      %7657 = vmatpush1.msra.mxu0 0.0
      %7658 = vmatprep.subr.mxu0 0.0
      %7659 = vmatpush1.msra.mxu0 0.0
      %7660 = vmatprep.subr.mxu0 0.0
      %7661 = vmatpush1.msra.mxu0 0.0
      %7662 = vmatprep.subr.mxu0 0.0
      %7663 = vmatpush1.msra.mxu0 0.0
      %7664 = vmatprep.subr.mxu0 0.0
      %7665 = vmatpush1.msra.mxu0 0.0
      %7666 = vmatprep.subr.mxu0 0.0
      %7667 = vmatpush1.msra.mxu0 0.0
      %7668 = vmatprep.subr.mxu0 0.0
      %7669 = vmatpush1.msra.mxu0 0.0
      %7670 = vmatprep.subr.mxu0 0.0
      %7671 = vmatpush1.msra.mxu0 0.0
      %7672 = vmatprep.subr.mxu0 0.0
      %7673 = vmatpush1.msra.mxu0 0.0
      %7674 = vmatprep.subr.mxu0 0.0
      %7675 = vmatpush1.msra.mxu0 0.0
      %7676 = vmatprep.subr.mxu0 0.0
      %7677 = vmatpush1.msra.mxu0 0.0
      %7678 = vmatprep.subr.mxu0 0.0
      %7679 = vmatpush1.msra.mxu0 0.0
      %7680 = vmatprep.subr.mxu0 0.0
      %7681 = vmatpush1.msra.mxu0 0.0
      %7682 = vmatprep.subr.mxu0 0.0
      %7683 = vmatpush1.msra.mxu0 0.0
      %7684 = vmatprep.subr.mxu0 0.0
      %7685 = vmatpush1.msra.mxu0 0.0
      %7686 = vmatprep.subr.mxu0 0.0
      %7687 = vmatpush1.msra.mxu0 0.0
      %7688 = vmatprep.subr.mxu0 0.0
      %7689 = vmatpush1.msra.mxu0 0.0
      %7690 = vmatprep.subr.mxu0 0.0
      %7691 = vmatpush1.msra.mxu0 0.0
      %7692 = vmatprep.subr.mxu0 0.0
      %7693 = vmatpush1.msra.mxu0 0.0
      %7694 = vmatprep.subr.mxu0 0.0
      %7695 = vmatpush1.msra.mxu0 0.0
      %7696 = vmatprep.subr.mxu0 0.0
      %7697 = vmatpush1.msra.mxu0 0.0
      %7698 = vmatprep.subr.mxu0 0.0
      %7699 = vmatpush1.msra.mxu0 0.0
      %7700 = vmatprep.mubr.f32.mxu0 0.0
      %7701 = vmatmul.mubr.f32.gmra.mrb[0].mxu0 %v7541
      %v7702 = vpop.f32.mrb[0].mxu0
      %v7703 = vadd.f32 %v7538, %v7702
      %v7704 = vpop.f32.mrb[0].mxu0
      %7705 = vmatprep.mubr.f32.mxu0 0.0
      %7706 = vmatmul.mubr.f32.gmra.mrb[0].mxu0 %v7544
      %v7707 = vpop.f32.mrb[0].mxu0
      %v7708 = vadd.f32 %v7538, %v7707
      %v7709 = vpop.f32.mrb[0].mxu0
      %7710 = vmatprep.mubr.f32.mxu0 0.0
      %7711 = vmatmul.mubr.f32.gmra.mrb[0].mxu0 %v7547
      %v7712 = vpop.f32.mrb[0].mxu0
      %v7713 = vadd.f32 %v7538, %v7712
      %v7714 = vpop.f32.mrb[0].mxu0
      %7715 = vmatprep.mubr.f32.mxu0 0.0
      %7716 = vmatmul.mubr.f32.gmra.mrb[0].mxu0 %v7550
      %v7717 = vpop.f32.mrb[0].mxu0
      %v7718 = vadd.f32 %v7538, %v7717
      %v7719 = vpop.f32.mrb[0].mxu0
      %7720 = vmatprep.mubr.f32.mxu0 0.0
      %7721 = vmatmul.mubr.f32.gmra.mrb[0].mxu0 %v7553
      %v7722 = vpop.f32.mrb[0].mxu0
      %v7723 = vadd.f32 %v7538, %v7722
      %v7724 = vpop.f32.mrb[0].mxu0
      %7725 = vmatprep.mubr.f32.mxu0 0.0
      %7726 = vmatmul.mubr.f32.gmra.mrb[0].mxu0 %v7556
      %v7727 = vpop.f32.mrb[0].mxu0
      %v7728 = vadd.f32 %v7538, %v7727
      %v7729 = vpop.f32.mrb[0].mxu0
      %7730 = vmatprep.mubr.f32.mxu0 0.0
      %7731 = vmatmul.mubr.f32.gmra.mrb[0].mxu0 %v7559
      %v7732 = vpop.f32.mrb[0].mxu0
      %v7733 = vadd.f32 %v7538, %v7732
      %v7734 = vpop.f32.mrb[0].mxu0
      %7735 = vmatprep.mubr.f32.mxu0 0.0
      %7736 = vmatmul.mubr.f32.gmra.mrb[0].mxu0 %v7562
      %v7737 = vpop.f32.mrb[0].mxu0
      %v7738 = vadd.f32 %v7538, %v7737
      %v7739 = vpop.f32.mrb[0].mxu0
      %7740 = vmatprep.mubr.f32.mxu0 0.0
      %7741 = vmatmul.mubr.f32.gmra.mrb[0].mxu0 %v7565
      %v7742 = vpop.f32.mrb[0].mxu0
      %v7743 = vadd.f32 %v7538, %v7742
      %v7744 = vpop.f32.mrb[0].mxu0
      %7745 = vmatprep.mubr.f32.mxu0 0.0
      %7746 = vmatmul.mubr.f32.gmra.mrb[0].mxu0 %v7568
      %v7747 = vpop.f32.mrb[0].mxu0
      %v7748 = vadd.f32 %v7538, %v7747
      %v7749 = vpop.f32.mrb[0].mxu0
      %7750 = vmatprep.mubr.f32.mxu0 0.0
      %7751 = vmatmul.mubr.f32.gmra.mrb[0].mxu0 %v7571
      %v7752 = vpop.f32.mrb[0].mxu0
      %v7753 = vadd.f32 %v7538, %v7752
      %v7754 = vpop.f32.mrb[0].mxu0
      %7755 = vmatprep.mubr.f32.mxu0 0.0
      %7756 = vmatmul.mubr.f32.gmra.mrb[0].mxu0 %v7574
      %v7757 = vpop.f32.mrb[0].mxu0
      %v7758 = vadd.f32 %v7538, %v7757
      %v7759 = vpop.f32.mrb[0].mxu0
      %7760 = vmatprep.mubr.f32.mxu0 0.0
      %7761 = vmatmul.mubr.f32.gmra.mrb[0].mxu0 %v7577
      %v7762 = vpop.f32.mrb[0].mxu0
      %v7763 = vadd.f32 %v7538, %v7762
      %v7764 = vpop.f32.mrb[0].mxu0
      %7765 = vmatprep.mubr.f32.mxu0 0.0
      %7766 = vmatmul.mubr.f32.gmra.mrb[0].mxu0 %v7580
      %v7767 = vpop.f32.mrb[0].mxu0
      %v7768 = vadd.f32 %v7538, %v7767
      %v7769 = vpop.f32.mrb[0].mxu0
      %7770 = vmatprep.mubr.f32.mxu0 0.0
      %7771 = vmatmul.mubr.f32.gmra.mrb[0].mxu0 %v7583
      %v7772 = vpop.f32.mrb[0].mxu0
      %v7773 = vadd.f32 %v7538, %v7772
      %v7774 = vpop.f32.mrb[0].mxu0
      %7775 = vmatprep.mubr.f32.mxu0 0.0
      %7776 = vmatmul.mubr.f32.gmra.mrb[0].mxu0 %v7586
      %v7777 = vpop.f32.mrb[0].mxu0
      %v7778 = vadd.f32 %v7538, %v7777
      %v7779 = vpop.f32.mrb[0].mxu0
      %7780 = vmatprep.mubr.f32.mxu0 0.0
      %7781 = vmatmul.mubr.f32.gmra.mrb[0].mxu0 %v7589
      %v7782 = vpop.f32.mrb[0].mxu0
      %v7783 = vadd.f32 %v7538, %v7782
      %v7784 = vpop.f32.mrb[0].mxu0
      %7785 = vmatprep.mubr.f32.mxu0 0.0
      %7786 = vmatmul.mubr.f32.gmra.mrb[0].mxu0 %v7592
      %v7787 = vpop.f32.mrb[0].mxu0
      %v7788 = vadd.f32 %v7538, %v7787
      %v7789 = vpop.f32.mrb[0].mxu0
      %7790 = vmatprep.mubr.f32.mxu0 0.0
      %7791 = vmatmul.mubr.f32.gmra.mrb[0].mxu0 %v7595
      %v7792 = vpop.f32.mrb[0].mxu0
      %v7793 = vadd.f32 %v7538, %v7792
      %v7794 = vpop.f32.mrb[0].mxu0
      %7795 = vmatprep.mubr.f32.mxu0 0.0
      %7796 = vmatmul.mubr.f32.gmra.mrb[0].mxu0 %v7598
      %v7797 = vpop.f32.mrb[0].mxu0
      %v7798 = vadd.f32 %v7538, %v7797
      %v7799 = vpop.f32.mrb[0].mxu0
      %7800 = vmatprep.mubr.f32.mxu0 0.0
      %7801 = vmatmul.mubr.f32.gmra.mrb[0].mxu0 %v7601
      %v7802 = vpop.f32.mrb[0].mxu0
      %v7803 = vadd.f32 %v7538, %v7802
      %v7804 = vpop.f32.mrb[0].mxu0
      %7805 = vmatprep.mubr.f32.mxu0 0.0
      %7806 = vmatmul.mubr.f32.gmra.mrb[0].mxu0 %v7604
      %v7807 = vpop.f32.mrb[0].mxu0
      %v7808 = vadd.f32 %v7538, %v7807
      %v7809 = vpop.f32.mrb[0].mxu0
      %7810 = vmatprep.mubr.f32.mxu0 0.0
      %7811 = vmatmul.mubr.f32.gmra.mrb[0].mxu0 %v7607
      %v7812 = vpop.f32.mrb[0].mxu0
      %v7813 = vadd.f32 %v7538, %v7812
      %v7814 = vpop.f32.mrb[0].mxu0
      %7815 = vmatprep.mubr.f32.mxu0 0.0
      %7816 = vmatmul.mubr.f32.gmra.mrb[0].mxu0 %v7610
      %v7817 = vpop.f32.mrb[0].mxu0
      %v7818 = vadd.f32 %v7538, %v7817
      %v7819 = vpop.f32.mrb[0].mxu0
      %7820 = vmatprep.mubr.f32.mxu0 0.0
      %7821 = vmatmul.mubr.f32.gmra.mrb[0].mxu0 %v7613
      %v7822 = vpop.f32.mrb[0].mxu0
      %v7823 = vadd.f32 %v7538, %v7822
      %v7824 = vpop.f32.mrb[0].mxu0
      %7825 = vmatprep.mubr.f32.mxu0 0.0
      %7826 = vmatmul.mubr.f32.gmra.mrb[0].mxu0 %v7616
      %v7827 = vpop.f32.mrb[0].mxu0
      %v7828 = vadd.f32 %v7538, %v7827
      %v7829 = vpop.f32.mrb[0].mxu0
      %7830 = vmatprep.mubr.f32.mxu0 0.0
      %7831 = vmatmul.mubr.f32.gmra.mrb[0].mxu0 %v7619
      %v7832 = vpop.f32.mrb[0].mxu0
      %v7833 = vadd.f32 %v7538, %v7832
      %v7834 = vpop.f32.mrb[0].mxu0
      %7835 = vmatprep.mubr.f32.mxu0 0.0
      %7836 = vmatmul.mubr.f32.gmra.mrb[0].mxu0 %v7622
      %v7837 = vpop.f32.mrb[0].mxu0
      %v7838 = vadd.f32 %v7538, %v7837
      %v7839 = vpop.f32.mrb[0].mxu0
      %7840 = vmatprep.mubr.f32.mxu0 0.0
      %7841 = vmatmul.mubr.f32.gmra.mrb[0].mxu0 %v7625
      %v7842 = vpop.f32.mrb[0].mxu0
      %v7843 = vadd.f32 %v7538, %v7842
      %v7844 = vpop.f32.mrb[0].mxu0
      %7845 = vmatprep.mubr.f32.mxu0 0.0
      %7846 = vmatmul.mubr.f32.gmra.mrb[0].mxu0 %v7628
      %v7847 = vpop.f32.mrb[0].mxu0
      %v7848 = vadd.f32 %v7538, %v7847
      %v7849 = vpop.f32.mrb[0].mxu0
      %7850 = vmatprep.mubr.f32.mxu0 0.0
      %7851 = vmatmul.mubr.f32.gmra.mrb[0].mxu0 %v7631
      %v7852 = vpop.f32.mrb[0].mxu0
      %v7853 = vadd.f32 %v7538, %v7852
      %v7854 = vpop.f32.mrb[0].mxu0
      %7855 = vmatprep.mubr.f32.mxu0 0.0
      %7856 = vmatmul.mubr.f32.gmra.mrb[0].mxu0 %v7634
      %v7857 = vpop.f32.mrb[0].mxu0
      %v7858 = vadd.f32 %v7538, %v7857
      %v7859 = vpop.f32.mrb[0].mxu0
      %7860 = vdwg.mxu0
      %v7861 = vmax.f32 %v7703, 0.0
      %v7862 = vmax.f32 %v7708, 0.0
      %v7863 = vmax.f32 %v7713, 0.0
      %v7864 = vmax.f32 %v7718, 0.0
      %v7865 = vmax.f32 %v7723, 0.0
      %v7866 = vmax.f32 %v7728, 0.0
      %v7867 = vmax.f32 %v7733, 0.0
      %v7868 = vmax.f32 %v7738, 0.0
      %v7869 = vmax.f32 %v7743, 0.0
      %v7870 = vmax.f32 %v7748, 0.0
      %v7871 = vmax.f32 %v7753, 0.0
      %v7872 = vmax.f32 %v7758, 0.0
      %v7873 = vmax.f32 %v7763, 0.0
      %v7874 = vmax.f32 %v7768, 0.0
      %v7875 = vmax.f32 %v7773, 0.0
      %v7876 = vmax.f32 %v7778, 0.0
      %v7877 = vmax.f32 %v7783, 0.0
      %v7878 = vmax.f32 %v7788, 0.0
      %v7879 = vmax.f32 %v7793, 0.0
      %v7880 = vmax.f32 %v7798, 0.0
      %v7881 = vmax.f32 %v7803, 0.0
      %v7882 = vmax.f32 %v7808, 0.0
      %v7883 = vmax.f32 %v7813, 0.0
      %v7884 = vmax.f32 %v7818, 0.0
      %v7885 = vmax.f32 %v7823, 0.0
      %v7886 = vmax.f32 %v7828, 0.0
      %v7887 = vmax.f32 %v7833, 0.0
      %v7888 = vmax.f32 %v7838, 0.0
      %v7889 = vmax.f32 %v7843, 0.0
      %v7890 = vmax.f32 %v7848, 0.0
      %v7891 = vmax.f32 %v7853, 0.0
      %v7892 = vmax.f32 %v7858, 0.0
      %v7893 = vlaneseq
      %v7894 = vshrl.u32 %v7893, 7
      %v7895 = vsub.s32 0, %v7894
      %v7896 = vrot.slane %v7861, %v7895
      %v7897 = vlaneseq
      %v7898 = vshrl.u32 %v7897, 7
      %v7899 = vsub.s32 0, %v7898
      %v7900 = vrot.slane %v7863, %v7899
      %v7901 = vlaneseq
      %v7902 = vshrl.u32 %v7901, 7
      %v7903 = vsub.s32 0, %v7902
      %v7904 = vrot.slane %v7865, %v7903
      %v7905 = vlaneseq
      %v7906 = vshrl.u32 %v7905, 7
      %v7907 = vsub.s32 0, %v7906
      %v7908 = vrot.slane %v7867, %v7907
      %v7909 = vlaneseq
      %v7910 = vshrl.u32 %v7909, 7
      %v7911 = vsub.s32 0, %v7910
      %v7912 = vrot.slane %v7869, %v7911
      %v7913 = vlaneseq
      %v7914 = vshrl.u32 %v7913, 7
      %v7915 = vsub.s32 0, %v7914
      %v7916 = vrot.slane %v7871, %v7915
      %v7917 = vlaneseq
      %v7918 = vshrl.u32 %v7917, 7
      %v7919 = vsub.s32 0, %v7918
      %v7920 = vrot.slane %v7873, %v7919
      %v7921 = vlaneseq
      %v7922 = vshrl.u32 %v7921, 7
      %v7923 = vsub.s32 0, %v7922
      %v7924 = vrot.slane %v7875, %v7923
      %v7925 = vlaneseq
      %v7926 = vshrl.u32 %v7925, 7
      %v7927 = vsub.s32 0, %v7926
      %v7928 = vrot.slane %v7877, %v7927
      %v7929 = vlaneseq
      %v7930 = vshrl.u32 %v7929, 7
      %v7931 = vsub.s32 0, %v7930
      %v7932 = vrot.slane %v7879, %v7931
      %v7933 = vlaneseq
      %v7934 = vshrl.u32 %v7933, 7
      %v7935 = vsub.s32 0, %v7934
      %v7936 = vrot.slane %v7881, %v7935
      %v7937 = vlaneseq
      %v7938 = vshrl.u32 %v7937, 7
      %v7939 = vsub.s32 0, %v7938
      %v7940 = vrot.slane %v7883, %v7939
      %v7941 = vlaneseq
      %v7942 = vshrl.u32 %v7941, 7
      %v7943 = vsub.s32 0, %v7942
      %v7944 = vrot.slane %v7885, %v7943
      %v7945 = vlaneseq
      %v7946 = vshrl.u32 %v7945, 7
      %v7947 = vsub.s32 0, %v7946
      %v7948 = vrot.slane %v7887, %v7947
      %v7949 = vlaneseq
      %v7950 = vshrl.u32 %v7949, 7
      %v7951 = vsub.s32 0, %v7950
      %v7952 = vrot.slane %v7889, %v7951
      %v7953 = vlaneseq
      %v7954 = vshrl.u32 %v7953, 7
      %v7955 = vsub.s32 0, %v7954
      %v7956 = vrot.slane %v7891, %v7955
      %7959 = vrot.lane.b32.xlu0 %v7861, 96
      %v7960 = vpop.permute.xlu0 %7959
      %7961 = vrot.lane.b32.xlu0 %v7862, 96
      %v7962 = vpop.permute.xlu0 %7961
      %v7965 = vmul.f32 %v7896, %v7960
      %v7966 = vmul.f32 %v7896, %v7962
      %v7967 = vmul.f32 %v7900, %v7960
      %v7968 = vmul.f32 %v7900, %v7962
      %v7969 = vmul.f32 %v7904, %v7960
      %v7970 = vmul.f32 %v7904, %v7962
      %v7971 = vmul.f32 %v7908, %v7960
      %v7972 = vmul.f32 %v7908, %v7962
      %v7973 = vmul.f32 %v7912, %v7960
      %v7974 = vmul.f32 %v7912, %v7962
      %v7975 = vmul.f32 %v7916, %v7960
      %v7976 = vmul.f32 %v7916, %v7962
      %v7977 = vmul.f32 %v7920, %v7960
      %v7978 = vmul.f32 %v7920, %v7962
      %v7979 = vmul.f32 %v7924, %v7960
      %v7980 = vmul.f32 %v7924, %v7962
      %v7981 = vmul.f32 %v7928, %v7960
      %v7982 = vmul.f32 %v7928, %v7962
      %v7983 = vmul.f32 %v7932, %v7960
      %v7984 = vmul.f32 %v7932, %v7962
      %v7985 = vmul.f32 %v7936, %v7960
      %v7986 = vmul.f32 %v7936, %v7962
      %v7987 = vmul.f32 %v7940, %v7960
      %v7988 = vmul.f32 %v7940, %v7962
      %v7989 = vmul.f32 %v7944, %v7960
      %v7990 = vmul.f32 %v7944, %v7962
      %v7991 = vmul.f32 %v7948, %v7960
      %v7992 = vmul.f32 %v7948, %v7962
      %v7993 = vmul.f32 %v7952, %v7960
      %v7994 = vmul.f32 %v7952, %v7962
      %v7995 = vmul.f32 %v7956, %v7960
      %v7996 = vmul.f32 %v7956, %v7962
      %v7997 = vlaneseq
      %v7998 = vshrl.u32 %v7997, 7
      %v7999 = vsub.s32 1, %v7998
      %v8000 = vrot.slane %v7861, %v7999
      %v8001 = vlaneseq
      %v8002 = vshrl.u32 %v8001, 7
      %v8003 = vsub.s32 1, %v8002
      %v8004 = vrot.slane %v7863, %v8003
      %v8005 = vlaneseq
      %v8006 = vshrl.u32 %v8005, 7
      %v8007 = vsub.s32 1, %v8006
      %v8008 = vrot.slane %v7865, %v8007
      %v8009 = vlaneseq
      %v8010 = vshrl.u32 %v8009, 7
      %v8011 = vsub.s32 1, %v8010
      %v8012 = vrot.slane %v7867, %v8011
      %v8013 = vlaneseq
      %v8014 = vshrl.u32 %v8013, 7
      %v8015 = vsub.s32 1, %v8014
      %v8016 = vrot.slane %v7869, %v8015
      %v8017 = vlaneseq
      %v8018 = vshrl.u32 %v8017, 7
      %v8019 = vsub.s32 1, %v8018
      %v8020 = vrot.slane %v7871, %v8019
      %v8021 = vlaneseq
      %v8022 = vshrl.u32 %v8021, 7
      %v8023 = vsub.s32 1, %v8022
      %v8024 = vrot.slane %v7873, %v8023
      %v8025 = vlaneseq
      %v8026 = vshrl.u32 %v8025, 7
      %v8027 = vsub.s32 1, %v8026
      %v8028 = vrot.slane %v7875, %v8027
      %v8029 = vlaneseq
      %v8030 = vshrl.u32 %v8029, 7
      %v8031 = vsub.s32 1, %v8030
      %v8032 = vrot.slane %v7877, %v8031
      %v8033 = vlaneseq
      %v8034 = vshrl.u32 %v8033, 7
      %v8035 = vsub.s32 1, %v8034
      %v8036 = vrot.slane %v7879, %v8035
      %v8037 = vlaneseq
      %v8038 = vshrl.u32 %v8037, 7
      %v8039 = vsub.s32 1, %v8038
      %v8040 = vrot.slane %v7881, %v8039
      %v8041 = vlaneseq
      %v8042 = vshrl.u32 %v8041, 7
      %v8043 = vsub.s32 1, %v8042
      %v8044 = vrot.slane %v7883, %v8043
      %v8045 = vlaneseq
      %v8046 = vshrl.u32 %v8045, 7
      %v8047 = vsub.s32 1, %v8046
      %v8048 = vrot.slane %v7885, %v8047
      %v8049 = vlaneseq
      %v8050 = vshrl.u32 %v8049, 7
      %v8051 = vsub.s32 1, %v8050
      %v8052 = vrot.slane %v7887, %v8051
      %v8053 = vlaneseq
      %v8054 = vshrl.u32 %v8053, 7
      %v8055 = vsub.s32 1, %v8054
      %v8056 = vrot.slane %v7889, %v8055
      %v8057 = vlaneseq
      %v8058 = vshrl.u32 %v8057, 7
      %v8059 = vsub.s32 1, %v8058
      %v8060 = vrot.slane %v7891, %v8059
      %8063 = vrot.lane.b32.xlu0 %v7863, 96
      %v8064 = vpop.permute.xlu0 %8063
      %8065 = vrot.lane.b32.xlu0 %v7864, 96
      %v8066 = vpop.permute.xlu0 %8065
      %v8069 = vmul.f32 %v8000, %v8064
      %v8070 = vmul.f32 %v8000, %v8066
      %v8071 = vmul.f32 %v8004, %v8064
      %v8072 = vmul.f32 %v8004, %v8066
      %v8073 = vmul.f32 %v8008, %v8064
      %v8074 = vmul.f32 %v8008, %v8066
      %v8075 = vmul.f32 %v8012, %v8064
      %v8076 = vmul.f32 %v8012, %v8066
      %v8077 = vmul.f32 %v8016, %v8064
      %v8078 = vmul.f32 %v8016, %v8066
      %v8079 = vmul.f32 %v8020, %v8064
      %v8080 = vmul.f32 %v8020, %v8066
      %v8081 = vmul.f32 %v8024, %v8064
      %v8082 = vmul.f32 %v8024, %v8066
      %v8083 = vmul.f32 %v8028, %v8064
      %v8084 = vmul.f32 %v8028, %v8066
      %v8085 = vmul.f32 %v8032, %v8064
      %v8086 = vmul.f32 %v8032, %v8066
      %v8087 = vmul.f32 %v8036, %v8064
      %v8088 = vmul.f32 %v8036, %v8066
      %v8089 = vmul.f32 %v8040, %v8064
      %v8090 = vmul.f32 %v8040, %v8066
      %v8091 = vmul.f32 %v8044, %v8064
      %v8092 = vmul.f32 %v8044, %v8066
      %v8093 = vmul.f32 %v8048, %v8064
      %v8094 = vmul.f32 %v8048, %v8066
      %v8095 = vmul.f32 %v8052, %v8064
      %v8096 = vmul.f32 %v8052, %v8066
      %v8097 = vmul.f32 %v8056, %v8064
      %v8098 = vmul.f32 %v8056, %v8066
      %v8099 = vmul.f32 %v8060, %v8064
      %v8100 = vmul.f32 %v8060, %v8066
      %v8101 = vadd.f32 %v7965, %v8069
      %v8102 = vadd.f32 %v7966, %v8070
      %v8103 = vadd.f32 %v7967, %v8071
      %v8104 = vadd.f32 %v7968, %v8072
      %v8105 = vadd.f32 %v7969, %v8073
      %v8106 = vadd.f32 %v7970, %v8074
      %v8107 = vadd.f32 %v7971, %v8075
      %v8108 = vadd.f32 %v7972, %v8076
      %v8109 = vadd.f32 %v7973, %v8077
      %v8110 = vadd.f32 %v7974, %v8078
      %v8111 = vadd.f32 %v7975, %v8079
      %v8112 = vadd.f32 %v7976, %v8080
      %v8113 = vadd.f32 %v7977, %v8081
      %v8114 = vadd.f32 %v7978, %v8082
      %v8115 = vadd.f32 %v7979, %v8083
      %v8116 = vadd.f32 %v7980, %v8084
      %v8117 = vadd.f32 %v7981, %v8085
      %v8118 = vadd.f32 %v7982, %v8086
      %v8119 = vadd.f32 %v7983, %v8087
      %v8120 = vadd.f32 %v7984, %v8088
      %v8121 = vadd.f32 %v7985, %v8089
      %v8122 = vadd.f32 %v7986, %v8090
      %v8123 = vadd.f32 %v7987, %v8091
      %v8124 = vadd.f32 %v7988, %v8092
      %v8125 = vadd.f32 %v7989, %v8093
      %v8126 = vadd.f32 %v7990, %v8094
      %v8127 = vadd.f32 %v7991, %v8095
      %v8128 = vadd.f32 %v7992, %v8096
      %v8129 = vadd.f32 %v7993, %v8097
      %v8130 = vadd.f32 %v7994, %v8098
      %v8131 = vadd.f32 %v7995, %v8099
      %v8132 = vadd.f32 %v7996, %v8100
      %v8133 = vlaneseq
      %v8134 = vshrl.u32 %v8133, 7
      %v8135 = vsub.s32 2, %v8134
      %v8136 = vrot.slane %v7861, %v8135
      %v8137 = vlaneseq
      %v8138 = vshrl.u32 %v8137, 7
      %v8139 = vsub.s32 2, %v8138
      %v8140 = vrot.slane %v7863, %v8139
      %v8141 = vlaneseq
      %v8142 = vshrl.u32 %v8141, 7
      %v8143 = vsub.s32 2, %v8142
      %v8144 = vrot.slane %v7865, %v8143
      %v8145 = vlaneseq
      %v8146 = vshrl.u32 %v8145, 7
      %v8147 = vsub.s32 2, %v8146
      %v8148 = vrot.slane %v7867, %v8147
      %v8149 = vlaneseq
      %v8150 = vshrl.u32 %v8149, 7
      %v8151 = vsub.s32 2, %v8150
      %v8152 = vrot.slane %v7869, %v8151
      %v8153 = vlaneseq
      %v8154 = vshrl.u32 %v8153, 7
      %v8155 = vsub.s32 2, %v8154
      %v8156 = vrot.slane %v7871, %v8155
      %v8157 = vlaneseq
      %v8158 = vshrl.u32 %v8157, 7
      %v8159 = vsub.s32 2, %v8158
      %v8160 = vrot.slane %v7873, %v8159
      %v8161 = vlaneseq
      %v8162 = vshrl.u32 %v8161, 7
      %v8163 = vsub.s32 2, %v8162
      %v8164 = vrot.slane %v7875, %v8163
      %v8165 = vlaneseq
      %v8166 = vshrl.u32 %v8165, 7
      %v8167 = vsub.s32 2, %v8166
      %v8168 = vrot.slane %v7877, %v8167
      %v8169 = vlaneseq
      %v8170 = vshrl.u32 %v8169, 7
      %v8171 = vsub.s32 2, %v8170
      %v8172 = vrot.slane %v7879, %v8171
      %v8173 = vlaneseq
      %v8174 = vshrl.u32 %v8173, 7
      %v8175 = vsub.s32 2, %v8174
      %v8176 = vrot.slane %v7881, %v8175
      %v8177 = vlaneseq
      %v8178 = vshrl.u32 %v8177, 7
      %v8179 = vsub.s32 2, %v8178
      %v8180 = vrot.slane %v7883, %v8179
      %v8181 = vlaneseq
      %v8182 = vshrl.u32 %v8181, 7
      %v8183 = vsub.s32 2, %v8182
      %v8184 = vrot.slane %v7885, %v8183
      %v8185 = vlaneseq
      %v8186 = vshrl.u32 %v8185, 7
      %v8187 = vsub.s32 2, %v8186
      %v8188 = vrot.slane %v7887, %v8187
      %v8189 = vlaneseq
      %v8190 = vshrl.u32 %v8189, 7
      %v8191 = vsub.s32 2, %v8190
      %v8192 = vrot.slane %v7889, %v8191
      %v8193 = vlaneseq
      %v8194 = vshrl.u32 %v8193, 7
      %v8195 = vsub.s32 2, %v8194
      %v8196 = vrot.slane %v7891, %v8195
      %8199 = vrot.lane.b32.xlu0 %v7865, 96
      %v8200 = vpop.permute.xlu0 %8199
      %8201 = vrot.lane.b32.xlu0 %v7866, 96
      %v8202 = vpop.permute.xlu0 %8201
      %v8205 = vmul.f32 %v8136, %v8200
      %v8206 = vmul.f32 %v8136, %v8202
      %v8207 = vmul.f32 %v8140, %v8200
      %v8208 = vmul.f32 %v8140, %v8202
      %v8209 = vmul.f32 %v8144, %v8200
      %v8210 = vmul.f32 %v8144, %v8202
      %v8211 = vmul.f32 %v8148, %v8200
      %v8212 = vmul.f32 %v8148, %v8202
      %v8213 = vmul.f32 %v8152, %v8200
      %v8214 = vmul.f32 %v8152, %v8202
      %v8215 = vmul.f32 %v8156, %v8200
      %v8216 = vmul.f32 %v8156, %v8202
      %v8217 = vmul.f32 %v8160, %v8200
      %v8218 = vmul.f32 %v8160, %v8202
      %v8219 = vmul.f32 %v8164, %v8200
      %v8220 = vmul.f32 %v8164, %v8202
      %v8221 = vmul.f32 %v8168, %v8200
      %v8222 = vmul.f32 %v8168, %v8202
      %v8223 = vmul.f32 %v8172, %v8200
      %v8224 = vmul.f32 %v8172, %v8202
      %v8225 = vmul.f32 %v8176, %v8200
      %v8226 = vmul.f32 %v8176, %v8202
      %v8227 = vmul.f32 %v8180, %v8200
      %v8228 = vmul.f32 %v8180, %v8202
      %v8229 = vmul.f32 %v8184, %v8200
      %v8230 = vmul.f32 %v8184, %v8202
      %v8231 = vmul.f32 %v8188, %v8200
      %v8232 = vmul.f32 %v8188, %v8202
      %v8233 = vmul.f32 %v8192, %v8200
      %v8234 = vmul.f32 %v8192, %v8202
      %v8235 = vmul.f32 %v8196, %v8200
      %v8236 = vmul.f32 %v8196, %v8202
      %v8237 = vadd.f32 %v8101, %v8205
      %v8238 = vadd.f32 %v8102, %v8206
      %v8239 = vadd.f32 %v8103, %v8207
      %v8240 = vadd.f32 %v8104, %v8208
      %v8241 = vadd.f32 %v8105, %v8209
      %v8242 = vadd.f32 %v8106, %v8210
      %v8243 = vadd.f32 %v8107, %v8211
      %v8244 = vadd.f32 %v8108, %v8212
      %v8245 = vadd.f32 %v8109, %v8213
      %v8246 = vadd.f32 %v8110, %v8214
      %v8247 = vadd.f32 %v8111, %v8215
      %v8248 = vadd.f32 %v8112, %v8216
      %v8249 = vadd.f32 %v8113, %v8217
      %v8250 = vadd.f32 %v8114, %v8218
      %v8251 = vadd.f32 %v8115, %v8219
      %v8252 = vadd.f32 %v8116, %v8220
      %v8253 = vadd.f32 %v8117, %v8221
      %v8254 = vadd.f32 %v8118, %v8222
      %v8255 = vadd.f32 %v8119, %v8223
      %v8256 = vadd.f32 %v8120, %v8224
      %v8257 = vadd.f32 %v8121, %v8225
      %v8258 = vadd.f32 %v8122, %v8226
      %v8259 = vadd.f32 %v8123, %v8227
      %v8260 = vadd.f32 %v8124, %v8228
      %v8261 = vadd.f32 %v8125, %v8229
      %v8262 = vadd.f32 %v8126, %v8230
      %v8263 = vadd.f32 %v8127, %v8231
      %v8264 = vadd.f32 %v8128, %v8232
      %v8265 = vadd.f32 %v8129, %v8233
      %v8266 = vadd.f32 %v8130, %v8234
      %v8267 = vadd.f32 %v8131, %v8235
      %v8268 = vadd.f32 %v8132, %v8236
      %v8269 = vlaneseq
      %v8270 = vshrl.u32 %v8269, 7
      %v8271 = vsub.s32 3, %v8270
      %v8272 = vrot.slane %v7861, %v8271
      %v8273 = vlaneseq
      %v8274 = vshrl.u32 %v8273, 7
      %v8275 = vsub.s32 3, %v8274
      %v8276 = vrot.slane %v7863, %v8275
      %v8277 = vlaneseq
      %v8278 = vshrl.u32 %v8277, 7
      %v8279 = vsub.s32 3, %v8278
      %v8280 = vrot.slane %v7865, %v8279
      %v8281 = vlaneseq
      %v8282 = vshrl.u32 %v8281, 7
      %v8283 = vsub.s32 3, %v8282
      %v8284 = vrot.slane %v7867, %v8283
      %v8285 = vlaneseq
      %v8286 = vshrl.u32 %v8285, 7
      %v8287 = vsub.s32 3, %v8286
      %v8288 = vrot.slane %v7869, %v8287
      %v8289 = vlaneseq
      %v8290 = vshrl.u32 %v8289, 7
      %v8291 = vsub.s32 3, %v8290
      %v8292 = vrot.slane %v7871, %v8291
      %v8293 = vlaneseq
      %v8294 = vshrl.u32 %v8293, 7
      %v8295 = vsub.s32 3, %v8294
      %v8296 = vrot.slane %v7873, %v8295
      %v8297 = vlaneseq
      %v8298 = vshrl.u32 %v8297, 7
      %v8299 = vsub.s32 3, %v8298
      %v8300 = vrot.slane %v7875, %v8299
      %v8301 = vlaneseq
      %v8302 = vshrl.u32 %v8301, 7
      %v8303 = vsub.s32 3, %v8302
      %v8304 = vrot.slane %v7877, %v8303
      %v8305 = vlaneseq
      %v8306 = vshrl.u32 %v8305, 7
      %v8307 = vsub.s32 3, %v8306
      %v8308 = vrot.slane %v7879, %v8307
      %v8309 = vlaneseq
      %v8310 = vshrl.u32 %v8309, 7
      %v8311 = vsub.s32 3, %v8310
      %v8312 = vrot.slane %v7881, %v8311
      %v8313 = vlaneseq
      %v8314 = vshrl.u32 %v8313, 7
      %v8315 = vsub.s32 3, %v8314
      %v8316 = vrot.slane %v7883, %v8315
      %v8317 = vlaneseq
      %v8318 = vshrl.u32 %v8317, 7
      %v8319 = vsub.s32 3, %v8318
      %v8320 = vrot.slane %v7885, %v8319
      %v8321 = vlaneseq
      %v8322 = vshrl.u32 %v8321, 7
      %v8323 = vsub.s32 3, %v8322
      %v8324 = vrot.slane %v7887, %v8323
      %v8325 = vlaneseq
      %v8326 = vshrl.u32 %v8325, 7
      %v8327 = vsub.s32 3, %v8326
      %v8328 = vrot.slane %v7889, %v8327
      %v8329 = vlaneseq
      %v8330 = vshrl.u32 %v8329, 7
      %v8331 = vsub.s32 3, %v8330
      %v8332 = vrot.slane %v7891, %v8331
      %8335 = vrot.lane.b32.xlu0 %v7867, 96
      %v8336 = vpop.permute.xlu0 %8335
      %8337 = vrot.lane.b32.xlu0 %v7868, 96
      %v8338 = vpop.permute.xlu0 %8337
      %v8341 = vmul.f32 %v8272, %v8336
      %v8342 = vmul.f32 %v8272, %v8338
      %v8343 = vmul.f32 %v8276, %v8336
      %v8344 = vmul.f32 %v8276, %v8338
      %v8345 = vmul.f32 %v8280, %v8336
      %v8346 = vmul.f32 %v8280, %v8338
      %v8347 = vmul.f32 %v8284, %v8336
      %v8348 = vmul.f32 %v8284, %v8338
      %v8349 = vmul.f32 %v8288, %v8336
      %v8350 = vmul.f32 %v8288, %v8338
      %v8351 = vmul.f32 %v8292, %v8336
      %v8352 = vmul.f32 %v8292, %v8338
      %v8353 = vmul.f32 %v8296, %v8336
      %v8354 = vmul.f32 %v8296, %v8338
      %v8355 = vmul.f32 %v8300, %v8336
      %v8356 = vmul.f32 %v8300, %v8338
      %v8357 = vmul.f32 %v8304, %v8336
      %v8358 = vmul.f32 %v8304, %v8338
      %v8359 = vmul.f32 %v8308, %v8336
      %v8360 = vmul.f32 %v8308, %v8338
      %v8361 = vmul.f32 %v8312, %v8336
      %v8362 = vmul.f32 %v8312, %v8338
      %v8363 = vmul.f32 %v8316, %v8336
      %v8364 = vmul.f32 %v8316, %v8338
      %v8365 = vmul.f32 %v8320, %v8336
      %v8366 = vmul.f32 %v8320, %v8338
      %v8367 = vmul.f32 %v8324, %v8336
      %v8368 = vmul.f32 %v8324, %v8338
      %v8369 = vmul.f32 %v8328, %v8336
      %v8370 = vmul.f32 %v8328, %v8338
      %v8371 = vmul.f32 %v8332, %v8336
      %v8372 = vmul.f32 %v8332, %v8338
      %v8373 = vadd.f32 %v8237, %v8341
      %v8374 = vadd.f32 %v8238, %v8342
      %v8375 = vadd.f32 %v8239, %v8343
      %v8376 = vadd.f32 %v8240, %v8344
      %v8377 = vadd.f32 %v8241, %v8345
      %v8378 = vadd.f32 %v8242, %v8346
      %v8379 = vadd.f32 %v8243, %v8347
      %v8380 = vadd.f32 %v8244, %v8348
      %v8381 = vadd.f32 %v8245, %v8349
      %v8382 = vadd.f32 %v8246, %v8350
      %v8383 = vadd.f32 %v8247, %v8351
      %v8384 = vadd.f32 %v8248, %v8352
      %v8385 = vadd.f32 %v8249, %v8353
      %v8386 = vadd.f32 %v8250, %v8354
      %v8387 = vadd.f32 %v8251, %v8355
      %v8388 = vadd.f32 %v8252, %v8356
      %v8389 = vadd.f32 %v8253, %v8357
      %v8390 = vadd.f32 %v8254, %v8358
      %v8391 = vadd.f32 %v8255, %v8359
      %v8392 = vadd.f32 %v8256, %v8360
      %v8393 = vadd.f32 %v8257, %v8361
      %v8394 = vadd.f32 %v8258, %v8362
      %v8395 = vadd.f32 %v8259, %v8363
      %v8396 = vadd.f32 %v8260, %v8364
      %v8397 = vadd.f32 %v8261, %v8365
      %v8398 = vadd.f32 %v8262, %v8366
      %v8399 = vadd.f32 %v8263, %v8367
      %v8400 = vadd.f32 %v8264, %v8368
      %v8401 = vadd.f32 %v8265, %v8369
      %v8402 = vadd.f32 %v8266, %v8370
      %v8403 = vadd.f32 %v8267, %v8371
      %v8404 = vadd.f32 %v8268, %v8372
      %v8405 = vlaneseq
      %v8406 = vshrl.u32 %v8405, 7
      %v8407 = vsub.s32 4, %v8406
      %v8408 = vrot.slane %v7861, %v8407
      %v8409 = vlaneseq
      %v8410 = vshrl.u32 %v8409, 7
      %v8411 = vsub.s32 4, %v8410
      %v8412 = vrot.slane %v7863, %v8411
      %v8413 = vlaneseq
      %v8414 = vshrl.u32 %v8413, 7
      %v8415 = vsub.s32 4, %v8414
      %v8416 = vrot.slane %v7865, %v8415
      %v8417 = vlaneseq
      %v8418 = vshrl.u32 %v8417, 7
      %v8419 = vsub.s32 4, %v8418
      %v8420 = vrot.slane %v7867, %v8419
      %v8421 = vlaneseq
      %v8422 = vshrl.u32 %v8421, 7
      %v8423 = vsub.s32 4, %v8422
      %v8424 = vrot.slane %v7869, %v8423
      %v8425 = vlaneseq
      %v8426 = vshrl.u32 %v8425, 7
      %v8427 = vsub.s32 4, %v8426
      %v8428 = vrot.slane %v7871, %v8427
      %v8429 = vlaneseq
      %v8430 = vshrl.u32 %v8429, 7
      %v8431 = vsub.s32 4, %v8430
      %v8432 = vrot.slane %v7873, %v8431
      %v8433 = vlaneseq
      %v8434 = vshrl.u32 %v8433, 7
      %v8435 = vsub.s32 4, %v8434
      %v8436 = vrot.slane %v7875, %v8435
      %v8437 = vlaneseq
      %v8438 = vshrl.u32 %v8437, 7
      %v8439 = vsub.s32 4, %v8438
      %v8440 = vrot.slane %v7877, %v8439
      %v8441 = vlaneseq
      %v8442 = vshrl.u32 %v8441, 7
      %v8443 = vsub.s32 4, %v8442
      %v8444 = vrot.slane %v7879, %v8443
      %v8445 = vlaneseq
      %v8446 = vshrl.u32 %v8445, 7
      %v8447 = vsub.s32 4, %v8446
      %v8448 = vrot.slane %v7881, %v8447
      %v8449 = vlaneseq
      %v8450 = vshrl.u32 %v8449, 7
      %v8451 = vsub.s32 4, %v8450
      %v8452 = vrot.slane %v7883, %v8451
      %v8453 = vlaneseq
      %v8454 = vshrl.u32 %v8453, 7
      %v8455 = vsub.s32 4, %v8454
      %v8456 = vrot.slane %v7885, %v8455
      %v8457 = vlaneseq
      %v8458 = vshrl.u32 %v8457, 7
      %v8459 = vsub.s32 4, %v8458
      %v8460 = vrot.slane %v7887, %v8459
      %v8461 = vlaneseq
      %v8462 = vshrl.u32 %v8461, 7
      %v8463 = vsub.s32 4, %v8462
      %v8464 = vrot.slane %v7889, %v8463
      %v8465 = vlaneseq
      %v8466 = vshrl.u32 %v8465, 7
      %v8467 = vsub.s32 4, %v8466
      %v8468 = vrot.slane %v7891, %v8467
      %8471 = vrot.lane.b32.xlu0 %v7869, 96
      %v8472 = vpop.permute.xlu0 %8471
      %8473 = vrot.lane.b32.xlu0 %v7870, 96
      %v8474 = vpop.permute.xlu0 %8473
      %v8477 = vmul.f32 %v8408, %v8472
      %v8478 = vmul.f32 %v8408, %v8474
      %v8479 = vmul.f32 %v8412, %v8472
      %v8480 = vmul.f32 %v8412, %v8474
      %v8481 = vmul.f32 %v8416, %v8472
      %v8482 = vmul.f32 %v8416, %v8474
      %v8483 = vmul.f32 %v8420, %v8472
      %v8484 = vmul.f32 %v8420, %v8474
      %v8485 = vmul.f32 %v8424, %v8472
      %v8486 = vmul.f32 %v8424, %v8474
      %v8487 = vmul.f32 %v8428, %v8472
      %v8488 = vmul.f32 %v8428, %v8474
      %v8489 = vmul.f32 %v8432, %v8472
      %v8490 = vmul.f32 %v8432, %v8474
      %v8491 = vmul.f32 %v8436, %v8472
      %v8492 = vmul.f32 %v8436, %v8474
      %v8493 = vmul.f32 %v8440, %v8472
      %v8494 = vmul.f32 %v8440, %v8474
      %v8495 = vmul.f32 %v8444, %v8472
      %v8496 = vmul.f32 %v8444, %v8474
      %v8497 = vmul.f32 %v8448, %v8472
      %v8498 = vmul.f32 %v8448, %v8474
      %v8499 = vmul.f32 %v8452, %v8472
      %v8500 = vmul.f32 %v8452, %v8474
      %v8501 = vmul.f32 %v8456, %v8472
      %v8502 = vmul.f32 %v8456, %v8474
      %v8503 = vmul.f32 %v8460, %v8472
      %v8504 = vmul.f32 %v8460, %v8474
      %v8505 = vmul.f32 %v8464, %v8472
      %v8506 = vmul.f32 %v8464, %v8474
      %v8507 = vmul.f32 %v8468, %v8472
      %v8508 = vmul.f32 %v8468, %v8474
      %v8509 = vadd.f32 %v8373, %v8477
      %v8510 = vadd.f32 %v8374, %v8478
      %v8511 = vadd.f32 %v8375, %v8479
      %v8512 = vadd.f32 %v8376, %v8480
      %v8513 = vadd.f32 %v8377, %v8481
      %v8514 = vadd.f32 %v8378, %v8482
      %v8515 = vadd.f32 %v8379, %v8483
      %v8516 = vadd.f32 %v8380, %v8484
      %v8517 = vadd.f32 %v8381, %v8485
      %v8518 = vadd.f32 %v8382, %v8486
      %v8519 = vadd.f32 %v8383, %v8487
      %v8520 = vadd.f32 %v8384, %v8488
      %v8521 = vadd.f32 %v8385, %v8489
      %v8522 = vadd.f32 %v8386, %v8490
      %v8523 = vadd.f32 %v8387, %v8491
      %v8524 = vadd.f32 %v8388, %v8492
      %v8525 = vadd.f32 %v8389, %v8493
      %v8526 = vadd.f32 %v8390, %v8494
      %v8527 = vadd.f32 %v8391, %v8495
      %v8528 = vadd.f32 %v8392, %v8496
      %v8529 = vadd.f32 %v8393, %v8497
      %v8530 = vadd.f32 %v8394, %v8498
      %v8531 = vadd.f32 %v8395, %v8499
      %v8532 = vadd.f32 %v8396, %v8500
      %v8533 = vadd.f32 %v8397, %v8501
      %v8534 = vadd.f32 %v8398, %v8502
      %v8535 = vadd.f32 %v8399, %v8503
      %v8536 = vadd.f32 %v8400, %v8504
      %v8537 = vadd.f32 %v8401, %v8505
      %v8538 = vadd.f32 %v8402, %v8506
      %v8539 = vadd.f32 %v8403, %v8507
      %v8540 = vadd.f32 %v8404, %v8508
      %v8541 = vlaneseq
      %v8542 = vshrl.u32 %v8541, 7
      %v8543 = vsub.s32 5, %v8542
      %v8544 = vrot.slane %v7861, %v8543
      %v8545 = vlaneseq
      %v8546 = vshrl.u32 %v8545, 7
      %v8547 = vsub.s32 5, %v8546
      %v8548 = vrot.slane %v7863, %v8547
      %v8549 = vlaneseq
      %v8550 = vshrl.u32 %v8549, 7
      %v8551 = vsub.s32 5, %v8550
      %v8552 = vrot.slane %v7865, %v8551
      %v8553 = vlaneseq
      %v8554 = vshrl.u32 %v8553, 7
      %v8555 = vsub.s32 5, %v8554
      %v8556 = vrot.slane %v7867, %v8555
      %v8557 = vlaneseq
      %v8558 = vshrl.u32 %v8557, 7
      %v8559 = vsub.s32 5, %v8558
      %v8560 = vrot.slane %v7869, %v8559
      %v8561 = vlaneseq
      %v8562 = vshrl.u32 %v8561, 7
      %v8563 = vsub.s32 5, %v8562
      %v8564 = vrot.slane %v7871, %v8563
      %v8565 = vlaneseq
      %v8566 = vshrl.u32 %v8565, 7
      %v8567 = vsub.s32 5, %v8566
      %v8568 = vrot.slane %v7873, %v8567
      %v8569 = vlaneseq
      %v8570 = vshrl.u32 %v8569, 7
      %v8571 = vsub.s32 5, %v8570
      %v8572 = vrot.slane %v7875, %v8571
      %v8573 = vlaneseq
      %v8574 = vshrl.u32 %v8573, 7
      %v8575 = vsub.s32 5, %v8574
      %v8576 = vrot.slane %v7877, %v8575
      %v8577 = vlaneseq
      %v8578 = vshrl.u32 %v8577, 7
      %v8579 = vsub.s32 5, %v8578
      %v8580 = vrot.slane %v7879, %v8579
      %v8581 = vlaneseq
      %v8582 = vshrl.u32 %v8581, 7
      %v8583 = vsub.s32 5, %v8582
      %v8584 = vrot.slane %v7881, %v8583
      %v8585 = vlaneseq
      %v8586 = vshrl.u32 %v8585, 7
      %v8587 = vsub.s32 5, %v8586
      %v8588 = vrot.slane %v7883, %v8587
      %v8589 = vlaneseq
      %v8590 = vshrl.u32 %v8589, 7
      %v8591 = vsub.s32 5, %v8590
      %v8592 = vrot.slane %v7885, %v8591
      %v8593 = vlaneseq
      %v8594 = vshrl.u32 %v8593, 7
      %v8595 = vsub.s32 5, %v8594
      %v8596 = vrot.slane %v7887, %v8595
      %v8597 = vlaneseq
      %v8598 = vshrl.u32 %v8597, 7
      %v8599 = vsub.s32 5, %v8598
      %v8600 = vrot.slane %v7889, %v8599
      %v8601 = vlaneseq
      %v8602 = vshrl.u32 %v8601, 7
      %v8603 = vsub.s32 5, %v8602
      %v8604 = vrot.slane %v7891, %v8603
      %8607 = vrot.lane.b32.xlu0 %v7871, 96
      %v8608 = vpop.permute.xlu0 %8607
      %8609 = vrot.lane.b32.xlu0 %v7872, 96
      %v8610 = vpop.permute.xlu0 %8609
      %v8613 = vmul.f32 %v8544, %v8608
      %v8614 = vmul.f32 %v8544, %v8610
      %v8615 = vmul.f32 %v8548, %v8608
      %v8616 = vmul.f32 %v8548, %v8610
      %v8617 = vmul.f32 %v8552, %v8608
      %v8618 = vmul.f32 %v8552, %v8610
      %v8619 = vmul.f32 %v8556, %v8608
      %v8620 = vmul.f32 %v8556, %v8610
      %v8621 = vmul.f32 %v8560, %v8608
      %v8622 = vmul.f32 %v8560, %v8610
      %v8623 = vmul.f32 %v8564, %v8608
      %v8624 = vmul.f32 %v8564, %v8610
      %v8625 = vmul.f32 %v8568, %v8608
      %v8626 = vmul.f32 %v8568, %v8610
      %v8627 = vmul.f32 %v8572, %v8608
      %v8628 = vmul.f32 %v8572, %v8610
      %v8629 = vmul.f32 %v8576, %v8608
      %v8630 = vmul.f32 %v8576, %v8610
      %v8631 = vmul.f32 %v8580, %v8608
      %v8632 = vmul.f32 %v8580, %v8610
      %v8633 = vmul.f32 %v8584, %v8608
      %v8634 = vmul.f32 %v8584, %v8610
      %v8635 = vmul.f32 %v8588, %v8608
      %v8636 = vmul.f32 %v8588, %v8610
      %v8637 = vmul.f32 %v8592, %v8608
      %v8638 = vmul.f32 %v8592, %v8610
      %v8639 = vmul.f32 %v8596, %v8608
      %v8640 = vmul.f32 %v8596, %v8610
      %v8641 = vmul.f32 %v8600, %v8608
      %v8642 = vmul.f32 %v8600, %v8610
      %v8643 = vmul.f32 %v8604, %v8608
      %v8644 = vmul.f32 %v8604, %v8610
      %v8645 = vadd.f32 %v8509, %v8613
      %v8646 = vadd.f32 %v8510, %v8614
      %v8647 = vadd.f32 %v8511, %v8615
      %v8648 = vadd.f32 %v8512, %v8616
      %v8649 = vadd.f32 %v8513, %v8617
      %v8650 = vadd.f32 %v8514, %v8618
      %v8651 = vadd.f32 %v8515, %v8619
      %v8652 = vadd.f32 %v8516, %v8620
      %v8653 = vadd.f32 %v8517, %v8621
      %v8654 = vadd.f32 %v8518, %v8622
      %v8655 = vadd.f32 %v8519, %v8623
      %v8656 = vadd.f32 %v8520, %v8624
      %v8657 = vadd.f32 %v8521, %v8625
      %v8658 = vadd.f32 %v8522, %v8626
      %v8659 = vadd.f32 %v8523, %v8627
      %v8660 = vadd.f32 %v8524, %v8628
      %v8661 = vadd.f32 %v8525, %v8629
      %v8662 = vadd.f32 %v8526, %v8630
      %v8663 = vadd.f32 %v8527, %v8631
      %v8664 = vadd.f32 %v8528, %v8632
      %v8665 = vadd.f32 %v8529, %v8633
      %v8666 = vadd.f32 %v8530, %v8634
      %v8667 = vadd.f32 %v8531, %v8635
      %v8668 = vadd.f32 %v8532, %v8636
      %v8669 = vadd.f32 %v8533, %v8637
      %v8670 = vadd.f32 %v8534, %v8638
      %v8671 = vadd.f32 %v8535, %v8639
      %v8672 = vadd.f32 %v8536, %v8640
      %v8673 = vadd.f32 %v8537, %v8641
      %v8674 = vadd.f32 %v8538, %v8642
      %v8675 = vadd.f32 %v8539, %v8643
      %v8676 = vadd.f32 %v8540, %v8644
      %v8677 = vlaneseq
      %v8678 = vshrl.u32 %v8677, 7
      %v8679 = vsub.s32 6, %v8678
      %v8680 = vrot.slane %v7861, %v8679
      %v8681 = vlaneseq
      %v8682 = vshrl.u32 %v8681, 7
      %v8683 = vsub.s32 6, %v8682
      %v8684 = vrot.slane %v7863, %v8683
      %v8685 = vlaneseq
      %v8686 = vshrl.u32 %v8685, 7
      %v8687 = vsub.s32 6, %v8686
      %v8688 = vrot.slane %v7865, %v8687
      %v8689 = vlaneseq
      %v8690 = vshrl.u32 %v8689, 7
      %v8691 = vsub.s32 6, %v8690
      %v8692 = vrot.slane %v7867, %v8691
      %v8693 = vlaneseq
      %v8694 = vshrl.u32 %v8693, 7
      %v8695 = vsub.s32 6, %v8694
      %v8696 = vrot.slane %v7869, %v8695
      %v8697 = vlaneseq
      %v8698 = vshrl.u32 %v8697, 7
      %v8699 = vsub.s32 6, %v8698
      %v8700 = vrot.slane %v7871, %v8699
      %v8701 = vlaneseq
      %v8702 = vshrl.u32 %v8701, 7
      %v8703 = vsub.s32 6, %v8702
      %v8704 = vrot.slane %v7873, %v8703
      %v8705 = vlaneseq
      %v8706 = vshrl.u32 %v8705, 7
      %v8707 = vsub.s32 6, %v8706
      %v8708 = vrot.slane %v7875, %v8707
      %v8709 = vlaneseq
      %v8710 = vshrl.u32 %v8709, 7
      %v8711 = vsub.s32 6, %v8710
      %v8712 = vrot.slane %v7877, %v8711
      %v8713 = vlaneseq
      %v8714 = vshrl.u32 %v8713, 7
      %v8715 = vsub.s32 6, %v8714
      %v8716 = vrot.slane %v7879, %v8715
      %v8717 = vlaneseq
      %v8718 = vshrl.u32 %v8717, 7
      %v8719 = vsub.s32 6, %v8718
      %v8720 = vrot.slane %v7881, %v8719
      %v8721 = vlaneseq
      %v8722 = vshrl.u32 %v8721, 7
      %v8723 = vsub.s32 6, %v8722
      %v8724 = vrot.slane %v7883, %v8723
      %v8725 = vlaneseq
      %v8726 = vshrl.u32 %v8725, 7
      %v8727 = vsub.s32 6, %v8726
      %v8728 = vrot.slane %v7885, %v8727
      %v8729 = vlaneseq
      %v8730 = vshrl.u32 %v8729, 7
      %v8731 = vsub.s32 6, %v8730
      %v8732 = vrot.slane %v7887, %v8731
      %v8733 = vlaneseq
      %v8734 = vshrl.u32 %v8733, 7
      %v8735 = vsub.s32 6, %v8734
      %v8736 = vrot.slane %v7889, %v8735
      %v8737 = vlaneseq
      %v8738 = vshrl.u32 %v8737, 7
      %v8739 = vsub.s32 6, %v8738
      %v8740 = vrot.slane %v7891, %v8739
      %8743 = vrot.lane.b32.xlu0 %v7873, 96
      %v8744 = vpop.permute.xlu0 %8743
      %8745 = vrot.lane.b32.xlu0 %v7874, 96
      %v8746 = vpop.permute.xlu0 %8745
      %v8749 = vmul.f32 %v8680, %v8744
      %v8750 = vmul.f32 %v8680, %v8746
      %v8751 = vmul.f32 %v8684, %v8744
      %v8752 = vmul.f32 %v8684, %v8746
      %v8753 = vmul.f32 %v8688, %v8744
      %v8754 = vmul.f32 %v8688, %v8746
      %v8755 = vmul.f32 %v8692, %v8744
      %v8756 = vmul.f32 %v8692, %v8746
      %v8757 = vmul.f32 %v8696, %v8744
      %v8758 = vmul.f32 %v8696, %v8746
      %v8759 = vmul.f32 %v8700, %v8744
      %v8760 = vmul.f32 %v8700, %v8746
      %v8761 = vmul.f32 %v8704, %v8744
      %v8762 = vmul.f32 %v8704, %v8746
      %v8763 = vmul.f32 %v8708, %v8744
      %v8764 = vmul.f32 %v8708, %v8746
      %v8765 = vmul.f32 %v8712, %v8744
      %v8766 = vmul.f32 %v8712, %v8746
      %v8767 = vmul.f32 %v8716, %v8744
      %v8768 = vmul.f32 %v8716, %v8746
      %v8769 = vmul.f32 %v8720, %v8744
      %v8770 = vmul.f32 %v8720, %v8746
      %v8771 = vmul.f32 %v8724, %v8744
      %v8772 = vmul.f32 %v8724, %v8746
      %v8773 = vmul.f32 %v8728, %v8744
      %v8774 = vmul.f32 %v8728, %v8746
      %v8775 = vmul.f32 %v8732, %v8744
      %v8776 = vmul.f32 %v8732, %v8746
      %v8777 = vmul.f32 %v8736, %v8744
      %v8778 = vmul.f32 %v8736, %v8746
      %v8779 = vmul.f32 %v8740, %v8744
      %v8780 = vmul.f32 %v8740, %v8746
      %v8781 = vadd.f32 %v8645, %v8749
      %v8782 = vadd.f32 %v8646, %v8750
      %v8783 = vadd.f32 %v8647, %v8751
      %v8784 = vadd.f32 %v8648, %v8752
      %v8785 = vadd.f32 %v8649, %v8753
      %v8786 = vadd.f32 %v8650, %v8754
      %v8787 = vadd.f32 %v8651, %v8755
      %v8788 = vadd.f32 %v8652, %v8756
      %v8789 = vadd.f32 %v8653, %v8757
      %v8790 = vadd.f32 %v8654, %v8758
      %v8791 = vadd.f32 %v8655, %v8759
      %v8792 = vadd.f32 %v8656, %v8760
      %v8793 = vadd.f32 %v8657, %v8761
      %v8794 = vadd.f32 %v8658, %v8762
      %v8795 = vadd.f32 %v8659, %v8763
      %v8796 = vadd.f32 %v8660, %v8764
      %v8797 = vadd.f32 %v8661, %v8765
      %v8798 = vadd.f32 %v8662, %v8766
      %v8799 = vadd.f32 %v8663, %v8767
      %v8800 = vadd.f32 %v8664, %v8768
      %v8801 = vadd.f32 %v8665, %v8769
      %v8802 = vadd.f32 %v8666, %v8770
      %v8803 = vadd.f32 %v8667, %v8771
      %v8804 = vadd.f32 %v8668, %v8772
      %v8805 = vadd.f32 %v8669, %v8773
      %v8806 = vadd.f32 %v8670, %v8774
      %v8807 = vadd.f32 %v8671, %v8775
      %v8808 = vadd.f32 %v8672, %v8776
      %v8809 = vadd.f32 %v8673, %v8777
      %v8810 = vadd.f32 %v8674, %v8778
      %v8811 = vadd.f32 %v8675, %v8779
      %v8812 = vadd.f32 %v8676, %v8780
      %v8813 = vlaneseq
      %v8814 = vshrl.u32 %v8813, 7
      %v8815 = vsub.s32 7, %v8814
      %v8816 = vrot.slane %v7861, %v8815
      %v8817 = vlaneseq
      %v8818 = vshrl.u32 %v8817, 7
      %v8819 = vsub.s32 7, %v8818
      %v8820 = vrot.slane %v7863, %v8819
      %v8821 = vlaneseq
      %v8822 = vshrl.u32 %v8821, 7
      %v8823 = vsub.s32 7, %v8822
      %v8824 = vrot.slane %v7865, %v8823
      %v8825 = vlaneseq
      %v8826 = vshrl.u32 %v8825, 7
      %v8827 = vsub.s32 7, %v8826
      %v8828 = vrot.slane %v7867, %v8827
      %v8829 = vlaneseq
      %v8830 = vshrl.u32 %v8829, 7
      %v8831 = vsub.s32 7, %v8830
      %v8832 = vrot.slane %v7869, %v8831
      %v8833 = vlaneseq
      %v8834 = vshrl.u32 %v8833, 7
      %v8835 = vsub.s32 7, %v8834
      %v8836 = vrot.slane %v7871, %v8835
      %v8837 = vlaneseq
      %v8838 = vshrl.u32 %v8837, 7
      %v8839 = vsub.s32 7, %v8838
      %v8840 = vrot.slane %v7873, %v8839
      %v8841 = vlaneseq
      %v8842 = vshrl.u32 %v8841, 7
      %v8843 = vsub.s32 7, %v8842
      %v8844 = vrot.slane %v7875, %v8843
      %v8845 = vlaneseq
      %v8846 = vshrl.u32 %v8845, 7
      %v8847 = vsub.s32 7, %v8846
      %v8848 = vrot.slane %v7877, %v8847
      %v8849 = vlaneseq
      %v8850 = vshrl.u32 %v8849, 7
      %v8851 = vsub.s32 7, %v8850
      %v8852 = vrot.slane %v7879, %v8851
      %v8853 = vlaneseq
      %v8854 = vshrl.u32 %v8853, 7
      %v8855 = vsub.s32 7, %v8854
      %v8856 = vrot.slane %v7881, %v8855
      %v8857 = vlaneseq
      %v8858 = vshrl.u32 %v8857, 7
      %v8859 = vsub.s32 7, %v8858
      %v8860 = vrot.slane %v7883, %v8859
      %v8861 = vlaneseq
      %v8862 = vshrl.u32 %v8861, 7
      %v8863 = vsub.s32 7, %v8862
      %v8864 = vrot.slane %v7885, %v8863
      %v8865 = vlaneseq
      %v8866 = vshrl.u32 %v8865, 7
      %v8867 = vsub.s32 7, %v8866
      %v8868 = vrot.slane %v7887, %v8867
      %v8869 = vlaneseq
      %v8870 = vshrl.u32 %v8869, 7
      %v8871 = vsub.s32 7, %v8870
      %v8872 = vrot.slane %v7889, %v8871
      %v8873 = vlaneseq
      %v8874 = vshrl.u32 %v8873, 7
      %v8875 = vsub.s32 7, %v8874
      %v8876 = vrot.slane %v7891, %v8875
      %8879 = vrot.lane.b32.xlu0 %v7875, 96
      %v8880 = vpop.permute.xlu0 %8879
      %8881 = vrot.lane.b32.xlu0 %v7876, 96
      %v8882 = vpop.permute.xlu0 %8881
      %v8885 = vmul.f32 %v8816, %v8880
      %v8886 = vmul.f32 %v8816, %v8882
      %v8887 = vmul.f32 %v8820, %v8880
      %v8888 = vmul.f32 %v8820, %v8882
      %v8889 = vmul.f32 %v8824, %v8880
      %v8890 = vmul.f32 %v8824, %v8882
      %v8891 = vmul.f32 %v8828, %v8880
      %v8892 = vmul.f32 %v8828, %v8882
      %v8893 = vmul.f32 %v8832, %v8880
      %v8894 = vmul.f32 %v8832, %v8882
      %v8895 = vmul.f32 %v8836, %v8880
      %v8896 = vmul.f32 %v8836, %v8882
      %v8897 = vmul.f32 %v8840, %v8880
      %v8898 = vmul.f32 %v8840, %v8882
      %v8899 = vmul.f32 %v8844, %v8880
      %v8900 = vmul.f32 %v8844, %v8882
      %v8901 = vmul.f32 %v8848, %v8880
      %v8902 = vmul.f32 %v8848, %v8882
      %v8903 = vmul.f32 %v8852, %v8880
      %v8904 = vmul.f32 %v8852, %v8882
      %v8905 = vmul.f32 %v8856, %v8880
      %v8906 = vmul.f32 %v8856, %v8882
      %v8907 = vmul.f32 %v8860, %v8880
      %v8908 = vmul.f32 %v8860, %v8882
      %v8909 = vmul.f32 %v8864, %v8880
      %v8910 = vmul.f32 %v8864, %v8882
      %v8911 = vmul.f32 %v8868, %v8880
      %v8912 = vmul.f32 %v8868, %v8882
      %v8913 = vmul.f32 %v8872, %v8880
      %v8914 = vmul.f32 %v8872, %v8882
      %v8915 = vmul.f32 %v8876, %v8880
      %v8916 = vmul.f32 %v8876, %v8882
      %v8917 = vadd.f32 %v8781, %v8885
      %v8918 = vadd.f32 %v8782, %v8886
      %v8919 = vadd.f32 %v8783, %v8887
      %v8920 = vadd.f32 %v8784, %v8888
      %v8921 = vadd.f32 %v8785, %v8889
      %v8922 = vadd.f32 %v8786, %v8890
      %v8923 = vadd.f32 %v8787, %v8891
      %v8924 = vadd.f32 %v8788, %v8892
      %v8925 = vadd.f32 %v8789, %v8893
      %v8926 = vadd.f32 %v8790, %v8894
      %v8927 = vadd.f32 %v8791, %v8895
      %v8928 = vadd.f32 %v8792, %v8896
      %v8929 = vadd.f32 %v8793, %v8897
      %v8930 = vadd.f32 %v8794, %v8898
      %v8931 = vadd.f32 %v8795, %v8899
      %v8932 = vadd.f32 %v8796, %v8900
      %v8933 = vadd.f32 %v8797, %v8901
      %v8934 = vadd.f32 %v8798, %v8902
      %v8935 = vadd.f32 %v8799, %v8903
      %v8936 = vadd.f32 %v8800, %v8904
      %v8937 = vadd.f32 %v8801, %v8905
      %v8938 = vadd.f32 %v8802, %v8906
      %v8939 = vadd.f32 %v8803, %v8907
      %v8940 = vadd.f32 %v8804, %v8908
      %v8941 = vadd.f32 %v8805, %v8909
      %v8942 = vadd.f32 %v8806, %v8910
      %v8943 = vadd.f32 %v8807, %v8911
      %v8944 = vadd.f32 %v8808, %v8912
      %v8945 = vadd.f32 %v8809, %v8913
      %v8946 = vadd.f32 %v8810, %v8914
      %v8947 = vadd.f32 %v8811, %v8915
      %v8948 = vadd.f32 %v8812, %v8916
      %v8949 = vlaneseq
      %v8950 = vshrl.u32 %v8949, 7
      %v8951 = vsub.s32 0, %v8950
      %v8952 = vrot.slane %v7862, %v8951
      %v8953 = vlaneseq
      %v8954 = vshrl.u32 %v8953, 7
      %v8955 = vsub.s32 0, %v8954
      %v8956 = vrot.slane %v7864, %v8955
      %v8957 = vlaneseq
      %v8958 = vshrl.u32 %v8957, 7
      %v8959 = vsub.s32 0, %v8958
      %v8960 = vrot.slane %v7866, %v8959
      %v8961 = vlaneseq
      %v8962 = vshrl.u32 %v8961, 7
      %v8963 = vsub.s32 0, %v8962
      %v8964 = vrot.slane %v7868, %v8963
      %v8965 = vlaneseq
      %v8966 = vshrl.u32 %v8965, 7
      %v8967 = vsub.s32 0, %v8966
      %v8968 = vrot.slane %v7870, %v8967
      %v8969 = vlaneseq
      %v8970 = vshrl.u32 %v8969, 7
      %v8971 = vsub.s32 0, %v8970
      %v8972 = vrot.slane %v7872, %v8971
      %v8973 = vlaneseq
      %v8974 = vshrl.u32 %v8973, 7
      %v8975 = vsub.s32 0, %v8974
      %v8976 = vrot.slane %v7874, %v8975
      %v8977 = vlaneseq
      %v8978 = vshrl.u32 %v8977, 7
      %v8979 = vsub.s32 0, %v8978
      %v8980 = vrot.slane %v7876, %v8979
      %v8981 = vlaneseq
      %v8982 = vshrl.u32 %v8981, 7
      %v8983 = vsub.s32 0, %v8982
      %v8984 = vrot.slane %v7878, %v8983
      %v8985 = vlaneseq
      %v8986 = vshrl.u32 %v8985, 7
      %v8987 = vsub.s32 0, %v8986
      %v8988 = vrot.slane %v7880, %v8987
      %v8989 = vlaneseq
      %v8990 = vshrl.u32 %v8989, 7
      %v8991 = vsub.s32 0, %v8990
      %v8992 = vrot.slane %v7882, %v8991
      %v8993 = vlaneseq
      %v8994 = vshrl.u32 %v8993, 7
      %v8995 = vsub.s32 0, %v8994
      %v8996 = vrot.slane %v7884, %v8995
      %v8997 = vlaneseq
      %v8998 = vshrl.u32 %v8997, 7
      %v8999 = vsub.s32 0, %v8998
      %v9000 = vrot.slane %v7886, %v8999
      %v9001 = vlaneseq
      %v9002 = vshrl.u32 %v9001, 7
      %v9003 = vsub.s32 0, %v9002
      %v9004 = vrot.slane %v7888, %v9003
      %v9005 = vlaneseq
      %v9006 = vshrl.u32 %v9005, 7
      %v9007 = vsub.s32 0, %v9006
      %v9008 = vrot.slane %v7890, %v9007
      %v9009 = vlaneseq
      %v9010 = vshrl.u32 %v9009, 7
      %v9011 = vsub.s32 0, %v9010
      %v9012 = vrot.slane %v7892, %v9011
      %9015 = vrot.lane.b32.xlu0 %v7877, 96
      %v9016 = vpop.permute.xlu0 %9015
      %9017 = vrot.lane.b32.xlu0 %v7878, 96
      %v9018 = vpop.permute.xlu0 %9017
      %v9021 = vmul.f32 %v8952, %v9016
      %v9022 = vmul.f32 %v8952, %v9018
      %v9023 = vmul.f32 %v8956, %v9016
      %v9024 = vmul.f32 %v8956, %v9018
      %v9025 = vmul.f32 %v8960, %v9016
      %v9026 = vmul.f32 %v8960, %v9018
      %v9027 = vmul.f32 %v8964, %v9016
      %v9028 = vmul.f32 %v8964, %v9018
      %v9029 = vmul.f32 %v8968, %v9016
      %v9030 = vmul.f32 %v8968, %v9018
      %v9031 = vmul.f32 %v8972, %v9016
      %v9032 = vmul.f32 %v8972, %v9018
      %v9033 = vmul.f32 %v8976, %v9016
      %v9034 = vmul.f32 %v8976, %v9018
      %v9035 = vmul.f32 %v8980, %v9016
      %v9036 = vmul.f32 %v8980, %v9018
      %v9037 = vmul.f32 %v8984, %v9016
      %v9038 = vmul.f32 %v8984, %v9018
      %v9039 = vmul.f32 %v8988, %v9016
      %v9040 = vmul.f32 %v8988, %v9018
      %v9041 = vmul.f32 %v8992, %v9016
      %v9042 = vmul.f32 %v8992, %v9018
      %v9043 = vmul.f32 %v8996, %v9016
      %v9044 = vmul.f32 %v8996, %v9018
      %v9045 = vmul.f32 %v9000, %v9016
      %v9046 = vmul.f32 %v9000, %v9018
      %v9047 = vmul.f32 %v9004, %v9016
      %v9048 = vmul.f32 %v9004, %v9018
      %v9049 = vmul.f32 %v9008, %v9016
      %v9050 = vmul.f32 %v9008, %v9018
      %v9051 = vmul.f32 %v9012, %v9016
      %v9052 = vmul.f32 %v9012, %v9018
      %v9053 = vadd.f32 %v8917, %v9021
      %v9054 = vadd.f32 %v8918, %v9022
      %v9055 = vadd.f32 %v8919, %v9023
      %v9056 = vadd.f32 %v8920, %v9024
      %v9057 = vadd.f32 %v8921, %v9025
      %v9058 = vadd.f32 %v8922, %v9026
      %v9059 = vadd.f32 %v8923, %v9027
      %v9060 = vadd.f32 %v8924, %v9028
      %v9061 = vadd.f32 %v8925, %v9029
      %v9062 = vadd.f32 %v8926, %v9030
      %v9063 = vadd.f32 %v8927, %v9031
      %v9064 = vadd.f32 %v8928, %v9032
      %v9065 = vadd.f32 %v8929, %v9033
      %v9066 = vadd.f32 %v8930, %v9034
      %v9067 = vadd.f32 %v8931, %v9035
      %v9068 = vadd.f32 %v8932, %v9036
      %v9069 = vadd.f32 %v8933, %v9037
      %v9070 = vadd.f32 %v8934, %v9038
      %v9071 = vadd.f32 %v8935, %v9039
      %v9072 = vadd.f32 %v8936, %v9040
      %v9073 = vadd.f32 %v8937, %v9041
      %v9074 = vadd.f32 %v8938, %v9042
      %v9075 = vadd.f32 %v8939, %v9043
      %v9076 = vadd.f32 %v8940, %v9044
      %v9077 = vadd.f32 %v8941, %v9045
      %v9078 = vadd.f32 %v8942, %v9046
      %v9079 = vadd.f32 %v8943, %v9047
      %v9080 = vadd.f32 %v8944, %v9048
      %v9081 = vadd.f32 %v8945, %v9049
      %v9082 = vadd.f32 %v8946, %v9050
      %v9083 = vadd.f32 %v8947, %v9051
      %v9084 = vadd.f32 %v8948, %v9052
      %v9085 = vlaneseq
      %v9086 = vshrl.u32 %v9085, 7
      %v9087 = vsub.s32 1, %v9086
      %v9088 = vrot.slane %v7862, %v9087
      %v9089 = vlaneseq
      %v9090 = vshrl.u32 %v9089, 7
      %v9091 = vsub.s32 1, %v9090
      %v9092 = vrot.slane %v7864, %v9091
      %v9093 = vlaneseq
      %v9094 = vshrl.u32 %v9093, 7
      %v9095 = vsub.s32 1, %v9094
      %v9096 = vrot.slane %v7866, %v9095
      %v9097 = vlaneseq
      %v9098 = vshrl.u32 %v9097, 7
      %v9099 = vsub.s32 1, %v9098
      %v9100 = vrot.slane %v7868, %v9099
      %v9101 = vlaneseq
      %v9102 = vshrl.u32 %v9101, 7
      %v9103 = vsub.s32 1, %v9102
      %v9104 = vrot.slane %v7870, %v9103
      %v9105 = vlaneseq
      %v9106 = vshrl.u32 %v9105, 7
      %v9107 = vsub.s32 1, %v9106
      %v9108 = vrot.slane %v7872, %v9107
      %v9109 = vlaneseq
      %v9110 = vshrl.u32 %v9109, 7
      %v9111 = vsub.s32 1, %v9110
      %v9112 = vrot.slane %v7874, %v9111
      %v9113 = vlaneseq
      %v9114 = vshrl.u32 %v9113, 7
      %v9115 = vsub.s32 1, %v9114
      %v9116 = vrot.slane %v7876, %v9115
      %v9117 = vlaneseq
      %v9118 = vshrl.u32 %v9117, 7
      %v9119 = vsub.s32 1, %v9118
      %v9120 = vrot.slane %v7878, %v9119
      %v9121 = vlaneseq
      %v9122 = vshrl.u32 %v9121, 7
      %v9123 = vsub.s32 1, %v9122
      %v9124 = vrot.slane %v7880, %v9123
      %v9125 = vlaneseq
      %v9126 = vshrl.u32 %v9125, 7
      %v9127 = vsub.s32 1, %v9126
      %v9128 = vrot.slane %v7882, %v9127
      %v9129 = vlaneseq
      %v9130 = vshrl.u32 %v9129, 7
      %v9131 = vsub.s32 1, %v9130
      %v9132 = vrot.slane %v7884, %v9131
      %v9133 = vlaneseq
      %v9134 = vshrl.u32 %v9133, 7
      %v9135 = vsub.s32 1, %v9134
      %v9136 = vrot.slane %v7886, %v9135
      %v9137 = vlaneseq
      %v9138 = vshrl.u32 %v9137, 7
      %v9139 = vsub.s32 1, %v9138
      %v9140 = vrot.slane %v7888, %v9139
      %v9141 = vlaneseq
      %v9142 = vshrl.u32 %v9141, 7
      %v9143 = vsub.s32 1, %v9142
      %v9144 = vrot.slane %v7890, %v9143
      %v9145 = vlaneseq
      %v9146 = vshrl.u32 %v9145, 7
      %v9147 = vsub.s32 1, %v9146
      %v9148 = vrot.slane %v7892, %v9147
      %9151 = vrot.lane.b32.xlu0 %v7879, 96
      %v9152 = vpop.permute.xlu0 %9151
      %9153 = vrot.lane.b32.xlu0 %v7880, 96
      %v9154 = vpop.permute.xlu0 %9153
      %v9157 = vmul.f32 %v9088, %v9152
      %v9158 = vmul.f32 %v9088, %v9154
      %v9159 = vmul.f32 %v9092, %v9152
      %v9160 = vmul.f32 %v9092, %v9154
      %v9161 = vmul.f32 %v9096, %v9152
      %v9162 = vmul.f32 %v9096, %v9154
      %v9163 = vmul.f32 %v9100, %v9152
      %v9164 = vmul.f32 %v9100, %v9154
      %v9165 = vmul.f32 %v9104, %v9152
      %v9166 = vmul.f32 %v9104, %v9154
      %v9167 = vmul.f32 %v9108, %v9152
      %v9168 = vmul.f32 %v9108, %v9154
      %v9169 = vmul.f32 %v9112, %v9152
      %v9170 = vmul.f32 %v9112, %v9154
      %v9171 = vmul.f32 %v9116, %v9152
      %v9172 = vmul.f32 %v9116, %v9154
      %v9173 = vmul.f32 %v9120, %v9152
      %v9174 = vmul.f32 %v9120, %v9154
      %v9175 = vmul.f32 %v9124, %v9152
      %v9176 = vmul.f32 %v9124, %v9154
      %v9177 = vmul.f32 %v9128, %v9152
      %v9178 = vmul.f32 %v9128, %v9154
      %v9179 = vmul.f32 %v9132, %v9152
      %v9180 = vmul.f32 %v9132, %v9154
      %v9181 = vmul.f32 %v9136, %v9152
      %v9182 = vmul.f32 %v9136, %v9154
      %v9183 = vmul.f32 %v9140, %v9152
      %v9184 = vmul.f32 %v9140, %v9154
      %v9185 = vmul.f32 %v9144, %v9152
      %v9186 = vmul.f32 %v9144, %v9154
      %v9187 = vmul.f32 %v9148, %v9152
      %v9188 = vmul.f32 %v9148, %v9154
      %v9189 = vadd.f32 %v9053, %v9157
      %v9190 = vadd.f32 %v9054, %v9158
      %v9191 = vadd.f32 %v9055, %v9159
      %v9192 = vadd.f32 %v9056, %v9160
      %v9193 = vadd.f32 %v9057, %v9161
      %v9194 = vadd.f32 %v9058, %v9162
      %v9195 = vadd.f32 %v9059, %v9163
      %v9196 = vadd.f32 %v9060, %v9164
      %v9197 = vadd.f32 %v9061, %v9165
      %v9198 = vadd.f32 %v9062, %v9166
      %v9199 = vadd.f32 %v9063, %v9167
      %v9200 = vadd.f32 %v9064, %v9168
      %v9201 = vadd.f32 %v9065, %v9169
      %v9202 = vadd.f32 %v9066, %v9170
      %v9203 = vadd.f32 %v9067, %v9171
      %v9204 = vadd.f32 %v9068, %v9172
      %v9205 = vadd.f32 %v9069, %v9173
      %v9206 = vadd.f32 %v9070, %v9174
      %v9207 = vadd.f32 %v9071, %v9175
      %v9208 = vadd.f32 %v9072, %v9176
      %v9209 = vadd.f32 %v9073, %v9177
      %v9210 = vadd.f32 %v9074, %v9178
      %v9211 = vadd.f32 %v9075, %v9179
      %v9212 = vadd.f32 %v9076, %v9180
      %v9213 = vadd.f32 %v9077, %v9181
      %v9214 = vadd.f32 %v9078, %v9182
      %v9215 = vadd.f32 %v9079, %v9183
      %v9216 = vadd.f32 %v9080, %v9184
      %v9217 = vadd.f32 %v9081, %v9185
      %v9218 = vadd.f32 %v9082, %v9186
      %v9219 = vadd.f32 %v9083, %v9187
      %v9220 = vadd.f32 %v9084, %v9188
      %v9221 = vlaneseq
      %v9222 = vshrl.u32 %v9221, 7
      %v9223 = vsub.s32 2, %v9222
      %v9224 = vrot.slane %v7862, %v9223
      %v9225 = vlaneseq
      %v9226 = vshrl.u32 %v9225, 7
      %v9227 = vsub.s32 2, %v9226
      %v9228 = vrot.slane %v7864, %v9227
      %v9229 = vlaneseq
      %v9230 = vshrl.u32 %v9229, 7
      %v9231 = vsub.s32 2, %v9230
      %v9232 = vrot.slane %v7866, %v9231
      %v9233 = vlaneseq
      %v9234 = vshrl.u32 %v9233, 7
      %v9235 = vsub.s32 2, %v9234
      %v9236 = vrot.slane %v7868, %v9235
      %v9237 = vlaneseq
      %v9238 = vshrl.u32 %v9237, 7
      %v9239 = vsub.s32 2, %v9238
      %v9240 = vrot.slane %v7870, %v9239
      %v9241 = vlaneseq
      %v9242 = vshrl.u32 %v9241, 7
      %v9243 = vsub.s32 2, %v9242
      %v9244 = vrot.slane %v7872, %v9243
      %v9245 = vlaneseq
      %v9246 = vshrl.u32 %v9245, 7
      %v9247 = vsub.s32 2, %v9246
      %v9248 = vrot.slane %v7874, %v9247
      %v9249 = vlaneseq
      %v9250 = vshrl.u32 %v9249, 7
      %v9251 = vsub.s32 2, %v9250
      %v9252 = vrot.slane %v7876, %v9251
      %v9253 = vlaneseq
      %v9254 = vshrl.u32 %v9253, 7
      %v9255 = vsub.s32 2, %v9254
      %v9256 = vrot.slane %v7878, %v9255
      %v9257 = vlaneseq
      %v9258 = vshrl.u32 %v9257, 7
      %v9259 = vsub.s32 2, %v9258
      %v9260 = vrot.slane %v7880, %v9259
      %v9261 = vlaneseq
      %v9262 = vshrl.u32 %v9261, 7
      %v9263 = vsub.s32 2, %v9262
      %v9264 = vrot.slane %v7882, %v9263
      %v9265 = vlaneseq
      %v9266 = vshrl.u32 %v9265, 7
      %v9267 = vsub.s32 2, %v9266
      %v9268 = vrot.slane %v7884, %v9267
      %v9269 = vlaneseq
      %v9270 = vshrl.u32 %v9269, 7
      %v9271 = vsub.s32 2, %v9270
      %v9272 = vrot.slane %v7886, %v9271
      %v9273 = vlaneseq
      %v9274 = vshrl.u32 %v9273, 7
      %v9275 = vsub.s32 2, %v9274
      %v9276 = vrot.slane %v7888, %v9275
      %v9277 = vlaneseq
      %v9278 = vshrl.u32 %v9277, 7
      %v9279 = vsub.s32 2, %v9278
      %v9280 = vrot.slane %v7890, %v9279
      %v9281 = vlaneseq
      %v9282 = vshrl.u32 %v9281, 7
      %v9283 = vsub.s32 2, %v9282
      %v9284 = vrot.slane %v7892, %v9283
      %9287 = vrot.lane.b32.xlu0 %v7881, 96
      %v9288 = vpop.permute.xlu0 %9287
      %9289 = vrot.lane.b32.xlu0 %v7882, 96
      %v9290 = vpop.permute.xlu0 %9289
      %v9293 = vmul.f32 %v9224, %v9288
      %v9294 = vmul.f32 %v9224, %v9290
      %v9295 = vmul.f32 %v9228, %v9288
      %v9296 = vmul.f32 %v9228, %v9290
      %v9297 = vmul.f32 %v9232, %v9288
      %v9298 = vmul.f32 %v9232, %v9290
      %v9299 = vmul.f32 %v9236, %v9288
      %v9300 = vmul.f32 %v9236, %v9290
      %v9301 = vmul.f32 %v9240, %v9288
      %v9302 = vmul.f32 %v9240, %v9290
      %v9303 = vmul.f32 %v9244, %v9288
      %v9304 = vmul.f32 %v9244, %v9290
      %v9305 = vmul.f32 %v9248, %v9288
      %v9306 = vmul.f32 %v9248, %v9290
      %v9307 = vmul.f32 %v9252, %v9288
      %v9308 = vmul.f32 %v9252, %v9290
      %v9309 = vmul.f32 %v9256, %v9288
      %v9310 = vmul.f32 %v9256, %v9290
      %v9311 = vmul.f32 %v9260, %v9288
      %v9312 = vmul.f32 %v9260, %v9290
      %v9313 = vmul.f32 %v9264, %v9288
      %v9314 = vmul.f32 %v9264, %v9290
      %v9315 = vmul.f32 %v9268, %v9288
      %v9316 = vmul.f32 %v9268, %v9290
      %v9317 = vmul.f32 %v9272, %v9288
      %v9318 = vmul.f32 %v9272, %v9290
      %v9319 = vmul.f32 %v9276, %v9288
      %v9320 = vmul.f32 %v9276, %v9290
      %v9321 = vmul.f32 %v9280, %v9288
      %v9322 = vmul.f32 %v9280, %v9290
      %v9323 = vmul.f32 %v9284, %v9288
      %v9324 = vmul.f32 %v9284, %v9290
      %v9325 = vadd.f32 %v9189, %v9293
      %v9326 = vadd.f32 %v9190, %v9294
      %v9327 = vadd.f32 %v9191, %v9295
      %v9328 = vadd.f32 %v9192, %v9296
      %v9329 = vadd.f32 %v9193, %v9297
      %v9330 = vadd.f32 %v9194, %v9298
      %v9331 = vadd.f32 %v9195, %v9299
      %v9332 = vadd.f32 %v9196, %v9300
      %v9333 = vadd.f32 %v9197, %v9301
      %v9334 = vadd.f32 %v9198, %v9302
      %v9335 = vadd.f32 %v9199, %v9303
      %v9336 = vadd.f32 %v9200, %v9304
      %v9337 = vadd.f32 %v9201, %v9305
      %v9338 = vadd.f32 %v9202, %v9306
      %v9339 = vadd.f32 %v9203, %v9307
      %v9340 = vadd.f32 %v9204, %v9308
      %v9341 = vadd.f32 %v9205, %v9309
      %v9342 = vadd.f32 %v9206, %v9310
      %v9343 = vadd.f32 %v9207, %v9311
      %v9344 = vadd.f32 %v9208, %v9312
      %v9345 = vadd.f32 %v9209, %v9313
      %v9346 = vadd.f32 %v9210, %v9314
      %v9347 = vadd.f32 %v9211, %v9315
      %v9348 = vadd.f32 %v9212, %v9316
      %v9349 = vadd.f32 %v9213, %v9317
      %v9350 = vadd.f32 %v9214, %v9318
      %v9351 = vadd.f32 %v9215, %v9319
      %v9352 = vadd.f32 %v9216, %v9320
      %v9353 = vadd.f32 %v9217, %v9321
      %v9354 = vadd.f32 %v9218, %v9322
      %v9355 = vadd.f32 %v9219, %v9323
      %v9356 = vadd.f32 %v9220, %v9324
      %v9357 = vlaneseq
      %v9358 = vshrl.u32 %v9357, 7
      %v9359 = vsub.s32 3, %v9358
      %v9360 = vrot.slane %v7862, %v9359
      %v9361 = vlaneseq
      %v9362 = vshrl.u32 %v9361, 7
      %v9363 = vsub.s32 3, %v9362
      %v9364 = vrot.slane %v7864, %v9363
      %v9365 = vlaneseq
      %v9366 = vshrl.u32 %v9365, 7
      %v9367 = vsub.s32 3, %v9366
      %v9368 = vrot.slane %v7866, %v9367
      %v9369 = vlaneseq
      %v9370 = vshrl.u32 %v9369, 7
      %v9371 = vsub.s32 3, %v9370
      %v9372 = vrot.slane %v7868, %v9371
      %v9373 = vlaneseq
      %v9374 = vshrl.u32 %v9373, 7
      %v9375 = vsub.s32 3, %v9374
      %v9376 = vrot.slane %v7870, %v9375
      %v9377 = vlaneseq
      %v9378 = vshrl.u32 %v9377, 7
      %v9379 = vsub.s32 3, %v9378
      %v9380 = vrot.slane %v7872, %v9379
      %v9381 = vlaneseq
      %v9382 = vshrl.u32 %v9381, 7
      %v9383 = vsub.s32 3, %v9382
      %v9384 = vrot.slane %v7874, %v9383
      %v9385 = vlaneseq
      %v9386 = vshrl.u32 %v9385, 7
      %v9387 = vsub.s32 3, %v9386
      %v9388 = vrot.slane %v7876, %v9387
      %v9389 = vlaneseq
      %v9390 = vshrl.u32 %v9389, 7
      %v9391 = vsub.s32 3, %v9390
      %v9392 = vrot.slane %v7878, %v9391
      %v9393 = vlaneseq
      %v9394 = vshrl.u32 %v9393, 7
      %v9395 = vsub.s32 3, %v9394
      %v9396 = vrot.slane %v7880, %v9395
      %v9397 = vlaneseq
      %v9398 = vshrl.u32 %v9397, 7
      %v9399 = vsub.s32 3, %v9398
      %v9400 = vrot.slane %v7882, %v9399
      %v9401 = vlaneseq
      %v9402 = vshrl.u32 %v9401, 7
      %v9403 = vsub.s32 3, %v9402
      %v9404 = vrot.slane %v7884, %v9403
      %v9405 = vlaneseq
      %v9406 = vshrl.u32 %v9405, 7
      %v9407 = vsub.s32 3, %v9406
      %v9408 = vrot.slane %v7886, %v9407
      %v9409 = vlaneseq
      %v9410 = vshrl.u32 %v9409, 7
      %v9411 = vsub.s32 3, %v9410
      %v9412 = vrot.slane %v7888, %v9411
      %v9413 = vlaneseq
      %v9414 = vshrl.u32 %v9413, 7
      %v9415 = vsub.s32 3, %v9414
      %v9416 = vrot.slane %v7890, %v9415
      %v9417 = vlaneseq
      %v9418 = vshrl.u32 %v9417, 7
      %v9419 = vsub.s32 3, %v9418
      %v9420 = vrot.slane %v7892, %v9419
      %9423 = vrot.lane.b32.xlu0 %v7883, 96
      %v9424 = vpop.permute.xlu0 %9423
      %9425 = vrot.lane.b32.xlu0 %v7884, 96
      %v9426 = vpop.permute.xlu0 %9425
      %v9429 = vmul.f32 %v9360, %v9424
      %v9430 = vmul.f32 %v9360, %v9426
      %v9431 = vmul.f32 %v9364, %v9424
      %v9432 = vmul.f32 %v9364, %v9426
      %v9433 = vmul.f32 %v9368, %v9424
      %v9434 = vmul.f32 %v9368, %v9426
      %v9435 = vmul.f32 %v9372, %v9424
      %v9436 = vmul.f32 %v9372, %v9426
      %v9437 = vmul.f32 %v9376, %v9424
      %v9438 = vmul.f32 %v9376, %v9426
      %v9439 = vmul.f32 %v9380, %v9424
      %v9440 = vmul.f32 %v9380, %v9426
      %v9441 = vmul.f32 %v9384, %v9424
      %v9442 = vmul.f32 %v9384, %v9426
      %v9443 = vmul.f32 %v9388, %v9424
      %v9444 = vmul.f32 %v9388, %v9426
      %v9445 = vmul.f32 %v9392, %v9424
      %v9446 = vmul.f32 %v9392, %v9426
      %v9447 = vmul.f32 %v9396, %v9424
      %v9448 = vmul.f32 %v9396, %v9426
      %v9449 = vmul.f32 %v9400, %v9424
      %v9450 = vmul.f32 %v9400, %v9426
      %v9451 = vmul.f32 %v9404, %v9424
      %v9452 = vmul.f32 %v9404, %v9426
      %v9453 = vmul.f32 %v9408, %v9424
      %v9454 = vmul.f32 %v9408, %v9426
      %v9455 = vmul.f32 %v9412, %v9424
      %v9456 = vmul.f32 %v9412, %v9426
      %v9457 = vmul.f32 %v9416, %v9424
      %v9458 = vmul.f32 %v9416, %v9426
      %v9459 = vmul.f32 %v9420, %v9424
      %v9460 = vmul.f32 %v9420, %v9426
      %v9461 = vadd.f32 %v9325, %v9429
      %v9462 = vadd.f32 %v9326, %v9430
      %v9463 = vadd.f32 %v9327, %v9431
      %v9464 = vadd.f32 %v9328, %v9432
      %v9465 = vadd.f32 %v9329, %v9433
      %v9466 = vadd.f32 %v9330, %v9434
      %v9467 = vadd.f32 %v9331, %v9435
      %v9468 = vadd.f32 %v9332, %v9436
      %v9469 = vadd.f32 %v9333, %v9437
      %v9470 = vadd.f32 %v9334, %v9438
      %v9471 = vadd.f32 %v9335, %v9439
      %v9472 = vadd.f32 %v9336, %v9440
      %v9473 = vadd.f32 %v9337, %v9441
      %v9474 = vadd.f32 %v9338, %v9442
      %v9475 = vadd.f32 %v9339, %v9443
      %v9476 = vadd.f32 %v9340, %v9444
      %v9477 = vadd.f32 %v9341, %v9445
      %v9478 = vadd.f32 %v9342, %v9446
      %v9479 = vadd.f32 %v9343, %v9447
      %v9480 = vadd.f32 %v9344, %v9448
      %v9481 = vadd.f32 %v9345, %v9449
      %v9482 = vadd.f32 %v9346, %v9450
      %v9483 = vadd.f32 %v9347, %v9451
      %v9484 = vadd.f32 %v9348, %v9452
      %v9485 = vadd.f32 %v9349, %v9453
      %v9486 = vadd.f32 %v9350, %v9454
      %v9487 = vadd.f32 %v9351, %v9455
      %v9488 = vadd.f32 %v9352, %v9456
      %v9489 = vadd.f32 %v9353, %v9457
      %v9490 = vadd.f32 %v9354, %v9458
      %v9491 = vadd.f32 %v9355, %v9459
      %v9492 = vadd.f32 %v9356, %v9460
      %v9493 = vlaneseq
      %v9494 = vshrl.u32 %v9493, 7
      %v9495 = vsub.s32 4, %v9494
      %v9496 = vrot.slane %v7862, %v9495
      %v9497 = vlaneseq
      %v9498 = vshrl.u32 %v9497, 7
      %v9499 = vsub.s32 4, %v9498
      %v9500 = vrot.slane %v7864, %v9499
      %v9501 = vlaneseq
      %v9502 = vshrl.u32 %v9501, 7
      %v9503 = vsub.s32 4, %v9502
      %v9504 = vrot.slane %v7866, %v9503
      %v9505 = vlaneseq
      %v9506 = vshrl.u32 %v9505, 7
      %v9507 = vsub.s32 4, %v9506
      %v9508 = vrot.slane %v7868, %v9507
      %v9509 = vlaneseq
      %v9510 = vshrl.u32 %v9509, 7
      %v9511 = vsub.s32 4, %v9510
      %v9512 = vrot.slane %v7870, %v9511
      %v9513 = vlaneseq
      %v9514 = vshrl.u32 %v9513, 7
      %v9515 = vsub.s32 4, %v9514
      %v9516 = vrot.slane %v7872, %v9515
      %v9517 = vlaneseq
      %v9518 = vshrl.u32 %v9517, 7
      %v9519 = vsub.s32 4, %v9518
      %v9520 = vrot.slane %v7874, %v9519
      %v9521 = vlaneseq
      %v9522 = vshrl.u32 %v9521, 7
      %v9523 = vsub.s32 4, %v9522
      %v9524 = vrot.slane %v7876, %v9523
      %v9525 = vlaneseq
      %v9526 = vshrl.u32 %v9525, 7
      %v9527 = vsub.s32 4, %v9526
      %v9528 = vrot.slane %v7878, %v9527
      %v9529 = vlaneseq
      %v9530 = vshrl.u32 %v9529, 7
      %v9531 = vsub.s32 4, %v9530
      %v9532 = vrot.slane %v7880, %v9531
      %v9533 = vlaneseq
      %v9534 = vshrl.u32 %v9533, 7
      %v9535 = vsub.s32 4, %v9534
      %v9536 = vrot.slane %v7882, %v9535
      %v9537 = vlaneseq
      %v9538 = vshrl.u32 %v9537, 7
      %v9539 = vsub.s32 4, %v9538
      %v9540 = vrot.slane %v7884, %v9539
      %v9541 = vlaneseq
      %v9542 = vshrl.u32 %v9541, 7
      %v9543 = vsub.s32 4, %v9542
      %v9544 = vrot.slane %v7886, %v9543
      %v9545 = vlaneseq
      %v9546 = vshrl.u32 %v9545, 7
      %v9547 = vsub.s32 4, %v9546
      %v9548 = vrot.slane %v7888, %v9547
      %v9549 = vlaneseq
      %v9550 = vshrl.u32 %v9549, 7
      %v9551 = vsub.s32 4, %v9550
      %v9552 = vrot.slane %v7890, %v9551
      %v9553 = vlaneseq
      %v9554 = vshrl.u32 %v9553, 7
      %v9555 = vsub.s32 4, %v9554
      %v9556 = vrot.slane %v7892, %v9555
      %9559 = vrot.lane.b32.xlu0 %v7885, 96
      %v9560 = vpop.permute.xlu0 %9559
      %9561 = vrot.lane.b32.xlu0 %v7886, 96
      %v9562 = vpop.permute.xlu0 %9561
      %v9565 = vmul.f32 %v9496, %v9560
      %v9566 = vmul.f32 %v9496, %v9562
      %v9567 = vmul.f32 %v9500, %v9560
      %v9568 = vmul.f32 %v9500, %v9562
      %v9569 = vmul.f32 %v9504, %v9560
      %v9570 = vmul.f32 %v9504, %v9562
      %v9571 = vmul.f32 %v9508, %v9560
      %v9572 = vmul.f32 %v9508, %v9562
      %v9573 = vmul.f32 %v9512, %v9560
      %v9574 = vmul.f32 %v9512, %v9562
      %v9575 = vmul.f32 %v9516, %v9560
      %v9576 = vmul.f32 %v9516, %v9562
      %v9577 = vmul.f32 %v9520, %v9560
      %v9578 = vmul.f32 %v9520, %v9562
      %v9579 = vmul.f32 %v9524, %v9560
      %v9580 = vmul.f32 %v9524, %v9562
      %v9581 = vmul.f32 %v9528, %v9560
      %v9582 = vmul.f32 %v9528, %v9562
      %v9583 = vmul.f32 %v9532, %v9560
      %v9584 = vmul.f32 %v9532, %v9562
      %v9585 = vmul.f32 %v9536, %v9560
      %v9586 = vmul.f32 %v9536, %v9562
      %v9587 = vmul.f32 %v9540, %v9560
      %v9588 = vmul.f32 %v9540, %v9562
      %v9589 = vmul.f32 %v9544, %v9560
      %v9590 = vmul.f32 %v9544, %v9562
      %v9591 = vmul.f32 %v9548, %v9560
      %v9592 = vmul.f32 %v9548, %v9562
      %v9593 = vmul.f32 %v9552, %v9560
      %v9594 = vmul.f32 %v9552, %v9562
      %v9595 = vmul.f32 %v9556, %v9560
      %v9596 = vmul.f32 %v9556, %v9562
      %v9597 = vadd.f32 %v9461, %v9565
      %v9598 = vadd.f32 %v9462, %v9566
      %v9599 = vadd.f32 %v9463, %v9567
      %v9600 = vadd.f32 %v9464, %v9568
      %v9601 = vadd.f32 %v9465, %v9569
      %v9602 = vadd.f32 %v9466, %v9570
      %v9603 = vadd.f32 %v9467, %v9571
      %v9604 = vadd.f32 %v9468, %v9572
      %v9605 = vadd.f32 %v9469, %v9573
      %v9606 = vadd.f32 %v9470, %v9574
      %v9607 = vadd.f32 %v9471, %v9575
      %v9608 = vadd.f32 %v9472, %v9576
      %v9609 = vadd.f32 %v9473, %v9577
      %v9610 = vadd.f32 %v9474, %v9578
      %v9611 = vadd.f32 %v9475, %v9579
      %v9612 = vadd.f32 %v9476, %v9580
      %v9613 = vadd.f32 %v9477, %v9581
      %v9614 = vadd.f32 %v9478, %v9582
      %v9615 = vadd.f32 %v9479, %v9583
      %v9616 = vadd.f32 %v9480, %v9584
      %v9617 = vadd.f32 %v9481, %v9585
      %v9618 = vadd.f32 %v9482, %v9586
      %v9619 = vadd.f32 %v9483, %v9587
      %v9620 = vadd.f32 %v9484, %v9588
      %v9621 = vadd.f32 %v9485, %v9589
      %v9622 = vadd.f32 %v9486, %v9590
      %v9623 = vadd.f32 %v9487, %v9591
      %v9624 = vadd.f32 %v9488, %v9592
      %v9625 = vadd.f32 %v9489, %v9593
      %v9626 = vadd.f32 %v9490, %v9594
      %v9627 = vadd.f32 %v9491, %v9595
      %v9628 = vadd.f32 %v9492, %v9596
      %v9629 = vlaneseq
      %v9630 = vshrl.u32 %v9629, 7
      %v9631 = vsub.s32 5, %v9630
      %v9632 = vrot.slane %v7862, %v9631
      %v9633 = vlaneseq
      %v9634 = vshrl.u32 %v9633, 7
      %v9635 = vsub.s32 5, %v9634
      %v9636 = vrot.slane %v7864, %v9635
      %v9637 = vlaneseq
      %v9638 = vshrl.u32 %v9637, 7
      %v9639 = vsub.s32 5, %v9638
      %v9640 = vrot.slane %v7866, %v9639
      %v9641 = vlaneseq
      %v9642 = vshrl.u32 %v9641, 7
      %v9643 = vsub.s32 5, %v9642
      %v9644 = vrot.slane %v7868, %v9643
      %v9645 = vlaneseq
      %v9646 = vshrl.u32 %v9645, 7
      %v9647 = vsub.s32 5, %v9646
      %v9648 = vrot.slane %v7870, %v9647
      %v9649 = vlaneseq
      %v9650 = vshrl.u32 %v9649, 7
      %v9651 = vsub.s32 5, %v9650
      %v9652 = vrot.slane %v7872, %v9651
      %v9653 = vlaneseq
      %v9654 = vshrl.u32 %v9653, 7
      %v9655 = vsub.s32 5, %v9654
      %v9656 = vrot.slane %v7874, %v9655
      %v9657 = vlaneseq
      %v9658 = vshrl.u32 %v9657, 7
      %v9659 = vsub.s32 5, %v9658
      %v9660 = vrot.slane %v7876, %v9659
      %v9661 = vlaneseq
      %v9662 = vshrl.u32 %v9661, 7
      %v9663 = vsub.s32 5, %v9662
      %v9664 = vrot.slane %v7878, %v9663
      %v9665 = vlaneseq
      %v9666 = vshrl.u32 %v9665, 7
      %v9667 = vsub.s32 5, %v9666
      %v9668 = vrot.slane %v7880, %v9667
      %v9669 = vlaneseq
      %v9670 = vshrl.u32 %v9669, 7
      %v9671 = vsub.s32 5, %v9670
      %v9672 = vrot.slane %v7882, %v9671
      %v9673 = vlaneseq
      %v9674 = vshrl.u32 %v9673, 7
      %v9675 = vsub.s32 5, %v9674
      %v9676 = vrot.slane %v7884, %v9675
      %v9677 = vlaneseq
      %v9678 = vshrl.u32 %v9677, 7
      %v9679 = vsub.s32 5, %v9678
      %v9680 = vrot.slane %v7886, %v9679
      %v9681 = vlaneseq
      %v9682 = vshrl.u32 %v9681, 7
      %v9683 = vsub.s32 5, %v9682
      %v9684 = vrot.slane %v7888, %v9683
      %v9685 = vlaneseq
      %v9686 = vshrl.u32 %v9685, 7
      %v9687 = vsub.s32 5, %v9686
      %v9688 = vrot.slane %v7890, %v9687
      %v9689 = vlaneseq
      %v9690 = vshrl.u32 %v9689, 7
      %v9691 = vsub.s32 5, %v9690
      %v9692 = vrot.slane %v7892, %v9691
      %9695 = vrot.lane.b32.xlu0 %v7887, 96
      %v9696 = vpop.permute.xlu0 %9695
      %9697 = vrot.lane.b32.xlu0 %v7888, 96
      %v9698 = vpop.permute.xlu0 %9697
      %v9701 = vmul.f32 %v9632, %v9696
      %v9702 = vmul.f32 %v9632, %v9698
      %v9703 = vmul.f32 %v9636, %v9696
      %v9704 = vmul.f32 %v9636, %v9698
      %v9705 = vmul.f32 %v9640, %v9696
      %v9706 = vmul.f32 %v9640, %v9698
      %v9707 = vmul.f32 %v9644, %v9696
      %v9708 = vmul.f32 %v9644, %v9698
      %v9709 = vmul.f32 %v9648, %v9696
      %v9710 = vmul.f32 %v9648, %v9698
      %v9711 = vmul.f32 %v9652, %v9696
      %v9712 = vmul.f32 %v9652, %v9698
      %v9713 = vmul.f32 %v9656, %v9696
      %v9714 = vmul.f32 %v9656, %v9698
      %v9715 = vmul.f32 %v9660, %v9696
      %v9716 = vmul.f32 %v9660, %v9698
      %v9717 = vmul.f32 %v9664, %v9696
      %v9718 = vmul.f32 %v9664, %v9698
      %v9719 = vmul.f32 %v9668, %v9696
      %v9720 = vmul.f32 %v9668, %v9698
      %v9721 = vmul.f32 %v9672, %v9696
      %v9722 = vmul.f32 %v9672, %v9698
      %v9723 = vmul.f32 %v9676, %v9696
      %v9724 = vmul.f32 %v9676, %v9698
      %v9725 = vmul.f32 %v9680, %v9696
      %v9726 = vmul.f32 %v9680, %v9698
      %v9727 = vmul.f32 %v9684, %v9696
      %v9728 = vmul.f32 %v9684, %v9698
      %v9729 = vmul.f32 %v9688, %v9696
      %v9730 = vmul.f32 %v9688, %v9698
      %v9731 = vmul.f32 %v9692, %v9696
      %v9732 = vmul.f32 %v9692, %v9698
      %v9733 = vadd.f32 %v9597, %v9701
      %v9734 = vadd.f32 %v9598, %v9702
      %v9735 = vadd.f32 %v9599, %v9703
      %v9736 = vadd.f32 %v9600, %v9704
      %v9737 = vadd.f32 %v9601, %v9705
      %v9738 = vadd.f32 %v9602, %v9706
      %v9739 = vadd.f32 %v9603, %v9707
      %v9740 = vadd.f32 %v9604, %v9708
      %v9741 = vadd.f32 %v9605, %v9709
      %v9742 = vadd.f32 %v9606, %v9710
      %v9743 = vadd.f32 %v9607, %v9711
      %v9744 = vadd.f32 %v9608, %v9712
      %v9745 = vadd.f32 %v9609, %v9713
      %v9746 = vadd.f32 %v9610, %v9714
      %v9747 = vadd.f32 %v9611, %v9715
      %v9748 = vadd.f32 %v9612, %v9716
      %v9749 = vadd.f32 %v9613, %v9717
      %v9750 = vadd.f32 %v9614, %v9718
      %v9751 = vadd.f32 %v9615, %v9719
      %v9752 = vadd.f32 %v9616, %v9720
      %v9753 = vadd.f32 %v9617, %v9721
      %v9754 = vadd.f32 %v9618, %v9722
      %v9755 = vadd.f32 %v9619, %v9723
      %v9756 = vadd.f32 %v9620, %v9724
      %v9757 = vadd.f32 %v9621, %v9725
      %v9758 = vadd.f32 %v9622, %v9726
      %v9759 = vadd.f32 %v9623, %v9727
      %v9760 = vadd.f32 %v9624, %v9728
      %v9761 = vadd.f32 %v9625, %v9729
      %v9762 = vadd.f32 %v9626, %v9730
      %v9763 = vadd.f32 %v9627, %v9731
      %v9764 = vadd.f32 %v9628, %v9732
      %v9765 = vlaneseq
      %v9766 = vshrl.u32 %v9765, 7
      %v9767 = vsub.s32 6, %v9766
      %v9768 = vrot.slane %v7862, %v9767
      %v9769 = vlaneseq
      %v9770 = vshrl.u32 %v9769, 7
      %v9771 = vsub.s32 6, %v9770
      %v9772 = vrot.slane %v7864, %v9771
      %v9773 = vlaneseq
      %v9774 = vshrl.u32 %v9773, 7
      %v9775 = vsub.s32 6, %v9774
      %v9776 = vrot.slane %v7866, %v9775
      %v9777 = vlaneseq
      %v9778 = vshrl.u32 %v9777, 7
      %v9779 = vsub.s32 6, %v9778
      %v9780 = vrot.slane %v7868, %v9779
      %v9781 = vlaneseq
      %v9782 = vshrl.u32 %v9781, 7
      %v9783 = vsub.s32 6, %v9782
      %v9784 = vrot.slane %v7870, %v9783
      %v9785 = vlaneseq
      %v9786 = vshrl.u32 %v9785, 7
      %v9787 = vsub.s32 6, %v9786
      %v9788 = vrot.slane %v7872, %v9787
      %v9789 = vlaneseq
      %v9790 = vshrl.u32 %v9789, 7
      %v9791 = vsub.s32 6, %v9790
      %v9792 = vrot.slane %v7874, %v9791
      %v9793 = vlaneseq
      %v9794 = vshrl.u32 %v9793, 7
      %v9795 = vsub.s32 6, %v9794
      %v9796 = vrot.slane %v7876, %v9795
      %v9797 = vlaneseq
      %v9798 = vshrl.u32 %v9797, 7
      %v9799 = vsub.s32 6, %v9798
      %v9800 = vrot.slane %v7878, %v9799
      %v9801 = vlaneseq
      %v9802 = vshrl.u32 %v9801, 7
      %v9803 = vsub.s32 6, %v9802
      %v9804 = vrot.slane %v7880, %v9803
      %v9805 = vlaneseq
      %v9806 = vshrl.u32 %v9805, 7
      %v9807 = vsub.s32 6, %v9806
      %v9808 = vrot.slane %v7882, %v9807
      %v9809 = vlaneseq
      %v9810 = vshrl.u32 %v9809, 7
      %v9811 = vsub.s32 6, %v9810
      %v9812 = vrot.slane %v7884, %v9811
      %v9813 = vlaneseq
      %v9814 = vshrl.u32 %v9813, 7
      %v9815 = vsub.s32 6, %v9814
      %v9816 = vrot.slane %v7886, %v9815
      %v9817 = vlaneseq
      %v9818 = vshrl.u32 %v9817, 7
      %v9819 = vsub.s32 6, %v9818
      %v9820 = vrot.slane %v7888, %v9819
      %v9821 = vlaneseq
      %v9822 = vshrl.u32 %v9821, 7
      %v9823 = vsub.s32 6, %v9822
      %v9824 = vrot.slane %v7890, %v9823
      %v9825 = vlaneseq
      %v9826 = vshrl.u32 %v9825, 7
      %v9827 = vsub.s32 6, %v9826
      %v9828 = vrot.slane %v7892, %v9827
      %9831 = vrot.lane.b32.xlu0 %v7889, 96
      %v9832 = vpop.permute.xlu0 %9831
      %9833 = vrot.lane.b32.xlu0 %v7890, 96
      %v9834 = vpop.permute.xlu0 %9833
      %v9837 = vmul.f32 %v9768, %v9832
      %v9838 = vmul.f32 %v9768, %v9834
      %v9839 = vmul.f32 %v9772, %v9832
      %v9840 = vmul.f32 %v9772, %v9834
      %v9841 = vmul.f32 %v9776, %v9832
      %v9842 = vmul.f32 %v9776, %v9834
      %v9843 = vmul.f32 %v9780, %v9832
      %v9844 = vmul.f32 %v9780, %v9834
      %v9845 = vmul.f32 %v9784, %v9832
      %v9846 = vmul.f32 %v9784, %v9834
      %v9847 = vmul.f32 %v9788, %v9832
      %v9848 = vmul.f32 %v9788, %v9834
      %v9849 = vmul.f32 %v9792, %v9832
      %v9850 = vmul.f32 %v9792, %v9834
      %v9851 = vmul.f32 %v9796, %v9832
      %v9852 = vmul.f32 %v9796, %v9834
      %v9853 = vmul.f32 %v9800, %v9832
      %v9854 = vmul.f32 %v9800, %v9834
      %v9855 = vmul.f32 %v9804, %v9832
      %v9856 = vmul.f32 %v9804, %v9834
      %v9857 = vmul.f32 %v9808, %v9832
      %v9858 = vmul.f32 %v9808, %v9834
      %v9859 = vmul.f32 %v9812, %v9832
      %v9860 = vmul.f32 %v9812, %v9834
      %v9861 = vmul.f32 %v9816, %v9832
      %v9862 = vmul.f32 %v9816, %v9834
      %v9863 = vmul.f32 %v9820, %v9832
      %v9864 = vmul.f32 %v9820, %v9834
      %v9865 = vmul.f32 %v9824, %v9832
      %v9866 = vmul.f32 %v9824, %v9834
      %v9867 = vmul.f32 %v9828, %v9832
      %v9868 = vmul.f32 %v9828, %v9834
      %v9869 = vadd.f32 %v9733, %v9837
      %v9870 = vadd.f32 %v9734, %v9838
      %v9871 = vadd.f32 %v9735, %v9839
      %v9872 = vadd.f32 %v9736, %v9840
      %v9873 = vadd.f32 %v9737, %v9841
      %v9874 = vadd.f32 %v9738, %v9842
      %v9875 = vadd.f32 %v9739, %v9843
      %v9876 = vadd.f32 %v9740, %v9844
      %v9877 = vadd.f32 %v9741, %v9845
      %v9878 = vadd.f32 %v9742, %v9846
      %v9879 = vadd.f32 %v9743, %v9847
      %v9880 = vadd.f32 %v9744, %v9848
      %v9881 = vadd.f32 %v9745, %v9849
      %v9882 = vadd.f32 %v9746, %v9850
      %v9883 = vadd.f32 %v9747, %v9851
      %v9884 = vadd.f32 %v9748, %v9852
      %v9885 = vadd.f32 %v9749, %v9853
      %v9886 = vadd.f32 %v9750, %v9854
      %v9887 = vadd.f32 %v9751, %v9855
      %v9888 = vadd.f32 %v9752, %v9856
      %v9889 = vadd.f32 %v9753, %v9857
      %v9890 = vadd.f32 %v9754, %v9858
      %v9891 = vadd.f32 %v9755, %v9859
      %v9892 = vadd.f32 %v9756, %v9860
      %v9893 = vadd.f32 %v9757, %v9861
      %v9894 = vadd.f32 %v9758, %v9862
      %v9895 = vadd.f32 %v9759, %v9863
      %v9896 = vadd.f32 %v9760, %v9864
      %v9897 = vadd.f32 %v9761, %v9865
      %v9898 = vadd.f32 %v9762, %v9866
      %v9899 = vadd.f32 %v9763, %v9867
      %v9900 = vadd.f32 %v9764, %v9868
      %v9901 = vlaneseq
      %v9902 = vshrl.u32 %v9901, 7
      %v9903 = vsub.s32 7, %v9902
      %v9904 = vrot.slane %v7862, %v9903
      %v9905 = vlaneseq
      %v9906 = vshrl.u32 %v9905, 7
      %v9907 = vsub.s32 7, %v9906
      %v9908 = vrot.slane %v7864, %v9907
      %v9909 = vlaneseq
      %v9910 = vshrl.u32 %v9909, 7
      %v9911 = vsub.s32 7, %v9910
      %v9912 = vrot.slane %v7866, %v9911
      %v9913 = vlaneseq
      %v9914 = vshrl.u32 %v9913, 7
      %v9915 = vsub.s32 7, %v9914
      %v9916 = vrot.slane %v7868, %v9915
      %v9917 = vlaneseq
      %v9918 = vshrl.u32 %v9917, 7
      %v9919 = vsub.s32 7, %v9918
      %v9920 = vrot.slane %v7870, %v9919
      %v9921 = vlaneseq
      %v9922 = vshrl.u32 %v9921, 7
      %v9923 = vsub.s32 7, %v9922
      %v9924 = vrot.slane %v7872, %v9923
      %v9925 = vlaneseq
      %v9926 = vshrl.u32 %v9925, 7
      %v9927 = vsub.s32 7, %v9926
      %v9928 = vrot.slane %v7874, %v9927
      %v9929 = vlaneseq
      %v9930 = vshrl.u32 %v9929, 7
      %v9931 = vsub.s32 7, %v9930
      %v9932 = vrot.slane %v7876, %v9931
      %v9933 = vlaneseq
      %v9934 = vshrl.u32 %v9933, 7
      %v9935 = vsub.s32 7, %v9934
      %v9936 = vrot.slane %v7878, %v9935
      %v9937 = vlaneseq
      %v9938 = vshrl.u32 %v9937, 7
      %v9939 = vsub.s32 7, %v9938
      %v9940 = vrot.slane %v7880, %v9939
      %v9941 = vlaneseq
      %v9942 = vshrl.u32 %v9941, 7
      %v9943 = vsub.s32 7, %v9942
      %v9944 = vrot.slane %v7882, %v9943
      %v9945 = vlaneseq
      %v9946 = vshrl.u32 %v9945, 7
      %v9947 = vsub.s32 7, %v9946
      %v9948 = vrot.slane %v7884, %v9947
      %v9949 = vlaneseq
      %v9950 = vshrl.u32 %v9949, 7
      %v9951 = vsub.s32 7, %v9950
      %v9952 = vrot.slane %v7886, %v9951
      %v9953 = vlaneseq
      %v9954 = vshrl.u32 %v9953, 7
      %v9955 = vsub.s32 7, %v9954
      %v9956 = vrot.slane %v7888, %v9955
      %v9957 = vlaneseq
      %v9958 = vshrl.u32 %v9957, 7
      %v9959 = vsub.s32 7, %v9958
      %v9960 = vrot.slane %v7890, %v9959
      %v9961 = vlaneseq
      %v9962 = vshrl.u32 %v9961, 7
      %v9963 = vsub.s32 7, %v9962
      %v9964 = vrot.slane %v7892, %v9963
      %9967 = vrot.lane.b32.xlu0 %v7891, 96
      %v9968 = vpop.permute.xlu0 %9967
      %9969 = vrot.lane.b32.xlu0 %v7892, 96
      %v9970 = vpop.permute.xlu0 %9969
      %v9973 = vmul.f32 %v9904, %v9968
      %v9974 = vmul.f32 %v9904, %v9970
      %v9975 = vmul.f32 %v9908, %v9968
      %v9976 = vmul.f32 %v9908, %v9970
      %v9977 = vmul.f32 %v9912, %v9968
      %v9978 = vmul.f32 %v9912, %v9970
      %v9979 = vmul.f32 %v9916, %v9968
      %v9980 = vmul.f32 %v9916, %v9970
      %v9981 = vmul.f32 %v9920, %v9968
      %v9982 = vmul.f32 %v9920, %v9970
      %v9983 = vmul.f32 %v9924, %v9968
      %v9984 = vmul.f32 %v9924, %v9970
      %v9985 = vmul.f32 %v9928, %v9968
      %v9986 = vmul.f32 %v9928, %v9970
      %v9987 = vmul.f32 %v9932, %v9968
      %v9988 = vmul.f32 %v9932, %v9970
      %v9989 = vmul.f32 %v9936, %v9968
      %v9990 = vmul.f32 %v9936, %v9970
      %v9991 = vmul.f32 %v9940, %v9968
      %v9992 = vmul.f32 %v9940, %v9970
      %v9993 = vmul.f32 %v9944, %v9968
      %v9994 = vmul.f32 %v9944, %v9970
      %v9995 = vmul.f32 %v9948, %v9968
      %v9996 = vmul.f32 %v9948, %v9970
      %v9997 = vmul.f32 %v9952, %v9968
      %v9998 = vmul.f32 %v9952, %v9970
      %v9999 = vmul.f32 %v9956, %v9968
      %v10000 = vmul.f32 %v9956, %v9970
      %v10001 = vmul.f32 %v9960, %v9968
      %v10002 = vmul.f32 %v9960, %v9970
      %v10003 = vmul.f32 %v9964, %v9968
      %v10004 = vmul.f32 %v9964, %v9970
      %v10005 = vadd.f32 %v9869, %v9973
      %v10006 = vadd.f32 %v9870, %v9974
      %v10007 = vadd.f32 %v9871, %v9975
      %v10008 = vadd.f32 %v9872, %v9976
      %v10009 = vadd.f32 %v9873, %v9977
      %v10010 = vadd.f32 %v9874, %v9978
      %v10011 = vadd.f32 %v9875, %v9979
      %v10012 = vadd.f32 %v9876, %v9980
      %v10013 = vadd.f32 %v9877, %v9981
      %v10014 = vadd.f32 %v9878, %v9982
      %v10015 = vadd.f32 %v9879, %v9983
      %v10016 = vadd.f32 %v9880, %v9984
      %v10017 = vadd.f32 %v9881, %v9985
      %v10018 = vadd.f32 %v9882, %v9986
      %v10019 = vadd.f32 %v9883, %v9987
      %v10020 = vadd.f32 %v9884, %v9988
      %v10021 = vadd.f32 %v9885, %v9989
      %v10022 = vadd.f32 %v9886, %v9990
      %v10023 = vadd.f32 %v9887, %v9991
      %v10024 = vadd.f32 %v9888, %v9992
      %v10025 = vadd.f32 %v9889, %v9993
      %v10026 = vadd.f32 %v9890, %v9994
      %v10027 = vadd.f32 %v9891, %v9995
      %v10028 = vadd.f32 %v9892, %v9996
      %v10029 = vadd.f32 %v9893, %v9997
      %v10030 = vadd.f32 %v9894, %v9998
      %v10031 = vadd.f32 %v9895, %v9999
      %v10032 = vadd.f32 %v9896, %v10000
      %v10033 = vadd.f32 %v9897, %v10001
      %v10034 = vadd.f32 %v9898, %v10002
      %v10035 = vadd.f32 %v9899, %v10003
      %v10036 = vadd.f32 %v9900, %v10004
      %10037 = vmatprep.subr.mxu0 0.0
      %10038 = vmatpush1.msra.mxu0 %v7529
      %10039 = vmatprep.subr.mxu0 0.0
      %10040 = vmatpush1.msra.mxu0 %v7530
      %10041 = vmatprep.subr.mxu0 0.0
      %10042 = vmatpush1.msra.mxu0 %v7531
      %10043 = vmatprep.subr.mxu0 0.0
      %10044 = vmatpush1.msra.mxu0 %v7532
      %10045 = vmatprep.subr.mxu0 0.0
      %10046 = vmatpush1.msra.mxu0 0.0
      %10047 = vmatprep.subr.mxu0 0.0
      %10048 = vmatpush1.msra.mxu0 0.0
      %10049 = vmatprep.subr.mxu0 0.0
      %10050 = vmatpush1.msra.mxu0 0.0
      %10051 = vmatprep.subr.mxu0 0.0
      %10052 = vmatpush1.msra.mxu0 0.0
      %10053 = vmatprep.subr.mxu0 0.0
      %10054 = vmatpush1.msra.mxu0 0.0
      %10055 = vmatprep.subr.mxu0 0.0
      %10056 = vmatpush1.msra.mxu0 0.0
      %10057 = vmatprep.subr.mxu0 0.0
      %10058 = vmatpush1.msra.mxu0 0.0
      %10059 = vmatprep.subr.mxu0 0.0
      %10060 = vmatpush1.msra.mxu0 0.0
      %10061 = vmatprep.subr.mxu0 0.0
      %10062 = vmatpush1.msra.mxu0 0.0
      %10063 = vmatprep.subr.mxu0 0.0
      %10064 = vmatpush1.msra.mxu0 0.0
      %10065 = vmatprep.subr.mxu0 0.0
      %10066 = vmatpush1.msra.mxu0 0.0
      %10067 = vmatprep.subr.mxu0 0.0
      %10068 = vmatpush1.msra.mxu0 0.0
      %10069 = vmatprep.subr.mxu0 0.0
      %10070 = vmatpush1.msra.mxu0 0.0
      %10071 = vmatprep.subr.mxu0 0.0
      %10072 = vmatpush1.msra.mxu0 0.0
      %10073 = vmatprep.subr.mxu0 0.0
      %10074 = vmatpush1.msra.mxu0 0.0
      %10075 = vmatprep.subr.mxu0 0.0
      %10076 = vmatpush1.msra.mxu0 0.0
      %10077 = vmatprep.subr.mxu0 0.0
      %10078 = vmatpush1.msra.mxu0 0.0
      %10079 = vmatprep.subr.mxu0 0.0
      %10080 = vmatpush1.msra.mxu0 0.0
      %10081 = vmatprep.subr.mxu0 0.0
      %10082 = vmatpush1.msra.mxu0 0.0
      %10083 = vmatprep.subr.mxu0 0.0
      %10084 = vmatpush1.msra.mxu0 0.0
      %10085 = vmatprep.subr.mxu0 0.0
      %10086 = vmatpush1.msra.mxu0 0.0
      %10087 = vmatprep.subr.mxu0 0.0
      %10088 = vmatpush1.msra.mxu0 0.0
      %10089 = vmatprep.subr.mxu0 0.0
      %10090 = vmatpush1.msra.mxu0 0.0
      %10091 = vmatprep.subr.mxu0 0.0
      %10092 = vmatpush1.msra.mxu0 0.0
      %10093 = vmatprep.subr.mxu0 0.0
      %10094 = vmatpush1.msra.mxu0 0.0
      %10095 = vmatprep.subr.mxu0 0.0
      %10096 = vmatpush1.msra.mxu0 0.0
      %10097 = vmatprep.subr.mxu0 0.0
      %10098 = vmatpush1.msra.mxu0 0.0
      %10099 = vmatprep.subr.mxu0 0.0
      %10100 = vmatpush1.msra.mxu0 0.0
      %10101 = vmatprep.mubr.f32.mxu0 0.0
      %10102 = vmatmul.mubr.f32.gmra.mrb[0].mxu0 %v7541
      %v10103 = vpop.f32.mrb[0].mxu0
      %v10104 = vadd.f32 0.0, %v10103
      %v10105 = vpop.f32.mrb[0].mxu0
      %10106 = vmatprep.mubr.f32.mxu0 0.0
      %10107 = vmatmul.mubr.f32.gmra.mrb[0].mxu0 %v7544
      %v10108 = vpop.f32.mrb[0].mxu0
      %v10109 = vadd.f32 0.0, %v10108
      %v10110 = vpop.f32.mrb[0].mxu0
      %10111 = vmatprep.mubr.f32.mxu0 0.0
      %10112 = vmatmul.mubr.f32.gmra.mrb[0].mxu0 %v7547
      %v10113 = vpop.f32.mrb[0].mxu0
      %v10114 = vadd.f32 0.0, %v10113
      %v10115 = vpop.f32.mrb[0].mxu0
      %10116 = vmatprep.mubr.f32.mxu0 0.0
      %10117 = vmatmul.mubr.f32.gmra.mrb[0].mxu0 %v7550
      %v10118 = vpop.f32.mrb[0].mxu0
      %v10119 = vadd.f32 0.0, %v10118
      %v10120 = vpop.f32.mrb[0].mxu0
      %10121 = vmatprep.mubr.f32.mxu0 0.0
      %10122 = vmatmul.mubr.f32.gmra.mrb[0].mxu0 %v7553
      %v10123 = vpop.f32.mrb[0].mxu0
      %v10124 = vadd.f32 0.0, %v10123
      %v10125 = vpop.f32.mrb[0].mxu0
      %10126 = vmatprep.mubr.f32.mxu0 0.0
      %10127 = vmatmul.mubr.f32.gmra.mrb[0].mxu0 %v7556
      %v10128 = vpop.f32.mrb[0].mxu0
      %v10129 = vadd.f32 0.0, %v10128
      %v10130 = vpop.f32.mrb[0].mxu0
      %10131 = vmatprep.mubr.f32.mxu0 0.0
      %10132 = vmatmul.mubr.f32.gmra.mrb[0].mxu0 %v7559
      %v10133 = vpop.f32.mrb[0].mxu0
      %v10134 = vadd.f32 0.0, %v10133
      %v10135 = vpop.f32.mrb[0].mxu0
      %10136 = vmatprep.mubr.f32.mxu0 0.0
      %10137 = vmatmul.mubr.f32.gmra.mrb[0].mxu0 %v7562
      %v10138 = vpop.f32.mrb[0].mxu0
      %v10139 = vadd.f32 0.0, %v10138
      %v10140 = vpop.f32.mrb[0].mxu0
      %10141 = vmatprep.mubr.f32.mxu0 0.0
      %10142 = vmatmul.mubr.f32.gmra.mrb[0].mxu0 %v7565
      %v10143 = vpop.f32.mrb[0].mxu0
      %v10144 = vadd.f32 0.0, %v10143
      %v10145 = vpop.f32.mrb[0].mxu0
      %10146 = vmatprep.mubr.f32.mxu0 0.0
      %10147 = vmatmul.mubr.f32.gmra.mrb[0].mxu0 %v7568
      %v10148 = vpop.f32.mrb[0].mxu0
      %v10149 = vadd.f32 0.0, %v10148
      %v10150 = vpop.f32.mrb[0].mxu0
      %10151 = vmatprep.mubr.f32.mxu0 0.0
      %10152 = vmatmul.mubr.f32.gmra.mrb[0].mxu0 %v7571
      %v10153 = vpop.f32.mrb[0].mxu0
      %v10154 = vadd.f32 0.0, %v10153
      %v10155 = vpop.f32.mrb[0].mxu0
      %10156 = vmatprep.mubr.f32.mxu0 0.0
      %10157 = vmatmul.mubr.f32.gmra.mrb[0].mxu0 %v7574
      %v10158 = vpop.f32.mrb[0].mxu0
      %v10159 = vadd.f32 0.0, %v10158
      %v10160 = vpop.f32.mrb[0].mxu0
      %10161 = vmatprep.mubr.f32.mxu0 0.0
      %10162 = vmatmul.mubr.f32.gmra.mrb[0].mxu0 %v7577
      %v10163 = vpop.f32.mrb[0].mxu0
      %v10164 = vadd.f32 0.0, %v10163
      %v10165 = vpop.f32.mrb[0].mxu0
      %10166 = vmatprep.mubr.f32.mxu0 0.0
      %10167 = vmatmul.mubr.f32.gmra.mrb[0].mxu0 %v7580
      %v10168 = vpop.f32.mrb[0].mxu0
      %v10169 = vadd.f32 0.0, %v10168
      %v10170 = vpop.f32.mrb[0].mxu0
      %10171 = vmatprep.mubr.f32.mxu0 0.0
      %10172 = vmatmul.mubr.f32.gmra.mrb[0].mxu0 %v7583
      %v10173 = vpop.f32.mrb[0].mxu0
      %v10174 = vadd.f32 0.0, %v10173
      %v10175 = vpop.f32.mrb[0].mxu0
      %10176 = vmatprep.mubr.f32.mxu0 0.0
      %10177 = vmatmul.mubr.f32.gmra.mrb[0].mxu0 %v7586
      %v10178 = vpop.f32.mrb[0].mxu0
      %v10179 = vadd.f32 0.0, %v10178
      %v10180 = vpop.f32.mrb[0].mxu0
      %10181 = vmatprep.mubr.f32.mxu0 0.0
      %10182 = vmatmul.mubr.f32.gmra.mrb[0].mxu0 %v7589
      %v10183 = vpop.f32.mrb[0].mxu0
      %v10184 = vadd.f32 0.0, %v10183
      %v10185 = vpop.f32.mrb[0].mxu0
      %10186 = vmatprep.mubr.f32.mxu0 0.0
      %10187 = vmatmul.mubr.f32.gmra.mrb[0].mxu0 %v7592
      %v10188 = vpop.f32.mrb[0].mxu0
      %v10189 = vadd.f32 0.0, %v10188
      %v10190 = vpop.f32.mrb[0].mxu0
      %10191 = vmatprep.mubr.f32.mxu0 0.0
      %10192 = vmatmul.mubr.f32.gmra.mrb[0].mxu0 %v7595
      %v10193 = vpop.f32.mrb[0].mxu0
      %v10194 = vadd.f32 0.0, %v10193
      %v10195 = vpop.f32.mrb[0].mxu0
      %10196 = vmatprep.mubr.f32.mxu0 0.0
      %10197 = vmatmul.mubr.f32.gmra.mrb[0].mxu0 %v7598
      %v10198 = vpop.f32.mrb[0].mxu0
      %v10199 = vadd.f32 0.0, %v10198
      %v10200 = vpop.f32.mrb[0].mxu0
      %10201 = vmatprep.mubr.f32.mxu0 0.0
      %10202 = vmatmul.mubr.f32.gmra.mrb[0].mxu0 %v7601
      %v10203 = vpop.f32.mrb[0].mxu0
      %v10204 = vadd.f32 0.0, %v10203
      %v10205 = vpop.f32.mrb[0].mxu0
      %10206 = vmatprep.mubr.f32.mxu0 0.0
      %10207 = vmatmul.mubr.f32.gmra.mrb[0].mxu0 %v7604
      %v10208 = vpop.f32.mrb[0].mxu0
      %v10209 = vadd.f32 0.0, %v10208
      %v10210 = vpop.f32.mrb[0].mxu0
      %10211 = vmatprep.mubr.f32.mxu0 0.0
      %10212 = vmatmul.mubr.f32.gmra.mrb[0].mxu0 %v7607
      %v10213 = vpop.f32.mrb[0].mxu0
      %v10214 = vadd.f32 0.0, %v10213
      %v10215 = vpop.f32.mrb[0].mxu0
      %10216 = vmatprep.mubr.f32.mxu0 0.0
      %10217 = vmatmul.mubr.f32.gmra.mrb[0].mxu0 %v7610
      %v10218 = vpop.f32.mrb[0].mxu0
      %v10219 = vadd.f32 0.0, %v10218
      %v10220 = vpop.f32.mrb[0].mxu0
      %10221 = vmatprep.mubr.f32.mxu0 0.0
      %10222 = vmatmul.mubr.f32.gmra.mrb[0].mxu0 %v7613
      %v10223 = vpop.f32.mrb[0].mxu0
      %v10224 = vadd.f32 0.0, %v10223
      %v10225 = vpop.f32.mrb[0].mxu0
      %10226 = vmatprep.mubr.f32.mxu0 0.0
      %10227 = vmatmul.mubr.f32.gmra.mrb[0].mxu0 %v7616
      %v10228 = vpop.f32.mrb[0].mxu0
      %v10229 = vadd.f32 0.0, %v10228
      %v10230 = vpop.f32.mrb[0].mxu0
      %10231 = vmatprep.mubr.f32.mxu0 0.0
      %10232 = vmatmul.mubr.f32.gmra.mrb[0].mxu0 %v7619
      %v10233 = vpop.f32.mrb[0].mxu0
      %v10234 = vadd.f32 0.0, %v10233
      %v10235 = vpop.f32.mrb[0].mxu0
      %10236 = vmatprep.mubr.f32.mxu0 0.0
      %10237 = vmatmul.mubr.f32.gmra.mrb[0].mxu0 %v7622
      %v10238 = vpop.f32.mrb[0].mxu0
      %v10239 = vadd.f32 0.0, %v10238
      %v10240 = vpop.f32.mrb[0].mxu0
      %10241 = vmatprep.mubr.f32.mxu0 0.0
      %10242 = vmatmul.mubr.f32.gmra.mrb[0].mxu0 %v7625
      %v10243 = vpop.f32.mrb[0].mxu0
      %v10244 = vadd.f32 0.0, %v10243
      %v10245 = vpop.f32.mrb[0].mxu0
      %10246 = vmatprep.mubr.f32.mxu0 0.0
      %10247 = vmatmul.mubr.f32.gmra.mrb[0].mxu0 %v7628
      %v10248 = vpop.f32.mrb[0].mxu0
      %v10249 = vadd.f32 0.0, %v10248
      %v10250 = vpop.f32.mrb[0].mxu0
      %10251 = vmatprep.mubr.f32.mxu0 0.0
      %10252 = vmatmul.mubr.f32.gmra.mrb[0].mxu0 %v7631
      %v10253 = vpop.f32.mrb[0].mxu0
      %v10254 = vadd.f32 0.0, %v10253
      %v10255 = vpop.f32.mrb[0].mxu0
      %10256 = vmatprep.mubr.f32.mxu0 0.0
      %10257 = vmatmul.mubr.f32.gmra.mrb[0].mxu0 %v7634
      %v10258 = vpop.f32.mrb[0].mxu0
      %v10259 = vadd.f32 0.0, %v10258
      %v10260 = vpop.f32.mrb[0].mxu0
      %10261 = vdwg.mxu0
      %v10263 = vsel %vm3483, %v10005, 0
      %v10266 = vsel %vm3483, %v10006, 0
      %v10269 = vsel %vm3483, %v10007, 0
      %v10272 = vsel %vm3483, %v10008, 0
      %v10275 = vsel %vm3483, %v10009, 0
      %v10278 = vsel %vm3483, %v10010, 0
      %v10281 = vsel %vm3483, %v10011, 0
      %v10284 = vsel %vm3483, %v10012, 0
      %v10287 = vsel %vm3483, %v10013, 0
      %v10290 = vsel %vm3483, %v10014, 0
      %v10293 = vsel %vm3483, %v10015, 0
      %v10296 = vsel %vm3483, %v10016, 0
      %v10299 = vsel %vm3483, %v10017, 0
      %v10302 = vsel %vm3483, %v10018, 0
      %v10305 = vsel %vm3483, %v10019, 0
      %v10308 = vsel %vm3483, %v10020, 0
      %v10311 = vsel %vm3483, %v10021, 0
      %v10314 = vsel %vm3483, %v10022, 0
      %v10317 = vsel %vm3483, %v10023, 0
      %v10320 = vsel %vm3483, %v10024, 0
      %v10323 = vsel %vm3483, %v10025, 0
      %v10326 = vsel %vm3483, %v10026, 0
      %v10329 = vsel %vm3483, %v10027, 0
      %v10332 = vsel %vm3483, %v10028, 0
      %v10335 = vsel %vm3483, %v10029, 0
      %v10338 = vsel %vm3483, %v10030, 0
      %v10341 = vsel %vm3483, %v10031, 0
      %v10344 = vsel %vm3483, %v10032, 0
      %v10347 = vsel %vm3483, %v10033, 0
      %v10350 = vsel %vm3483, %v10034, 0
      %v10353 = vsel %vm3483, %v10035, 0
      %v10356 = vsel %vm3483, %v10036, 0
      %10358 = vmatprep.subr.mxu0 0.0
      %10359 = vmatpush1.msra.mxu0 %v7525
      %10360 = vmatprep.subr.mxu0 0.0
      %10361 = vmatpush1.msra.mxu0 %v7526
      %10362 = vmatprep.subr.mxu0 0.0
      %10363 = vmatpush1.msra.mxu0 %v7527
      %10364 = vmatprep.subr.mxu0 0.0
      %10365 = vmatpush1.msra.mxu0 %v7528
      %10366 = vmatprep.subr.mxu0 0.0
      %10367 = vmatpush1.msra.mxu0 0.0
      %10368 = vmatprep.subr.mxu0 0.0
      %10369 = vmatpush1.msra.mxu0 0.0
      %10370 = vmatprep.subr.mxu0 0.0
      %10371 = vmatpush1.msra.mxu0 0.0
      %10372 = vmatprep.subr.mxu0 0.0
      %10373 = vmatpush1.msra.mxu0 0.0
      %10374 = vmatprep.subr.mxu0 0.0
      %10375 = vmatpush1.msra.mxu0 0.0
      %10376 = vmatprep.subr.mxu0 0.0
      %10377 = vmatpush1.msra.mxu0 0.0
      %10378 = vmatprep.subr.mxu0 0.0
      %10379 = vmatpush1.msra.mxu0 0.0
      %10380 = vmatprep.subr.mxu0 0.0
      %10381 = vmatpush1.msra.mxu0 0.0
      %10382 = vmatprep.subr.mxu0 0.0
      %10383 = vmatpush1.msra.mxu0 0.0
      %10384 = vmatprep.subr.mxu0 0.0
      %10385 = vmatpush1.msra.mxu0 0.0
      %10386 = vmatprep.subr.mxu0 0.0
      %10387 = vmatpush1.msra.mxu0 0.0
      %10388 = vmatprep.subr.mxu0 0.0
      %10389 = vmatpush1.msra.mxu0 0.0
      %10390 = vmatprep.subr.mxu0 0.0
      %10391 = vmatpush1.msra.mxu0 0.0
      %10392 = vmatprep.subr.mxu0 0.0
      %10393 = vmatpush1.msra.mxu0 0.0
      %10394 = vmatprep.subr.mxu0 0.0
      %10395 = vmatpush1.msra.mxu0 0.0
      %10396 = vmatprep.subr.mxu0 0.0
      %10397 = vmatpush1.msra.mxu0 0.0
      %10398 = vmatprep.subr.mxu0 0.0
      %10399 = vmatpush1.msra.mxu0 0.0
      %10400 = vmatprep.subr.mxu0 0.0
      %10401 = vmatpush1.msra.mxu0 0.0
      %10402 = vmatprep.subr.mxu0 0.0
      %10403 = vmatpush1.msra.mxu0 0.0
      %10404 = vmatprep.subr.mxu0 0.0
      %10405 = vmatpush1.msra.mxu0 0.0
      %10406 = vmatprep.subr.mxu0 0.0
      %10407 = vmatpush1.msra.mxu0 0.0
      %10408 = vmatprep.subr.mxu0 0.0
      %10409 = vmatpush1.msra.mxu0 0.0
      %10410 = vmatprep.subr.mxu0 0.0
      %10411 = vmatpush1.msra.mxu0 0.0
      %10412 = vmatprep.subr.mxu0 0.0
      %10413 = vmatpush1.msra.mxu0 0.0
      %10414 = vmatprep.subr.mxu0 0.0
      %10415 = vmatpush1.msra.mxu0 0.0
      %10416 = vmatprep.subr.mxu0 0.0
      %10417 = vmatpush1.msra.mxu0 0.0
      %10418 = vmatprep.subr.mxu0 0.0
      %10419 = vmatpush1.msra.mxu0 0.0
      %10420 = vmatprep.subr.mxu0 0.0
      %10421 = vmatpush1.msra.mxu0 0.0
      %10422 = vmatprep.mubr.f32.mxu0 0.0
      %10423 = vmatmul.mubr.f32.gmra.mrb[0].mxu0 %v10263
      %v10424 = vpop.f32.mrb[0].mxu0
      %v10425 = vadd.f32 %v10104, %v10424
      %v10426 = vpop.f32.mrb[0].mxu0
      %10427 = vmatprep.mubr.f32.mxu0 0.0
      %10428 = vmatmul.mubr.f32.gmra.mrb[0].mxu0 %v10266
      %v10429 = vpop.f32.mrb[0].mxu0
      %v10430 = vadd.f32 %v10109, %v10429
      %v10431 = vpop.f32.mrb[0].mxu0
      %10432 = vmatprep.mubr.f32.mxu0 0.0
      %10433 = vmatmul.mubr.f32.gmra.mrb[0].mxu0 %v10269
      %v10434 = vpop.f32.mrb[0].mxu0
      %v10435 = vadd.f32 %v10114, %v10434
      %v10436 = vpop.f32.mrb[0].mxu0
      %10437 = vmatprep.mubr.f32.mxu0 0.0
      %10438 = vmatmul.mubr.f32.gmra.mrb[0].mxu0 %v10272
      %v10439 = vpop.f32.mrb[0].mxu0
      %v10440 = vadd.f32 %v10119, %v10439
      %v10441 = vpop.f32.mrb[0].mxu0
      %10442 = vmatprep.mubr.f32.mxu0 0.0
      %10443 = vmatmul.mubr.f32.gmra.mrb[0].mxu0 %v10275
      %v10444 = vpop.f32.mrb[0].mxu0
      %v10445 = vadd.f32 %v10124, %v10444
      %v10446 = vpop.f32.mrb[0].mxu0
      %10447 = vmatprep.mubr.f32.mxu0 0.0
      %10448 = vmatmul.mubr.f32.gmra.mrb[0].mxu0 %v10278
      %v10449 = vpop.f32.mrb[0].mxu0
      %v10450 = vadd.f32 %v10129, %v10449
      %v10451 = vpop.f32.mrb[0].mxu0
      %10452 = vmatprep.mubr.f32.mxu0 0.0
      %10453 = vmatmul.mubr.f32.gmra.mrb[0].mxu0 %v10281
      %v10454 = vpop.f32.mrb[0].mxu0
      %v10455 = vadd.f32 %v10134, %v10454
      %v10456 = vpop.f32.mrb[0].mxu0
      %10457 = vmatprep.mubr.f32.mxu0 0.0
      %10458 = vmatmul.mubr.f32.gmra.mrb[0].mxu0 %v10284
      %v10459 = vpop.f32.mrb[0].mxu0
      %v10460 = vadd.f32 %v10139, %v10459
      %v10461 = vpop.f32.mrb[0].mxu0
      %10462 = vmatprep.mubr.f32.mxu0 0.0
      %10463 = vmatmul.mubr.f32.gmra.mrb[0].mxu0 %v10287
      %v10464 = vpop.f32.mrb[0].mxu0
      %v10465 = vadd.f32 %v10144, %v10464
      %v10466 = vpop.f32.mrb[0].mxu0
      %10467 = vmatprep.mubr.f32.mxu0 0.0
      %10468 = vmatmul.mubr.f32.gmra.mrb[0].mxu0 %v10290
      %v10469 = vpop.f32.mrb[0].mxu0
      %v10470 = vadd.f32 %v10149, %v10469
      %v10471 = vpop.f32.mrb[0].mxu0
      %10472 = vmatprep.mubr.f32.mxu0 0.0
      %10473 = vmatmul.mubr.f32.gmra.mrb[0].mxu0 %v10293
      %v10474 = vpop.f32.mrb[0].mxu0
      %v10475 = vadd.f32 %v10154, %v10474
      %v10476 = vpop.f32.mrb[0].mxu0
      %10477 = vmatprep.mubr.f32.mxu0 0.0
      %10478 = vmatmul.mubr.f32.gmra.mrb[0].mxu0 %v10296
      %v10479 = vpop.f32.mrb[0].mxu0
      %v10480 = vadd.f32 %v10159, %v10479
      %v10481 = vpop.f32.mrb[0].mxu0
      %10482 = vmatprep.mubr.f32.mxu0 0.0
      %10483 = vmatmul.mubr.f32.gmra.mrb[0].mxu0 %v10299
      %v10484 = vpop.f32.mrb[0].mxu0
      %v10485 = vadd.f32 %v10164, %v10484
      %v10486 = vpop.f32.mrb[0].mxu0
      %10487 = vmatprep.mubr.f32.mxu0 0.0
      %10488 = vmatmul.mubr.f32.gmra.mrb[0].mxu0 %v10302
      %v10489 = vpop.f32.mrb[0].mxu0
      %v10490 = vadd.f32 %v10169, %v10489
      %v10491 = vpop.f32.mrb[0].mxu0
      %10492 = vmatprep.mubr.f32.mxu0 0.0
      %10493 = vmatmul.mubr.f32.gmra.mrb[0].mxu0 %v10305
      %v10494 = vpop.f32.mrb[0].mxu0
      %v10495 = vadd.f32 %v10174, %v10494
      %v10496 = vpop.f32.mrb[0].mxu0
      %10497 = vmatprep.mubr.f32.mxu0 0.0
      %10498 = vmatmul.mubr.f32.gmra.mrb[0].mxu0 %v10308
      %v10499 = vpop.f32.mrb[0].mxu0
      %v10500 = vadd.f32 %v10179, %v10499
      %v10501 = vpop.f32.mrb[0].mxu0
      %10502 = vmatprep.mubr.f32.mxu0 0.0
      %10503 = vmatmul.mubr.f32.gmra.mrb[0].mxu0 %v10311
      %v10504 = vpop.f32.mrb[0].mxu0
      %v10505 = vadd.f32 %v10184, %v10504
      %v10506 = vpop.f32.mrb[0].mxu0
      %10507 = vmatprep.mubr.f32.mxu0 0.0
      %10508 = vmatmul.mubr.f32.gmra.mrb[0].mxu0 %v10314
      %v10509 = vpop.f32.mrb[0].mxu0
      %v10510 = vadd.f32 %v10189, %v10509
      %v10511 = vpop.f32.mrb[0].mxu0
      %10512 = vmatprep.mubr.f32.mxu0 0.0
      %10513 = vmatmul.mubr.f32.gmra.mrb[0].mxu0 %v10317
      %v10514 = vpop.f32.mrb[0].mxu0
      %v10515 = vadd.f32 %v10194, %v10514
      %v10516 = vpop.f32.mrb[0].mxu0
      %10517 = vmatprep.mubr.f32.mxu0 0.0
      %10518 = vmatmul.mubr.f32.gmra.mrb[0].mxu0 %v10320
      %v10519 = vpop.f32.mrb[0].mxu0
      %v10520 = vadd.f32 %v10199, %v10519
      %v10521 = vpop.f32.mrb[0].mxu0
      %10522 = vmatprep.mubr.f32.mxu0 0.0
      %10523 = vmatmul.mubr.f32.gmra.mrb[0].mxu0 %v10323
      %v10524 = vpop.f32.mrb[0].mxu0
      %v10525 = vadd.f32 %v10204, %v10524
      %v10526 = vpop.f32.mrb[0].mxu0
      %10527 = vmatprep.mubr.f32.mxu0 0.0
      %10528 = vmatmul.mubr.f32.gmra.mrb[0].mxu0 %v10326
      %v10529 = vpop.f32.mrb[0].mxu0
      %v10530 = vadd.f32 %v10209, %v10529
      %v10531 = vpop.f32.mrb[0].mxu0
      %10532 = vmatprep.mubr.f32.mxu0 0.0
      %10533 = vmatmul.mubr.f32.gmra.mrb[0].mxu0 %v10329
      %v10534 = vpop.f32.mrb[0].mxu0
      %v10535 = vadd.f32 %v10214, %v10534
      %v10536 = vpop.f32.mrb[0].mxu0
      %10537 = vmatprep.mubr.f32.mxu0 0.0
      %10538 = vmatmul.mubr.f32.gmra.mrb[0].mxu0 %v10332
      %v10539 = vpop.f32.mrb[0].mxu0
      %v10540 = vadd.f32 %v10219, %v10539
      %v10541 = vpop.f32.mrb[0].mxu0
      %10542 = vmatprep.mubr.f32.mxu0 0.0
      %10543 = vmatmul.mubr.f32.gmra.mrb[0].mxu0 %v10335
      %v10544 = vpop.f32.mrb[0].mxu0
      %v10545 = vadd.f32 %v10224, %v10544
      %v10546 = vpop.f32.mrb[0].mxu0
      %10547 = vmatprep.mubr.f32.mxu0 0.0
      %10548 = vmatmul.mubr.f32.gmra.mrb[0].mxu0 %v10338
      %v10549 = vpop.f32.mrb[0].mxu0
      %v10550 = vadd.f32 %v10229, %v10549
      %v10551 = vpop.f32.mrb[0].mxu0
      %10552 = vmatprep.mubr.f32.mxu0 0.0
      %10553 = vmatmul.mubr.f32.gmra.mrb[0].mxu0 %v10341
      %v10554 = vpop.f32.mrb[0].mxu0
      %v10555 = vadd.f32 %v10234, %v10554
      %v10556 = vpop.f32.mrb[0].mxu0
      %10557 = vmatprep.mubr.f32.mxu0 0.0
      %10558 = vmatmul.mubr.f32.gmra.mrb[0].mxu0 %v10344
      %v10559 = vpop.f32.mrb[0].mxu0
      %v10560 = vadd.f32 %v10239, %v10559
      %v10561 = vpop.f32.mrb[0].mxu0
      %10562 = vmatprep.mubr.f32.mxu0 0.0
      %10563 = vmatmul.mubr.f32.gmra.mrb[0].mxu0 %v10347
      %v10564 = vpop.f32.mrb[0].mxu0
      %v10565 = vadd.f32 %v10244, %v10564
      %v10566 = vpop.f32.mrb[0].mxu0
      %10567 = vmatprep.mubr.f32.mxu0 0.0
      %10568 = vmatmul.mubr.f32.gmra.mrb[0].mxu0 %v10350
      %v10569 = vpop.f32.mrb[0].mxu0
      %v10570 = vadd.f32 %v10249, %v10569
      %v10571 = vpop.f32.mrb[0].mxu0
      %10572 = vmatprep.mubr.f32.mxu0 0.0
      %10573 = vmatmul.mubr.f32.gmra.mrb[0].mxu0 %v10353
      %v10574 = vpop.f32.mrb[0].mxu0
      %v10575 = vadd.f32 %v10254, %v10574
      %v10576 = vpop.f32.mrb[0].mxu0
      %10577 = vmatprep.mubr.f32.mxu0 0.0
      %10578 = vmatmul.mubr.f32.gmra.mrb[0].mxu0 %v10356
      %v10579 = vpop.f32.mrb[0].mxu0
      %v10580 = vadd.f32 %v10259, %v10579
      %v10581 = vpop.f32.mrb[0].mxu0
      %10582 = vdwg.mxu0
      %v10584 = vlaneseq
      %v10585 = vshrl.u32 %v10584, 7
      %v10586 = vsub.s32 0, %v10585
      %v10587 = vrot.slane %v7533, %v10586
      %v10589 = vadd.f32 %v10425, %v10587
      %v10590 = vadd.f32 %v10430, %v10587
      %v10591 = vadd.f32 %v10435, %v10587
      %v10592 = vadd.f32 %v10440, %v10587
      %v10593 = vadd.f32 %v10445, %v10587
      %v10594 = vadd.f32 %v10450, %v10587
      %v10595 = vadd.f32 %v10455, %v10587
      %v10596 = vadd.f32 %v10460, %v10587
      %v10597 = vadd.f32 %v10465, %v10587
      %v10598 = vadd.f32 %v10470, %v10587
      %v10599 = vadd.f32 %v10475, %v10587
      %v10600 = vadd.f32 %v10480, %v10587
      %v10601 = vadd.f32 %v10485, %v10587
      %v10602 = vadd.f32 %v10490, %v10587
      %v10603 = vadd.f32 %v10495, %v10587
      %v10604 = vadd.f32 %v10500, %v10587
      %v10605 = vadd.f32 %v10505, %v10587
      %v10606 = vadd.f32 %v10510, %v10587
      %v10607 = vadd.f32 %v10515, %v10587
      %v10608 = vadd.f32 %v10520, %v10587
      %v10609 = vadd.f32 %v10525, %v10587
      %v10610 = vadd.f32 %v10530, %v10587
      %v10611 = vadd.f32 %v10535, %v10587
      %v10612 = vadd.f32 %v10540, %v10587
      %v10613 = vadd.f32 %v10545, %v10587
      %v10614 = vadd.f32 %v10550, %v10587
      %v10615 = vadd.f32 %v10555, %v10587
      %v10616 = vadd.f32 %v10560, %v10587
      %v10617 = vadd.f32 %v10565, %v10587
      %v10618 = vadd.f32 %v10570, %v10587
      %v10619 = vadd.f32 %v10575, %v10587
      %v10620 = vadd.f32 %v10580, %v10587
      %v10621 = vmax.f32 %v10589, 0.0
      %v10622 = vmax.f32 %v10590, 0.0
      %v10623 = vmax.f32 %v10591, 0.0
      %v10624 = vmax.f32 %v10592, 0.0
      %v10625 = vmax.f32 %v10593, 0.0
      %v10626 = vmax.f32 %v10594, 0.0
      %v10627 = vmax.f32 %v10595, 0.0
      %v10628 = vmax.f32 %v10596, 0.0
      %v10629 = vmax.f32 %v10597, 0.0
      %v10630 = vmax.f32 %v10598, 0.0
      %v10631 = vmax.f32 %v10599, 0.0
      %v10632 = vmax.f32 %v10600, 0.0
      %v10633 = vmax.f32 %v10601, 0.0
      %v10634 = vmax.f32 %v10602, 0.0
      %v10635 = vmax.f32 %v10603, 0.0
      %v10636 = vmax.f32 %v10604, 0.0
      %v10637 = vmax.f32 %v10605, 0.0
      %v10638 = vmax.f32 %v10606, 0.0
      %v10639 = vmax.f32 %v10607, 0.0
      %v10640 = vmax.f32 %v10608, 0.0
      %v10641 = vmax.f32 %v10609, 0.0
      %v10642 = vmax.f32 %v10610, 0.0
      %v10643 = vmax.f32 %v10611, 0.0
      %v10644 = vmax.f32 %v10612, 0.0
      %v10645 = vmax.f32 %v10613, 0.0
      %v10646 = vmax.f32 %v10614, 0.0
      %v10647 = vmax.f32 %v10615, 0.0
      %v10648 = vmax.f32 %v10616, 0.0
      %v10649 = vmax.f32 %v10617, 0.0
      %v10650 = vmax.f32 %v10618, 0.0
      %v10651 = vmax.f32 %v10619, 0.0
      %v10652 = vmax.f32 %v10620, 0.0
      %v10653 = vmul.f32 %v10621, %v3878
      %v10654 = vmul.f32 %v10622, %v3883
      %v10655 = vmul.f32 %v10623, %v3888
      %v10656 = vmul.f32 %v10624, %v3893
      %v10657 = vmul.f32 %v10625, %v3898
      %v10658 = vmul.f32 %v10626, %v3903
      %v10659 = vmul.f32 %v10627, %v3908
      %v10660 = vmul.f32 %v10628, %v3913
      %v10661 = vmul.f32 %v10629, %v3918
      %v10662 = vmul.f32 %v10630, %v3923
      %v10663 = vmul.f32 %v10631, %v3928
      %v10664 = vmul.f32 %v10632, %v3933
      %v10665 = vmul.f32 %v10633, %v3938
      %v10666 = vmul.f32 %v10634, %v3943
      %v10667 = vmul.f32 %v10635, %v3948
      %v10668 = vmul.f32 %v10636, %v3953
      %v10669 = vmul.f32 %v10637, %v3958
      %v10670 = vmul.f32 %v10638, %v3963
      %v10671 = vmul.f32 %v10639, %v3968
      %v10672 = vmul.f32 %v10640, %v3973
      %v10673 = vmul.f32 %v10641, %v3978
      %v10674 = vmul.f32 %v10642, %v3983
      %v10675 = vmul.f32 %v10643, %v3988
      %v10676 = vmul.f32 %v10644, %v3993
      %v10677 = vmul.f32 %v10645, %v3998
      %v10678 = vmul.f32 %v10646, %v4003
      %v10679 = vmul.f32 %v10647, %v4008
      %v10680 = vmul.f32 %v10648, %v4013
      %v10681 = vmul.f32 %v10649, %v4018
      %v10682 = vmul.f32 %v10650, %v4023
      %v10683 = vmul.f32 %v10651, %v4028
      %v10684 = vmul.f32 %v10652, %v4033
      %v10685 = vsel %vm3483, %v10653, 0.0
      %v10686 = vsel %vm3483, %v10654, 0.0
      %v10687 = vadd.f32 %v10685, %v10686
      %v10688 = vrot.slane %v10687, 4
      %v10689 = vadd.f32 %v10687, %v10688
      %v10690 = vrot.slane %v10689, 2
      %v10691 = vadd.f32 %v10689, %v10690
      %v10692 = vrot.slane %v10691, 1
      %v10693 = vadd.f32 %v10691, %v10692
      %v10694 = vsel %vm3483, %v10655, 0.0
      %v10695 = vsel %vm3483, %v10656, 0.0
      %v10696 = vadd.f32 %v10694, %v10695
      %v10697 = vrot.slane %v10696, 4
      %v10698 = vadd.f32 %v10696, %v10697
      %v10699 = vrot.slane %v10698, 2
      %v10700 = vadd.f32 %v10698, %v10699
      %v10701 = vrot.slane %v10700, 1
      %v10702 = vadd.f32 %v10700, %v10701
      %v10703 = vsel %vm3483, %v10657, 0.0
      %v10704 = vsel %vm3483, %v10658, 0.0
      %v10705 = vadd.f32 %v10703, %v10704
      %v10706 = vrot.slane %v10705, 4
      %v10707 = vadd.f32 %v10705, %v10706
      %v10708 = vrot.slane %v10707, 2
      %v10709 = vadd.f32 %v10707, %v10708
      %v10710 = vrot.slane %v10709, 1
      %v10711 = vadd.f32 %v10709, %v10710
      %v10712 = vsel %vm3483, %v10659, 0.0
      %v10713 = vsel %vm3483, %v10660, 0.0
      %v10714 = vadd.f32 %v10712, %v10713
      %v10715 = vrot.slane %v10714, 4
      %v10716 = vadd.f32 %v10714, %v10715
      %v10717 = vrot.slane %v10716, 2
      %v10718 = vadd.f32 %v10716, %v10717
      %v10719 = vrot.slane %v10718, 1
      %v10720 = vadd.f32 %v10718, %v10719
      %v10721 = vsel %vm3483, %v10661, 0.0
      %v10722 = vsel %vm3483, %v10662, 0.0
      %v10723 = vadd.f32 %v10721, %v10722
      %v10724 = vrot.slane %v10723, 4
      %v10725 = vadd.f32 %v10723, %v10724
      %v10726 = vrot.slane %v10725, 2
      %v10727 = vadd.f32 %v10725, %v10726
      %v10728 = vrot.slane %v10727, 1
      %v10729 = vadd.f32 %v10727, %v10728
      %v10730 = vsel %vm3483, %v10663, 0.0
      %v10731 = vsel %vm3483, %v10664, 0.0
      %v10732 = vadd.f32 %v10730, %v10731
      %v10733 = vrot.slane %v10732, 4
      %v10734 = vadd.f32 %v10732, %v10733
      %v10735 = vrot.slane %v10734, 2
      %v10736 = vadd.f32 %v10734, %v10735
      %v10737 = vrot.slane %v10736, 1
      %v10738 = vadd.f32 %v10736, %v10737
      %v10739 = vsel %vm3483, %v10665, 0.0
      %v10740 = vsel %vm3483, %v10666, 0.0
      %v10741 = vadd.f32 %v10739, %v10740
      %v10742 = vrot.slane %v10741, 4
      %v10743 = vadd.f32 %v10741, %v10742
      %v10744 = vrot.slane %v10743, 2
      %v10745 = vadd.f32 %v10743, %v10744
      %v10746 = vrot.slane %v10745, 1
      %v10747 = vadd.f32 %v10745, %v10746
      %v10748 = vsel %vm3483, %v10667, 0.0
      %v10749 = vsel %vm3483, %v10668, 0.0
      %v10750 = vadd.f32 %v10748, %v10749
      %v10751 = vrot.slane %v10750, 4
      %v10752 = vadd.f32 %v10750, %v10751
      %v10753 = vrot.slane %v10752, 2
      %v10754 = vadd.f32 %v10752, %v10753
      %v10755 = vrot.slane %v10754, 1
      %v10756 = vadd.f32 %v10754, %v10755
      %v10757 = vsel %vm3483, %v10669, 0.0
      %v10758 = vsel %vm3483, %v10670, 0.0
      %v10759 = vadd.f32 %v10757, %v10758
      %v10760 = vrot.slane %v10759, 4
      %v10761 = vadd.f32 %v10759, %v10760
      %v10762 = vrot.slane %v10761, 2
      %v10763 = vadd.f32 %v10761, %v10762
      %v10764 = vrot.slane %v10763, 1
      %v10765 = vadd.f32 %v10763, %v10764
      %v10766 = vsel %vm3483, %v10671, 0.0
      %v10767 = vsel %vm3483, %v10672, 0.0
      %v10768 = vadd.f32 %v10766, %v10767
      %v10769 = vrot.slane %v10768, 4
      %v10770 = vadd.f32 %v10768, %v10769
      %v10771 = vrot.slane %v10770, 2
      %v10772 = vadd.f32 %v10770, %v10771
      %v10773 = vrot.slane %v10772, 1
      %v10774 = vadd.f32 %v10772, %v10773
      %v10775 = vsel %vm3483, %v10673, 0.0
      %v10776 = vsel %vm3483, %v10674, 0.0
      %v10777 = vadd.f32 %v10775, %v10776
      %v10778 = vrot.slane %v10777, 4
      %v10779 = vadd.f32 %v10777, %v10778
      %v10780 = vrot.slane %v10779, 2
      %v10781 = vadd.f32 %v10779, %v10780
      %v10782 = vrot.slane %v10781, 1
      %v10783 = vadd.f32 %v10781, %v10782
      %v10784 = vsel %vm3483, %v10675, 0.0
      %v10785 = vsel %vm3483, %v10676, 0.0
      %v10786 = vadd.f32 %v10784, %v10785
      %v10787 = vrot.slane %v10786, 4
      %v10788 = vadd.f32 %v10786, %v10787
      %v10789 = vrot.slane %v10788, 2
      %v10790 = vadd.f32 %v10788, %v10789
      %v10791 = vrot.slane %v10790, 1
      %v10792 = vadd.f32 %v10790, %v10791
      %v10793 = vsel %vm3483, %v10677, 0.0
      %v10794 = vsel %vm3483, %v10678, 0.0
      %v10795 = vadd.f32 %v10793, %v10794
      %v10796 = vrot.slane %v10795, 4
      %v10797 = vadd.f32 %v10795, %v10796
      %v10798 = vrot.slane %v10797, 2
      %v10799 = vadd.f32 %v10797, %v10798
      %v10800 = vrot.slane %v10799, 1
      %v10801 = vadd.f32 %v10799, %v10800
      %v10802 = vsel %vm3483, %v10679, 0.0
      %v10803 = vsel %vm3483, %v10680, 0.0
      %v10804 = vadd.f32 %v10802, %v10803
      %v10805 = vrot.slane %v10804, 4
      %v10806 = vadd.f32 %v10804, %v10805
      %v10807 = vrot.slane %v10806, 2
      %v10808 = vadd.f32 %v10806, %v10807
      %v10809 = vrot.slane %v10808, 1
      %v10810 = vadd.f32 %v10808, %v10809
      %v10811 = vsel %vm3483, %v10681, 0.0
      %v10812 = vsel %vm3483, %v10682, 0.0
      %v10813 = vadd.f32 %v10811, %v10812
      %v10814 = vrot.slane %v10813, 4
      %v10815 = vadd.f32 %v10813, %v10814
      %v10816 = vrot.slane %v10815, 2
      %v10817 = vadd.f32 %v10815, %v10816
      %v10818 = vrot.slane %v10817, 1
      %v10819 = vadd.f32 %v10817, %v10818
      %v10820 = vsel %vm3483, %v10683, 0.0
      %v10821 = vsel %vm3483, %v10684, 0.0
      %v10822 = vadd.f32 %v10820, %v10821
      %v10823 = vrot.slane %v10822, 4
      %v10824 = vadd.f32 %v10822, %v10823
      %v10825 = vrot.slane %v10824, 2
      %v10826 = vadd.f32 %v10824, %v10825
      %v10827 = vrot.slane %v10826, 1
      %v10828 = vadd.f32 %v10826, %v10827
      %vm10845 = vcmask 1041409
      %v10846 = vsel %vm10845, %v4084, %v4075
      %vm10847 = vcmask 1042434
      %v10848 = vsel %vm10847, %v4093, %v10846
      %vm10849 = vcmask 1043459
      %v10850 = vsel %vm10849, %v4102, %v10848
      %vm10851 = vcmask 1044484
      %v10852 = vsel %vm10851, %v4111, %v10850
      %vm10853 = vcmask 1045509
      %v10854 = vsel %vm10853, %v4120, %v10852
      %vm10855 = vcmask 1046534
      %v10856 = vsel %vm10855, %v4129, %v10854
      %vm10857 = vcmask 1047559
      %v10858 = vsel %vm10857, %v4138, %v10856
      %v10859 = vsel %vm10845, %v4156, %v4147
      %v10860 = vsel %vm10847, %v4165, %v10859
      %v10861 = vsel %vm10849, %v4174, %v10860
      %v10862 = vsel %vm10851, %v4183, %v10861
      %v10863 = vsel %vm10853, %v4192, %v10862
      %v10864 = vsel %vm10855, %v4201, %v10863
      %v10865 = vsel %vm10857, %v4210, %v10864
      %v10884 = vsel %vm10845, %v7393, %v7384
      %v10885 = vsel %vm10847, %v7402, %v10884
      %v10886 = vsel %vm10849, %v7411, %v10885
      %v10887 = vsel %vm10851, %v7420, %v10886
      %v10888 = vsel %vm10853, %v7429, %v10887
      %v10889 = vsel %vm10855, %v7438, %v10888
      %v10890 = vsel %vm10857, %v7447, %v10889
      %v10891 = vsel %vm10845, %v7465, %v7456
      %v10892 = vsel %vm10847, %v7474, %v10891
      %v10893 = vsel %vm10849, %v7483, %v10892
      %v10894 = vsel %vm10851, %v7492, %v10893
      %v10895 = vsel %vm10853, %v7501, %v10894
      %v10896 = vsel %vm10855, %v7510, %v10895
      %v10897 = vsel %vm10857, %v7519, %v10896
      %10898 = vrot.lane.b32.xlu0 %v10890, 32
      %v10899 = vpop.permute.xlu0 %10898
      %10900 = vrot.lane.b32.xlu0 %v10897, 32
      %v10901 = vpop.permute.xlu0 %10900
      %v10920 = vsel %vm10845, %v10702, %v10693
      %v10921 = vsel %vm10847, %v10711, %v10920
      %v10922 = vsel %vm10849, %v10720, %v10921
      %v10923 = vsel %vm10851, %v10729, %v10922
      %v10924 = vsel %vm10853, %v10738, %v10923
      %v10925 = vsel %vm10855, %v10747, %v10924
      %v10926 = vsel %vm10857, %v10756, %v10925
      %v10927 = vsel %vm10845, %v10774, %v10765
      %v10928 = vsel %vm10847, %v10783, %v10927
      %v10929 = vsel %vm10849, %v10792, %v10928
      %v10930 = vsel %vm10851, %v10801, %v10929
      %v10931 = vsel %vm10853, %v10810, %v10930
      %v10932 = vsel %vm10855, %v10819, %v10931
      %v10933 = vsel %vm10857, %v10828, %v10932
      %10934 = vrot.lane.b32.xlu0 %v10926, 64
      %v10935 = vpop.permute.xlu0 %10934
      %10936 = vrot.lane.b32.xlu0 %v10933, 64
      %v10937 = vpop.permute.xlu0 %10936
      %v10940 = vsel %vm3483, %v10858, %v10899
      %v10941 = vsel %vm3483, %v10865, %v10901
      %vm10942 = vcmask 523264
      %v10943 = vsel %vm10942, %v10940, %v10935
      %v10944 = vsel %vm10942, %v10941, %v10937
      %v10945 = vld [vmem:[%s17] sm:$0xff]
      %v10946 = vld [vmem:[%s17 + $0x8] sm:$0xff]
      %v10947 = vld [vmem:[%s17 + $0x10] sm:$0xff]
      %v10948 = vld [vmem:[%s17 + $0x18] sm:$0xff]
      %v10949 = vld [vmem:[%s17 + $0x20] sm:$0xff]
      %v10950 = vld [vmem:[%s17 + $0x28] sm:$0xff]
      %v10951 = vld [vmem:[%s17 + $0x30] sm:$0xff]
      %v10952 = vld [vmem:[%s17 + $0x38] sm:$0xff]
      %v10953 = vld [vmem:[%s17 + $0x40] sm:$0xff]
      %v10954 = vld [vmem:[%s17 + $0x48] sm:$0xff]
      %v10955 = vld [vmem:[%s17 + $0x50] sm:$0xff]
      %v10956 = vld [vmem:[%s17 + $0x58] sm:$0xff]
      %v10957 = vld [vmem:[%s18] sm:$0x1]
      %v10959 = vlaneseq
      %v10960 = vshrl.u32 %v10959, 7
      %v10961 = vsub.s32 0, %v10960
      %v10962 = vrot.slane %v10957, %v10961
      %vm10964 = vcmask 785408
      %v10966 = vsel %vm10964, %v10943, 0
      %v10969 = vsel %vm10964, %v10944, 0
      %10971 = vmatprep.subr.mxu0 0.0
      %10972 = vmatpush1.msra.mxu0 %v10945
      %10973 = vmatprep.subr.mxu0 0.0
      %10974 = vmatpush1.msra.mxu0 %v10946
      %10975 = vmatprep.subr.mxu0 0.0
      %10976 = vmatpush1.msra.mxu0 %v10947
      %10977 = vmatprep.subr.mxu0 0.0
      %10978 = vmatpush1.msra.mxu0 %v10948
      %10979 = vmatprep.subr.mxu0 0.0
      %10980 = vmatpush1.msra.mxu0 %v10949
      %10981 = vmatprep.subr.mxu0 0.0
      %10982 = vmatpush1.msra.mxu0 %v10950
      %10983 = vmatprep.subr.mxu0 0.0
      %10984 = vmatpush1.msra.mxu0 %v10951
      %10985 = vmatprep.subr.mxu0 0.0
      %10986 = vmatpush1.msra.mxu0 %v10952
      %10987 = vmatprep.subr.mxu0 0.0
      %10988 = vmatpush1.msra.mxu0 %v10953
      %10989 = vmatprep.subr.mxu0 0.0
      %10990 = vmatpush1.msra.mxu0 %v10954
      %10991 = vmatprep.subr.mxu0 0.0
      %10992 = vmatpush1.msra.mxu0 %v10955
      %10993 = vmatprep.subr.mxu0 0.0
      %10994 = vmatpush1.msra.mxu0 %v10956
      %10995 = vmatprep.subr.mxu0 0.0
      %10996 = vmatpush1.msra.mxu0 0.0
      %10997 = vmatprep.subr.mxu0 0.0
      %10998 = vmatpush1.msra.mxu0 0.0
      %10999 = vmatprep.subr.mxu0 0.0
      %11000 = vmatpush1.msra.mxu0 0.0
      %11001 = vmatprep.subr.mxu0 0.0
      %11002 = vmatpush1.msra.mxu0 0.0
      %11003 = vmatprep.subr.mxu0 0.0
      %11004 = vmatpush1.msra.mxu0 0.0
      %11005 = vmatprep.subr.mxu0 0.0
      %11006 = vmatpush1.msra.mxu0 0.0
      %11007 = vmatprep.subr.mxu0 0.0
      %11008 = vmatpush1.msra.mxu0 0.0
      %11009 = vmatprep.subr.mxu0 0.0
      %11010 = vmatpush1.msra.mxu0 0.0
      %11011 = vmatprep.subr.mxu0 0.0
      %11012 = vmatpush1.msra.mxu0 0.0
      %11013 = vmatprep.subr.mxu0 0.0
      %11014 = vmatpush1.msra.mxu0 0.0
      %11015 = vmatprep.subr.mxu0 0.0
      %11016 = vmatpush1.msra.mxu0 0.0
      %11017 = vmatprep.subr.mxu0 0.0
      %11018 = vmatpush1.msra.mxu0 0.0
      %11019 = vmatprep.subr.mxu0 0.0
      %11020 = vmatpush1.msra.mxu0 0.0
      %11021 = vmatprep.subr.mxu0 0.0
      %11022 = vmatpush1.msra.mxu0 0.0
      %11023 = vmatprep.subr.mxu0 0.0
      %11024 = vmatpush1.msra.mxu0 0.0
      %11025 = vmatprep.subr.mxu0 0.0
      %11026 = vmatpush1.msra.mxu0 0.0
      %11027 = vmatprep.subr.mxu0 0.0
      %11028 = vmatpush1.msra.mxu0 0.0
      %11029 = vmatprep.subr.mxu0 0.0
      %11030 = vmatpush1.msra.mxu0 0.0
      %11031 = vmatprep.subr.mxu0 0.0
      %11032 = vmatpush1.msra.mxu0 0.0
      %11033 = vmatprep.subr.mxu0 0.0
      %11034 = vmatpush1.msra.mxu0 0.0
      %11035 = vmatprep.mubr.f32.mxu0 0.0
      %11036 = vmatmul.mubr.f32.gmra.mrb[0].mxu0 %v10966
      %v11037 = vpop.f32.mrb[0].mxu0
      %v11038 = vadd.f32 %v10962, %v11037
      %v11039 = vpop.f32.mrb[0].mxu0
      %11040 = vmatprep.mubr.f32.mxu0 0.0
      %11041 = vmatmul.mubr.f32.gmra.mrb[0].mxu0 %v10969
      %v11042 = vpop.f32.mrb[0].mxu0
      %v11043 = vadd.f32 %v10962, %v11042
      %v11044 = vpop.f32.mrb[0].mxu0
      %11045 = vdwg.mxu0
      %v11046 = vmax.f32 %v11038, 0.0
      %v11047 = vmax.f32 %v11043, 0.0
      %v11048 = vsel %vm10942, %v11046, 0.0
      %v11049 = vsel %vm10942, %v11047, 0.0
      %v11050 = vadd.f32 %v11048, %v11049
      %v11051 = vrot.slane %v11050, 4
      %v11052 = vadd.f32 %v11050, %v11051
      %v11053 = vrot.slane %v11052, 2
      %v11054 = vadd.f32 %v11052, %v11053
      %v11055 = vrot.slane %v11054, 1
      %v11056 = vadd.f32 %v11054, %v11055
      %v11057 = vrcp.pop 16.0
      %v11058 = vmul.f32 %v11056, %v11057
      %v11059 = vld [vmem:[%s19] sm:$0xff]
      %v11060 = vld [vmem:[%s19 + $0x8] sm:$0xff]
      %v11061 = vld [vmem:[%s19 + $0x10] sm:$0xff]
      %v11062 = vld [vmem:[%s19 + $0x18] sm:$0xff]
      %v11063 = vld [vmem:[%s19 + $0x20] sm:$0xff]
      %v11064 = vld [vmem:[%s19 + $0x28] sm:$0xff]
      %v11065 = vld [vmem:[%s19 + $0x30] sm:$0xff]
      %v11066 = vld [vmem:[%s19 + $0x38] sm:$0xff]
      %v11067 = vld [vmem:[#allocation2] sm:$0x1]
      %v11069 = vsel %vm10942, %v11058, 0
      %11071 = vmatprep.subr.mxu0 0.0
      %11072 = vmatpush1.msra.mxu0 %v11059
      %11073 = vmatprep.subr.mxu0 0.0
      %11074 = vmatpush1.msra.mxu0 %v11060
      %11075 = vmatprep.subr.mxu0 0.0
      %11076 = vmatpush1.msra.mxu0 %v11061
      %11077 = vmatprep.subr.mxu0 0.0
      %11078 = vmatpush1.msra.mxu0 %v11062
      %11079 = vmatprep.subr.mxu0 0.0
      %11080 = vmatpush1.msra.mxu0 %v11063
      %11081 = vmatprep.subr.mxu0 0.0
      %11082 = vmatpush1.msra.mxu0 %v11064
      %11083 = vmatprep.subr.mxu0 0.0
      %11084 = vmatpush1.msra.mxu0 %v11065
      %11085 = vmatprep.subr.mxu0 0.0
      %11086 = vmatpush1.msra.mxu0 %v11066
      %11087 = vmatprep.subr.mxu0 0.0
      %11088 = vmatpush1.msra.mxu0 0.0
      %11089 = vmatprep.subr.mxu0 0.0
      %11090 = vmatpush1.msra.mxu0 0.0
      %11091 = vmatprep.subr.mxu0 0.0
      %11092 = vmatpush1.msra.mxu0 0.0
      %11093 = vmatprep.subr.mxu0 0.0
      %11094 = vmatpush1.msra.mxu0 0.0
      %11095 = vmatprep.subr.mxu0 0.0
      %11096 = vmatpush1.msra.mxu0 0.0
      %11097 = vmatprep.subr.mxu0 0.0
      %11098 = vmatpush1.msra.mxu0 0.0
      %11099 = vmatprep.subr.mxu0 0.0
      %11100 = vmatpush1.msra.mxu0 0.0
      %11101 = vmatprep.subr.mxu0 0.0
      %11102 = vmatpush1.msra.mxu0 0.0
      %11103 = vmatprep.subr.mxu0 0.0
      %11104 = vmatpush1.msra.mxu0 0.0
      %11105 = vmatprep.subr.mxu0 0.0
      %11106 = vmatpush1.msra.mxu0 0.0
      %11107 = vmatprep.subr.mxu0 0.0
      %11108 = vmatpush1.msra.mxu0 0.0
      %11109 = vmatprep.subr.mxu0 0.0
      %11110 = vmatpush1.msra.mxu0 0.0
      %11111 = vmatprep.subr.mxu0 0.0
      %11112 = vmatpush1.msra.mxu0 0.0
      %11113 = vmatprep.subr.mxu0 0.0
      %11114 = vmatpush1.msra.mxu0 0.0
      %11115 = vmatprep.subr.mxu0 0.0
      %11116 = vmatpush1.msra.mxu0 0.0
      %11117 = vmatprep.subr.mxu0 0.0
      %11118 = vmatpush1.msra.mxu0 0.0
      %11119 = vmatprep.subr.mxu0 0.0
      %11120 = vmatpush1.msra.mxu0 0.0
      %11121 = vmatprep.subr.mxu0 0.0
      %11122 = vmatpush1.msra.mxu0 0.0
      %11123 = vmatprep.subr.mxu0 0.0
      %11124 = vmatpush1.msra.mxu0 0.0
      %11125 = vmatprep.subr.mxu0 0.0
      %11126 = vmatpush1.msra.mxu0 0.0
      %11127 = vmatprep.subr.mxu0 0.0
      %11128 = vmatpush1.msra.mxu0 0.0
      %11129 = vmatprep.subr.mxu0 0.0
      %11130 = vmatpush1.msra.mxu0 0.0
      %11131 = vmatprep.subr.mxu0 0.0
      %11132 = vmatpush1.msra.mxu0 0.0
      %11133 = vmatprep.subr.mxu0 0.0
      %11134 = vmatpush1.msra.mxu0 0.0
      %11135 = vmatprep.mubr.f32.mxu0 0.0
      %11136 = vmatmul.mubr.f32.gmra.mrb[0].mxu0 %v11069
      %v11137 = vpop.f32.mrb[0].mxu0
      %v11138 = vadd.f32 %v11067, %v11137
      %v11139 = vpop.f32.mrb[0].mxu0
      %11140 = vdwg.mxu0
      %vm11141 = vcmask 0
      %11142 = vst.msk [vmem:[%s674] sm:$0x1] %vm11141, %v11138
      %p11143 = scmp.lt.s32.totalorder %s34, 1
      %s11144 = scalar_select %p11143, %s34, 1
      %s11145 = scalar_lea.vmem %s21, %s11144
      // Predicated region
      $region105: #{ppgn_forward.1} parent=103 // pred_check
        %p11146 = pneg %p503
      $region106: #{ppgn_forward.1} parent=103 // pred_check_branch
        %11148 = sbr.rel (%p11146) target = $region108
      $region107: #{ppgn_forward.1} parent=103 // pred_region
        _
      $region108: #{ppgn_forward.1} parent=103 // pred_fallthru
        _
    $region104: #{ppgn_forward.1} parent=5 // pred_fallthru
      _
    %p11149 = scmp.le.s32.totalorder 2, %s29
    // Predicated region
    $region109: #{ppgn_forward.1} parent=5 // pred_check
      %p11150 = pneg %p11149
    $region110: #{ppgn_forward.1} parent=5 // pred_check_branch
      %11152 = sbr.rel (%p11150) target = $region112
    $region111: #{ppgn_forward.1} parent=5 // pred_region
      %s11153 = ssub.s32 %s29, 2
      // Predicated region
      $region113: #{ppgn_forward.1} parent=111 // pred_check
        %p11154 = pneg %p509
      $region114: #{ppgn_forward.1} parent=111 // pred_check_branch
        %11156 = sbr.rel (%p11154) target = $region116
      $region115: #{ppgn_forward.1} parent=111 // pred_region
        %p11157 = scmp.lt.s32.totalorder %s35, 1
        %s11158 = scalar_select %p11157, %s35, 1
        %s11159 = scalar_lea.vmem %s21, %s11158
      $region116: #{ppgn_forward.1} parent=111 // pred_fallthru
        _
    $region112: #{ppgn_forward.1} parent=5 // pred_fallthru
      _
  $region6: #{ppgn_forward.1} parent=0 // loop_footer
    %s33 = sadd.s32 1, %s29
  $region7: #{ppgn_forward.1} parent=0 // loop_footer_branch
    %28 = sbr.rel target = $region3
  $region8: #{ppgn_forward.1} parent=0 // loop_exit
    _

</llo_original>
